<compile_context>
chip_gen: v5e
topology: v5e:2x2
jax: 0.10.0
libtpu: 0.0.40
codegen_flags: <defaults>
</compile_context>

<pallas_src>
import jax
import jax.numpy as jnp
from jax.experimental import pallas as pl
from jax.experimental.pallas import tpu as pltpu

EPS = 1e-5        # plain python floats only -> never captured as jax array constants
TAPS = 5          # conv positions per maxpool(1,5) window == conv2 kernel width
POOL2_SPAN = 20   # maxpool(1,10) over stride-2 conv2 positions uses rows 0,2,...,18


# ----------------------------- in-kernel helpers -----------------------------

def _mxu(a, w_bf16):
    """MXU matmul: bf16 operands (weights are pre-stored bf16), f32 accumulation."""
    return jnp.dot(a.astype(jnp.bfloat16), w_bf16, preferred_element_type=jnp.float32)


def _bn_rows(x):
    """Training-mode BatchNorm1d over rows (biased var, gamma=1, beta=0)."""
    mean = jnp.mean(x, axis=0, keepdims=True)
    var = jnp.mean((x - mean) ** 2, axis=0, keepdims=True)
    return (x - mean) * jax.lax.rsqrt(var + EPS)


def _nbytes(x):
    return int(x.size) * jnp.dtype(x.dtype).itemsize


# ----------------------------- K_drug: drug branch -----------------------------

def _drug_kernel(a_ref, x_ref, w1_ref, b1_ref, w2_ref, b2_ref, w3_ref, b3_ref,
                 w4_ref, b4_ref, o_ref):
    a = a_ref[...]                                      # bf16 normalized adjacency
    x = x_ref[...]
    for w_ref, b_ref in ((w1_ref, b1_ref), (w2_ref, b2_ref),
                         (w3_ref, b3_ref), (w4_ref, b4_ref)):
        ax = jnp.dot(a, x.astype(jnp.bfloat16), preferred_element_type=jnp.float32)
        y = _mxu(ax, w_ref[...]) + b_ref[...]
        x = _bn_rows(jnp.maximum(y, 0.0))               # ReLU -> BatchNorm1d (train)
    # global_max_pool: graphs are batched contiguously with equal node counts
    # (as in the harness); ragged batching would need a segment-mask variant.
    num_graphs = o_ref.shape[0]
    nodes_per = x.shape[0] // num_graphs
    o_ref[...] = jnp.max(x.reshape(num_graphs, nodes_per, x.shape[1]), axis=1)


def drug_branch(a_hat_bf16, x0, p, num_graphs):
    n = a_hat_bf16.shape[0]
    layers = [(p["w_conv1"], p["b_conv1"]), (p["w_g0"], p["b_g0"]),
              (p["w_g1"], p["b_g1"]), (p["w_end"], p["b_end"])]
    flops = sum(2 * n * n * w.shape[0] + 2 * n * w.shape[0] * w.shape[1]
                for w, _ in layers)
    bytes_acc = (_nbytes(a_hat_bf16) + _nbytes(x0)
                 + sum(_nbytes(w) + _nbytes(b) for w, b in layers)
                 + num_graphs * p["w_end"].shape[1] * 4)
    return pl.pallas_call(
        _drug_kernel,
        out_shape=jax.ShapeDtypeStruct((num_graphs, p["w_end"].shape[1]), jnp.float32),
        cost_estimate=pl.CostEstimate(flops=flops, transcendentals=4 * n,
                                      bytes_accessed=bytes_acc),
        compiler_params=pltpu.CompilerParams(vmem_limit_bytes=32 * 1024 * 1024),
    )(a_hat_bf16, x0, p["w_conv1"], p["b_conv1"], p["w_g0"], p["b_g0"],
      p["w_g1"], p["b_g1"], p["w_end"], p["b_end"])


# -------- K_cell: conv1/conv2/pools/fc_mut + omics MLPs + fcat + final BN --------

def _cell_kernel(p1_ref, wc1_ref, bc1_ref, wc2_ref, bc2_ref, wfm_ref, bfm_ref,
                 xge_ref, wg1_ref, bg1_ref, wg2_ref, bg2_ref,
                 xcn_ref, wm1_ref, bm1_ref, wm2_ref, bm2_ref,
                 xdrug_ref, wf_m_ref, wf_g_ref, wf_c_ref, bf_ref, o_ref):
    batch = xge_ref.shape[0]
    rows = p1_ref.shape[0] // TAPS                      # batch * wp_pad pooled positions
    wp_pad = rows // batch                              # 8-aligned pooled width (32)

    # ---- conv1 + tanh + maxpool(1,5): ONE matmul, tap-max, tanh/bias hoisted ----
    y1 = _mxu(p1_ref[...], wc1_ref[...])                # (TAPS*rows, 128) f32
    y1 = jnp.max(y1.reshape(TAPS, rows, y1.shape[1]), axis=0)       # max over taps
    pooled1 = jnp.tanh(y1 + bc1_ref[...]).astype(jnp.bfloat16)      # pad lanes stay 0

    # ---- conv2 (1x5, stride 2) as 5 per-tap shifted matmuls (in-kernel im2col) ----
    acc2 = jnp.dot(pooled1, wc2_ref[0], preferred_element_type=jnp.float32)
    for t in range(1, TAPS):
        shifted = jnp.concatenate([pooled1[t:], pooled1[:t]], axis=0)   # row w -> w+t
        acc2 = acc2 + jnp.dot(shifted, wc2_ref[t], preferred_element_type=jnp.float32)
    y2 = jnp.maximum(acc2 + bc2_ref[...], 0.0)                          # relu(cov2)

    # relu + maxpool(1,10): keep the 10 stride-2 positions w in {0,2,...,18}; mask
    # everything else (odd offsets, w >= 20, alignment pad rows) to 0 -- exact
    # because relu output is >= 0 and w = 0 is always a kept row.
    w_in_block = jax.lax.broadcasted_iota(jnp.int32, (rows, 1), 0) % wp_pad
    keep = (w_in_block < POOL2_SPAN) & (w_in_block % 2 == 0)
    y2 = jnp.where(keep, y2, 0.0)
    pooled2 = jnp.max(y2.reshape(batch, wp_pad, y2.shape[1]), axis=1)   # (B, 1024)

    # flatten + fc_mut + relu (zero-padded rows/lanes contribute exactly 0)
    x_mut = jnp.maximum(_mxu(pooled2, wfm_ref[...]) + bfm_ref[...], 0.0)   # (B, 128)

    # ---- gexpr / copy-number branches (Linear -> act -> BN -> Linear -> relu) ----
    def omics(x, w1_ref, b1_ref, w2_ref, b2_ref, sigmoid_first):
        h = _mxu(x, w1_ref[...]) + b1_ref[...]
        h = jax.nn.sigmoid(h) if sigmoid_first else jnp.tanh(h)
        h = _bn_rows(h)
        return jnp.maximum(_mxu(h, w2_ref[...]) + b2_ref[...], 0.0)

    x_gexpr = omics(xge_ref[...], wg1_ref, bg1_ref, wg2_ref, bg2_ref, True)
    x_cnv = omics(xcn_ref[...], wm1_ref, bm1_ref, wm2_ref, bm2_ref, False)

    # ---- fcat(cat(x_mut, x_gexpr, x_cnv)) as 3 partial matmuls + leaky_relu ----
    xc = (_mxu(x_mut, wf_m_ref[...]) + _mxu(x_gexpr, wf_g_ref[...])
          + _mxu(x_cnv, wf_c_ref[...]) + bf_ref[...])
    x_cell = jnp.where(xc >= 0.0, xc, 0.01 * xc)

    # ---- cat((x_cell, x_drug), dim=0) + final BatchNorm1d over all B+G rows ----
    o_ref[...] = _bn_rows(jnp.concatenate([x_cell, xdrug_ref[...]], axis=0))


def cell_fusion(patches1, x_gexpr, x_cn, x_drug, p):
    B, G = x_gexpr.shape[0], x_drug.shape[0]
    out = p["b_fcat"].shape[1]
    rows = patches1.shape[0] // TAPS
    n1 = p["w_cov1"].shape[1]
    n2 = p["w_cov2"].shape[2]
    mms = ([(patches1.shape[0], patches1.shape[1], n1)]            # conv1
           + [(rows, n1, n2)] * TAPS                               # conv2 taps
           + [(B, n2, out)]                                        # fc_mut
           + [(B,) + p["w_gexp1"].shape, (B,) + p["w_gexp2"].shape,
              (B,) + p["w_methy1"].shape, (B,) + p["w_methy2"].shape]
           + [(B, 128, out)] * 3)                                  # fcat pieces
    flops = sum(2 * m * k * n for m, k, n in mms)
    args = (patches1, p["w_cov1"], p["b_cov1"], p["w_cov2"], p["b_cov2"],
            p["w_fc_mut"], p["b_fc_mut"],
            x_gexpr, p["w_gexp1"], p["b_gexp1"], p["w_gexp2"], p["b_gexp2"],
            x_cn, p["w_methy1"], p["b_methy1"], p["w_methy2"], p["b_methy2"],
            x_drug, p["w_fcat_mut"], p["w_fcat_gexp"], p["w_fcat_cnv"], p["b_fcat"])
    bytes_acc = sum(_nbytes(a) for a in args) + (B + G) * out * 4
    return pl.pallas_call(
        _cell_kernel,
        out_shape=jax.ShapeDtypeStruct((B + G, out), jnp.float32),
        cost_estimate=pl.CostEstimate(flops=flops,
                                      transcendentals=rows * n1 + 8 * B * 256,
                                      bytes_accessed=bytes_acc),
        compiler_params=pltpu.CompilerParams(vmem_limit_bytes=32 * 1024 * 1024),
    )(*args)


# ------------------------------- XLA-side glue -------------------------------

def _conv1_patches(mutation_data):
    """NCHW (B,1,1,W) -> conv1 im2col grouped tap-major by maxpool(1,5) window.
    Rows ordered (tap, sample, pooled_position) with the pooled width padded to a
    multiple of 8 (>= 24); pad positions use clamped indices and are masked out
    downstream.  Conv kernel dim padded 50 -> 64."""
    B = mutation_data.shape[0]
    x = mutation_data.reshape(B, -1)                    # (B, W)
    W = x.shape[1]
    w1 = (W - 50) // 5 + 1                              # conv1 output width
    wp = w1 // 5                                        # width after maxpool(1,5)
    wp_pad = ((max(wp, 24) + 7) // 8) * 8               # 8-aligned, >= 24 rows needed
    j = jnp.arange(wp_pad)                              # pooled position
    r = jnp.arange(TAPS)                                # conv position inside window
    t = jnp.arange(50)                                  # conv kernel tap
    idx = 25 * j[None, :, None] + 5 * r[:, None, None] + t[None, None, :]
    idx = jnp.minimum(idx, W - 1)                       # clamp alignment-pad positions
    patches = x[:, idx]                                 # (B, TAPS, wp_pad, 50)
    patches = jnp.transpose(patches, (1, 0, 2, 3))      # tap-major
    patches = jnp.pad(patches, ((0, 0), (0, 0), (0, 0), (0, 14)))   # K 50 -> 64
    return patches.reshape(TAPS * B * wp_pad, 64)


def node_representation_forward(params, drug_feature, a_hat, mutation_data,
                                gexpr_data, copy_number_data, num_graphs):
    p = params

    # ---- drug branch: 4x (SGConv -> ReLU -> BN) + global_max_pool, one kernel ----
    x_drug = drug_branch(a_hat.astype(jnp.bfloat16), drug_feature, p, num_graphs)

    # TODO(synk): epoch-conditional pandas CSV dumps of x_drug/x_cell/x_all are host
    # file I/O with no kernel equivalent; skipped.

    # ---- everything else (mutation CNN, omics MLPs, fcat, final BN): one kernel ----
    patches1 = _conv1_patches(mutation_data)            # single XLA gather (only glue)
    return cell_fusion(patches1, gexpr_data, copy_number_data, x_drug, p)


# ----------------------------- parameter init -----------------------------

def _xavier(key, shape, fan_in, fan_out):
    bound = (6.0 / (fan_in + fan_out)) ** 0.5
    return jax.random.uniform(key, shape, jnp.float32, -bound, bound)


def _pad2(w, rows, cols):
    return jnp.zeros((rows, cols), w.dtype).at[: w.shape[0], : w.shape[1]].set(w)


def init_params(key, gcn_layer, dim_gexp, dim_methy, output, units_list):
    ks = jax.random.split(key, 12)
    bf = jnp.bfloat16
    p = {}

    def lin(k, din, dout):
        return (_xavier(k, (din, dout), din, dout).astype(bf),
                jnp.zeros((1, dout), jnp.float32))

    p["w_conv1"], p["b_conv1"] = lin(ks[0], gcn_layer, units_list[0])
    p["w_g0"], p["b_g0"] = lin(ks[1], units_list[0], units_list[1])
    p["w_g1"], p["b_g1"] = lin(ks[2], units_list[1], units_list[2])
    p["w_end"], p["b_end"] = lin(ks[3], units_list[2], output)
    p["w_gexp1"], p["b_gexp1"] = lin(ks[4], dim_gexp, 256)
    p["w_gexp2"], p["b_gexp2"] = lin(ks[5], 256, output)
    p["w_methy1"], p["b_methy1"] = lin(ks[6], dim_methy, 256)
    p["w_methy2"], p["b_methy2"] = lin(ks[7], 256, output)
    # cov1: Conv2d(1,50,(1,50)) -> (kernel_tap, out_ch) matmul weight, padded (64,128)
    p["w_cov1"] = _pad2(_xavier(ks[8], (50, 50), 50, 50 * 50), 64, 128).astype(bf)
    p["b_cov1"] = jnp.zeros((1, 128), jnp.float32)
    # cov2: Conv2d(50,960,(1,5)) -> 5 per-tap (in_ch, out_ch) matmuls, padded (5,128,1024)
    w2 = _xavier(ks[9], (250, 960), 250, 960 * 5)              # rows = (in_ch, tap)
    w2 = jnp.transpose(w2.reshape(50, 5, 960), (1, 0, 2))      # (tap, in_ch, out_ch)
    p["w_cov2"] = jnp.stack([_pad2(w2[t], 128, 1024) for t in range(5)]).astype(bf)
    p["b_cov2"] = jnp.zeros((1, 1024), jnp.float32)
    # fc_mut: Linear(960, output); rows zero-padded 960 -> 1024
    p["w_fc_mut"] = _pad2(_xavier(ks[10], (960, output), 960, output),
                          1024, output).astype(bf)
    p["b_fc_mut"] = jnp.zeros((1, output), jnp.float32)
    # fcat: Linear(3*128, output), pre-split into the three concat pieces
    w_fcat = _xavier(ks[11], (3 * 128, output), 3 * 128, output)
    p["w_fcat_mut"] = w_fcat[0:128].astype(bf)
    p["w_fcat_gexp"] = w_fcat[128:256].astype(bf)
    p["w_fcat_cnv"] = w_fcat[256:384].astype(bf)
    p["b_fcat"] = jnp.zeros((1, output), jnp.float32)
    return p


if __name__ == "__main__":
    key = jax.random.PRNGKey(0)

    # hyper-params (output must equal feature_dim=128 so fcat(3*128) is consistent)
    GCN_LAYER, DIM_GEXP, DIM_METHY, OUTPUT = 64, 128, 128, 128
    UNITS = [256, 256, 256]
    B = 4                 # cell-line samples
    G = 4                 # drug graphs
    NODES_PER = 8         # equal, contiguous graph segments (8-aligned sublane split)
    N_NODES = G * NODES_PER
    MUT_W = 795           # cov1/pool/cov2/pool flattens to exactly 960 (fc_mut input)

    k_par, k_feat, k_adj, k_mut, k_gex, k_cnv = jax.random.split(key, 6)
    params = init_params(k_par, GCN_LAYER, DIM_GEXP, DIM_METHY, OUTPUT, UNITS)

    # drug graph inputs: node features + dense GCN-normalized adjacency (SGConv K=1)
    drug_feature = jax.random.normal(k_feat, (N_NODES, GCN_LAYER), jnp.float32)
    ibatch = jnp.repeat(jnp.arange(G), NODES_PER)
    same_graph = (ibatch[:, None] == ibatch[None, :]).astype(jnp.float32)
    rand_adj = (jax.random.uniform(k_adj, (N_NODES, N_NODES)) > 0.5).astype(jnp.float32)
    rand_adj = jnp.maximum(rand_adj, rand_adj.T) * same_graph
    adj = jnp.minimum(rand_adj + jnp.eye(N_NODES, dtype=jnp.float32), 1.0)
    dinv = 1.0 / jnp.sqrt(adj.sum(axis=1))
    a_hat = adj * dinv[:, None] * dinv[None, :]

    # cell-line omics inputs
    mutation_data = jax.random.normal(k_mut, (B, 1, 1, MUT_W), jnp.float32)   # NCHW
    gexpr_data = jax.random.normal(k_gex, (B, DIM_GEXP), jnp.float32)
    copy_number_data = jax.random.normal(k_cnv, (B, DIM_METHY), jnp.float32)

    fwd = jax.jit(node_representation_forward, static_argnames=("num_graphs",))
    x_all = fwd(params, drug_feature, a_hat, mutation_data, gexpr_data,
                copy_number_data, num_graphs=G)
    x_all = jax.block_until_ready(x_all)
    assert x_all.shape == (B + G, OUTPUT) and x_all.dtype == jnp.float32
    print("KERNEL_OK")
</pallas_src>

<mosaic_0001>
module attributes {stable_mosaic.version = 11 : i64} {
  func.func @_drug_kernel(%arg0: memref<32x32xbf16, #tpu.memory_space<vmem>>, %arg1: memref<32x64xf32, #tpu.memory_space<vmem>>, %arg2: memref<64x256xbf16, #tpu.memory_space<vmem>>, %arg3: memref<1x256xf32, #tpu.memory_space<vmem>>, %arg4: memref<256x256xbf16, #tpu.memory_space<vmem>>, %arg5: memref<1x256xf32, #tpu.memory_space<vmem>>, %arg6: memref<256x256xbf16, #tpu.memory_space<vmem>>, %arg7: memref<1x256xf32, #tpu.memory_space<vmem>>, %arg8: memref<256x128xbf16, #tpu.memory_space<vmem>>, %arg9: memref<1x128xf32, #tpu.memory_space<vmem>>, %arg10: memref<4x128xf32, #tpu.memory_space<vmem>>) attributes {dimension_semantics = [], scalar_prefetch = 0 : i64, scratch_operands = 0 : i64, tpu.core_type = #tpu.core_type<tc>} {
    %c0 = arith.constant 0 : index
    %c0_0 = arith.constant 0 : index
    %0 = vector.load %arg0[%c0, %c0_0] : memref<32x32xbf16, #tpu.memory_space<vmem>>, vector<32x32xbf16>
    %c0_1 = arith.constant 0 : index
    %c0_2 = arith.constant 0 : index
    %1 = vector.load %arg1[%c0_1, %c0_2] : memref<32x64xf32, #tpu.memory_space<vmem>>, vector<32x64xf32>
    %2 = arith.truncf %1 : vector<32x64xf32> to vector<32x64xbf16>
    %cst = arith.constant dense<0.000000e+00> : vector<32x64xf32>
    %3 = tpu.matmul %0, %2, %cst {dimension_numbers = #tpu.dot_dimension_numbers<[1], [0], [0], [1], [0, 0, 1, 1], [], []>} : vector<32x32xbf16>, vector<32x64xbf16>, vector<32x64xf32> -> vector<32x64xf32>
    %c0_3 = arith.constant 0 : index
    %c0_4 = arith.constant 0 : index
    %4 = vector.load %arg2[%c0_3, %c0_4] : memref<64x256xbf16, #tpu.memory_space<vmem>>, vector<64x256xbf16>
    %5 = arith.truncf %3 : vector<32x64xf32> to vector<32x64xbf16>
    %cst_5 = arith.constant dense<0.000000e+00> : vector<32x256xf32>
    %6 = tpu.matmul %5, %4, %cst_5 {dimension_numbers = #tpu.dot_dimension_numbers<[1], [0], [0], [1], [0, 0, 1, 1], [], []>} : vector<32x64xbf16>, vector<64x256xbf16>, vector<32x256xf32> -> vector<32x256xf32>
    %c0_6 = arith.constant 0 : index
    %c0_7 = arith.constant 0 : index
    %7 = vector.load %arg3[%c0_6, %c0_7] : memref<1x256xf32, #tpu.memory_space<vmem>>, vector<1x256xf32>
    %8 = vector.broadcast %7 : vector<1x256xf32> to vector<32x256xf32>
    %9 = arith.addf %6, %8 : vector<32x256xf32>
    %cst_8 = arith.constant 0.000000e+00 : f32
    %10 = vector.broadcast %cst_8 : f32 to vector<32x256xf32>
    %11 = arith.maximumf %9, %10 : vector<32x256xf32>
    %cst_9 = arith.constant dense<0.000000e+00> : vector<256xf32>
    %12 = vector.multi_reduction <add>, %11, %cst_9 [0] : vector<32x256xf32> to vector<256xf32>
    %13 = vector.shape_cast %12 : vector<256xf32> to vector<1x256xf32>
    %cst_10 = arith.constant 3.200000e+01 : f32
    %14 = vector.broadcast %cst_10 : f32 to vector<1x256xf32>
    %15 = arith.divf %13, %14 : vector<1x256xf32>
    %16 = vector.broadcast %15 : vector<1x256xf32> to vector<32x256xf32>
    %17 = arith.subf %11, %16 : vector<32x256xf32>
    %18 = arith.mulf %17, %17 : vector<32x256xf32>
    %cst_11 = arith.constant dense<0.000000e+00> : vector<256xf32>
    %19 = vector.multi_reduction <add>, %18, %cst_11 [0] : vector<32x256xf32> to vector<256xf32>
    %20 = vector.shape_cast %19 : vector<256xf32> to vector<1x256xf32>
    %cst_12 = arith.constant 3.200000e+01 : f32
    %21 = vector.broadcast %cst_12 : f32 to vector<1x256xf32>
    %22 = arith.divf %20, %21 : vector<1x256xf32>
    %23 = vector.broadcast %15 : vector<1x256xf32> to vector<32x256xf32>
    %24 = arith.subf %11, %23 : vector<32x256xf32>
    %cst_13 = arith.constant 9.99999974E-6 : f32
    %25 = vector.broadcast %cst_13 : f32 to vector<1x256xf32>
    %26 = arith.addf %22, %25 : vector<1x256xf32>
    %27 = math.rsqrt %26 : vector<1x256xf32>
    %28 = vector.broadcast %27 : vector<1x256xf32> to vector<32x256xf32>
    %29 = arith.mulf %24, %28 : vector<32x256xf32>
    %30 = arith.truncf %29 : vector<32x256xf32> to vector<32x256xbf16>
    %cst_14 = arith.constant dense<0.000000e+00> : vector<32x256xf32>
    %31 = tpu.matmul %0, %30, %cst_14 {dimension_numbers = #tpu.dot_dimension_numbers<[1], [0], [0], [1], [0, 0, 1, 1], [], []>} : vector<32x32xbf16>, vector<32x256xbf16>, vector<32x256xf32> -> vector<32x256xf32>
    %c0_15 = arith.constant 0 : index
    %c0_16 = arith.constant 0 : index
    %32 = vector.load %arg4[%c0_15, %c0_16] : memref<256x256xbf16, #tpu.memory_space<vmem>>, vector<256x256xbf16>
    %33 = arith.truncf %31 : vector<32x256xf32> to vector<32x256xbf16>
    %cst_17 = arith.constant dense<0.000000e+00> : vector<32x256xf32>
    %34 = tpu.matmul %33, %32, %cst_17 {dimension_numbers = #tpu.dot_dimension_numbers<[1], [0], [0], [1], [0, 0, 1, 1], [], []>} : vector<32x256xbf16>, vector<256x256xbf16>, vector<32x256xf32> -> vector<32x256xf32>
    %c0_18 = arith.constant 0 : index
    %c0_19 = arith.constant 0 : index
    %35 = vector.load %arg5[%c0_18, %c0_19] : memref<1x256xf32, #tpu.memory_space<vmem>>, vector<1x256xf32>
    %36 = vector.broadcast %35 : vector<1x256xf32> to vector<32x256xf32>
    %37 = arith.addf %34, %36 : vector<32x256xf32>
    %cst_20 = arith.constant 0.000000e+00 : f32
    %38 = vector.broadcast %cst_20 : f32 to vector<32x256xf32>
    %39 = arith.maximumf %37, %38 : vector<32x256xf32>
    %cst_21 = arith.constant dense<0.000000e+00> : vector<256xf32>
    %40 = vector.multi_reduction <add>, %39, %cst_21 [0] : vector<32x256xf32> to vector<256xf32>
    %41 = vector.shape_cast %40 : vector<256xf32> to vector<1x256xf32>
    %cst_22 = arith.constant 3.200000e+01 : f32
    %42 = vector.broadcast %cst_22 : f32 to vector<1x256xf32>
    %43 = arith.divf %41, %42 : vector<1x256xf32>
    %44 = vector.broadcast %43 : vector<1x256xf32> to vector<32x256xf32>
    %45 = arith.subf %39, %44 : vector<32x256xf32>
    %46 = arith.mulf %45, %45 : vector<32x256xf32>
    %cst_23 = arith.constant dense<0.000000e+00> : vector<256xf32>
    %47 = vector.multi_reduction <add>, %46, %cst_23 [0] : vector<32x256xf32> to vector<256xf32>
    %48 = vector.shape_cast %47 : vector<256xf32> to vector<1x256xf32>
    %cst_24 = arith.constant 3.200000e+01 : f32
    %49 = vector.broadcast %cst_24 : f32 to vector<1x256xf32>
    %50 = arith.divf %48, %49 : vector<1x256xf32>
    %51 = vector.broadcast %43 : vector<1x256xf32> to vector<32x256xf32>
    %52 = arith.subf %39, %51 : vector<32x256xf32>
    %cst_25 = arith.constant 9.99999974E-6 : f32
    %53 = vector.broadcast %cst_25 : f32 to vector<1x256xf32>
    %54 = arith.addf %50, %53 : vector<1x256xf32>
    %55 = math.rsqrt %54 : vector<1x256xf32>
    %56 = vector.broadcast %55 : vector<1x256xf32> to vector<32x256xf32>
    %57 = arith.mulf %52, %56 : vector<32x256xf32>
    %58 = arith.truncf %57 : vector<32x256xf32> to vector<32x256xbf16>
    %cst_26 = arith.constant dense<0.000000e+00> : vector<32x256xf32>
    %59 = tpu.matmul %0, %58, %cst_26 {dimension_numbers = #tpu.dot_dimension_numbers<[1], [0], [0], [1], [0, 0, 1, 1], [], []>} : vector<32x32xbf16>, vector<32x256xbf16>, vector<32x256xf32> -> vector<32x256xf32>
    %c0_27 = arith.constant 0 : index
    %c0_28 = arith.constant 0 : index
    %60 = vector.load %arg6[%c0_27, %c0_28] : memref<256x256xbf16, #tpu.memory_space<vmem>>, vector<256x256xbf16>
    %61 = arith.truncf %59 : vector<32x256xf32> to vector<32x256xbf16>
    %cst_29 = arith.constant dense<0.000000e+00> : vector<32x256xf32>
    %62 = tpu.matmul %61, %60, %cst_29 {dimension_numbers = #tpu.dot_dimension_numbers<[1], [0], [0], [1], [0, 0, 1, 1], [], []>} : vector<32x256xbf16>, vector<256x256xbf16>, vector<32x256xf32> -> vector<32x256xf32>
    %c0_30 = arith.constant 0 : index
    %c0_31 = arith.constant 0 : index
    %63 = vector.load %arg7[%c0_30, %c0_31] : memref<1x256xf32, #tpu.memory_space<vmem>>, vector<1x256xf32>
    %64 = vector.broadcast %63 : vector<1x256xf32> to vector<32x256xf32>
    %65 = arith.addf %62, %64 : vector<32x256xf32>
    %cst_32 = arith.constant 0.000000e+00 : f32
    %66 = vector.broadcast %cst_32 : f32 to vector<32x256xf32>
    %67 = arith.maximumf %65, %66 : vector<32x256xf32>
    %cst_33 = arith.constant dense<0.000000e+00> : vector<256xf32>
    %68 = vector.multi_reduction <add>, %67, %cst_33 [0] : vector<32x256xf32> to vector<256xf32>
    %69 = vector.shape_cast %68 : vector<256xf32> to vector<1x256xf32>
    %cst_34 = arith.constant 3.200000e+01 : f32
    %70 = vector.broadcast %cst_34 : f32 to vector<1x256xf32>
    %71 = arith.divf %69, %70 : vector<1x256xf32>
    %72 = vector.broadcast %71 : vector<1x256xf32> to vector<32x256xf32>
    %73 = arith.subf %67, %72 : vector<32x256xf32>
    %74 = arith.mulf %73, %73 : vector<32x256xf32>
    %cst_35 = arith.constant dense<0.000000e+00> : vector<256xf32>
    %75 = vector.multi_reduction <add>, %74, %cst_35 [0] : vector<32x256xf32> to vector<256xf32>
    %76 = vector.shape_cast %75 : vector<256xf32> to vector<1x256xf32>
    %cst_36 = arith.constant 3.200000e+01 : f32
    %77 = vector.broadcast %cst_36 : f32 to vector<1x256xf32>
    %78 = arith.divf %76, %77 : vector<1x256xf32>
    %79 = vector.broadcast %71 : vector<1x256xf32> to vector<32x256xf32>
    %80 = arith.subf %67, %79 : vector<32x256xf32>
    %cst_37 = arith.constant 9.99999974E-6 : f32
    %81 = vector.broadcast %cst_37 : f32 to vector<1x256xf32>
    %82 = arith.addf %78, %81 : vector<1x256xf32>
    %83 = math.rsqrt %82 : vector<1x256xf32>
    %84 = vector.broadcast %83 : vector<1x256xf32> to vector<32x256xf32>
    %85 = arith.mulf %80, %84 : vector<32x256xf32>
    %86 = arith.truncf %85 : vector<32x256xf32> to vector<32x256xbf16>
    %cst_38 = arith.constant dense<0.000000e+00> : vector<32x256xf32>
    %87 = tpu.matmul %0, %86, %cst_38 {dimension_numbers = #tpu.dot_dimension_numbers<[1], [0], [0], [1], [0, 0, 1, 1], [], []>} : vector<32x32xbf16>, vector<32x256xbf16>, vector<32x256xf32> -> vector<32x256xf32>
    %c0_39 = arith.constant 0 : index
    %c0_40 = arith.constant 0 : index
    %88 = vector.load %arg8[%c0_39, %c0_40] : memref<256x128xbf16, #tpu.memory_space<vmem>>, vector<256x128xbf16>
    %89 = arith.truncf %87 : vector<32x256xf32> to vector<32x256xbf16>
    %cst_41 = arith.constant dense<0.000000e+00> : vector<32x128xf32>
    %90 = tpu.matmul %89, %88, %cst_41 {dimension_numbers = #tpu.dot_dimension_numbers<[1], [0], [0], [1], [0, 0, 1, 1], [], []>} : vector<32x256xbf16>, vector<256x128xbf16>, vector<32x128xf32> -> vector<32x128xf32>
    %c0_42 = arith.constant 0 : index
    %c0_43 = arith.constant 0 : index
    %91 = vector.load %arg9[%c0_42, %c0_43] : memref<1x128xf32, #tpu.memory_space<vmem>>, vector<1x128xf32>
    %92 = vector.broadcast %91 : vector<1x128xf32> to vector<32x128xf32>
    %93 = arith.addf %90, %92 : vector<32x128xf32>
    %cst_44 = arith.constant 0.000000e+00 : f32
    %94 = vector.broadcast %cst_44 : f32 to vector<32x128xf32>
    %95 = arith.maximumf %93, %94 : vector<32x128xf32>
    %cst_45 = arith.constant dense<0.000000e+00> : vector<128xf32>
    %96 = vector.multi_reduction <add>, %95, %cst_45 [0] : vector<32x128xf32> to vector<128xf32>
    %97 = vector.shape_cast %96 : vector<128xf32> to vector<1x128xf32>
    %cst_46 = arith.constant 3.200000e+01 : f32
    %98 = vector.broadcast %cst_46 : f32 to vector<1x128xf32>
    %99 = arith.divf %97, %98 : vector<1x128xf32>
    %100 = vector.broadcast %99 : vector<1x128xf32> to vector<32x128xf32>
    %101 = arith.subf %95, %100 : vector<32x128xf32>
    %102 = arith.mulf %101, %101 : vector<32x128xf32>
    %cst_47 = arith.constant dense<0.000000e+00> : vector<128xf32>
    %103 = vector.multi_reduction <add>, %102, %cst_47 [0] : vector<32x128xf32> to vector<128xf32>
    %104 = vector.shape_cast %103 : vector<128xf32> to vector<1x128xf32>
    %cst_48 = arith.constant 3.200000e+01 : f32
    %105 = vector.broadcast %cst_48 : f32 to vector<1x128xf32>
    %106 = arith.divf %104, %105 : vector<1x128xf32>
    %107 = vector.broadcast %99 : vector<1x128xf32> to vector<32x128xf32>
    %108 = arith.subf %95, %107 : vector<32x128xf32>
    %cst_49 = arith.constant 9.99999974E-6 : f32
    %109 = vector.broadcast %cst_49 : f32 to vector<1x128xf32>
    %110 = arith.addf %106, %109 : vector<1x128xf32>
    %111 = math.rsqrt %110 : vector<1x128xf32>
    %112 = vector.broadcast %111 : vector<1x128xf32> to vector<32x128xf32>
    %113 = arith.mulf %108, %112 : vector<32x128xf32>
    %114 = vector.shape_cast %113 : vector<32x128xf32> to vector<4x8x128xf32>
    %cst_50 = arith.constant dense<0xFF800000> : vector<4x128xf32>
    %115 = vector.multi_reduction <maximumf>, %114, %cst_50 [1] : vector<4x8x128xf32> to vector<4x128xf32>
    %c0_51 = arith.constant 0 : index
    %c0_52 = arith.constant 0 : index
    %116 = vector.load %arg10[%c0_51, %c0_52] : memref<4x128xf32, #tpu.memory_space<vmem>>, vector<4x128xf32>
    tpu.vector_store %arg10[%c0_51, %c0_52], %115 {strides = array<i32>} : memref<4x128xf32, #tpu.memory_space<vmem>>, vector<4x128xf32>,
    return
  }
}

module attributes {stable_mosaic.version = 11 : i64} {
  func.func @_cell_kernel(%arg0: memref<640x64xf32, #tpu.memory_space<vmem>>, %arg1: memref<64x128xbf16, #tpu.memory_space<vmem>>, %arg2: memref<1x128xf32, #tpu.memory_space<vmem>>, %arg3: memref<5x128x1024xbf16, #tpu.memory_space<vmem>>, %arg4: memref<1x1024xf32, #tpu.memory_space<vmem>>, %arg5: memref<1024x128xbf16, #tpu.memory_space<vmem>>, %arg6: memref<1x128xf32, #tpu.memory_space<vmem>>, %arg7: memref<4x128xf32, #tpu.memory_space<vmem>>, %arg8: memref<128x256xbf16, #tpu.memory_space<vmem>>, %arg9: memref<1x256xf32, #tpu.memory_space<vmem>>, %arg10: memref<256x128xbf16, #tpu.memory_space<vmem>>, %arg11: memref<1x128xf32, #tpu.memory_space<vmem>>, %arg12: memref<4x128xf32, #tpu.memory_space<vmem>>, %arg13: memref<128x256xbf16, #tpu.memory_space<vmem>>, %arg14: memref<1x256xf32, #tpu.memory_space<vmem>>, %arg15: memref<256x128xbf16, #tpu.memory_space<vmem>>, %arg16: memref<1x128xf32, #tpu.memory_space<vmem>>, %arg17: memref<4x128xf32, #tpu.memory_space<vmem>>, %arg18: memref<128x128xbf16, #tpu.memory_space<vmem>>, %arg19: memref<128x128xbf16, #tpu.memory_space<vmem>>, %arg20: memref<128x128xbf16, #tpu.memory_space<vmem>>, %arg21: memref<1x128xf32, #tpu.memory_space<vmem>>, %arg22: memref<8x128xf32, #tpu.memory_space<vmem>>) attributes {dimension_semantics = [], scalar_prefetch = 0 : i64, scratch_operands = 0 : i64, tpu.core_type = #tpu.core_type<tc>} {
    %c0 = arith.constant 0 : index
    %c0_0 = arith.constant 0 : index
    %0 = vector.load %arg0[%c0, %c0_0] : memref<640x64xf32, #tpu.memory_space<vmem>>, vector<640x64xf32>
    %c0_1 = arith.constant 0 : index
    %c0_2 = arith.constant 0 : index
    %1 = vector.load %arg1[%c0_1, %c0_2] : memref<64x128xbf16, #tpu.memory_space<vmem>>, vector<64x128xbf16>
    %2 = arith.truncf %0 : vector<640x64xf32> to vector<640x64xbf16>
    %cst = arith.constant dense<0.000000e+00> : vector<640x128xf32>
    %3 = tpu.matmul %2, %1, %cst {dimension_numbers = #tpu.dot_dimension_numbers<[1], [0], [0], [1], [0, 0, 1, 1], [], []>} : vector<640x64xbf16>, vector<64x128xbf16>, vector<640x128xf32> -> vector<640x128xf32>
    %4 = vector.shape_cast %3 : vector<640x128xf32> to vector<5x128x128xf32>
    %cst_3 = arith.constant dense<0xFF800000> : vector<128x128xf32>
    %5 = vector.multi_reduction <maximumf>, %4, %cst_3 [0] : vector<5x128x128xf32> to vector<128x128xf32>
    %c0_4 = arith.constant 0 : index
    %c0_5 = arith.constant 0 : index
    %6 = vector.load %arg2[%c0_4, %c0_5] : memref<1x128xf32, #tpu.memory_space<vmem>>, vector<1x128xf32>
    %7 = vector.broadcast %6 : vector<1x128xf32> to vector<128x128xf32>
    %8 = arith.addf %5, %7 : vector<128x128xf32>
    %9 = math.tanh %8 : vector<128x128xf32>
    %10 = arith.truncf %9 : vector<128x128xf32> to vector<128x128xbf16>
    %c0_6 = arith.constant 0 : index
    %c0_7 = arith.constant 0 : index
    %c0_8 = arith.constant 0 : index
    %11 = vector.load %arg3[%c0_6, %c0_7, %c0_8] : memref<5x128x1024xbf16, #tpu.memory_space<vmem>>, vector<1x128x1024xbf16>
    %12 = vector.shape_cast %11 : vector<1x128x1024xbf16> to vector<128x1024xbf16>
    %cst_9 = arith.constant dense<0.000000e+00> : vector<128x1024xf32>
    %13 = tpu.matmul %10, %12, %cst_9 {dimension_numbers = #tpu.dot_dimension_numbers<[1], [0], [0], [1], [0, 0, 1, 1], [], []>} : vector<128x128xbf16>, vector<128x1024xbf16>, vector<128x1024xf32> -> vector<128x1024xf32>
    %14 = vector.extract_strided_slice %10 {offsets = [1, 0], sizes = [127, 128], strides = [1, 1]} : vector<128x128xbf16> to vector<127x128xbf16>
    %15 = vector.extract_strided_slice %10 {offsets = [0, 0], sizes = [1, 128], strides = [1, 1]} : vector<128x128xbf16> to vector<1x128xbf16>
    %16 = tpu.concatenate %14, %15 in 0 : vector<127x128xbf16>, vector<1x128xbf16> -> vector<128x128xbf16>
    %c1 = arith.constant 1 : index
    %c0_10 = arith.constant 0 : index
    %c0_11 = arith.constant 0 : index
    %17 = vector.load %arg3[%c1, %c0_10, %c0_11] : memref<5x128x1024xbf16, #tpu.memory_space<vmem>>, vector<1x128x1024xbf16>
    %18 = vector.shape_cast %17 : vector<1x128x1024xbf16> to vector<128x1024xbf16>
    %cst_12 = arith.constant dense<0.000000e+00> : vector<128x1024xf32>
    %19 = tpu.matmul %16, %18, %cst_12 {dimension_numbers = #tpu.dot_dimension_numbers<[1], [0], [0], [1], [0, 0, 1, 1], [], []>} : vector<128x128xbf16>, vector<128x1024xbf16>, vector<128x1024xf32> -> vector<128x1024xf32>
    %20 = arith.addf %13, %19 : vector<128x1024xf32>
    %21 = vector.extract_strided_slice %10 {offsets = [2, 0], sizes = [126, 128], strides = [1, 1]} : vector<128x128xbf16> to vector<126x128xbf16>
    %22 = vector.extract_strided_slice %10 {offsets = [0, 0], sizes = [2, 128], strides = [1, 1]} : vector<128x128xbf16> to vector<2x128xbf16>
    %23 = tpu.concatenate %21, %22 in 0 : vector<126x128xbf16>, vector<2x128xbf16> -> vector<128x128xbf16>
    %c2 = arith.constant 2 : index
    %c0_13 = arith.constant 0 : index
    %c0_14 = arith.constant 0 : index
    %24 = vector.load %arg3[%c2, %c0_13, %c0_14] : memref<5x128x1024xbf16, #tpu.memory_space<vmem>>, vector<1x128x1024xbf16>
    %25 = vector.shape_cast %24 : vector<1x128x1024xbf16> to vector<128x1024xbf16>
    %cst_15 = arith.constant dense<0.000000e+00> : vector<128x1024xf32>
    %26 = tpu.matmul %23, %25, %cst_15 {dimension_numbers = #tpu.dot_dimension_numbers<[1], [0], [0], [1], [0, 0, 1, 1], [], []>} : vector<128x128xbf16>, vector<128x1024xbf16>, vector<128x1024xf32> -> vector<128x1024xf32>
    %27 = arith.addf %20, %26 : vector<128x1024xf32>
    %28 = vector.extract_strided_slice %10 {offsets = [3, 0], sizes = [125, 128], strides = [1, 1]} : vector<128x128xbf16> to vector<125x128xbf16>
    %29 = vector.extract_strided_slice %10 {offsets = [0, 0], sizes = [3, 128], strides = [1, 1]} : vector<128x128xbf16> to vector<3x128xbf16>
    %30 = tpu.concatenate %28, %29 in 0 : vector<125x128xbf16>, vector<3x128xbf16> -> vector<128x128xbf16>
    %c3 = arith.constant 3 : index
    %c0_16 = arith.constant 0 : index
    %c0_17 = arith.constant 0 : index
    %31 = vector.load %arg3[%c3, %c0_16, %c0_17] : memref<5x128x1024xbf16, #tpu.memory_space<vmem>>, vector<1x128x1024xbf16>
    %32 = vector.shape_cast %31 : vector<1x128x1024xbf16> to vector<128x1024xbf16>
    %cst_18 = arith.constant dense<0.000000e+00> : vector<128x1024xf32>
    %33 = tpu.matmul %30, %32, %cst_18 {dimension_numbers = #tpu.dot_dimension_numbers<[1], [0], [0], [1], [0, 0, 1, 1], [], []>} : vector<128x128xbf16>, vector<128x1024xbf16>, vector<128x1024xf32> -> vector<128x1024xf32>
    %34 = arith.addf %27, %33 : vector<128x1024xf32>
    %35 = vector.extract_strided_slice %10 {offsets = [4, 0], sizes = [124, 128], strides = [1, 1]} : vector<128x128xbf16> to vector<124x128xbf16>
    %36 = vector.extract_strided_slice %10 {offsets = [0, 0], sizes = [4, 128], strides = [1, 1]} : vector<128x128xbf16> to vector<4x128xbf16>
    %37 = tpu.concatenate %35, %36 in 0 : vector<124x128xbf16>, vector<4x128xbf16> -> vector<128x128xbf16>
    %c4 = arith.constant 4 : index
    %c0_19 = arith.constant 0 : index
    %c0_20 = arith.constant 0 : index
    %38 = vector.load %arg3[%c4, %c0_19, %c0_20] : memref<5x128x1024xbf16, #tpu.memory_space<vmem>>, vector<1x128x1024xbf16>
    %39 = vector.shape_cast %38 : vector<1x128x1024xbf16> to vector<128x1024xbf16>
    %cst_21 = arith.constant dense<0.000000e+00> : vector<128x1024xf32>
    %40 = tpu.matmul %37, %39, %cst_21 {dimension_numbers = #tpu.dot_dimension_numbers<[1], [0], [0], [1], [0, 0, 1, 1], [], []>} : vector<128x128xbf16>, vector<128x1024xbf16>, vector<128x1024xf32> -> vector<128x1024xf32>
    %41 = arith.addf %34, %40 : vector<128x1024xf32>
    %c0_22 = arith.constant 0 : index
    %c0_23 = arith.constant 0 : index
    %42 = vector.load %arg4[%c0_22, %c0_23] : memref<1x1024xf32, #tpu.memory_space<vmem>>, vector<1x1024xf32>
    %43 = vector.broadcast %42 : vector<1x1024xf32> to vector<128x1024xf32>
    %44 = arith.addf %41, %43 : vector<128x1024xf32>
    %cst_24 = arith.constant 0.000000e+00 : f32
    %45 = vector.broadcast %cst_24 : f32 to vector<128x1024xf32>
    %46 = arith.maximumf %44, %45 : vector<128x1024xf32>
    %47 = tpu.iota {dimensions = array<i32: 0>} : vector<128x1xi32>
    %c32_i32 = arith.constant 32 : i32
    %c0_i32 = arith.constant 0 : i32
    %48 = arith.cmpi eq, %c32_i32, %c0_i32 : i32
    %c1_i32 = arith.constant 1 : i32
    %49 = arith.select %48, %c1_i32, %c32_i32 : i32
    %50 = vector.broadcast %49 : i32 to vector<128x1xi32>
    %51 = arith.remsi %47, %50 : vector<128x1xi32>
    %c0_i32_25 = arith.constant 0 : i32
    %52 = vector.broadcast %c0_i32_25 : i32 to vector<128x1xi32>
    %53 = arith.cmpi ne, %51, %52 : vector<128x1xi32>
    %c0_i32_26 = arith.constant 0 : i32
    %54 = vector.broadcast %c0_i32_26 : i32 to vector<128x1xi32>
    %55 = arith.cmpi slt, %51, %54 : vector<128x1xi32>
    %c0_i32_27 = arith.constant 0 : i32
    %56 = arith.cmpi slt, %49, %c0_i32_27 : i32
    %57 = vector.broadcast %56 : i1 to vector<128x1xi1>
    %58 = vector.broadcast %57 : vector<128x1xi1> to vector<128x1xi1>
    %59 = arith.xori %55, %58 : vector<128x1xi1>
    %60 = arith.andi %59, %53 : vector<128x1xi1>
    %61 = vector.broadcast %49 : i32 to vector<128x1xi32>
    %62 = arith.addi %51, %61 : vector<128x1xi32>
    %63 = arith.select %60, %62, %51 : vector<128x1xi1>, vector<128x1xi32>
    %c20_i32 = arith.constant 20 : i32
    %64 = vector.broadcast %c20_i32 : i32 to vector<128x1xi32>
    %65 = arith.cmpi slt, %63, %64 : vector<128x1xi32>
    %c2_i32 = arith.constant 2 : i32
    %c0_i32_28 = arith.constant 0 : i32
    %66 = arith.cmpi eq, %c2_i32, %c0_i32_28 : i32
    %c1_i32_29 = arith.constant 1 : i32
    %67 = arith.select %66, %c1_i32_29, %c2_i32 : i32
    %68 = vector.broadcast %67 : i32 to vector<128x1xi32>
    %69 = arith.remsi %63, %68 : vector<128x1xi32>
    %c0_i32_30 = arith.constant 0 : i32
    %70 = vector.broadcast %c0_i32_30 : i32 to vector<128x1xi32>
    %71 = arith.cmpi ne, %69, %70 : vector<128x1xi32>
    %c0_i32_31 = arith.constant 0 : i32
    %72 = vector.broadcast %c0_i32_31 : i32 to vector<128x1xi32>
    %73 = arith.cmpi slt, %69, %72 : vector<128x1xi32>
    %c0_i32_32 = arith.constant 0 : i32
    %74 = arith.cmpi slt, %67, %c0_i32_32 : i32
    %75 = vector.broadcast %74 : i1 to vector<128x1xi1>
    %76 = vector.broadcast %75 : vector<128x1xi1> to vector<128x1xi1>
    %77 = arith.xori %73, %76 : vector<128x1xi1>
    %78 = arith.andi %77, %71 : vector<128x1xi1>
    %79 = vector.broadcast %67 : i32 to vector<128x1xi32>
    %80 = arith.addi %69, %79 : vector<128x1xi32>
    %81 = arith.select %78, %80, %69 : vector<128x1xi1>, vector<128x1xi32>
    %c0_i32_33 = arith.constant 0 : i32
    %82 = vector.broadcast %c0_i32_33 : i32 to vector<128x1xi32>
    %83 = arith.cmpi eq, %81, %82 : vector<128x1xi32>
    %84 = arith.andi %65, %83 : vector<128x1xi1>
    %cst_34 = arith.constant 0.000000e+00 : f32
    %85 = vector.shape_cast %84 : vector<128x1xi1> to vector<128x1xi1>
    %86 = vector.broadcast %85 : vector<128x1xi1> to vector<128x1024xi1>
    %87 = vector.broadcast %cst_34 : f32 to vector<128x1024xf32>
    %88 = arith.select %86, %46, %87 : vector<128x1024xi1>, vector<128x1024xf32>
    %89 = vector.shape_cast %88 : vector<128x1024xf32> to vector<4x32x1024xf32>
    %cst_35 = arith.constant dense<0xFF800000> : vector<4x1024xf32>
    %90 = vector.multi_reduction <maximumf>, %89, %cst_35 [1] : vector<4x32x1024xf32> to vector<4x1024xf32>
    %c0_36 = arith.constant 0 : index
    %c0_37 = arith.constant 0 : index
    %91 = vector.load %arg5[%c0_36, %c0_37] : memref<1024x128xbf16, #tpu.memory_space<vmem>>, vector<1024x128xbf16>
    %92 = arith.truncf %90 : vector<4x1024xf32> to vector<4x1024xbf16>
    %cst_38 = arith.constant dense<0.000000e+00> : vector<4x128xf32>
    %93 = tpu.matmul %92, %91, %cst_38 {dimension_numbers = #tpu.dot_dimension_numbers<[1], [0], [0], [1], [0, 0, 1, 1], [], []>} : vector<4x1024xbf16>, vector<1024x128xbf16>, vector<4x128xf32> -> vector<4x128xf32>
    %c0_39 = arith.constant 0 : index
    %c0_40 = arith.constant 0 : index
    %94 = vector.load %arg6[%c0_39, %c0_40] : memref<1x128xf32, #tpu.memory_space<vmem>>, vector<1x128xf32>
    %95 = vector.broadcast %94 : vector<1x128xf32> to vector<4x128xf32>
    %96 = arith.addf %93, %95 : vector<4x128xf32>
    %cst_41 = arith.constant 0.000000e+00 : f32
    %97 = vector.broadcast %cst_41 : f32 to vector<4x128xf32>
    %98 = arith.maximumf %96, %97 : vector<4x128xf32>
    %c0_42 = arith.constant 0 : index
    %c0_43 = arith.constant 0 : index
    %99 = vector.load %arg7[%c0_42, %c0_43] : memref<4x128xf32, #tpu.memory_space<vmem>>, vector<4x128xf32>
    %c0_44 = arith.constant 0 : index
    %c0_45 = arith.constant 0 : index
    %100 = vector.load %arg8[%c0_44, %c0_45] : memref<128x256xbf16, #tpu.memory_space<vmem>>, vector<128x256xbf16>
    %101 = arith.truncf %99 : vector<4x128xf32> to vector<4x128xbf16>
    %cst_46 = arith.constant dense<0.000000e+00> : vector<4x256xf32>
    %102 = tpu.matmul %101, %100, %cst_46 {dimension_numbers = #tpu.dot_dimension_numbers<[1], [0], [0], [1], [0, 0, 1, 1], [], []>} : vector<4x128xbf16>, vector<128x256xbf16>, vector<4x256xf32> -> vector<4x256xf32>
    %c0_47 = arith.constant 0 : index
    %c0_48 = arith.constant 0 : index
    %103 = vector.load %arg9[%c0_47, %c0_48] : memref<1x256xf32, #tpu.memory_space<vmem>>, vector<1x256xf32>
    %104 = vector.broadcast %103 : vector<1x256xf32> to vector<4x256xf32>
    %105 = arith.addf %102, %104 : vector<4x256xf32>
    %106 = arith.negf %105 : vector<4x256xf32>
    %107 = math.exp %106 : vector<4x256xf32>
    %cst_49 = arith.constant 1.000000e+00 : f32
    %108 = vector.broadcast %cst_49 : f32 to vector<4x256xf32>
    %109 = arith.addf %108, %107 : vector<4x256xf32>
    %110 = arith.divf %108, %109 : vector<4x256xf32>
    %cst_50 = arith.constant dense<0.000000e+00> : vector<256xf32>
    %111 = vector.multi_reduction <add>, %110, %cst_50 [0] : vector<4x256xf32> to vector<256xf32>
    %112 = vector.shape_cast %111 : vector<256xf32> to vector<1x256xf32>
    %cst_51 = arith.constant 4.000000e+00 : f32
    %113 = vector.broadcast %cst_51 : f32 to vector<1x256xf32>
    %114 = arith.divf %112, %113 : vector<1x256xf32>
    %115 = vector.broadcast %114 : vector<1x256xf32> to vector<4x256xf32>
    %116 = arith.subf %110, %115 : vector<4x256xf32>
    %117 = arith.mulf %116, %116 : vector<4x256xf32>
    %cst_52 = arith.constant dense<0.000000e+00> : vector<256xf32>
    %118 = vector.multi_reduction <add>, %117, %cst_52 [0] : vector<4x256xf32> to vector<256xf32>
    %119 = vector.shape_cast %118 : vector<256xf32> to vector<1x256xf32>
    %cst_53 = arith.constant 4.000000e+00 : f32
    %120 = vector.broadcast %cst_53 : f32 to vector<1x256xf32>
    %121 = arith.divf %119, %120 : vector<1x256xf32>
    %122 = vector.broadcast %114 : vector<1x256xf32> to vector<4x256xf32>
    %123 = arith.subf %110, %122 : vector<4x256xf32>
    %cst_54 = arith.constant 9.99999974E-6 : f32
    %124 = vector.broadcast %cst_54 : f32 to vector<1x256xf32>
    %125 = arith.addf %121, %124 : vector<1x256xf32>
    %126 = math.rsqrt %125 : vector<1x256xf32>
    %127 = vector.broadcast %126 : vector<1x256xf32> to vector<4x256xf32>
    %128 = arith.mulf %123, %127 : vector<4x256xf32>
    %c0_55 = arith.constant 0 : index
    %c0_56 = arith.constant 0 : index
    %129 = vector.load %arg10[%c0_55, %c0_56] : memref<256x128xbf16, #tpu.memory_space<vmem>>, vector<256x128xbf16>
    %130 = arith.truncf %128 : vector<4x256xf32> to vector<4x256xbf16>
    %cst_57 = arith.constant dense<0.000000e+00> : vector<4x128xf32>
    %131 = tpu.matmul %130, %129, %cst_57 {dimension_numbers = #tpu.dot_dimension_numbers<[1], [0], [0], [1], [0, 0, 1, 1], [], []>} : vector<4x256xbf16>, vector<256x128xbf16>, vector<4x128xf32> -> vector<4x128xf32>
    %c0_58 = arith.constant 0 : index
    %c0_59 = arith.constant 0 : index
    %132 = vector.load %arg11[%c0_58, %c0_59] : memref<1x128xf32, #tpu.memory_space<vmem>>, vector<1x128xf32>
    %133 = vector.broadcast %132 : vector<1x128xf32> to vector<4x128xf32>
    %134 = arith.addf %131, %133 : vector<4x128xf32>
    %cst_60 = arith.constant 0.000000e+00 : f32
    %135 = vector.broadcast %cst_60 : f32 to vector<4x128xf32>
    %136 = arith.maximumf %134, %135 : vector<4x128xf32>
    %c0_61 = arith.constant 0 : index
    %c0_62 = arith.constant 0 : index
    %137 = vector.load %arg12[%c0_61, %c0_62] : memref<4x128xf32, #tpu.memory_space<vmem>>, vector<4x128xf32>
    %c0_63 = arith.constant 0 : index
    %c0_64 = arith.constant 0 : index
    %138 = vector.load %arg13[%c0_63, %c0_64] : memref<128x256xbf16, #tpu.memory_space<vmem>>, vector<128x256xbf16>
    %139 = arith.truncf %137 : vector<4x128xf32> to vector<4x128xbf16>
    %cst_65 = arith.constant dense<0.000000e+00> : vector<4x256xf32>
    %140 = tpu.matmul %139, %138, %cst_65 {dimension_numbers = #tpu.dot_dimension_numbers<[1], [0], [0], [1], [0, 0, 1, 1], [], []>} : vector<4x128xbf16>, vector<128x256xbf16>, vector<4x256xf32> -> vector<4x256xf32>
    %c0_66 = arith.constant 0 : index
    %c0_67 = arith.constant 0 : index
    %141 = vector.load %arg14[%c0_66, %c0_67] : memref<1x256xf32, #tpu.memory_space<vmem>>, vector<1x256xf32>
    %142 = vector.broadcast %141 : vector<1x256xf32> to vector<4x256xf32>
    %143 = arith.addf %140, %142 : vector<4x256xf32>
    %144 = math.tanh %143 : vector<4x256xf32>
    %cst_68 = arith.constant dense<0.000000e+00> : vector<256xf32>
    %145 = vector.multi_reduction <add>, %144, %cst_68 [0] : vector<4x256xf32> to vector<256xf32>
    %146 = vector.shape_cast %145 : vector<256xf32> to vector<1x256xf32>
    %cst_69 = arith.constant 4.000000e+00 : f32
    %147 = vector.broadcast %cst_69 : f32 to vector<1x256xf32>
    %148 = arith.divf %146, %147 : vector<1x256xf32>
    %149 = vector.broadcast %148 : vector<1x256xf32> to vector<4x256xf32>
    %150 = arith.subf %144, %149 : vector<4x256xf32>
    %151 = arith.mulf %150, %150 : vector<4x256xf32>
    %cst_70 = arith.constant dense<0.000000e+00> : vector<256xf32>
    %152 = vector.multi_reduction <add>, %151, %cst_70 [0] : vector<4x256xf32> to vector<256xf32>
    %153 = vector.shape_cast %152 : vector<256xf32> to vector<1x256xf32>
    %cst_71 = arith.constant 4.000000e+00 : f32
    %154 = vector.broadcast %cst_71 : f32 to vector<1x256xf32>
    %155 = arith.divf %153, %154 : vector<1x256xf32>
    %156 = vector.broadcast %148 : vector<1x256xf32> to vector<4x256xf32>
    %157 = arith.subf %144, %156 : vector<4x256xf32>
    %cst_72 = arith.constant 9.99999974E-6 : f32
    %158 = vector.broadcast %cst_72 : f32 to vector<1x256xf32>
    %159 = arith.addf %155, %158 : vector<1x256xf32>
    %160 = math.rsqrt %159 : vector<1x256xf32>
    %161 = vector.broadcast %160 : vector<1x256xf32> to vector<4x256xf32>
    %162 = arith.mulf %157, %161 : vector<4x256xf32>
    %c0_73 = arith.constant 0 : index
    %c0_74 = arith.constant 0 : index
    %163 = vector.load %arg15[%c0_73, %c0_74] : memref<256x128xbf16, #tpu.memory_space<vmem>>, vector<256x128xbf16>
    %164 = arith.truncf %162 : vector<4x256xf32> to vector<4x256xbf16>
    %cst_75 = arith.constant dense<0.000000e+00> : vector<4x128xf32>
    %165 = tpu.matmul %164, %163, %cst_75 {dimension_numbers = #tpu.dot_dimension_numbers<[1], [0], [0], [1], [0, 0, 1, 1], [], []>} : vector<4x256xbf16>, vector<256x128xbf16>, vector<4x128xf32> -> vector<4x128xf32>
    %c0_76 = arith.constant 0 : index
    %c0_77 = arith.constant 0 : index
    %166 = vector.load %arg16[%c0_76, %c0_77] : memref<1x128xf32, #tpu.memory_space<vmem>>, vector<1x128xf32>
    %167 = vector.broadcast %166 : vector<1x128xf32> to vector<4x128xf32>
    %168 = arith.addf %165, %167 : vector<4x128xf32>
    %cst_78 = arith.constant 0.000000e+00 : f32
    %169 = vector.broadcast %cst_78 : f32 to vector<4x128xf32>
    %170 = arith.maximumf %168, %169 : vector<4x128xf32>
    %c0_79 = arith.constant 0 : index
    %c0_80 = arith.constant 0 : index
    %171 = vector.load %arg18[%c0_79, %c0_80] : memref<128x128xbf16, #tpu.memory_space<vmem>>, vector<128x128xbf16>
    %172 = arith.truncf %98 : vector<4x128xf32> to vector<4x128xbf16>
    %cst_81 = arith.constant dense<0.000000e+00> : vector<4x128xf32>
    %173 = tpu.matmul %172, %171, %cst_81 {dimension_numbers = #tpu.dot_dimension_numbers<[1], [0], [0], [1], [0, 0, 1, 1], [], []>} : vector<4x128xbf16>, vector<128x128xbf16>, vector<4x128xf32> -> vector<4x128xf32>
    %c0_82 = arith.constant 0 : index
    %c0_83 = arith.constant 0 : index
    %174 = vector.load %arg19[%c0_82, %c0_83] : memref<128x128xbf16, #tpu.memory_space<vmem>>, vector<128x128xbf16>
    %175 = arith.truncf %136 : vector<4x128xf32> to vector<4x128xbf16>
    %cst_84 = arith.constant dense<0.000000e+00> : vector<4x128xf32>
    %176 = tpu.matmul %175, %174, %cst_84 {dimension_numbers = #tpu.dot_dimension_numbers<[1], [0], [0], [1], [0, 0, 1, 1], [], []>} : vector<4x128xbf16>, vector<128x128xbf16>, vector<4x128xf32> -> vector<4x128xf32>
    %177 = arith.addf %173, %176 : vector<4x128xf32>
    %c0_85 = arith.constant 0 : index
    %c0_86 = arith.constant 0 : index
    %178 = vector.load %arg20[%c0_85, %c0_86] : memref<128x128xbf16, #tpu.memory_space<vmem>>, vector<128x128xbf16>
    %179 = arith.truncf %170 : vector<4x128xf32> to vector<4x128xbf16>
    %cst_87 = arith.constant dense<0.000000e+00> : vector<4x128xf32>
    %180 = tpu.matmul %179, %178, %cst_87 {dimension_numbers = #tpu.dot_dimension_numbers<[1], [0], [0], [1], [0, 0, 1, 1], [], []>} : vector<4x128xbf16>, vector<128x128xbf16>, vector<4x128xf32> -> vector<4x128xf32>
    %181 = arith.addf %177, %180 : vector<4x128xf32>
    %c0_88 = arith.constant 0 : index
    %c0_89 = arith.constant 0 : index
    %182 = vector.load %arg21[%c0_88, %c0_89] : memref<1x128xf32, #tpu.memory_space<vmem>>, vector<1x128xf32>
    %183 = vector.broadcast %182 : vector<1x128xf32> to vector<4x128xf32>
    %184 = arith.addf %181, %183 : vector<4x128xf32>
    %cst_90 = arith.constant 0.000000e+00 : f32
    %185 = vector.broadcast %cst_90 : f32 to vector<4x128xf32>
    %186 = arith.cmpf oge, %184, %185 : vector<4x128xf32>
    %cst_91 = arith.constant 0.00999999977 : f32
    %187 = vector.broadcast %cst_91 : f32 to vector<4x128xf32>
    %188 = arith.mulf %187, %184 : vector<4x128xf32>
    %189 = arith.select %186, %184, %188 : vector<4x128xi1>, vector<4x128xf32>
    %c0_92 = arith.constant 0 : index
    %c0_93 = arith.constant 0 : index
    %190 = vector.load %arg17[%c0_92, %c0_93] : memref<4x128xf32, #tpu.memory_space<vmem>>, vector<4x128xf32>
    %191 = tpu.concatenate %189, %190 in 0 : vector<4x128xf32>, vector<4x128xf32> -> vector<8x128xf32>
    %cst_94 = arith.constant dense<0.000000e+00> : vector<128xf32>
    %192 = vector.multi_reduction <add>, %191, %cst_94 [0] : vector<8x128xf32> to vector<128xf32>
    %193 = vector.shape_cast %192 : vector<128xf32> to vector<1x128xf32>
    %cst_95 = arith.constant 8.000000e+00 : f32
    %194 = vector.broadcast %cst_95 : f32 to vector<1x128xf32>
    %195 = arith.divf %193, %194 : vector<1x128xf32>
    %196 = vector.broadcast %195 : vector<1x128xf32> to vector<8x128xf32>
    %197 = arith.subf %191, %196 : vector<8x128xf32>
    %198 = arith.mulf %197, %197 : vector<8x128xf32>
    %cst_96 = arith.constant dense<0.000000e+00> : vector<128xf32>
    %199 = vector.multi_reduction <add>, %198, %cst_96 [0] : vector<8x128xf32> to vector<128xf32>
    %200 = vector.shape_cast %199 : vector<128xf32> to vector<1x128xf32>
    %cst_97 = arith.constant 8.000000e+00 : f32
    %201 = vector.broadcast %cst_97 : f32 to vector<1x128xf32>
    %202 = arith.divf %200, %201 : vector<1x128xf32>
    %203 = vector.broadcast %195 : vector<1x128xf32> to vector<8x128xf32>
    %204 = arith.subf %191, %203 : vector<8x128xf32>
    %cst_98 = arith.constant 9.99999974E-6 : f32
    %205 = vector.broadcast %cst_98 : f32 to vector<1x128xf32>
    %206 = arith.addf %202, %205 : vector<1x128xf32>
    %207 = math.rsqrt %206 : vector<1x128xf32>
    %208 = vector.broadcast %207 : vector<1x128xf32> to vector<8x128xf32>
    %209 = arith.mulf %204, %208 : vector<8x128xf32>
    %c0_99 = arith.constant 0 : index
    %c0_100 = arith.constant 0 : index
    %210 = vector.load %arg22[%c0_99, %c0_100] : memref<8x128xf32, #tpu.memory_space<vmem>>, vector<8x128xf32>
    tpu.vector_store %arg22[%c0_99, %c0_100], %209 {strides = array<i32>} : memref<8x128xf32, #tpu.memory_space<vmem>>, vector<8x128xf32>,
    return
  }
}

</mosaic_0001>

<llo_original>
// kernel: node_representation_forward.2
$region0: #{node_representation_forward.2}
  #allocation0 [shape = 'u32[]', space=smem, size = 0x4, offset = 0x4, fixed_abs, tag = 'smem constant byte address 0x4 - core index']
  #allocation1 [shape = 'u32[72,128]{1,0:T(1,128)}', space=vmem, size = 0x9000, scoped, tag = 'internal scratch']
  %s0 = inlined_call_operand.vmem [shape: bf16[32,32], index: 0, kind: input, shape index: {}]
  %s1 = inlined_call_operand.vmem [shape: f32[32,64], index: 1, kind: input, shape index: {}]
  %s2 = inlined_call_operand.vmem [shape: bf16[64,256], index: 2, kind: input, shape index: {}]
  %s3 = inlined_call_operand.vmem [shape: f32[1,256], index: 3, kind: input, shape index: {}]
  %s4 = inlined_call_operand.vmem [shape: bf16[256,256], index: 4, kind: input, shape index: {}]
  %s5 = inlined_call_operand.vmem [shape: f32[1,256], index: 5, kind: input, shape index: {}]
  %s6 = inlined_call_operand.vmem [shape: bf16[256,256], index: 6, kind: input, shape index: {}]
  %s7 = inlined_call_operand.vmem [shape: f32[1,256], index: 7, kind: input, shape index: {}]
  %s8 = inlined_call_operand.vmem [shape: bf16[256,128], index: 8, kind: input, shape index: {}]
  %s9 = inlined_call_operand.vmem [shape: f32[1,128], index: 9, kind: input, shape index: {}]
  %s10 = inlined_call_operand.vmem [shape: f32[4,128], index: 10, kind: output, shape index: {}]
  %s11 = sld [smem:[#allocation0]]
  $region50: #{node_representation_forward.2} parent=0
    _
  %s13 = ssub.s32 1, %s11
  %s14 = scalar_select 0, %s13, %s11
  // Predicated region
  $region2: #{node_representation_forward.2} parent=0 // pred_check
    _
  $region3: #{node_representation_forward.2} parent=0 // pred_check_branch
    %16 = sbr.rel (0) target = $region5
  $region4: #{node_representation_forward.2} parent=0 // pred_region
    _
  $region5: #{node_representation_forward.2} parent=0 // pred_fallthru
    _
  // Predicated region
  $region6: #{node_representation_forward.2} parent=0 // pred_check
    _
  $region7: #{node_representation_forward.2} parent=0 // pred_check_branch
    %18 = sbr.rel (0) target = $region9
  $region8: #{node_representation_forward.2} parent=0 // pred_region
    _
  $region9: #{node_representation_forward.2} parent=0 // pred_fallthru
    _
  // Predicated region
  $region10: #{node_representation_forward.2} parent=0 // pred_check
    _
  $region11: #{node_representation_forward.2} parent=0 // pred_check_branch
    %20 = sbr.rel (0) target = $region13
  $region12: #{node_representation_forward.2} parent=0 // pred_region
    _
  $region13: #{node_representation_forward.2} parent=0 // pred_fallthru
    _
  // Predicated region
  $region14: #{node_representation_forward.2} parent=0 // pred_check
    _
  $region15: #{node_representation_forward.2} parent=0 // pred_check_branch
    %22 = sbr.rel (0) target = $region17
  $region16: #{node_representation_forward.2} parent=0 // pred_region
    _
  $region17: #{node_representation_forward.2} parent=0 // pred_fallthru
    _
  // Predicated region
  $region18: #{node_representation_forward.2} parent=0 // pred_check
    _
  $region19: #{node_representation_forward.2} parent=0 // pred_check_branch
    %24 = sbr.rel (0) target = $region21
  $region20: #{node_representation_forward.2} parent=0 // pred_region
    _
  $region21: #{node_representation_forward.2} parent=0 // pred_fallthru
    _
  // Predicated region
  $region22: #{node_representation_forward.2} parent=0 // pred_check
    _
  $region23: #{node_representation_forward.2} parent=0 // pred_check_branch
    %26 = sbr.rel (0) target = $region25
  $region24: #{node_representation_forward.2} parent=0 // pred_region
    _
  $region25: #{node_representation_forward.2} parent=0 // pred_fallthru
    _
  // Predicated region
  $region26: #{node_representation_forward.2} parent=0 // pred_check
    _
  $region27: #{node_representation_forward.2} parent=0 // pred_check_branch
    %28 = sbr.rel (0) target = $region29
  $region28: #{node_representation_forward.2} parent=0 // pred_region
    _
  $region29: #{node_representation_forward.2} parent=0 // pred_fallthru
    _
  // Predicated region
  $region30: #{node_representation_forward.2} parent=0 // pred_check
    _
  $region31: #{node_representation_forward.2} parent=0 // pred_check_branch
    %30 = sbr.rel (0) target = $region33
  $region32: #{node_representation_forward.2} parent=0 // pred_region
    _
  $region33: #{node_representation_forward.2} parent=0 // pred_fallthru
    _
  // Predicated region
  $region34: #{node_representation_forward.2} parent=0 // pred_check
    _
  $region35: #{node_representation_forward.2} parent=0 // pred_check_branch
    %32 = sbr.rel (0) target = $region37
  $region36: #{node_representation_forward.2} parent=0 // pred_region
    _
  $region37: #{node_representation_forward.2} parent=0 // pred_fallthru
    _
  // Predicated region
  $region38: #{node_representation_forward.2} parent=0 // pred_check
    _
  $region39: #{node_representation_forward.2} parent=0 // pred_check_branch
    %34 = sbr.rel (0) target = $region41
  $region40: #{node_representation_forward.2} parent=0 // pred_region
    _
  $region41: #{node_representation_forward.2} parent=0 // pred_fallthru
    _
  %v36 = vld [vmem:[%s0] sm:$0xf]
  %v37 = vld [vmem:[%s0 + $0x4] sm:$0xf]
  %v38 = vld [vmem:[%s0 + $0x8] sm:$0xf]
  %v39 = vld [vmem:[%s0 + $0xc] sm:$0xf]
  %v40 = vld [vmem:[%s1] sm:$0xff]
  %v41 = vld [vmem:[%s1 + $0x8] sm:$0xff]
  %v42 = vld [vmem:[%s1 + $0x10] sm:$0xff]
  %v43 = vld [vmem:[%s1 + $0x18] sm:$0xff]
  %v44 = vpack.c.bf16 %v41, %v40
  %v45 = vpack.c.bf16 %v43, %v42
  %v50 = vunpack.c.l.b16 %v36
  %v51 = vunpack.c.l.b16 %v37
  %v52 = vunpack.c.l.b16 %v38
  %v53 = vunpack.c.l.b16 %v39
  %v54 = vpack.c.b16 %v51, %v50
  %v55 = vpack.c.b16 %v53, %v52
  %vm56 = vcmask 261120
  %v58 = vsel %vm56, %v54, 0
  %v61 = vsel %vm56, %v55, 0
  %63 = vmatpush.bf16.msra.mxu0 0
  %64 = vmatpush.bf16.msra.mxu0 0
  %65 = vmatpush.bf16.msra.mxu0 0
  %66 = vmatpush.bf16.msra.mxu0 0
  %67 = vmatpush.bf16.msra.mxu0 0
  %68 = vmatpush.bf16.msra.mxu0 0
  %69 = vmatpush.bf16.msra.mxu0 %v45
  %70 = vmatpush.bf16.msra.mxu0 %v44
  %71 = vmatmul.bf16.gmra.mxu0 %v58
  %v72 = vpop.f32.mrf.mxu0
  %v73 = vadd.f32 0.0, %v72
  %v74 = vpop.f32.mrf.mxu0
  %v75 = vadd.f32 0.0, %v74
  %76 = vmatmul.bf16.gmra.mxu0 %v61
  %v77 = vpop.f32.mrf.mxu0
  %v78 = vadd.f32 0.0, %v77
  %v79 = vpop.f32.mrf.mxu0
  %v80 = vadd.f32 0.0, %v79
  %81 = vdwg.mxu0
  %v82 = vld [vmem:[%s2] sm:$0xff]
  %v83 = vld [vmem:[%s2 + $0x8] sm:$0xff]
  %v84 = vld [vmem:[%s2 + $0x10] sm:$0xff]
  %v85 = vld [vmem:[%s2 + $0x18] sm:$0xff]
  %v86 = vld [vmem:[%s2 + $0x20] sm:$0xff]
  %v87 = vld [vmem:[%s2 + $0x28] sm:$0xff]
  %v88 = vld [vmem:[%s2 + $0x30] sm:$0xff]
  %v89 = vld [vmem:[%s2 + $0x38] sm:$0xff]
  %v90 = vpack.c.bf16 %v75, %v73
  %v91 = vpack.c.bf16 %v80, %v78
  %v92 = vld [vmem:[%s3] sm:$0x3]
  %v94 = vperm.slane %v92, 0
  %v95 = vperm.slane %v92, 1
  %v106 = vunpack.c.l.b16 %v82
  %v107 = vunpack.c.h.b16 %v82
  %v108 = vunpack.c.l.b16 %v83
  %v109 = vunpack.c.h.b16 %v83
  %v110 = vunpack.c.l.b16 %v84
  %v111 = vunpack.c.h.b16 %v84
  %v112 = vunpack.c.l.b16 %v85
  %v113 = vunpack.c.h.b16 %v85
  %v114 = vunpack.c.l.b16 %v86
  %v115 = vunpack.c.h.b16 %v86
  %v116 = vunpack.c.l.b16 %v87
  %v117 = vunpack.c.h.b16 %v87
  %v118 = vunpack.c.l.b16 %v88
  %v119 = vunpack.c.h.b16 %v88
  %v120 = vunpack.c.l.b16 %v89
  %v121 = vunpack.c.h.b16 %v89
  %v122 = vpack.c.b16 %v108, %v106
  %v123 = vpack.c.b16 %v109, %v107
  %v124 = vpack.c.b16 %v112, %v110
  %v125 = vpack.c.b16 %v113, %v111
  %v126 = vpack.c.b16 %v116, %v114
  %v127 = vpack.c.b16 %v117, %v115
  %v128 = vpack.c.b16 %v120, %v118
  %v129 = vpack.c.b16 %v121, %v119
  %vm138 = vcmask 523264
  %v140 = vsel %vm138, %v90, 0
  %v143 = vsel %vm138, %v91, 0
  %145 = vmatpush.bf16.msra.mxu0 0
  %146 = vmatpush.bf16.msra.mxu0 0
  %147 = vmatpush.bf16.msra.mxu0 0
  %148 = vmatpush.bf16.msra.mxu0 0
  %149 = vmatpush.bf16.msra.mxu0 %v128
  %150 = vmatpush.bf16.msra.mxu0 %v126
  %151 = vmatpush.bf16.msra.mxu0 %v124
  %152 = vmatpush.bf16.msra.mxu0 %v122
  %153 = vmatmul.bf16.gmra.mxu0 %v140
  %v154 = vpop.f32.mrf.mxu0
  %v155 = vadd.f32 %v94, %v154
  %v156 = vpop.f32.mrf.mxu0
  %v157 = vadd.f32 %v94, %v156
  %158 = vmatmul.bf16.gmra.mxu0 %v143
  %v159 = vpop.f32.mrf.mxu0
  %v160 = vadd.f32 %v94, %v159
  %v161 = vpop.f32.mrf.mxu0
  %v162 = vadd.f32 %v94, %v161
  %163 = vdwg.mxu0
  %164 = vmatpush.bf16.msra.mxu0 0
  %165 = vmatpush.bf16.msra.mxu0 0
  %166 = vmatpush.bf16.msra.mxu0 0
  %167 = vmatpush.bf16.msra.mxu0 0
  %168 = vmatpush.bf16.msra.mxu0 %v129
  %169 = vmatpush.bf16.msra.mxu0 %v127
  %170 = vmatpush.bf16.msra.mxu0 %v125
  %171 = vmatpush.bf16.msra.mxu0 %v123
  %172 = vmatmul.bf16.gmra.mxu0 %v140
  %v173 = vpop.f32.mrf.mxu0
  %v174 = vadd.f32 %v95, %v173
  %v175 = vpop.f32.mrf.mxu0
  %v176 = vadd.f32 %v95, %v175
  %177 = vmatmul.bf16.gmra.mxu0 %v143
  %v178 = vpop.f32.mrf.mxu0
  %v179 = vadd.f32 %v95, %v178
  %v180 = vpop.f32.mrf.mxu0
  %v181 = vadd.f32 %v95, %v180
  %182 = vdwg.mxu0
  %v183 = vmax.f32 %v155, 0.0
  %v184 = vmax.f32 %v174, 0.0
  %v185 = vmax.f32 %v157, 0.0
  %v186 = vmax.f32 %v176, 0.0
  %v187 = vmax.f32 %v160, 0.0
  %v188 = vmax.f32 %v179, 0.0
  %v189 = vmax.f32 %v162, 0.0
  %v190 = vmax.f32 %v181, 0.0
  %v191 = vadd.f32 %v183, %v185
  %v192 = vadd.f32 %v191, %v187
  %v193 = vadd.f32 %v192, %v189
  %v194 = vrot.slane %v193, 4
  %v195 = vadd.f32 %v193, %v194
  %v196 = vrot.slane %v195, 2
  %v197 = vadd.f32 %v195, %v196
  %v198 = vrot.slane %v197, 1
  %v199 = vadd.f32 %v197, %v198
  %v200 = vadd.f32 %v184, %v186
  %v201 = vadd.f32 %v200, %v188
  %v202 = vadd.f32 %v201, %v190
  %v203 = vrot.slane %v202, 4
  %v204 = vadd.f32 %v202, %v203
  %v205 = vrot.slane %v204, 2
  %v206 = vadd.f32 %v204, %v205
  %v207 = vrot.slane %v206, 1
  %v208 = vadd.f32 %v206, %v207
  %v209 = vrcp.pop 32.0
  %v210 = vmul.f32 32.0, %v209
  %v211 = vsub.f32 1.0, %v210
  %v212 = vmul.f32 %v209, %v211
  %v213 = vadd.f32 %v209, %v212
  %vm214 = vweird.f32 %v209
  %v215 = vsel %vm214, %v209, %v213
  %v216 = vmul.f32 %v199, %v215
  %v217 = vmul.f32 %v208, %v215
  %v218 = vsub.f32 %v183, %v216
  %v219 = vsub.f32 %v184, %v217
  %v220 = vsub.f32 %v185, %v216
  %v221 = vsub.f32 %v186, %v217
  %v222 = vsub.f32 %v187, %v216
  %v223 = vsub.f32 %v188, %v217
  %v224 = vsub.f32 %v189, %v216
  %v225 = vsub.f32 %v190, %v217
  %v226 = vmul.f32 %v218, %v218
  %v227 = vmul.f32 %v219, %v219
  %v228 = vmul.f32 %v220, %v220
  %v229 = vmul.f32 %v221, %v221
  %v230 = vmul.f32 %v222, %v222
  %v231 = vmul.f32 %v223, %v223
  %v232 = vmul.f32 %v224, %v224
  %v233 = vmul.f32 %v225, %v225
  %v234 = vadd.f32 %v226, %v228
  %v235 = vadd.f32 %v234, %v230
  %v236 = vadd.f32 %v235, %v232
  %v237 = vrot.slane %v236, 4
  %v238 = vadd.f32 %v236, %v237
  %v239 = vrot.slane %v238, 2
  %v240 = vadd.f32 %v238, %v239
  %v241 = vrot.slane %v240, 1
  %v242 = vadd.f32 %v240, %v241
  %v243 = vadd.f32 %v227, %v229
  %v244 = vadd.f32 %v243, %v231
  %v245 = vadd.f32 %v244, %v233
  %v246 = vrot.slane %v245, 4
  %v247 = vadd.f32 %v245, %v246
  %v248 = vrot.slane %v247, 2
  %v249 = vadd.f32 %v247, %v248
  %v250 = vrot.slane %v249, 1
  %v251 = vadd.f32 %v249, %v250
  %v252 = vmul.f32 %v242, %v215
  %v253 = vmul.f32 %v251, %v215
  %v254 = vadd.f32 %v252, 1e-05
  %v255 = vadd.f32 %v253, 1e-05
  %v256 = vrsqrt.pop %v254
  %v257 = vmul.f32 %v256, %v254
  %v258 = vmul.f32 %v257, %v256
  %v259 = vmul.f32 0.5, %v258
  %v260 = vsub.f32 1.5, %v259
  %v261 = vmul.f32 %v256, %v260
  %vm262 = vweird.f32 %v254
  %vm263 = vweird.f32 %v256
  %vm264 = vmor %vm262, %vm263
  %v265 = vsel %vm264, %v256, %v261
  %v266 = vrsqrt.pop %v255
  %v267 = vmul.f32 %v266, %v255
  %v268 = vmul.f32 %v267, %v266
  %v269 = vmul.f32 0.5, %v268
  %v270 = vsub.f32 1.5, %v269
  %v271 = vmul.f32 %v266, %v270
  %vm272 = vweird.f32 %v255
  %vm273 = vweird.f32 %v266
  %vm274 = vmor %vm272, %vm273
  %v275 = vsel %vm274, %v266, %v271
  %v276 = vmul.f32 %v218, %v265
  %v277 = vmul.f32 %v219, %v275
  %v278 = vmul.f32 %v220, %v265
  %v279 = vmul.f32 %v221, %v275
  %v280 = vmul.f32 %v222, %v265
  %v281 = vmul.f32 %v223, %v275
  %v282 = vmul.f32 %v224, %v265
  %v283 = vmul.f32 %v225, %v275
  %v284 = vpack.c.bf16 %v278, %v276
  %v285 = vpack.c.bf16 %v279, %v277
  %v286 = vpack.c.bf16 %v282, %v280
  %v287 = vpack.c.bf16 %v283, %v281
  %288 = vmatpush.bf16.msra.mxu0 0
  %289 = vmatpush.bf16.msra.mxu0 0
  %290 = vmatpush.bf16.msra.mxu0 0
  %291 = vmatpush.bf16.msra.mxu0 0
  %292 = vmatpush.bf16.msra.mxu0 0
  %293 = vmatpush.bf16.msra.mxu0 0
  %294 = vmatpush.bf16.msra.mxu0 %v286
  %295 = vmatpush.bf16.msra.mxu0 %v284
  %296 = vmatmul.bf16.gmra.mxu0 %v58
  %v297 = vpop.f32.mrf.mxu0
  %v298 = vadd.f32 0.0, %v297
  %v299 = vpop.f32.mrf.mxu0
  %v300 = vadd.f32 0.0, %v299
  %301 = vmatmul.bf16.gmra.mxu0 %v61
  %v302 = vpop.f32.mrf.mxu0
  %v303 = vadd.f32 0.0, %v302
  %v304 = vpop.f32.mrf.mxu0
  %v305 = vadd.f32 0.0, %v304
  %306 = vdwg.mxu0
  %307 = vmatpush.bf16.msra.mxu0 0
  %308 = vmatpush.bf16.msra.mxu0 0
  %309 = vmatpush.bf16.msra.mxu0 0
  %310 = vmatpush.bf16.msra.mxu0 0
  %311 = vmatpush.bf16.msra.mxu0 0
  %312 = vmatpush.bf16.msra.mxu0 0
  %313 = vmatpush.bf16.msra.mxu0 %v287
  %314 = vmatpush.bf16.msra.mxu0 %v285
  %315 = vmatmul.bf16.gmra.mxu0 %v58
  %v316 = vpop.f32.mrf.mxu0
  %v317 = vadd.f32 0.0, %v316
  %v318 = vpop.f32.mrf.mxu0
  %v319 = vadd.f32 0.0, %v318
  %320 = vmatmul.bf16.gmra.mxu0 %v61
  %v321 = vpop.f32.mrf.mxu0
  %v322 = vadd.f32 0.0, %v321
  %v323 = vpop.f32.mrf.mxu0
  %v324 = vadd.f32 0.0, %v323
  %325 = vdwg.mxu0
  %v326 = vld [vmem:[%s4] sm:$0xff]
  %v327 = vld [vmem:[%s4 + $0x8] sm:$0xff]
  %v328 = vld [vmem:[%s4 + $0x10] sm:$0xff]
  %v329 = vld [vmem:[%s4 + $0x18] sm:$0xff]
  %v330 = vld [vmem:[%s4 + $0x20] sm:$0xff]
  %v331 = vld [vmem:[%s4 + $0x28] sm:$0xff]
  %v332 = vld [vmem:[%s4 + $0x30] sm:$0xff]
  %v333 = vld [vmem:[%s4 + $0x38] sm:$0xff]
  %v334 = vld [vmem:[%s4 + $0x40] sm:$0xff]
  %v335 = vld [vmem:[%s4 + $0x48] sm:$0xff]
  %v336 = vld [vmem:[%s4 + $0x50] sm:$0xff]
  %v337 = vld [vmem:[%s4 + $0x58] sm:$0xff]
  %v338 = vld [vmem:[%s4 + $0x60] sm:$0xff]
  %v339 = vld [vmem:[%s4 + $0x68] sm:$0xff]
  %v340 = vld [vmem:[%s4 + $0x70] sm:$0xff]
  %v341 = vld [vmem:[%s4 + $0x78] sm:$0xff]
  %v342 = vld [vmem:[%s4 + $0x80] sm:$0xff]
  %v343 = vld [vmem:[%s4 + $0x88] sm:$0xff]
  %v344 = vld [vmem:[%s4 + $0x90] sm:$0xff]
  %v345 = vld [vmem:[%s4 + $0x98] sm:$0xff]
  %v346 = vld [vmem:[%s4 + $0xa0] sm:$0xff]
  %v347 = vld [vmem:[%s4 + $0xa8] sm:$0xff]
  %v348 = vld [vmem:[%s4 + $0xb0] sm:$0xff]
  %v349 = vld [vmem:[%s4 + $0xb8] sm:$0xff]
  %v350 = vld [vmem:[%s4 + $0xc0] sm:$0xff]
  %v351 = vld [vmem:[%s4 + $0xc8] sm:$0xff]
  %v352 = vld [vmem:[%s4 + $0xd0] sm:$0xff]
  %v353 = vld [vmem:[%s4 + $0xd8] sm:$0xff]
  %v354 = vld [vmem:[%s4 + $0xe0] sm:$0xff]
  %v355 = vld [vmem:[%s4 + $0xe8] sm:$0xff]
  %v356 = vld [vmem:[%s4 + $0xf0] sm:$0xff]
  %v357 = vld [vmem:[%s4 + $0xf8] sm:$0xff]
  %v358 = vpack.c.bf16 %v300, %v298
  %v359 = vpack.c.bf16 %v319, %v317
  %v360 = vpack.c.bf16 %v305, %v303
  %v361 = vpack.c.bf16 %v324, %v322
  %v362 = vld [vmem:[%s5] sm:$0x3]
  %v364 = vperm.slane %v362, 0
  %v365 = vperm.slane %v362, 1
  %v400 = vunpack.c.l.b16 %v326
  %v401 = vunpack.c.h.b16 %v326
  %v402 = vunpack.c.l.b16 %v327
  %v403 = vunpack.c.h.b16 %v327
  %v404 = vunpack.c.l.b16 %v328
  %v405 = vunpack.c.h.b16 %v328
  %v406 = vunpack.c.l.b16 %v329
  %v407 = vunpack.c.h.b16 %v329
  %v408 = vunpack.c.l.b16 %v330
  %v409 = vunpack.c.h.b16 %v330
  %v410 = vunpack.c.l.b16 %v331
  %v411 = vunpack.c.h.b16 %v331
  %v412 = vunpack.c.l.b16 %v332
  %v413 = vunpack.c.h.b16 %v332
  %v414 = vunpack.c.l.b16 %v333
  %v415 = vunpack.c.h.b16 %v333
  %v416 = vunpack.c.l.b16 %v334
  %v417 = vunpack.c.h.b16 %v334
  %v418 = vunpack.c.l.b16 %v335
  %v419 = vunpack.c.h.b16 %v335
  %v420 = vunpack.c.l.b16 %v336
  %v421 = vunpack.c.h.b16 %v336
  %v422 = vunpack.c.l.b16 %v337
  %v423 = vunpack.c.h.b16 %v337
  %v424 = vunpack.c.l.b16 %v338
  %v425 = vunpack.c.h.b16 %v338
  %v426 = vunpack.c.l.b16 %v339
  %v427 = vunpack.c.h.b16 %v339
  %v428 = vunpack.c.l.b16 %v340
  %v429 = vunpack.c.h.b16 %v340
  %v430 = vunpack.c.l.b16 %v341
  %v431 = vunpack.c.h.b16 %v341
  %v432 = vunpack.c.l.b16 %v342
  %v433 = vunpack.c.h.b16 %v342
  %v434 = vunpack.c.l.b16 %v343
  %v435 = vunpack.c.h.b16 %v343
  %v436 = vunpack.c.l.b16 %v344
  %v437 = vunpack.c.h.b16 %v344
  %v438 = vunpack.c.l.b16 %v345
  %v439 = vunpack.c.h.b16 %v345
  %v440 = vunpack.c.l.b16 %v346
  %v441 = vunpack.c.h.b16 %v346
  %v442 = vunpack.c.l.b16 %v347
  %v443 = vunpack.c.h.b16 %v347
  %v444 = vunpack.c.l.b16 %v348
  %v445 = vunpack.c.h.b16 %v348
  %v446 = vunpack.c.l.b16 %v349
  %v447 = vunpack.c.h.b16 %v349
  %v448 = vunpack.c.l.b16 %v350
  %v449 = vunpack.c.h.b16 %v350
  %v450 = vunpack.c.l.b16 %v351
  %v451 = vunpack.c.h.b16 %v351
  %v452 = vunpack.c.l.b16 %v352
  %v453 = vunpack.c.h.b16 %v352
  %v454 = vunpack.c.l.b16 %v353
  %v455 = vunpack.c.h.b16 %v353
  %v456 = vunpack.c.l.b16 %v354
  %v457 = vunpack.c.h.b16 %v354
  %v458 = vunpack.c.l.b16 %v355
  %v459 = vunpack.c.h.b16 %v355
  %v460 = vunpack.c.l.b16 %v356
  %v461 = vunpack.c.h.b16 %v356
  %v462 = vunpack.c.l.b16 %v357
  %v463 = vunpack.c.h.b16 %v357
  %v464 = vpack.c.b16 %v402, %v400
  %v465 = vpack.c.b16 %v403, %v401
  %v466 = vpack.c.b16 %v406, %v404
  %v467 = vpack.c.b16 %v407, %v405
  %v468 = vpack.c.b16 %v410, %v408
  %v469 = vpack.c.b16 %v411, %v409
  %v470 = vpack.c.b16 %v414, %v412
  %v471 = vpack.c.b16 %v415, %v413
  %v472 = vpack.c.b16 %v418, %v416
  %v473 = vpack.c.b16 %v419, %v417
  %v474 = vpack.c.b16 %v422, %v420
  %v475 = vpack.c.b16 %v423, %v421
  %v476 = vpack.c.b16 %v426, %v424
  %v477 = vpack.c.b16 %v427, %v425
  %v478 = vpack.c.b16 %v430, %v428
  %v479 = vpack.c.b16 %v431, %v429
  %v480 = vpack.c.b16 %v434, %v432
  %v481 = vpack.c.b16 %v435, %v433
  %v482 = vpack.c.b16 %v438, %v436
  %v483 = vpack.c.b16 %v439, %v437
  %v484 = vpack.c.b16 %v442, %v440
  %v485 = vpack.c.b16 %v443, %v441
  %v486 = vpack.c.b16 %v446, %v444
  %v487 = vpack.c.b16 %v447, %v445
  %v488 = vpack.c.b16 %v450, %v448
  %v489 = vpack.c.b16 %v451, %v449
  %v490 = vpack.c.b16 %v454, %v452
  %v491 = vpack.c.b16 %v455, %v453
  %v492 = vpack.c.b16 %v458, %v456
  %v493 = vpack.c.b16 %v459, %v457
  %v494 = vpack.c.b16 %v462, %v460
  %v495 = vpack.c.b16 %v463, %v461
  %528 = vmatpush.bf16.msra.mxu0 %v478
  %529 = vmatpush.bf16.msra.mxu0 %v476
  %530 = vmatpush.bf16.msra.mxu0 %v474
  %531 = vmatpush.bf16.msra.mxu0 %v472
  %532 = vmatpush.bf16.msra.mxu0 %v470
  %533 = vmatpush.bf16.msra.mxu0 %v468
  %534 = vmatpush.bf16.msra.mxu0 %v466
  %535 = vmatpush.bf16.msra.mxu0 %v464
  %536 = vmatmul.bf16.gmra.mxu0 %v358
  %v537 = vpop.f32.mrf.mxu0
  %v538 = vadd.f32 %v364, %v537
  %v539 = vpop.f32.mrf.mxu0
  %v540 = vadd.f32 %v364, %v539
  %541 = vmatmul.bf16.gmra.mxu0 %v360
  %v542 = vpop.f32.mrf.mxu0
  %v543 = vadd.f32 %v364, %v542
  %v544 = vpop.f32.mrf.mxu0
  %v545 = vadd.f32 %v364, %v544
  %546 = vdwg.mxu0
  %547 = vmatpush.bf16.msra.mxu0 %v494
  %548 = vmatpush.bf16.msra.mxu0 %v492
  %549 = vmatpush.bf16.msra.mxu0 %v490
  %550 = vmatpush.bf16.msra.mxu0 %v488
  %551 = vmatpush.bf16.msra.mxu0 %v486
  %552 = vmatpush.bf16.msra.mxu0 %v484
  %553 = vmatpush.bf16.msra.mxu0 %v482
  %554 = vmatpush.bf16.msra.mxu0 %v480
  %555 = vmatmul.bf16.gmra.mxu0 %v359
  %v556 = vpop.f32.mrf.mxu0
  %v557 = vadd.f32 %v538, %v556
  %v558 = vpop.f32.mrf.mxu0
  %v559 = vadd.f32 %v540, %v558
  %560 = vmatmul.bf16.gmra.mxu0 %v361
  %v561 = vpop.f32.mrf.mxu0
  %v562 = vadd.f32 %v543, %v561
  %v563 = vpop.f32.mrf.mxu0
  %v564 = vadd.f32 %v545, %v563
  %565 = vdwg.mxu0
  %566 = vmatpush.bf16.msra.mxu0 %v479
  %567 = vmatpush.bf16.msra.mxu0 %v477
  %568 = vmatpush.bf16.msra.mxu0 %v475
  %569 = vmatpush.bf16.msra.mxu0 %v473
  %570 = vmatpush.bf16.msra.mxu0 %v471
  %571 = vmatpush.bf16.msra.mxu0 %v469
  %572 = vmatpush.bf16.msra.mxu0 %v467
  %573 = vmatpush.bf16.msra.mxu0 %v465
  %574 = vmatmul.bf16.gmra.mxu0 %v358
  %v575 = vpop.f32.mrf.mxu0
  %v576 = vadd.f32 %v365, %v575
  %v577 = vpop.f32.mrf.mxu0
  %v578 = vadd.f32 %v365, %v577
  %579 = vmatmul.bf16.gmra.mxu0 %v360
  %v580 = vpop.f32.mrf.mxu0
  %v581 = vadd.f32 %v365, %v580
  %v582 = vpop.f32.mrf.mxu0
  %v583 = vadd.f32 %v365, %v582
  %584 = vdwg.mxu0
  %585 = vmatpush.bf16.msra.mxu0 %v495
  %586 = vmatpush.bf16.msra.mxu0 %v493
  %587 = vmatpush.bf16.msra.mxu0 %v491
  %588 = vmatpush.bf16.msra.mxu0 %v489
  %589 = vmatpush.bf16.msra.mxu0 %v487
  %590 = vmatpush.bf16.msra.mxu0 %v485
  %591 = vmatpush.bf16.msra.mxu0 %v483
  %592 = vmatpush.bf16.msra.mxu0 %v481
  %593 = vmatmul.bf16.gmra.mxu0 %v359
  %v594 = vpop.f32.mrf.mxu0
  %v595 = vadd.f32 %v576, %v594
  %v596 = vpop.f32.mrf.mxu0
  %v597 = vadd.f32 %v578, %v596
  %598 = vmatmul.bf16.gmra.mxu0 %v361
  %v599 = vpop.f32.mrf.mxu0
  %v600 = vadd.f32 %v581, %v599
  %v601 = vpop.f32.mrf.mxu0
  %v602 = vadd.f32 %v583, %v601
  %603 = vdwg.mxu0
  %v604 = vmax.f32 %v557, 0.0
  %v605 = vmax.f32 %v595, 0.0
  %v606 = vmax.f32 %v559, 0.0
  %v607 = vmax.f32 %v597, 0.0
  %v608 = vmax.f32 %v562, 0.0
  %v609 = vmax.f32 %v600, 0.0
  %v610 = vmax.f32 %v564, 0.0
  %v611 = vmax.f32 %v602, 0.0
  %v612 = vadd.f32 %v604, %v606
  %v613 = vadd.f32 %v612, %v608
  %v614 = vadd.f32 %v613, %v610
  %v615 = vrot.slane %v614, 4
  %v616 = vadd.f32 %v614, %v615
  %v617 = vrot.slane %v616, 2
  %v618 = vadd.f32 %v616, %v617
  %v619 = vrot.slane %v618, 1
  %v620 = vadd.f32 %v618, %v619
  %v621 = vadd.f32 %v605, %v607
  %v622 = vadd.f32 %v621, %v609
  %v623 = vadd.f32 %v622, %v611
  %v624 = vrot.slane %v623, 4
  %v625 = vadd.f32 %v623, %v624
  %v626 = vrot.slane %v625, 2
  %v627 = vadd.f32 %v625, %v626
  %v628 = vrot.slane %v627, 1
  %v629 = vadd.f32 %v627, %v628
  %v630 = vmul.f32 %v620, %v215
  %v631 = vmul.f32 %v629, %v215
  %v632 = vsub.f32 %v604, %v630
  %v633 = vsub.f32 %v605, %v631
  %v634 = vsub.f32 %v606, %v630
  %v635 = vsub.f32 %v607, %v631
  %v636 = vsub.f32 %v608, %v630
  %v637 = vsub.f32 %v609, %v631
  %v638 = vsub.f32 %v610, %v630
  %v639 = vsub.f32 %v611, %v631
  %v640 = vmul.f32 %v632, %v632
  %v641 = vmul.f32 %v633, %v633
  %v642 = vmul.f32 %v634, %v634
  %v643 = vmul.f32 %v635, %v635
  %v644 = vmul.f32 %v636, %v636
  %v645 = vmul.f32 %v637, %v637
  %v646 = vmul.f32 %v638, %v638
  %v647 = vmul.f32 %v639, %v639
  %v648 = vadd.f32 %v640, %v642
  %v649 = vadd.f32 %v648, %v644
  %v650 = vadd.f32 %v649, %v646
  %v651 = vrot.slane %v650, 4
  %v652 = vadd.f32 %v650, %v651
  %v653 = vrot.slane %v652, 2
  %v654 = vadd.f32 %v652, %v653
  %v655 = vrot.slane %v654, 1
  %v656 = vadd.f32 %v654, %v655
  %v657 = vadd.f32 %v641, %v643
  %v658 = vadd.f32 %v657, %v645
  %v659 = vadd.f32 %v658, %v647
  %v660 = vrot.slane %v659, 4
  %v661 = vadd.f32 %v659, %v660
  %v662 = vrot.slane %v661, 2
  %v663 = vadd.f32 %v661, %v662
  %v664 = vrot.slane %v663, 1
  %v665 = vadd.f32 %v663, %v664
  %v666 = vmul.f32 %v656, %v215
  %v667 = vmul.f32 %v665, %v215
  %v668 = vadd.f32 %v666, 1e-05
  %v669 = vadd.f32 %v667, 1e-05
  %v670 = vrsqrt.pop %v668
  %v671 = vmul.f32 %v670, %v668
  %v672 = vmul.f32 %v671, %v670
  %v673 = vmul.f32 0.5, %v672
  %v674 = vsub.f32 1.5, %v673
  %v675 = vmul.f32 %v670, %v674
  %vm676 = vweird.f32 %v668
  %vm677 = vweird.f32 %v670
  %vm678 = vmor %vm676, %vm677
  %v679 = vsel %vm678, %v670, %v675
  %v680 = vrsqrt.pop %v669
  %v681 = vmul.f32 %v680, %v669
  %v682 = vmul.f32 %v681, %v680
  %v683 = vmul.f32 0.5, %v682
  %v684 = vsub.f32 1.5, %v683
  %v685 = vmul.f32 %v680, %v684
  %vm686 = vweird.f32 %v669
  %vm687 = vweird.f32 %v680
  %vm688 = vmor %vm686, %vm687
  %v689 = vsel %vm688, %v680, %v685
  %v690 = vmul.f32 %v632, %v679
  %v691 = vmul.f32 %v633, %v689
  %v692 = vmul.f32 %v634, %v679
  %v693 = vmul.f32 %v635, %v689
  %v694 = vmul.f32 %v636, %v679
  %v695 = vmul.f32 %v637, %v689
  %v696 = vmul.f32 %v638, %v679
  %v697 = vmul.f32 %v639, %v689
  %v698 = vpack.c.bf16 %v692, %v690
  %v699 = vpack.c.bf16 %v693, %v691
  %v700 = vpack.c.bf16 %v696, %v694
  %v701 = vpack.c.bf16 %v697, %v695
  %702 = vmatpush.bf16.msra.mxu0 0
  %703 = vmatpush.bf16.msra.mxu0 0
  %704 = vmatpush.bf16.msra.mxu0 0
  %705 = vmatpush.bf16.msra.mxu0 0
  %706 = vmatpush.bf16.msra.mxu0 0
  %707 = vmatpush.bf16.msra.mxu0 0
  %708 = vmatpush.bf16.msra.mxu0 %v700
  %709 = vmatpush.bf16.msra.mxu0 %v698
  %710 = vmatmul.bf16.gmra.mxu0 %v58
  %v711 = vpop.f32.mrf.mxu0
  %v712 = vadd.f32 0.0, %v711
  %v713 = vpop.f32.mrf.mxu0
  %v714 = vadd.f32 0.0, %v713
  %715 = vmatmul.bf16.gmra.mxu0 %v61
  %v716 = vpop.f32.mrf.mxu0
  %v717 = vadd.f32 0.0, %v716
  %v718 = vpop.f32.mrf.mxu0
  %v719 = vadd.f32 0.0, %v718
  %720 = vdwg.mxu0
  %721 = vmatpush.bf16.msra.mxu0 0
  %722 = vmatpush.bf16.msra.mxu0 0
  %723 = vmatpush.bf16.msra.mxu0 0
  %724 = vmatpush.bf16.msra.mxu0 0
  %725 = vmatpush.bf16.msra.mxu0 0
  %726 = vmatpush.bf16.msra.mxu0 0
  %727 = vmatpush.bf16.msra.mxu0 %v701
  %728 = vmatpush.bf16.msra.mxu0 %v699
  %729 = vmatmul.bf16.gmra.mxu0 %v58
  %v730 = vpop.f32.mrf.mxu0
  %v731 = vadd.f32 0.0, %v730
  %v732 = vpop.f32.mrf.mxu0
  %v733 = vadd.f32 0.0, %v732
  %734 = vmatmul.bf16.gmra.mxu0 %v61
  %v735 = vpop.f32.mrf.mxu0
  %v736 = vadd.f32 0.0, %v735
  %v737 = vpop.f32.mrf.mxu0
  %v738 = vadd.f32 0.0, %v737
  %739 = vdwg.mxu0
  %v740 = vld [vmem:[%s6] sm:$0xff]
  %v741 = vld [vmem:[%s6 + $0x8] sm:$0xff]
  %v742 = vld [vmem:[%s6 + $0x10] sm:$0xff]
  %v743 = vld [vmem:[%s6 + $0x18] sm:$0xff]
  %v744 = vld [vmem:[%s6 + $0x20] sm:$0xff]
  %v745 = vld [vmem:[%s6 + $0x28] sm:$0xff]
  %v746 = vld [vmem:[%s6 + $0x30] sm:$0xff]
  %v747 = vld [vmem:[%s6 + $0x38] sm:$0xff]
  %v748 = vld [vmem:[%s6 + $0x40] sm:$0xff]
  %v749 = vld [vmem:[%s6 + $0x48] sm:$0xff]
  %v750 = vld [vmem:[%s6 + $0x50] sm:$0xff]
  %v751 = vld [vmem:[%s6 + $0x58] sm:$0xff]
  %v752 = vld [vmem:[%s6 + $0x60] sm:$0xff]
  %v753 = vld [vmem:[%s6 + $0x68] sm:$0xff]
  %v754 = vld [vmem:[%s6 + $0x70] sm:$0xff]
  %v755 = vld [vmem:[%s6 + $0x78] sm:$0xff]
  %v756 = vld [vmem:[%s6 + $0x80] sm:$0xff]
  %v757 = vld [vmem:[%s6 + $0x88] sm:$0xff]
  %v758 = vld [vmem:[%s6 + $0x90] sm:$0xff]
  %v759 = vld [vmem:[%s6 + $0x98] sm:$0xff]
  %v760 = vld [vmem:[%s6 + $0xa0] sm:$0xff]
  %v761 = vld [vmem:[%s6 + $0xa8] sm:$0xff]
  %v762 = vld [vmem:[%s6 + $0xb0] sm:$0xff]
  %v763 = vld [vmem:[%s6 + $0xb8] sm:$0xff]
  %v764 = vld [vmem:[%s6 + $0xc0] sm:$0xff]
  %v765 = vld [vmem:[%s6 + $0xc8] sm:$0xff]
  %v766 = vld [vmem:[%s6 + $0xd0] sm:$0xff]
  %v767 = vld [vmem:[%s6 + $0xd8] sm:$0xff]
  %v768 = vld [vmem:[%s6 + $0xe0] sm:$0xff]
  %v769 = vld [vmem:[%s6 + $0xe8] sm:$0xff]
  %v770 = vld [vmem:[%s6 + $0xf0] sm:$0xff]
  %v771 = vld [vmem:[%s6 + $0xf8] sm:$0xff]
  %v772 = vpack.c.bf16 %v714, %v712
  %v773 = vpack.c.bf16 %v733, %v731
  %v774 = vpack.c.bf16 %v719, %v717
  %v775 = vpack.c.bf16 %v738, %v736
  %v776 = vld [vmem:[%s7] sm:$0x3]
  %v778 = vperm.slane %v776, 0
  %v779 = vperm.slane %v776, 1
  %v814 = vunpack.c.l.b16 %v740
  %v815 = vunpack.c.h.b16 %v740
  %v816 = vunpack.c.l.b16 %v741
  %v817 = vunpack.c.h.b16 %v741
  %v818 = vunpack.c.l.b16 %v742
  %v819 = vunpack.c.h.b16 %v742
  %v820 = vunpack.c.l.b16 %v743
  %v821 = vunpack.c.h.b16 %v743
  %v822 = vunpack.c.l.b16 %v744
  %v823 = vunpack.c.h.b16 %v744
  %v824 = vunpack.c.l.b16 %v745
  %v825 = vunpack.c.h.b16 %v745
  %v826 = vunpack.c.l.b16 %v746
  %v827 = vunpack.c.h.b16 %v746
  %v828 = vunpack.c.l.b16 %v747
  %v829 = vunpack.c.h.b16 %v747
  %v830 = vunpack.c.l.b16 %v748
  %v831 = vunpack.c.h.b16 %v748
  %v832 = vunpack.c.l.b16 %v749
  %v833 = vunpack.c.h.b16 %v749
  %v834 = vunpack.c.l.b16 %v750
  %v835 = vunpack.c.h.b16 %v750
  %v836 = vunpack.c.l.b16 %v751
  %v837 = vunpack.c.h.b16 %v751
  %v838 = vunpack.c.l.b16 %v752
  %v839 = vunpack.c.h.b16 %v752
  %v840 = vunpack.c.l.b16 %v753
  %v841 = vunpack.c.h.b16 %v753
  %v842 = vunpack.c.l.b16 %v754
  %v843 = vunpack.c.h.b16 %v754
  %v844 = vunpack.c.l.b16 %v755
  %v845 = vunpack.c.h.b16 %v755
  %v846 = vunpack.c.l.b16 %v756
  %v847 = vunpack.c.h.b16 %v756
  %v848 = vunpack.c.l.b16 %v757
  %v849 = vunpack.c.h.b16 %v757
  %v850 = vunpack.c.l.b16 %v758
  %v851 = vunpack.c.h.b16 %v758
  %v852 = vunpack.c.l.b16 %v759
  %v853 = vunpack.c.h.b16 %v759
  %v854 = vunpack.c.l.b16 %v760
  %v855 = vunpack.c.h.b16 %v760
  %v856 = vunpack.c.l.b16 %v761
  %v857 = vunpack.c.h.b16 %v761
  %v858 = vunpack.c.l.b16 %v762
  %v859 = vunpack.c.h.b16 %v762
  %v860 = vunpack.c.l.b16 %v763
  %v861 = vunpack.c.h.b16 %v763
  %v862 = vunpack.c.l.b16 %v764
  %v863 = vunpack.c.h.b16 %v764
  %v864 = vunpack.c.l.b16 %v765
  %v865 = vunpack.c.h.b16 %v765
  %v866 = vunpack.c.l.b16 %v766
  %v867 = vunpack.c.h.b16 %v766
  %v868 = vunpack.c.l.b16 %v767
  %v869 = vunpack.c.h.b16 %v767
  %v870 = vunpack.c.l.b16 %v768
  %v871 = vunpack.c.h.b16 %v768
  %v872 = vunpack.c.l.b16 %v769
  %v873 = vunpack.c.h.b16 %v769
  %v874 = vunpack.c.l.b16 %v770
  %v875 = vunpack.c.h.b16 %v770
  %v876 = vunpack.c.l.b16 %v771
  %v877 = vunpack.c.h.b16 %v771
  %v878 = vpack.c.b16 %v816, %v814
  %v879 = vpack.c.b16 %v817, %v815
  %v880 = vpack.c.b16 %v820, %v818
  %v881 = vpack.c.b16 %v821, %v819
  %v882 = vpack.c.b16 %v824, %v822
  %v883 = vpack.c.b16 %v825, %v823
  %v884 = vpack.c.b16 %v828, %v826
  %v885 = vpack.c.b16 %v829, %v827
  %v886 = vpack.c.b16 %v832, %v830
  %v887 = vpack.c.b16 %v833, %v831
  %v888 = vpack.c.b16 %v836, %v834
  %v889 = vpack.c.b16 %v837, %v835
  %v890 = vpack.c.b16 %v840, %v838
  %v891 = vpack.c.b16 %v841, %v839
  %v892 = vpack.c.b16 %v844, %v842
  %v893 = vpack.c.b16 %v845, %v843
  %v894 = vpack.c.b16 %v848, %v846
  %v895 = vpack.c.b16 %v849, %v847
  %v896 = vpack.c.b16 %v852, %v850
  %v897 = vpack.c.b16 %v853, %v851
  %v898 = vpack.c.b16 %v856, %v854
  %v899 = vpack.c.b16 %v857, %v855
  %v900 = vpack.c.b16 %v860, %v858
  %v901 = vpack.c.b16 %v861, %v859
  %v902 = vpack.c.b16 %v864, %v862
  %v903 = vpack.c.b16 %v865, %v863
  %v904 = vpack.c.b16 %v868, %v866
  %v905 = vpack.c.b16 %v869, %v867
  %v906 = vpack.c.b16 %v872, %v870
  %v907 = vpack.c.b16 %v873, %v871
  %v908 = vpack.c.b16 %v876, %v874
  %v909 = vpack.c.b16 %v877, %v875
  %942 = vmatpush.bf16.msra.mxu0 %v892
  %943 = vmatpush.bf16.msra.mxu0 %v890
  %944 = vmatpush.bf16.msra.mxu0 %v888
  %945 = vmatpush.bf16.msra.mxu0 %v886
  %946 = vmatpush.bf16.msra.mxu0 %v884
  %947 = vmatpush.bf16.msra.mxu0 %v882
  %948 = vmatpush.bf16.msra.mxu0 %v880
  %949 = vmatpush.bf16.msra.mxu0 %v878
  %950 = vmatmul.bf16.gmra.mxu0 %v772
  %v951 = vpop.f32.mrf.mxu0
  %v952 = vadd.f32 %v778, %v951
  %v953 = vpop.f32.mrf.mxu0
  %v954 = vadd.f32 %v778, %v953
  %955 = vmatmul.bf16.gmra.mxu0 %v774
  %v956 = vpop.f32.mrf.mxu0
  %v957 = vadd.f32 %v778, %v956
  %v958 = vpop.f32.mrf.mxu0
  %v959 = vadd.f32 %v778, %v958
  %960 = vdwg.mxu0
  %961 = vmatpush.bf16.msra.mxu0 %v908
  %962 = vmatpush.bf16.msra.mxu0 %v906
  %963 = vmatpush.bf16.msra.mxu0 %v904
  %964 = vmatpush.bf16.msra.mxu0 %v902
  %965 = vmatpush.bf16.msra.mxu0 %v900
  %966 = vmatpush.bf16.msra.mxu0 %v898
  %967 = vmatpush.bf16.msra.mxu0 %v896
  %968 = vmatpush.bf16.msra.mxu0 %v894
  %969 = vmatmul.bf16.gmra.mxu0 %v773
  %v970 = vpop.f32.mrf.mxu0
  %v971 = vadd.f32 %v952, %v970
  %v972 = vpop.f32.mrf.mxu0
  %v973 = vadd.f32 %v954, %v972
  %974 = vmatmul.bf16.gmra.mxu0 %v775
  %v975 = vpop.f32.mrf.mxu0
  %v976 = vadd.f32 %v957, %v975
  %v977 = vpop.f32.mrf.mxu0
  %v978 = vadd.f32 %v959, %v977
  %979 = vdwg.mxu0
  %980 = vmatpush.bf16.msra.mxu0 %v893
  %981 = vmatpush.bf16.msra.mxu0 %v891
  %982 = vmatpush.bf16.msra.mxu0 %v889
  %983 = vmatpush.bf16.msra.mxu0 %v887
  %984 = vmatpush.bf16.msra.mxu0 %v885
  %985 = vmatpush.bf16.msra.mxu0 %v883
  %986 = vmatpush.bf16.msra.mxu0 %v881
  %987 = vmatpush.bf16.msra.mxu0 %v879
  %988 = vmatmul.bf16.gmra.mxu0 %v772
  %v989 = vpop.f32.mrf.mxu0
  %v990 = vadd.f32 %v779, %v989
  %v991 = vpop.f32.mrf.mxu0
  %v992 = vadd.f32 %v779, %v991
  %993 = vmatmul.bf16.gmra.mxu0 %v774
  %v994 = vpop.f32.mrf.mxu0
  %v995 = vadd.f32 %v779, %v994
  %v996 = vpop.f32.mrf.mxu0
  %v997 = vadd.f32 %v779, %v996
  %998 = vdwg.mxu0
  %999 = vmatpush.bf16.msra.mxu0 %v909
  %1000 = vmatpush.bf16.msra.mxu0 %v907
  %1001 = vmatpush.bf16.msra.mxu0 %v905
  %1002 = vmatpush.bf16.msra.mxu0 %v903
  %1003 = vmatpush.bf16.msra.mxu0 %v901
  %1004 = vmatpush.bf16.msra.mxu0 %v899
  %1005 = vmatpush.bf16.msra.mxu0 %v897
  %1006 = vmatpush.bf16.msra.mxu0 %v895
  %1007 = vmatmul.bf16.gmra.mxu0 %v773
  %v1008 = vpop.f32.mrf.mxu0
  %v1009 = vadd.f32 %v990, %v1008
  %v1010 = vpop.f32.mrf.mxu0
  %v1011 = vadd.f32 %v992, %v1010
  %1012 = vmatmul.bf16.gmra.mxu0 %v775
  %v1013 = vpop.f32.mrf.mxu0
  %v1014 = vadd.f32 %v995, %v1013
  %v1015 = vpop.f32.mrf.mxu0
  %v1016 = vadd.f32 %v997, %v1015
  %1017 = vdwg.mxu0
  %v1018 = vmax.f32 %v971, 0.0
  %v1019 = vmax.f32 %v1009, 0.0
  %v1020 = vmax.f32 %v973, 0.0
  %v1021 = vmax.f32 %v1011, 0.0
  %v1022 = vmax.f32 %v976, 0.0
  %v1023 = vmax.f32 %v1014, 0.0
  %v1024 = vmax.f32 %v978, 0.0
  %v1025 = vmax.f32 %v1016, 0.0
  %v1026 = vadd.f32 %v1018, %v1020
  %v1027 = vadd.f32 %v1026, %v1022
  %v1028 = vadd.f32 %v1027, %v1024
  %v1029 = vrot.slane %v1028, 4
  %v1030 = vadd.f32 %v1028, %v1029
  %v1031 = vrot.slane %v1030, 2
  %v1032 = vadd.f32 %v1030, %v1031
  %v1033 = vrot.slane %v1032, 1
  %v1034 = vadd.f32 %v1032, %v1033
  %v1035 = vadd.f32 %v1019, %v1021
  %v1036 = vadd.f32 %v1035, %v1023
  %v1037 = vadd.f32 %v1036, %v1025
  %v1038 = vrot.slane %v1037, 4
  %v1039 = vadd.f32 %v1037, %v1038
  %v1040 = vrot.slane %v1039, 2
  %v1041 = vadd.f32 %v1039, %v1040
  %v1042 = vrot.slane %v1041, 1
  %v1043 = vadd.f32 %v1041, %v1042
  %v1044 = vmul.f32 %v1034, %v215
  %v1045 = vmul.f32 %v1043, %v215
  %v1046 = vsub.f32 %v1018, %v1044
  %v1047 = vsub.f32 %v1019, %v1045
  %v1048 = vsub.f32 %v1020, %v1044
  %v1049 = vsub.f32 %v1021, %v1045
  %v1050 = vsub.f32 %v1022, %v1044
  %v1051 = vsub.f32 %v1023, %v1045
  %v1052 = vsub.f32 %v1024, %v1044
  %v1053 = vsub.f32 %v1025, %v1045
  %v1054 = vmul.f32 %v1046, %v1046
  %v1055 = vmul.f32 %v1047, %v1047
  %v1056 = vmul.f32 %v1048, %v1048
  %v1057 = vmul.f32 %v1049, %v1049
  %v1058 = vmul.f32 %v1050, %v1050
  %v1059 = vmul.f32 %v1051, %v1051
  %v1060 = vmul.f32 %v1052, %v1052
  %v1061 = vmul.f32 %v1053, %v1053
  %v1062 = vadd.f32 %v1054, %v1056
  %v1063 = vadd.f32 %v1062, %v1058
  %v1064 = vadd.f32 %v1063, %v1060
  %v1065 = vrot.slane %v1064, 4
  %v1066 = vadd.f32 %v1064, %v1065
  %v1067 = vrot.slane %v1066, 2
  %v1068 = vadd.f32 %v1066, %v1067
  %v1069 = vrot.slane %v1068, 1
  %v1070 = vadd.f32 %v1068, %v1069
  %v1071 = vadd.f32 %v1055, %v1057
  %v1072 = vadd.f32 %v1071, %v1059
  %v1073 = vadd.f32 %v1072, %v1061
  %v1074 = vrot.slane %v1073, 4
  %v1075 = vadd.f32 %v1073, %v1074
  %v1076 = vrot.slane %v1075, 2
  %v1077 = vadd.f32 %v1075, %v1076
  %v1078 = vrot.slane %v1077, 1
  %v1079 = vadd.f32 %v1077, %v1078
  %v1080 = vmul.f32 %v1070, %v215
  %v1081 = vmul.f32 %v1079, %v215
  %v1082 = vadd.f32 %v1080, 1e-05
  %v1083 = vadd.f32 %v1081, 1e-05
  %v1084 = vrsqrt.pop %v1082
  %v1085 = vmul.f32 %v1084, %v1082
  %v1086 = vmul.f32 %v1085, %v1084
  %v1087 = vmul.f32 0.5, %v1086
  %v1088 = vsub.f32 1.5, %v1087
  %v1089 = vmul.f32 %v1084, %v1088
  %vm1090 = vweird.f32 %v1082
  %vm1091 = vweird.f32 %v1084
  %vm1092 = vmor %vm1090, %vm1091
  %v1093 = vsel %vm1092, %v1084, %v1089
  %v1094 = vrsqrt.pop %v1083
  %v1095 = vmul.f32 %v1094, %v1083
  %v1096 = vmul.f32 %v1095, %v1094
  %v1097 = vmul.f32 0.5, %v1096
  %v1098 = vsub.f32 1.5, %v1097
  %v1099 = vmul.f32 %v1094, %v1098
  %vm1100 = vweird.f32 %v1083
  %vm1101 = vweird.f32 %v1094
  %vm1102 = vmor %vm1100, %vm1101
  %v1103 = vsel %vm1102, %v1094, %v1099
  %v1104 = vmul.f32 %v1046, %v1093
  %v1105 = vmul.f32 %v1047, %v1103
  %v1106 = vmul.f32 %v1048, %v1093
  %v1107 = vmul.f32 %v1049, %v1103
  %v1108 = vmul.f32 %v1050, %v1093
  %v1109 = vmul.f32 %v1051, %v1103
  %v1110 = vmul.f32 %v1052, %v1093
  %v1111 = vmul.f32 %v1053, %v1103
  %v1112 = vpack.c.bf16 %v1106, %v1104
  %v1113 = vpack.c.bf16 %v1107, %v1105
  %v1114 = vpack.c.bf16 %v1110, %v1108
  %v1115 = vpack.c.bf16 %v1111, %v1109
  %1116 = vmatpush.bf16.msra.mxu0 0
  %1117 = vmatpush.bf16.msra.mxu0 0
  %1118 = vmatpush.bf16.msra.mxu0 0
  %1119 = vmatpush.bf16.msra.mxu0 0
  %1120 = vmatpush.bf16.msra.mxu0 0
  %1121 = vmatpush.bf16.msra.mxu0 0
  %1122 = vmatpush.bf16.msra.mxu0 %v1114
  %1123 = vmatpush.bf16.msra.mxu0 %v1112
  %1124 = vmatmul.bf16.gmra.mxu0 %v58
  %v1125 = vpop.f32.mrf.mxu0
  %v1126 = vadd.f32 0.0, %v1125
  %v1127 = vpop.f32.mrf.mxu0
  %v1128 = vadd.f32 0.0, %v1127
  %1129 = vmatmul.bf16.gmra.mxu0 %v61
  %v1130 = vpop.f32.mrf.mxu0
  %v1131 = vadd.f32 0.0, %v1130
  %v1132 = vpop.f32.mrf.mxu0
  %v1133 = vadd.f32 0.0, %v1132
  %1134 = vdwg.mxu0
  %1135 = vmatpush.bf16.msra.mxu0 0
  %1136 = vmatpush.bf16.msra.mxu0 0
  %1137 = vmatpush.bf16.msra.mxu0 0
  %1138 = vmatpush.bf16.msra.mxu0 0
  %1139 = vmatpush.bf16.msra.mxu0 0
  %1140 = vmatpush.bf16.msra.mxu0 0
  %1141 = vmatpush.bf16.msra.mxu0 %v1115
  %1142 = vmatpush.bf16.msra.mxu0 %v1113
  %1143 = vmatmul.bf16.gmra.mxu0 %v58
  %v1144 = vpop.f32.mrf.mxu0
  %v1145 = vadd.f32 0.0, %v1144
  %v1146 = vpop.f32.mrf.mxu0
  %v1147 = vadd.f32 0.0, %v1146
  %1148 = vmatmul.bf16.gmra.mxu0 %v61
  %v1149 = vpop.f32.mrf.mxu0
  %v1150 = vadd.f32 0.0, %v1149
  %v1151 = vpop.f32.mrf.mxu0
  %v1152 = vadd.f32 0.0, %v1151
  %1153 = vdwg.mxu0
  %v1154 = vld [vmem:[%s8] sm:$0xf]
  %v1155 = vld [vmem:[%s8 + $0x4] sm:$0xf]
  %v1156 = vld [vmem:[%s8 + $0x8] sm:$0xf]
  %v1157 = vld [vmem:[%s8 + $0xc] sm:$0xf]
  %v1158 = vld [vmem:[%s8 + $0x10] sm:$0xf]
  %v1159 = vld [vmem:[%s8 + $0x14] sm:$0xf]
  %v1160 = vld [vmem:[%s8 + $0x18] sm:$0xf]
  %v1161 = vld [vmem:[%s8 + $0x1c] sm:$0xf]
  %v1162 = vld [vmem:[%s8 + $0x20] sm:$0xf]
  %v1163 = vld [vmem:[%s8 + $0x24] sm:$0xf]
  %v1164 = vld [vmem:[%s8 + $0x28] sm:$0xf]
  %v1165 = vld [vmem:[%s8 + $0x2c] sm:$0xf]
  %v1166 = vld [vmem:[%s8 + $0x30] sm:$0xf]
  %v1167 = vld [vmem:[%s8 + $0x34] sm:$0xf]
  %v1168 = vld [vmem:[%s8 + $0x38] sm:$0xf]
  %v1169 = vld [vmem:[%s8 + $0x3c] sm:$0xf]
  %v1170 = vld [vmem:[%s8 + $0x40] sm:$0xf]
  %v1171 = vld [vmem:[%s8 + $0x44] sm:$0xf]
  %v1172 = vld [vmem:[%s8 + $0x48] sm:$0xf]
  %v1173 = vld [vmem:[%s8 + $0x4c] sm:$0xf]
  %v1174 = vld [vmem:[%s8 + $0x50] sm:$0xf]
  %v1175 = vld [vmem:[%s8 + $0x54] sm:$0xf]
  %v1176 = vld [vmem:[%s8 + $0x58] sm:$0xf]
  %v1177 = vld [vmem:[%s8 + $0x5c] sm:$0xf]
  %v1178 = vld [vmem:[%s8 + $0x60] sm:$0xf]
  %v1179 = vld [vmem:[%s8 + $0x64] sm:$0xf]
  %v1180 = vld [vmem:[%s8 + $0x68] sm:$0xf]
  %v1181 = vld [vmem:[%s8 + $0x6c] sm:$0xf]
  %v1182 = vld [vmem:[%s8 + $0x70] sm:$0xf]
  %v1183 = vld [vmem:[%s8 + $0x74] sm:$0xf]
  %v1184 = vld [vmem:[%s8 + $0x78] sm:$0xf]
  %v1185 = vld [vmem:[%s8 + $0x7c] sm:$0xf]
  %v1186 = vpack.c.bf16 %v1128, %v1126
  %v1187 = vpack.c.bf16 %v1147, %v1145
  %v1188 = vpack.c.bf16 %v1133, %v1131
  %v1189 = vpack.c.bf16 %v1152, %v1150
  %v1190 = vld [vmem:[%s9] sm:$0x1]
  %v1192 = vperm.slane %v1190, 0
  %v1226 = vunpack.c.l.b16 %v1154
  %v1227 = vunpack.c.l.b16 %v1155
  %v1228 = vunpack.c.l.b16 %v1156
  %v1229 = vunpack.c.l.b16 %v1157
  %v1230 = vunpack.c.l.b16 %v1158
  %v1231 = vunpack.c.l.b16 %v1159
  %v1232 = vunpack.c.l.b16 %v1160
  %v1233 = vunpack.c.l.b16 %v1161
  %v1234 = vunpack.c.l.b16 %v1162
  %v1235 = vunpack.c.l.b16 %v1163
  %v1236 = vunpack.c.l.b16 %v1164
  %v1237 = vunpack.c.l.b16 %v1165
  %v1238 = vunpack.c.l.b16 %v1166
  %v1239 = vunpack.c.l.b16 %v1167
  %v1240 = vunpack.c.l.b16 %v1168
  %v1241 = vunpack.c.l.b16 %v1169
  %v1242 = vunpack.c.l.b16 %v1170
  %v1243 = vunpack.c.l.b16 %v1171
  %v1244 = vunpack.c.l.b16 %v1172
  %v1245 = vunpack.c.l.b16 %v1173
  %v1246 = vunpack.c.l.b16 %v1174
  %v1247 = vunpack.c.l.b16 %v1175
  %v1248 = vunpack.c.l.b16 %v1176
  %v1249 = vunpack.c.l.b16 %v1177
  %v1250 = vunpack.c.l.b16 %v1178
  %v1251 = vunpack.c.l.b16 %v1179
  %v1252 = vunpack.c.l.b16 %v1180
  %v1253 = vunpack.c.l.b16 %v1181
  %v1254 = vunpack.c.l.b16 %v1182
  %v1255 = vunpack.c.l.b16 %v1183
  %v1256 = vunpack.c.l.b16 %v1184
  %v1257 = vunpack.c.l.b16 %v1185
  %v1258 = vpack.c.b16 %v1227, %v1226
  %v1259 = vpack.c.b16 %v1229, %v1228
  %v1260 = vpack.c.b16 %v1231, %v1230
  %v1261 = vpack.c.b16 %v1233, %v1232
  %v1262 = vpack.c.b16 %v1235, %v1234
  %v1263 = vpack.c.b16 %v1237, %v1236
  %v1264 = vpack.c.b16 %v1239, %v1238
  %v1265 = vpack.c.b16 %v1241, %v1240
  %v1266 = vpack.c.b16 %v1243, %v1242
  %v1267 = vpack.c.b16 %v1245, %v1244
  %v1268 = vpack.c.b16 %v1247, %v1246
  %v1269 = vpack.c.b16 %v1249, %v1248
  %v1270 = vpack.c.b16 %v1251, %v1250
  %v1271 = vpack.c.b16 %v1253, %v1252
  %v1272 = vpack.c.b16 %v1255, %v1254
  %v1273 = vpack.c.b16 %v1257, %v1256
  %1290 = vmatpush.bf16.msra.mxu0 %v1265
  %1291 = vmatpush.bf16.msra.mxu0 %v1264
  %1292 = vmatpush.bf16.msra.mxu0 %v1263
  %1293 = vmatpush.bf16.msra.mxu0 %v1262
  %1294 = vmatpush.bf16.msra.mxu0 %v1261
  %1295 = vmatpush.bf16.msra.mxu0 %v1260
  %1296 = vmatpush.bf16.msra.mxu0 %v1259
  %1297 = vmatpush.bf16.msra.mxu0 %v1258
  %1298 = vmatmul.bf16.gmra.mxu0 %v1186
  %v1299 = vpop.f32.mrf.mxu0
  %v1300 = vadd.f32 %v1192, %v1299
  %v1301 = vpop.f32.mrf.mxu0
  %v1302 = vadd.f32 %v1192, %v1301
  %1303 = vmatmul.bf16.gmra.mxu0 %v1188
  %v1304 = vpop.f32.mrf.mxu0
  %v1305 = vadd.f32 %v1192, %v1304
  %v1306 = vpop.f32.mrf.mxu0
  %v1307 = vadd.f32 %v1192, %v1306
  %1308 = vdwg.mxu0
  %1309 = vmatpush.bf16.msra.mxu0 %v1273
  %1310 = vmatpush.bf16.msra.mxu0 %v1272
  %1311 = vmatpush.bf16.msra.mxu0 %v1271
  %1312 = vmatpush.bf16.msra.mxu0 %v1270
  %1313 = vmatpush.bf16.msra.mxu0 %v1269
  %1314 = vmatpush.bf16.msra.mxu0 %v1268
  %1315 = vmatpush.bf16.msra.mxu0 %v1267
  %1316 = vmatpush.bf16.msra.mxu0 %v1266
  %1317 = vmatmul.bf16.gmra.mxu0 %v1187
  %v1318 = vpop.f32.mrf.mxu0
  %v1319 = vadd.f32 %v1300, %v1318
  %v1320 = vpop.f32.mrf.mxu0
  %v1321 = vadd.f32 %v1302, %v1320
  %1322 = vmatmul.bf16.gmra.mxu0 %v1189
  %v1323 = vpop.f32.mrf.mxu0
  %v1324 = vadd.f32 %v1305, %v1323
  %v1325 = vpop.f32.mrf.mxu0
  %v1326 = vadd.f32 %v1307, %v1325
  %1327 = vdwg.mxu0
  %v1328 = vmax.f32 %v1319, 0.0
  %v1329 = vmax.f32 %v1321, 0.0
  %v1330 = vmax.f32 %v1324, 0.0
  %v1331 = vmax.f32 %v1326, 0.0
  %v1332 = vadd.f32 %v1328, %v1329
  %v1333 = vadd.f32 %v1332, %v1330
  %v1334 = vadd.f32 %v1333, %v1331
  %v1335 = vrot.slane %v1334, 4
  %v1336 = vadd.f32 %v1334, %v1335
  %v1337 = vrot.slane %v1336, 2
  %v1338 = vadd.f32 %v1336, %v1337
  %v1339 = vrot.slane %v1338, 1
  %v1340 = vadd.f32 %v1338, %v1339
  %v1341 = vmul.f32 %v1340, %v215
  %v1342 = vsub.f32 %v1328, %v1341
  %v1343 = vsub.f32 %v1329, %v1341
  %v1344 = vsub.f32 %v1330, %v1341
  %v1345 = vsub.f32 %v1331, %v1341
  %v1346 = vmul.f32 %v1342, %v1342
  %v1347 = vmul.f32 %v1343, %v1343
  %v1348 = vmul.f32 %v1344, %v1344
  %v1349 = vmul.f32 %v1345, %v1345
  %v1350 = vadd.f32 %v1346, %v1347
  %v1351 = vadd.f32 %v1350, %v1348
  %v1352 = vadd.f32 %v1351, %v1349
  %v1353 = vrot.slane %v1352, 4
  %v1354 = vadd.f32 %v1352, %v1353
  %v1355 = vrot.slane %v1354, 2
  %v1356 = vadd.f32 %v1354, %v1355
  %v1357 = vrot.slane %v1356, 1
  %v1358 = vadd.f32 %v1356, %v1357
  %v1359 = vmul.f32 %v1358, %v215
  %v1360 = vadd.f32 %v1359, 1e-05
  %v1361 = vrsqrt.pop %v1360
  %v1362 = vmul.f32 %v1361, %v1360
  %v1363 = vmul.f32 %v1362, %v1361
  %v1364 = vmul.f32 0.5, %v1363
  %v1365 = vsub.f32 1.5, %v1364
  %v1366 = vmul.f32 %v1361, %v1365
  %vm1367 = vweird.f32 %v1360
  %vm1368 = vweird.f32 %v1361
  %vm1369 = vmor %vm1367, %vm1368
  %v1370 = vsel %vm1369, %v1361, %v1366
  %v1371 = vmul.f32 %v1342, %v1370
  %v1372 = vmul.f32 %v1343, %v1370
  %v1373 = vmul.f32 %v1344, %v1370
  %v1374 = vmul.f32 %v1345, %v1370
  %v1375 = vrot.slane %v1371, 4
  %v1376 = vmax.f32 %v1371, %v1375
  %v1377 = vrot.slane %v1376, 2
  %v1378 = vmax.f32 %v1376, %v1377
  %v1379 = vrot.slane %v1378, 1
  %v1380 = vmax.f32 %v1378, %v1379
  %v1381 = vrot.slane %v1372, 4
  %v1382 = vmax.f32 %v1372, %v1381
  %v1383 = vrot.slane %v1382, 2
  %v1384 = vmax.f32 %v1382, %v1383
  %v1385 = vrot.slane %v1384, 1
  %v1386 = vmax.f32 %v1384, %v1385
  %v1387 = vrot.slane %v1373, 4
  %v1388 = vmax.f32 %v1373, %v1387
  %v1389 = vrot.slane %v1388, 2
  %v1390 = vmax.f32 %v1388, %v1389
  %v1391 = vrot.slane %v1390, 1
  %v1392 = vmax.f32 %v1390, %v1391
  %v1393 = vrot.slane %v1374, 4
  %v1394 = vmax.f32 %v1374, %v1393
  %v1395 = vrot.slane %v1394, 2
  %v1396 = vmax.f32 %v1394, %v1395
  %v1397 = vrot.slane %v1396, 1
  %v1398 = vmax.f32 %v1396, %v1397
  %vm1403 = vcmask 1041409
  %v1404 = vsel %vm1403, %v1386, %v1380
  %vm1405 = vcmask 1042434
  %v1406 = vsel %vm1405, %v1392, %v1404
  %vm1407 = vcmask 1043459
  %v1408 = vsel %vm1407, %v1398, %v1406
  %1410 = vst [vmem:[%s10] sm:$0xf] %v1408
  // Predicated region
  $region42: #{node_representation_forward.2} parent=0 // pred_check
    _
  $region43: #{node_representation_forward.2} parent=0 // pred_check_branch
    %1412 = sbr.rel (0) target = $region45
  $region44: #{node_representation_forward.2} parent=0 // pred_region
    _
  $region45: #{node_representation_forward.2} parent=0 // pred_fallthru
    _
  // Predicated region
  $region46: #{node_representation_forward.2} parent=0 // pred_check
    _
  $region47: #{node_representation_forward.2} parent=0 // pred_check_branch
    %1414 = sbr.rel (0) target = $region49
  $region48: #{node_representation_forward.2} parent=0 // pred_region
    _
  $region49: #{node_representation_forward.2} parent=0 // pred_fallthru
    _

// kernel: node_representation_forward.3
$region0: #{node_representation_forward.3}
  #allocation0 [shape = 'u32[]', space=smem, size = 0x4, offset = 0x4, fixed_abs, tag = 'smem constant byte address 0x4 - core index']
  #allocation1 [shape = 'u32[72,128]{1,0:T(1,128)}', space=vmem, size = 0x9000, scoped, tag = 'internal scratch']
  %s0 = inlined_call_operand.vmem [shape: f32[640,64], index: 0, kind: input, shape index: {}]
  %s1 = inlined_call_operand.vmem [shape: bf16[64,128], index: 1, kind: input, shape index: {}]
  %s2 = inlined_call_operand.vmem [shape: f32[1,128], index: 2, kind: input, shape index: {}]
  %s3 = inlined_call_operand.vmem [shape: bf16[5,128,1024], index: 3, kind: input, shape index: {}]
  %s4 = inlined_call_operand.vmem [shape: f32[1,1024], index: 4, kind: input, shape index: {}]
  %s5 = inlined_call_operand.vmem [shape: bf16[1024,128], index: 5, kind: input, shape index: {}]
  %s6 = inlined_call_operand.vmem [shape: f32[1,128], index: 6, kind: input, shape index: {}]
  %s7 = inlined_call_operand.vmem [shape: f32[4,128], index: 7, kind: input, shape index: {}]
  %s8 = inlined_call_operand.vmem [shape: bf16[128,256], index: 8, kind: input, shape index: {}]
  %s9 = inlined_call_operand.vmem [shape: f32[1,256], index: 9, kind: input, shape index: {}]
  %s10 = inlined_call_operand.vmem [shape: bf16[256,128], index: 10, kind: input, shape index: {}]
  %s11 = inlined_call_operand.vmem [shape: f32[1,128], index: 11, kind: input, shape index: {}]
  %s12 = inlined_call_operand.vmem [shape: f32[4,128], index: 12, kind: input, shape index: {}]
  %s13 = inlined_call_operand.vmem [shape: bf16[128,256], index: 13, kind: input, shape index: {}]
  %s14 = inlined_call_operand.vmem [shape: f32[1,256], index: 14, kind: input, shape index: {}]
  %s15 = inlined_call_operand.vmem [shape: bf16[256,128], index: 15, kind: input, shape index: {}]
  %s16 = inlined_call_operand.vmem [shape: f32[1,128], index: 16, kind: input, shape index: {}]
  %s17 = inlined_call_operand.vmem [shape: f32[4,128], index: 17, kind: input, shape index: {}]
  %s18 = inlined_call_operand.vmem [shape: bf16[128,128], index: 18, kind: input, shape index: {}]
  %s19 = inlined_call_operand.vmem [shape: bf16[128,128], index: 19, kind: input, shape index: {}]
  %s20 = inlined_call_operand.vmem [shape: bf16[128,128], index: 20, kind: input, shape index: {}]
  %s21 = inlined_call_operand.vmem [shape: f32[1,128], index: 21, kind: input, shape index: {}]
  %s22 = inlined_call_operand.hbm [shape: f32[8,128], index: 22, kind: output, shape index: {}]
  %s23 = sld [smem:[#allocation0]]
  $region98: #{node_representation_forward.3} parent=0
    _
  %s25 = ssub.s32 1, %s23
  %s26 = scalar_select 0, %s25, %s23
  $region1: #{node_representation_forward.3} parent=0
    #allocation2 [shape = 'u8[4096]{0}', space=vmem, size = 0x1000, scoped, tag = 'output window, operand 0, single buffered']
    #allocation3 [shape = 's32[1]{0}', space=sflag, size = 0x4, scoped, tag = 'scoped memory for node_representation_forward.3']
    %27 = vsyncpa [#allocation3], 0
    // Predicated region
    $region2: #{node_representation_forward.3} parent=1 // pred_check
      _
    $region3: #{node_representation_forward.3} parent=1 // pred_check_branch
      %29 = sbr.rel (0) target = $region5
    $region4: #{node_representation_forward.3} parent=1 // pred_region
      _
    $region5: #{node_representation_forward.3} parent=1 // pred_fallthru
      _
    // Predicated region
    $region6: #{node_representation_forward.3} parent=1 // pred_check
      _
    $region7: #{node_representation_forward.3} parent=1 // pred_check_branch
      %31 = sbr.rel (0) target = $region9
    $region8: #{node_representation_forward.3} parent=1 // pred_region
      _
    $region9: #{node_representation_forward.3} parent=1 // pred_fallthru
      _
    // Predicated region
    $region10: #{node_representation_forward.3} parent=1 // pred_check
      _
    $region11: #{node_representation_forward.3} parent=1 // pred_check_branch
      %33 = sbr.rel (0) target = $region13
    $region12: #{node_representation_forward.3} parent=1 // pred_region
      _
    $region13: #{node_representation_forward.3} parent=1 // pred_fallthru
      _
    // Predicated region
    $region14: #{node_representation_forward.3} parent=1 // pred_check
      _
    $region15: #{node_representation_forward.3} parent=1 // pred_check_branch
      %35 = sbr.rel (0) target = $region17
    $region16: #{node_representation_forward.3} parent=1 // pred_region
      _
    $region17: #{node_representation_forward.3} parent=1 // pred_fallthru
      _
    // Predicated region
    $region18: #{node_representation_forward.3} parent=1 // pred_check
      _
    $region19: #{node_representation_forward.3} parent=1 // pred_check_branch
      %37 = sbr.rel (0) target = $region21
    $region20: #{node_representation_forward.3} parent=1 // pred_region
      _
    $region21: #{node_representation_forward.3} parent=1 // pred_fallthru
      _
    // Predicated region
    $region22: #{node_representation_forward.3} parent=1 // pred_check
      _
    $region23: #{node_representation_forward.3} parent=1 // pred_check_branch
      %39 = sbr.rel (0) target = $region25
    $region24: #{node_representation_forward.3} parent=1 // pred_region
      _
    $region25: #{node_representation_forward.3} parent=1 // pred_fallthru
      _
    // Predicated region
    $region26: #{node_representation_forward.3} parent=1 // pred_check
      _
    $region27: #{node_representation_forward.3} parent=1 // pred_check_branch
      %41 = sbr.rel (0) target = $region29
    $region28: #{node_representation_forward.3} parent=1 // pred_region
      _
    $region29: #{node_representation_forward.3} parent=1 // pred_fallthru
      _
    // Predicated region
    $region30: #{node_representation_forward.3} parent=1 // pred_check
      _
    $region31: #{node_representation_forward.3} parent=1 // pred_check_branch
      %43 = sbr.rel (0) target = $region33
    $region32: #{node_representation_forward.3} parent=1 // pred_region
      _
    $region33: #{node_representation_forward.3} parent=1 // pred_fallthru
      _
    // Predicated region
    $region34: #{node_representation_forward.3} parent=1 // pred_check
      _
    $region35: #{node_representation_forward.3} parent=1 // pred_check_branch
      %45 = sbr.rel (0) target = $region37
    $region36: #{node_representation_forward.3} parent=1 // pred_region
      _
    $region37: #{node_representation_forward.3} parent=1 // pred_fallthru
      _
    // Predicated region
    $region38: #{node_representation_forward.3} parent=1 // pred_check
      _
    $region39: #{node_representation_forward.3} parent=1 // pred_check_branch
      %47 = sbr.rel (0) target = $region41
    $region40: #{node_representation_forward.3} parent=1 // pred_region
      _
    $region41: #{node_representation_forward.3} parent=1 // pred_fallthru
      _
    // Predicated region
    $region42: #{node_representation_forward.3} parent=1 // pred_check
      _
    $region43: #{node_representation_forward.3} parent=1 // pred_check_branch
      %49 = sbr.rel (0) target = $region45
    $region44: #{node_representation_forward.3} parent=1 // pred_region
      _
    $region45: #{node_representation_forward.3} parent=1 // pred_fallthru
      _
    // Predicated region
    $region46: #{node_representation_forward.3} parent=1 // pred_check
      _
    $region47: #{node_representation_forward.3} parent=1 // pred_check_branch
      %51 = sbr.rel (0) target = $region49
    $region48: #{node_representation_forward.3} parent=1 // pred_region
      _
    $region49: #{node_representation_forward.3} parent=1 // pred_fallthru
      _
    // Predicated region
    $region50: #{node_representation_forward.3} parent=1 // pred_check
      _
    $region51: #{node_representation_forward.3} parent=1 // pred_check_branch
      %53 = sbr.rel (0) target = $region53
    $region52: #{node_representation_forward.3} parent=1 // pred_region
      _
    $region53: #{node_representation_forward.3} parent=1 // pred_fallthru
      _
    // Predicated region
    $region54: #{node_representation_forward.3} parent=1 // pred_check
      _
    $region55: #{node_representation_forward.3} parent=1 // pred_check_branch
      %55 = sbr.rel (0) target = $region57
    $region56: #{node_representation_forward.3} parent=1 // pred_region
      _
    $region57: #{node_representation_forward.3} parent=1 // pred_fallthru
      _
    // Predicated region
    $region58: #{node_representation_forward.3} parent=1 // pred_check
      _
    $region59: #{node_representation_forward.3} parent=1 // pred_check_branch
      %57 = sbr.rel (0) target = $region61
    $region60: #{node_representation_forward.3} parent=1 // pred_region
      _
    $region61: #{node_representation_forward.3} parent=1 // pred_fallthru
      _
    // Predicated region
    $region62: #{node_representation_forward.3} parent=1 // pred_check
      _
    $region63: #{node_representation_forward.3} parent=1 // pred_check_branch
      %59 = sbr.rel (0) target = $region65
    $region64: #{node_representation_forward.3} parent=1 // pred_region
      _
    $region65: #{node_representation_forward.3} parent=1 // pred_fallthru
      _
    // Predicated region
    $region66: #{node_representation_forward.3} parent=1 // pred_check
      _
    $region67: #{node_representation_forward.3} parent=1 // pred_check_branch
      %61 = sbr.rel (0) target = $region69
    $region68: #{node_representation_forward.3} parent=1 // pred_region
      _
    $region69: #{node_representation_forward.3} parent=1 // pred_fallthru
      _
    // Predicated region
    $region70: #{node_representation_forward.3} parent=1 // pred_check
      _
    $region71: #{node_representation_forward.3} parent=1 // pred_check_branch
      %63 = sbr.rel (0) target = $region73
    $region72: #{node_representation_forward.3} parent=1 // pred_region
      _
    $region73: #{node_representation_forward.3} parent=1 // pred_fallthru
      _
    // Predicated region
    $region74: #{node_representation_forward.3} parent=1 // pred_check
      _
    $region75: #{node_representation_forward.3} parent=1 // pred_check_branch
      %65 = sbr.rel (0) target = $region77
    $region76: #{node_representation_forward.3} parent=1 // pred_region
      _
    $region77: #{node_representation_forward.3} parent=1 // pred_fallthru
      _
    // Predicated region
    $region78: #{node_representation_forward.3} parent=1 // pred_check
      _
    $region79: #{node_representation_forward.3} parent=1 // pred_check_branch
      %67 = sbr.rel (0) target = $region81
    $region80: #{node_representation_forward.3} parent=1 // pred_region
      _
    $region81: #{node_representation_forward.3} parent=1 // pred_fallthru
      _
    // Predicated region
    $region82: #{node_representation_forward.3} parent=1 // pred_check
      _
    $region83: #{node_representation_forward.3} parent=1 // pred_check_branch
      %69 = sbr.rel (0) target = $region85
    $region84: #{node_representation_forward.3} parent=1 // pred_region
      _
    $region85: #{node_representation_forward.3} parent=1 // pred_fallthru
      _
    // Predicated region
    $region86: #{node_representation_forward.3} parent=1 // pred_check
      _
    $region87: #{node_representation_forward.3} parent=1 // pred_check_branch
      %71 = sbr.rel (0) target = $region89
    $region88: #{node_representation_forward.3} parent=1 // pred_region
      _
    $region89: #{node_representation_forward.3} parent=1 // pred_fallthru
      _
    %v73 = vld [vmem:[%s0] sm:$0xff]
    %v74 = vld [vmem:[%s0 + $0x8] sm:$0xff]
    %v75 = vld [vmem:[%s0 + $0x10] sm:$0xff]
    %v76 = vld [vmem:[%s0 + $0x18] sm:$0xff]
    %v77 = vld [vmem:[%s0 + $0x20] sm:$0xff]
    %v78 = vld [vmem:[%s0 + $0x28] sm:$0xff]
    %v79 = vld [vmem:[%s0 + $0x30] sm:$0xff]
    %v80 = vld [vmem:[%s0 + $0x38] sm:$0xff]
    %v81 = vld [vmem:[%s0 + $0x40] sm:$0xff]
    %v82 = vld [vmem:[%s0 + $0x48] sm:$0xff]
    %v83 = vld [vmem:[%s0 + $0x50] sm:$0xff]
    %v84 = vld [vmem:[%s0 + $0x58] sm:$0xff]
    %v85 = vld [vmem:[%s0 + $0x60] sm:$0xff]
    %v86 = vld [vmem:[%s0 + $0x68] sm:$0xff]
    %v87 = vld [vmem:[%s0 + $0x70] sm:$0xff]
    %v88 = vld [vmem:[%s0 + $0x78] sm:$0xff]
    %v89 = vld [vmem:[%s0 + $0x80] sm:$0xff]
    %v90 = vld [vmem:[%s0 + $0x88] sm:$0xff]
    %v91 = vld [vmem:[%s0 + $0x90] sm:$0xff]
    %v92 = vld [vmem:[%s0 + $0x98] sm:$0xff]
    %v93 = vld [vmem:[%s0 + $0xa0] sm:$0xff]
    %v94 = vld [vmem:[%s0 + $0xa8] sm:$0xff]
    %v95 = vld [vmem:[%s0 + $0xb0] sm:$0xff]
    %v96 = vld [vmem:[%s0 + $0xb8] sm:$0xff]
    %v97 = vld [vmem:[%s0 + $0xc0] sm:$0xff]
    %v98 = vld [vmem:[%s0 + $0xc8] sm:$0xff]
    %v99 = vld [vmem:[%s0 + $0xd0] sm:$0xff]
    %v100 = vld [vmem:[%s0 + $0xd8] sm:$0xff]
    %v101 = vld [vmem:[%s0 + $0xe0] sm:$0xff]
    %v102 = vld [vmem:[%s0 + $0xe8] sm:$0xff]
    %v103 = vld [vmem:[%s0 + $0xf0] sm:$0xff]
    %v104 = vld [vmem:[%s0 + $0xf8] sm:$0xff]
    %v105 = vld [vmem:[%s0 + $0x100] sm:$0xff]
    %v106 = vld [vmem:[%s0 + $0x108] sm:$0xff]
    %v107 = vld [vmem:[%s0 + $0x110] sm:$0xff]
    %v108 = vld [vmem:[%s0 + $0x118] sm:$0xff]
    %v109 = vld [vmem:[%s0 + $0x120] sm:$0xff]
    %v110 = vld [vmem:[%s0 + $0x128] sm:$0xff]
    %v111 = vld [vmem:[%s0 + $0x130] sm:$0xff]
    %v112 = vld [vmem:[%s0 + $0x138] sm:$0xff]
    %v113 = vld [vmem:[%s0 + $0x140] sm:$0xff]
    %v114 = vld [vmem:[%s0 + $0x148] sm:$0xff]
    %v115 = vld [vmem:[%s0 + $0x150] sm:$0xff]
    %v116 = vld [vmem:[%s0 + $0x158] sm:$0xff]
    %v117 = vld [vmem:[%s0 + $0x160] sm:$0xff]
    %v118 = vld [vmem:[%s0 + $0x168] sm:$0xff]
    %v119 = vld [vmem:[%s0 + $0x170] sm:$0xff]
    %v120 = vld [vmem:[%s0 + $0x178] sm:$0xff]
    %v121 = vld [vmem:[%s0 + $0x180] sm:$0xff]
    %v122 = vld [vmem:[%s0 + $0x188] sm:$0xff]
    %v123 = vld [vmem:[%s0 + $0x190] sm:$0xff]
    %v124 = vld [vmem:[%s0 + $0x198] sm:$0xff]
    %v125 = vld [vmem:[%s0 + $0x1a0] sm:$0xff]
    %v126 = vld [vmem:[%s0 + $0x1a8] sm:$0xff]
    %v127 = vld [vmem:[%s0 + $0x1b0] sm:$0xff]
    %v128 = vld [vmem:[%s0 + $0x1b8] sm:$0xff]
    %v129 = vld [vmem:[%s0 + $0x1c0] sm:$0xff]
    %v130 = vld [vmem:[%s0 + $0x1c8] sm:$0xff]
    %v131 = vld [vmem:[%s0 + $0x1d0] sm:$0xff]
    %v132 = vld [vmem:[%s0 + $0x1d8] sm:$0xff]
    %v133 = vld [vmem:[%s0 + $0x1e0] sm:$0xff]
    %v134 = vld [vmem:[%s0 + $0x1e8] sm:$0xff]
    %v135 = vld [vmem:[%s0 + $0x1f0] sm:$0xff]
    %v136 = vld [vmem:[%s0 + $0x1f8] sm:$0xff]
    %v137 = vld [vmem:[%s0 + $0x200] sm:$0xff]
    %v138 = vld [vmem:[%s0 + $0x208] sm:$0xff]
    %v139 = vld [vmem:[%s0 + $0x210] sm:$0xff]
    %v140 = vld [vmem:[%s0 + $0x218] sm:$0xff]
    %v141 = vld [vmem:[%s0 + $0x220] sm:$0xff]
    %v142 = vld [vmem:[%s0 + $0x228] sm:$0xff]
    %v143 = vld [vmem:[%s0 + $0x230] sm:$0xff]
    %v144 = vld [vmem:[%s0 + $0x238] sm:$0xff]
    %v145 = vld [vmem:[%s0 + $0x240] sm:$0xff]
    %v146 = vld [vmem:[%s0 + $0x248] sm:$0xff]
    %v147 = vld [vmem:[%s0 + $0x250] sm:$0xff]
    %v148 = vld [vmem:[%s0 + $0x258] sm:$0xff]
    %v149 = vld [vmem:[%s0 + $0x260] sm:$0xff]
    %v150 = vld [vmem:[%s0 + $0x268] sm:$0xff]
    %v151 = vld [vmem:[%s0 + $0x270] sm:$0xff]
    %v152 = vld [vmem:[%s0 + $0x278] sm:$0xff]
    %v153 = vld [vmem:[%s1] sm:$0xf]
    %v154 = vld [vmem:[%s1 + $0x4] sm:$0xf]
    %v155 = vld [vmem:[%s1 + $0x8] sm:$0xf]
    %v156 = vld [vmem:[%s1 + $0xc] sm:$0xf]
    %v157 = vld [vmem:[%s1 + $0x10] sm:$0xf]
    %v158 = vld [vmem:[%s1 + $0x14] sm:$0xf]
    %v159 = vld [vmem:[%s1 + $0x18] sm:$0xf]
    %v160 = vld [vmem:[%s1 + $0x1c] sm:$0xf]
    %v161 = vpack.c.bf16 %v74, %v73
    %v162 = vpack.c.bf16 %v76, %v75
    %v163 = vpack.c.bf16 %v78, %v77
    %v164 = vpack.c.bf16 %v80, %v79
    %v165 = vpack.c.bf16 %v82, %v81
    %v166 = vpack.c.bf16 %v84, %v83
    %v167 = vpack.c.bf16 %v86, %v85
    %v168 = vpack.c.bf16 %v88, %v87
    %v169 = vpack.c.bf16 %v90, %v89
    %v170 = vpack.c.bf16 %v92, %v91
    %v171 = vpack.c.bf16 %v94, %v93
    %v172 = vpack.c.bf16 %v96, %v95
    %v173 = vpack.c.bf16 %v98, %v97
    %v174 = vpack.c.bf16 %v100, %v99
    %v175 = vpack.c.bf16 %v102, %v101
    %v176 = vpack.c.bf16 %v104, %v103
    %v177 = vpack.c.bf16 %v106, %v105
    %v178 = vpack.c.bf16 %v108, %v107
    %v179 = vpack.c.bf16 %v110, %v109
    %v180 = vpack.c.bf16 %v112, %v111
    %v181 = vpack.c.bf16 %v114, %v113
    %v182 = vpack.c.bf16 %v116, %v115
    %v183 = vpack.c.bf16 %v118, %v117
    %v184 = vpack.c.bf16 %v120, %v119
    %v185 = vpack.c.bf16 %v122, %v121
    %v186 = vpack.c.bf16 %v124, %v123
    %v187 = vpack.c.bf16 %v126, %v125
    %v188 = vpack.c.bf16 %v128, %v127
    %v189 = vpack.c.bf16 %v130, %v129
    %v190 = vpack.c.bf16 %v132, %v131
    %v191 = vpack.c.bf16 %v134, %v133
    %v192 = vpack.c.bf16 %v136, %v135
    %v193 = vpack.c.bf16 %v138, %v137
    %v194 = vpack.c.bf16 %v140, %v139
    %v195 = vpack.c.bf16 %v142, %v141
    %v196 = vpack.c.bf16 %v144, %v143
    %v197 = vpack.c.bf16 %v146, %v145
    %v198 = vpack.c.bf16 %v148, %v147
    %v199 = vpack.c.bf16 %v150, %v149
    %v200 = vpack.c.bf16 %v152, %v151
    %v209 = vunpack.c.l.b16 %v153
    %v210 = vunpack.c.l.b16 %v154
    %v211 = vunpack.c.l.b16 %v155
    %v212 = vunpack.c.l.b16 %v156
    %v213 = vunpack.c.l.b16 %v157
    %v214 = vunpack.c.l.b16 %v158
    %v215 = vunpack.c.l.b16 %v159
    %v216 = vunpack.c.l.b16 %v160
    %v217 = vpack.c.b16 %v210, %v209
    %v218 = vpack.c.b16 %v212, %v211
    %v219 = vpack.c.b16 %v214, %v213
    %v220 = vpack.c.b16 %v216, %v215
    %vm225 = vcmask 523264
    %v227 = vsel %vm225, %v161, 0
    %v230 = vsel %vm225, %v162, 0
    %v233 = vsel %vm225, %v163, 0
    %v236 = vsel %vm225, %v164, 0
    %v239 = vsel %vm225, %v165, 0
    %v242 = vsel %vm225, %v166, 0
    %v245 = vsel %vm225, %v167, 0
    %v248 = vsel %vm225, %v168, 0
    %v251 = vsel %vm225, %v169, 0
    %v254 = vsel %vm225, %v170, 0
    %v257 = vsel %vm225, %v171, 0
    %v260 = vsel %vm225, %v172, 0
    %v263 = vsel %vm225, %v173, 0
    %v266 = vsel %vm225, %v174, 0
    %v269 = vsel %vm225, %v175, 0
    %v272 = vsel %vm225, %v176, 0
    %v275 = vsel %vm225, %v177, 0
    %v278 = vsel %vm225, %v178, 0
    %v281 = vsel %vm225, %v179, 0
    %v284 = vsel %vm225, %v180, 0
    %v287 = vsel %vm225, %v181, 0
    %v290 = vsel %vm225, %v182, 0
    %v293 = vsel %vm225, %v183, 0
    %v296 = vsel %vm225, %v184, 0
    %v299 = vsel %vm225, %v185, 0
    %v302 = vsel %vm225, %v186, 0
    %v305 = vsel %vm225, %v187, 0
    %v308 = vsel %vm225, %v188, 0
    %v311 = vsel %vm225, %v189, 0
    %v314 = vsel %vm225, %v190, 0
    %v317 = vsel %vm225, %v191, 0
    %v320 = vsel %vm225, %v192, 0
    %v323 = vsel %vm225, %v193, 0
    %v326 = vsel %vm225, %v194, 0
    %v329 = vsel %vm225, %v195, 0
    %v332 = vsel %vm225, %v196, 0
    %v335 = vsel %vm225, %v197, 0
    %v338 = vsel %vm225, %v198, 0
    %v341 = vsel %vm225, %v199, 0
    %v344 = vsel %vm225, %v200, 0
    %346 = vmatpush.bf16.msra.mxu0 0
    %347 = vmatpush.bf16.msra.mxu0 0
    %348 = vmatpush.bf16.msra.mxu0 0
    %349 = vmatpush.bf16.msra.mxu0 0
    %350 = vmatpush.bf16.msra.mxu0 %v220
    %351 = vmatpush.bf16.msra.mxu0 %v219
    %352 = vmatpush.bf16.msra.mxu0 %v218
    %353 = vmatpush.bf16.msra.mxu0 %v217
    %354 = vmatmul.bf16.gmra.mxu0 %v227
    %v355 = vpop.f32.mrf.mxu0
    %v356 = vadd.f32 0.0, %v355
    %v357 = vpop.f32.mrf.mxu0
    %v358 = vadd.f32 0.0, %v357
    %359 = vmatmul.bf16.gmra.mxu0 %v230
    %v360 = vpop.f32.mrf.mxu0
    %v361 = vadd.f32 0.0, %v360
    %v362 = vpop.f32.mrf.mxu0
    %v363 = vadd.f32 0.0, %v362
    %364 = vmatmul.bf16.gmra.mxu0 %v233
    %v365 = vpop.f32.mrf.mxu0
    %v366 = vadd.f32 0.0, %v365
    %v367 = vpop.f32.mrf.mxu0
    %v368 = vadd.f32 0.0, %v367
    %369 = vmatmul.bf16.gmra.mxu0 %v236
    %v370 = vpop.f32.mrf.mxu0
    %v371 = vadd.f32 0.0, %v370
    %v372 = vpop.f32.mrf.mxu0
    %v373 = vadd.f32 0.0, %v372
    %374 = vmatmul.bf16.gmra.mxu0 %v239
    %v375 = vpop.f32.mrf.mxu0
    %v376 = vadd.f32 0.0, %v375
    %v377 = vpop.f32.mrf.mxu0
    %v378 = vadd.f32 0.0, %v377
    %379 = vmatmul.bf16.gmra.mxu0 %v242
    %v380 = vpop.f32.mrf.mxu0
    %v381 = vadd.f32 0.0, %v380
    %v382 = vpop.f32.mrf.mxu0
    %v383 = vadd.f32 0.0, %v382
    %384 = vmatmul.bf16.gmra.mxu0 %v245
    %v385 = vpop.f32.mrf.mxu0
    %v386 = vadd.f32 0.0, %v385
    %v387 = vpop.f32.mrf.mxu0
    %v388 = vadd.f32 0.0, %v387
    %389 = vmatmul.bf16.gmra.mxu0 %v248
    %v390 = vpop.f32.mrf.mxu0
    %v391 = vadd.f32 0.0, %v390
    %v392 = vpop.f32.mrf.mxu0
    %v393 = vadd.f32 0.0, %v392
    %394 = vmatmul.bf16.gmra.mxu0 %v251
    %v395 = vpop.f32.mrf.mxu0
    %v396 = vadd.f32 0.0, %v395
    %v397 = vpop.f32.mrf.mxu0
    %v398 = vadd.f32 0.0, %v397
    %399 = vmatmul.bf16.gmra.mxu0 %v254
    %v400 = vpop.f32.mrf.mxu0
    %v401 = vadd.f32 0.0, %v400
    %v402 = vpop.f32.mrf.mxu0
    %v403 = vadd.f32 0.0, %v402
    %404 = vmatmul.bf16.gmra.mxu0 %v257
    %v405 = vpop.f32.mrf.mxu0
    %v406 = vadd.f32 0.0, %v405
    %v407 = vpop.f32.mrf.mxu0
    %v408 = vadd.f32 0.0, %v407
    %409 = vmatmul.bf16.gmra.mxu0 %v260
    %v410 = vpop.f32.mrf.mxu0
    %v411 = vadd.f32 0.0, %v410
    %v412 = vpop.f32.mrf.mxu0
    %v413 = vadd.f32 0.0, %v412
    %414 = vmatmul.bf16.gmra.mxu0 %v263
    %v415 = vpop.f32.mrf.mxu0
    %v416 = vadd.f32 0.0, %v415
    %v417 = vpop.f32.mrf.mxu0
    %v418 = vadd.f32 0.0, %v417
    %419 = vmatmul.bf16.gmra.mxu0 %v266
    %v420 = vpop.f32.mrf.mxu0
    %v421 = vadd.f32 0.0, %v420
    %v422 = vpop.f32.mrf.mxu0
    %v423 = vadd.f32 0.0, %v422
    %424 = vmatmul.bf16.gmra.mxu0 %v269
    %v425 = vpop.f32.mrf.mxu0
    %v426 = vadd.f32 0.0, %v425
    %v427 = vpop.f32.mrf.mxu0
    %v428 = vadd.f32 0.0, %v427
    %429 = vmatmul.bf16.gmra.mxu0 %v272
    %v430 = vpop.f32.mrf.mxu0
    %v431 = vadd.f32 0.0, %v430
    %v432 = vpop.f32.mrf.mxu0
    %v433 = vadd.f32 0.0, %v432
    %434 = vmatmul.bf16.gmra.mxu0 %v275
    %v435 = vpop.f32.mrf.mxu0
    %v436 = vadd.f32 0.0, %v435
    %v437 = vpop.f32.mrf.mxu0
    %v438 = vadd.f32 0.0, %v437
    %439 = vmatmul.bf16.gmra.mxu0 %v278
    %v440 = vpop.f32.mrf.mxu0
    %v441 = vadd.f32 0.0, %v440
    %v442 = vpop.f32.mrf.mxu0
    %v443 = vadd.f32 0.0, %v442
    %444 = vmatmul.bf16.gmra.mxu0 %v281
    %v445 = vpop.f32.mrf.mxu0
    %v446 = vadd.f32 0.0, %v445
    %v447 = vpop.f32.mrf.mxu0
    %v448 = vadd.f32 0.0, %v447
    %449 = vmatmul.bf16.gmra.mxu0 %v284
    %v450 = vpop.f32.mrf.mxu0
    %v451 = vadd.f32 0.0, %v450
    %v452 = vpop.f32.mrf.mxu0
    %v453 = vadd.f32 0.0, %v452
    %454 = vmatmul.bf16.gmra.mxu0 %v287
    %v455 = vpop.f32.mrf.mxu0
    %v456 = vadd.f32 0.0, %v455
    %v457 = vpop.f32.mrf.mxu0
    %v458 = vadd.f32 0.0, %v457
    %459 = vmatmul.bf16.gmra.mxu0 %v290
    %v460 = vpop.f32.mrf.mxu0
    %v461 = vadd.f32 0.0, %v460
    %v462 = vpop.f32.mrf.mxu0
    %v463 = vadd.f32 0.0, %v462
    %464 = vmatmul.bf16.gmra.mxu0 %v293
    %v465 = vpop.f32.mrf.mxu0
    %v466 = vadd.f32 0.0, %v465
    %v467 = vpop.f32.mrf.mxu0
    %v468 = vadd.f32 0.0, %v467
    %469 = vmatmul.bf16.gmra.mxu0 %v296
    %v470 = vpop.f32.mrf.mxu0
    %v471 = vadd.f32 0.0, %v470
    %v472 = vpop.f32.mrf.mxu0
    %v473 = vadd.f32 0.0, %v472
    %474 = vmatmul.bf16.gmra.mxu0 %v299
    %v475 = vpop.f32.mrf.mxu0
    %v476 = vadd.f32 0.0, %v475
    %v477 = vpop.f32.mrf.mxu0
    %v478 = vadd.f32 0.0, %v477
    %479 = vmatmul.bf16.gmra.mxu0 %v302
    %v480 = vpop.f32.mrf.mxu0
    %v481 = vadd.f32 0.0, %v480
    %v482 = vpop.f32.mrf.mxu0
    %v483 = vadd.f32 0.0, %v482
    %484 = vmatmul.bf16.gmra.mxu0 %v305
    %v485 = vpop.f32.mrf.mxu0
    %v486 = vadd.f32 0.0, %v485
    %v487 = vpop.f32.mrf.mxu0
    %v488 = vadd.f32 0.0, %v487
    %489 = vmatmul.bf16.gmra.mxu0 %v308
    %v490 = vpop.f32.mrf.mxu0
    %v491 = vadd.f32 0.0, %v490
    %v492 = vpop.f32.mrf.mxu0
    %v493 = vadd.f32 0.0, %v492
    %494 = vmatmul.bf16.gmra.mxu0 %v311
    %v495 = vpop.f32.mrf.mxu0
    %v496 = vadd.f32 0.0, %v495
    %v497 = vpop.f32.mrf.mxu0
    %v498 = vadd.f32 0.0, %v497
    %499 = vmatmul.bf16.gmra.mxu0 %v314
    %v500 = vpop.f32.mrf.mxu0
    %v501 = vadd.f32 0.0, %v500
    %v502 = vpop.f32.mrf.mxu0
    %v503 = vadd.f32 0.0, %v502
    %504 = vmatmul.bf16.gmra.mxu0 %v317
    %v505 = vpop.f32.mrf.mxu0
    %v506 = vadd.f32 0.0, %v505
    %v507 = vpop.f32.mrf.mxu0
    %v508 = vadd.f32 0.0, %v507
    %509 = vmatmul.bf16.gmra.mxu0 %v320
    %v510 = vpop.f32.mrf.mxu0
    %v511 = vadd.f32 0.0, %v510
    %v512 = vpop.f32.mrf.mxu0
    %v513 = vadd.f32 0.0, %v512
    %514 = vmatmul.bf16.gmra.mxu0 %v323
    %v515 = vpop.f32.mrf.mxu0
    %v516 = vadd.f32 0.0, %v515
    %v517 = vpop.f32.mrf.mxu0
    %v518 = vadd.f32 0.0, %v517
    %519 = vmatmul.bf16.gmra.mxu0 %v326
    %v520 = vpop.f32.mrf.mxu0
    %v521 = vadd.f32 0.0, %v520
    %v522 = vpop.f32.mrf.mxu0
    %v523 = vadd.f32 0.0, %v522
    %524 = vmatmul.bf16.gmra.mxu0 %v329
    %v525 = vpop.f32.mrf.mxu0
    %v526 = vadd.f32 0.0, %v525
    %v527 = vpop.f32.mrf.mxu0
    %v528 = vadd.f32 0.0, %v527
    %529 = vmatmul.bf16.gmra.mxu0 %v332
    %v530 = vpop.f32.mrf.mxu0
    %v531 = vadd.f32 0.0, %v530
    %v532 = vpop.f32.mrf.mxu0
    %v533 = vadd.f32 0.0, %v532
    %534 = vmatmul.bf16.gmra.mxu0 %v335
    %v535 = vpop.f32.mrf.mxu0
    %v536 = vadd.f32 0.0, %v535
    %v537 = vpop.f32.mrf.mxu0
    %v538 = vadd.f32 0.0, %v537
    %539 = vmatmul.bf16.gmra.mxu0 %v338
    %v540 = vpop.f32.mrf.mxu0
    %v541 = vadd.f32 0.0, %v540
    %v542 = vpop.f32.mrf.mxu0
    %v543 = vadd.f32 0.0, %v542
    %544 = vmatmul.bf16.gmra.mxu0 %v341
    %v545 = vpop.f32.mrf.mxu0
    %v546 = vadd.f32 0.0, %v545
    %v547 = vpop.f32.mrf.mxu0
    %v548 = vadd.f32 0.0, %v547
    %549 = vmatmul.bf16.gmra.mxu0 %v344
    %v550 = vpop.f32.mrf.mxu0
    %v551 = vadd.f32 0.0, %v550
    %v552 = vpop.f32.mrf.mxu0
    %v553 = vadd.f32 0.0, %v552
    %554 = vdwg.mxu0
    %v555 = vmax.f32 %v356, %v396
    %v556 = vmax.f32 %v555, %v436
    %v557 = vmax.f32 %v556, %v476
    %v558 = vmax.f32 %v557, %v516
    %v559 = vmax.f32 %v358, %v398
    %v560 = vmax.f32 %v559, %v438
    %v561 = vmax.f32 %v560, %v478
    %v562 = vmax.f32 %v561, %v518
    %v563 = vmax.f32 %v361, %v401
    %v564 = vmax.f32 %v563, %v441
    %v565 = vmax.f32 %v564, %v481
    %v566 = vmax.f32 %v565, %v521
    %v567 = vmax.f32 %v363, %v403
    %v568 = vmax.f32 %v567, %v443
    %v569 = vmax.f32 %v568, %v483
    %v570 = vmax.f32 %v569, %v523
    %v571 = vmax.f32 %v366, %v406
    %v572 = vmax.f32 %v571, %v446
    %v573 = vmax.f32 %v572, %v486
    %v574 = vmax.f32 %v573, %v526
    %v575 = vmax.f32 %v368, %v408
    %v576 = vmax.f32 %v575, %v448
    %v577 = vmax.f32 %v576, %v488
    %v578 = vmax.f32 %v577, %v528
    %v579 = vmax.f32 %v371, %v411
    %v580 = vmax.f32 %v579, %v451
    %v581 = vmax.f32 %v580, %v491
    %v582 = vmax.f32 %v581, %v531
    %v583 = vmax.f32 %v373, %v413
    %v584 = vmax.f32 %v583, %v453
    %v585 = vmax.f32 %v584, %v493
    %v586 = vmax.f32 %v585, %v533
    %v587 = vmax.f32 %v376, %v416
    %v588 = vmax.f32 %v587, %v456
    %v589 = vmax.f32 %v588, %v496
    %v590 = vmax.f32 %v589, %v536
    %v591 = vmax.f32 %v378, %v418
    %v592 = vmax.f32 %v591, %v458
    %v593 = vmax.f32 %v592, %v498
    %v594 = vmax.f32 %v593, %v538
    %v595 = vmax.f32 %v381, %v421
    %v596 = vmax.f32 %v595, %v461
    %v597 = vmax.f32 %v596, %v501
    %v598 = vmax.f32 %v597, %v541
    %v599 = vmax.f32 %v383, %v423
    %v600 = vmax.f32 %v599, %v463
    %v601 = vmax.f32 %v600, %v503
    %v602 = vmax.f32 %v601, %v543
    %v603 = vmax.f32 %v386, %v426
    %v604 = vmax.f32 %v603, %v466
    %v605 = vmax.f32 %v604, %v506
    %v606 = vmax.f32 %v605, %v546
    %v607 = vmax.f32 %v388, %v428
    %v608 = vmax.f32 %v607, %v468
    %v609 = vmax.f32 %v608, %v508
    %v610 = vmax.f32 %v609, %v548
    %v611 = vmax.f32 %v391, %v431
    %v612 = vmax.f32 %v611, %v471
    %v613 = vmax.f32 %v612, %v511
    %v614 = vmax.f32 %v613, %v551
    %v615 = vmax.f32 %v393, %v433
    %v616 = vmax.f32 %v615, %v473
    %v617 = vmax.f32 %v616, %v513
    %v618 = vmax.f32 %v617, %v553
    %v619 = vld [vmem:[%s2] sm:$0x1]
    %v621 = vperm.slane %v619, 0
    %v623 = vadd.f32 %v558, %v621
    %v624 = vadd.f32 %v562, %v621
    %v625 = vadd.f32 %v566, %v621
    %v626 = vadd.f32 %v570, %v621
    %v627 = vadd.f32 %v574, %v621
    %v628 = vadd.f32 %v578, %v621
    %v629 = vadd.f32 %v582, %v621
    %v630 = vadd.f32 %v586, %v621
    %v631 = vadd.f32 %v590, %v621
    %v632 = vadd.f32 %v594, %v621
    %v633 = vadd.f32 %v598, %v621
    %v634 = vadd.f32 %v602, %v621
    %v635 = vadd.f32 %v606, %v621
    %v636 = vadd.f32 %v610, %v621
    %v637 = vadd.f32 %v614, %v621
    %v638 = vadd.f32 %v618, %v621
    %v639 = vtanh.pop %v623
    %v640 = vtanh.pop %v624
    %v641 = vtanh.pop %v625
    %v642 = vtanh.pop %v626
    %v643 = vtanh.pop %v627
    %v644 = vtanh.pop %v628
    %v645 = vtanh.pop %v629
    %v646 = vtanh.pop %v630
    %v647 = vtanh.pop %v631
    %v648 = vtanh.pop %v632
    %v649 = vtanh.pop %v633
    %v650 = vtanh.pop %v634
    %v651 = vtanh.pop %v635
    %v652 = vtanh.pop %v636
    %v653 = vtanh.pop %v637
    %v654 = vtanh.pop %v638
    %v655 = vpack.c.bf16 %v639, %v639
    %v656 = vpack.c.bf16 %v640, %v640
    %v657 = vpack.c.bf16 %v641, %v641
    %v658 = vpack.c.bf16 %v642, %v642
    %v659 = vpack.c.bf16 %v643, %v643
    %v660 = vpack.c.bf16 %v644, %v644
    %v661 = vpack.c.bf16 %v645, %v645
    %v662 = vpack.c.bf16 %v646, %v646
    %v663 = vpack.c.bf16 %v647, %v647
    %v664 = vpack.c.bf16 %v648, %v648
    %v665 = vpack.c.bf16 %v649, %v649
    %v666 = vpack.c.bf16 %v650, %v650
    %v667 = vpack.c.bf16 %v651, %v651
    %v668 = vpack.c.bf16 %v652, %v652
    %v669 = vpack.c.bf16 %v653, %v653
    %v670 = vpack.c.bf16 %v654, %v654
    %v671 = vld [vmem:[%s3] sm:$0xff]
    %v672 = vld [vmem:[%s3 + $0x8] sm:$0xff]
    %v673 = vld [vmem:[%s3 + $0x10] sm:$0xff]
    %v674 = vld [vmem:[%s3 + $0x18] sm:$0xff]
    %v675 = vld [vmem:[%s3 + $0x20] sm:$0xff]
    %v676 = vld [vmem:[%s3 + $0x28] sm:$0xff]
    %v677 = vld [vmem:[%s3 + $0x30] sm:$0xff]
    %v678 = vld [vmem:[%s3 + $0x38] sm:$0xff]
    %v679 = vld [vmem:[%s3 + $0x40] sm:$0xff]
    %v680 = vld [vmem:[%s3 + $0x48] sm:$0xff]
    %v681 = vld [vmem:[%s3 + $0x50] sm:$0xff]
    %v682 = vld [vmem:[%s3 + $0x58] sm:$0xff]
    %v683 = vld [vmem:[%s3 + $0x60] sm:$0xff]
    %v684 = vld [vmem:[%s3 + $0x68] sm:$0xff]
    %v685 = vld [vmem:[%s3 + $0x70] sm:$0xff]
    %v686 = vld [vmem:[%s3 + $0x78] sm:$0xff]
    %v687 = vld [vmem:[%s3 + $0x80] sm:$0xff]
    %v688 = vld [vmem:[%s3 + $0x88] sm:$0xff]
    %v689 = vld [vmem:[%s3 + $0x90] sm:$0xff]
    %v690 = vld [vmem:[%s3 + $0x98] sm:$0xff]
    %v691 = vld [vmem:[%s3 + $0xa0] sm:$0xff]
    %v692 = vld [vmem:[%s3 + $0xa8] sm:$0xff]
    %v693 = vld [vmem:[%s3 + $0xb0] sm:$0xff]
    %v694 = vld [vmem:[%s3 + $0xb8] sm:$0xff]
    %v695 = vld [vmem:[%s3 + $0xc0] sm:$0xff]
    %v696 = vld [vmem:[%s3 + $0xc8] sm:$0xff]
    %v697 = vld [vmem:[%s3 + $0xd0] sm:$0xff]
    %v698 = vld [vmem:[%s3 + $0xd8] sm:$0xff]
    %v699 = vld [vmem:[%s3 + $0xe0] sm:$0xff]
    %v700 = vld [vmem:[%s3 + $0xe8] sm:$0xff]
    %v701 = vld [vmem:[%s3 + $0xf0] sm:$0xff]
    %v702 = vld [vmem:[%s3 + $0xf8] sm:$0xff]
    %v703 = vld [vmem:[%s3 + $0x100] sm:$0xff]
    %v704 = vld [vmem:[%s3 + $0x108] sm:$0xff]
    %v705 = vld [vmem:[%s3 + $0x110] sm:$0xff]
    %v706 = vld [vmem:[%s3 + $0x118] sm:$0xff]
    %v707 = vld [vmem:[%s3 + $0x120] sm:$0xff]
    %v708 = vld [vmem:[%s3 + $0x128] sm:$0xff]
    %v709 = vld [vmem:[%s3 + $0x130] sm:$0xff]
    %v710 = vld [vmem:[%s3 + $0x138] sm:$0xff]
    %v711 = vld [vmem:[%s3 + $0x140] sm:$0xff]
    %v712 = vld [vmem:[%s3 + $0x148] sm:$0xff]
    %v713 = vld [vmem:[%s3 + $0x150] sm:$0xff]
    %v714 = vld [vmem:[%s3 + $0x158] sm:$0xff]
    %v715 = vld [vmem:[%s3 + $0x160] sm:$0xff]
    %v716 = vld [vmem:[%s3 + $0x168] sm:$0xff]
    %v717 = vld [vmem:[%s3 + $0x170] sm:$0xff]
    %v718 = vld [vmem:[%s3 + $0x178] sm:$0xff]
    %v719 = vld [vmem:[%s3 + $0x180] sm:$0xff]
    %v720 = vld [vmem:[%s3 + $0x188] sm:$0xff]
    %v721 = vld [vmem:[%s3 + $0x190] sm:$0xff]
    %v722 = vld [vmem:[%s3 + $0x198] sm:$0xff]
    %v723 = vld [vmem:[%s3 + $0x1a0] sm:$0xff]
    %v724 = vld [vmem:[%s3 + $0x1a8] sm:$0xff]
    %v725 = vld [vmem:[%s3 + $0x1b0] sm:$0xff]
    %v726 = vld [vmem:[%s3 + $0x1b8] sm:$0xff]
    %v727 = vld [vmem:[%s3 + $0x1c0] sm:$0xff]
    %v728 = vld [vmem:[%s3 + $0x1c8] sm:$0xff]
    %v729 = vld [vmem:[%s3 + $0x1d0] sm:$0xff]
    %v730 = vld [vmem:[%s3 + $0x1d8] sm:$0xff]
    %v731 = vld [vmem:[%s3 + $0x1e0] sm:$0xff]
    %v732 = vld [vmem:[%s3 + $0x1e8] sm:$0xff]
    %v733 = vld [vmem:[%s3 + $0x1f0] sm:$0xff]
    %v734 = vld [vmem:[%s3 + $0x1f8] sm:$0xff]
    %v751 = vunpack.c.l.b16 %v655
    %v752 = vunpack.c.l.b16 %v656
    %v753 = vunpack.c.l.b16 %v657
    %v754 = vunpack.c.l.b16 %v658
    %v755 = vunpack.c.l.b16 %v659
    %v756 = vunpack.c.l.b16 %v660
    %v757 = vunpack.c.l.b16 %v661
    %v758 = vunpack.c.l.b16 %v662
    %v759 = vunpack.c.l.b16 %v663
    %v760 = vunpack.c.l.b16 %v664
    %v761 = vunpack.c.l.b16 %v665
    %v762 = vunpack.c.l.b16 %v666
    %v763 = vunpack.c.l.b16 %v667
    %v764 = vunpack.c.l.b16 %v668
    %v765 = vunpack.c.l.b16 %v669
    %v766 = vunpack.c.l.b16 %v670
    %v767 = vpack.c.b16 %v752, %v751
    %v768 = vpack.c.b16 %v754, %v753
    %v769 = vpack.c.b16 %v756, %v755
    %v770 = vpack.c.b16 %v758, %v757
    %v771 = vpack.c.b16 %v760, %v759
    %v772 = vpack.c.b16 %v762, %v761
    %v773 = vpack.c.b16 %v764, %v763
    %v774 = vpack.c.b16 %v766, %v765
    %vm775 = vsmask.f32 7424
    %v777 = vshrl.u32 %v767, 16
    %v779 = vshll.u32 %v767, 16
    %v781 = vrot.slane %v779, 1
    %v782 = vor.u32 %v777, %v781
    %v784 = vshll.u32 %v768, 16
    %v786 = vrot.slane %v784, 1
    %v787 = vsel %vm775, %v782, %v786
    %v788 = vshrl.u32 %v768, 16
    %v790 = vor.u32 %v788, %v786
    %v792 = vshll.u32 %v769, 16
    %v794 = vrot.slane %v792, 1
    %v795 = vsel %vm775, %v790, %v794
    %v796 = vshrl.u32 %v769, 16
    %v798 = vor.u32 %v796, %v794
    %v800 = vshll.u32 %v770, 16
    %v802 = vrot.slane %v800, 1
    %v803 = vsel %vm775, %v798, %v802
    %v804 = vshrl.u32 %v770, 16
    %v806 = vor.u32 %v804, %v802
    %v808 = vshll.u32 %v771, 16
    %v810 = vrot.slane %v808, 1
    %v811 = vsel %vm775, %v806, %v810
    %v812 = vshrl.u32 %v771, 16
    %v814 = vor.u32 %v812, %v810
    %v816 = vshll.u32 %v772, 16
    %v818 = vrot.slane %v816, 1
    %v819 = vsel %vm775, %v814, %v818
    %v820 = vshrl.u32 %v772, 16
    %v822 = vor.u32 %v820, %v818
    %v824 = vshll.u32 %v773, 16
    %v826 = vrot.slane %v824, 1
    %v827 = vsel %vm775, %v822, %v826
    %v828 = vshrl.u32 %v773, 16
    %v830 = vor.u32 %v828, %v826
    %v832 = vshll.u32 %v774, 16
    %v834 = vrot.slane %v832, 1
    %v835 = vsel %vm775, %v830, %v834
    %v836 = vshrl.u32 %v774, 16
    %v838 = vor.u32 %v836, %v834
    %v847 = vpack.c.b16 %v751, %v751
    %v849 = vshll.u32 %v847, 16
    %v851 = vrot.slane %v849, 1
    %vm853 = vcmask 1047552
    %vm854 = vmand %vm853, %vm775
    %v855 = vsel %vm854, %v838, %v851
    %s856 = scalar_lea.vmem %s3, 512
    %v857 = vld [vmem:[%s856] sm:$0xff]
    %v858 = vld [vmem:[%s856 + $0x8] sm:$0xff]
    %v859 = vld [vmem:[%s856 + $0x10] sm:$0xff]
    %v860 = vld [vmem:[%s856 + $0x18] sm:$0xff]
    %v861 = vld [vmem:[%s856 + $0x20] sm:$0xff]
    %v862 = vld [vmem:[%s856 + $0x28] sm:$0xff]
    %v863 = vld [vmem:[%s856 + $0x30] sm:$0xff]
    %v864 = vld [vmem:[%s856 + $0x38] sm:$0xff]
    %v865 = vld [vmem:[%s856 + $0x40] sm:$0xff]
    %v866 = vld [vmem:[%s856 + $0x48] sm:$0xff]
    %v867 = vld [vmem:[%s856 + $0x50] sm:$0xff]
    %v868 = vld [vmem:[%s856 + $0x58] sm:$0xff]
    %v869 = vld [vmem:[%s856 + $0x60] sm:$0xff]
    %v870 = vld [vmem:[%s856 + $0x68] sm:$0xff]
    %v871 = vld [vmem:[%s856 + $0x70] sm:$0xff]
    %v872 = vld [vmem:[%s856 + $0x78] sm:$0xff]
    %v873 = vld [vmem:[%s856 + $0x80] sm:$0xff]
    %v874 = vld [vmem:[%s856 + $0x88] sm:$0xff]
    %v875 = vld [vmem:[%s856 + $0x90] sm:$0xff]
    %v876 = vld [vmem:[%s856 + $0x98] sm:$0xff]
    %v877 = vld [vmem:[%s856 + $0xa0] sm:$0xff]
    %v878 = vld [vmem:[%s856 + $0xa8] sm:$0xff]
    %v879 = vld [vmem:[%s856 + $0xb0] sm:$0xff]
    %v880 = vld [vmem:[%s856 + $0xb8] sm:$0xff]
    %v881 = vld [vmem:[%s856 + $0xc0] sm:$0xff]
    %v882 = vld [vmem:[%s856 + $0xc8] sm:$0xff]
    %v883 = vld [vmem:[%s856 + $0xd0] sm:$0xff]
    %v884 = vld [vmem:[%s856 + $0xd8] sm:$0xff]
    %v885 = vld [vmem:[%s856 + $0xe0] sm:$0xff]
    %v886 = vld [vmem:[%s856 + $0xe8] sm:$0xff]
    %v887 = vld [vmem:[%s856 + $0xf0] sm:$0xff]
    %v888 = vld [vmem:[%s856 + $0xf8] sm:$0xff]
    %v889 = vld [vmem:[%s856 + $0x100] sm:$0xff]
    %v890 = vld [vmem:[%s856 + $0x108] sm:$0xff]
    %v891 = vld [vmem:[%s856 + $0x110] sm:$0xff]
    %v892 = vld [vmem:[%s856 + $0x118] sm:$0xff]
    %v893 = vld [vmem:[%s856 + $0x120] sm:$0xff]
    %v894 = vld [vmem:[%s856 + $0x128] sm:$0xff]
    %v895 = vld [vmem:[%s856 + $0x130] sm:$0xff]
    %v896 = vld [vmem:[%s856 + $0x138] sm:$0xff]
    %v897 = vld [vmem:[%s856 + $0x140] sm:$0xff]
    %v898 = vld [vmem:[%s856 + $0x148] sm:$0xff]
    %v899 = vld [vmem:[%s856 + $0x150] sm:$0xff]
    %v900 = vld [vmem:[%s856 + $0x158] sm:$0xff]
    %v901 = vld [vmem:[%s856 + $0x160] sm:$0xff]
    %v902 = vld [vmem:[%s856 + $0x168] sm:$0xff]
    %v903 = vld [vmem:[%s856 + $0x170] sm:$0xff]
    %v904 = vld [vmem:[%s856 + $0x178] sm:$0xff]
    %v905 = vld [vmem:[%s856 + $0x180] sm:$0xff]
    %v906 = vld [vmem:[%s856 + $0x188] sm:$0xff]
    %v907 = vld [vmem:[%s856 + $0x190] sm:$0xff]
    %v908 = vld [vmem:[%s856 + $0x198] sm:$0xff]
    %v909 = vld [vmem:[%s856 + $0x1a0] sm:$0xff]
    %v910 = vld [vmem:[%s856 + $0x1a8] sm:$0xff]
    %v911 = vld [vmem:[%s856 + $0x1b0] sm:$0xff]
    %v912 = vld [vmem:[%s856 + $0x1b8] sm:$0xff]
    %v913 = vld [vmem:[%s856 + $0x1c0] sm:$0xff]
    %v914 = vld [vmem:[%s856 + $0x1c8] sm:$0xff]
    %v915 = vld [vmem:[%s856 + $0x1d0] sm:$0xff]
    %v916 = vld [vmem:[%s856 + $0x1d8] sm:$0xff]
    %v917 = vld [vmem:[%s856 + $0x1e0] sm:$0xff]
    %v918 = vld [vmem:[%s856 + $0x1e8] sm:$0xff]
    %v919 = vld [vmem:[%s856 + $0x1f0] sm:$0xff]
    %v920 = vld [vmem:[%s856 + $0x1f8] sm:$0xff]
    %v985 = vunpack.c.l.b16 %v857
    %v986 = vunpack.c.h.b16 %v857
    %v987 = vunpack.c.l.b16 %v858
    %v988 = vunpack.c.h.b16 %v858
    %v989 = vunpack.c.l.b16 %v859
    %v990 = vunpack.c.h.b16 %v859
    %v991 = vunpack.c.l.b16 %v860
    %v992 = vunpack.c.h.b16 %v860
    %v993 = vunpack.c.l.b16 %v861
    %v994 = vunpack.c.h.b16 %v861
    %v995 = vunpack.c.l.b16 %v862
    %v996 = vunpack.c.h.b16 %v862
    %v997 = vunpack.c.l.b16 %v863
    %v998 = vunpack.c.h.b16 %v863
    %v999 = vunpack.c.l.b16 %v864
    %v1000 = vunpack.c.h.b16 %v864
    %v1001 = vunpack.c.l.b16 %v865
    %v1002 = vunpack.c.h.b16 %v865
    %v1003 = vunpack.c.l.b16 %v866
    %v1004 = vunpack.c.h.b16 %v866
    %v1005 = vunpack.c.l.b16 %v867
    %v1006 = vunpack.c.h.b16 %v867
    %v1007 = vunpack.c.l.b16 %v868
    %v1008 = vunpack.c.h.b16 %v868
    %v1009 = vunpack.c.l.b16 %v869
    %v1010 = vunpack.c.h.b16 %v869
    %v1011 = vunpack.c.l.b16 %v870
    %v1012 = vunpack.c.h.b16 %v870
    %v1013 = vunpack.c.l.b16 %v871
    %v1014 = vunpack.c.h.b16 %v871
    %v1015 = vunpack.c.l.b16 %v872
    %v1016 = vunpack.c.h.b16 %v872
    %v1017 = vunpack.c.l.b16 %v873
    %v1018 = vunpack.c.h.b16 %v873
    %v1019 = vunpack.c.l.b16 %v874
    %v1020 = vunpack.c.h.b16 %v874
    %v1021 = vunpack.c.l.b16 %v875
    %v1022 = vunpack.c.h.b16 %v875
    %v1023 = vunpack.c.l.b16 %v876
    %v1024 = vunpack.c.h.b16 %v876
    %v1025 = vunpack.c.l.b16 %v877
    %v1026 = vunpack.c.h.b16 %v877
    %v1027 = vunpack.c.l.b16 %v878
    %v1028 = vunpack.c.h.b16 %v878
    %v1029 = vunpack.c.l.b16 %v879
    %v1030 = vunpack.c.h.b16 %v879
    %v1031 = vunpack.c.l.b16 %v880
    %v1032 = vunpack.c.h.b16 %v880
    %v1033 = vunpack.c.l.b16 %v881
    %v1034 = vunpack.c.h.b16 %v881
    %v1035 = vunpack.c.l.b16 %v882
    %v1036 = vunpack.c.h.b16 %v882
    %v1037 = vunpack.c.l.b16 %v883
    %v1038 = vunpack.c.h.b16 %v883
    %v1039 = vunpack.c.l.b16 %v884
    %v1040 = vunpack.c.h.b16 %v884
    %v1041 = vunpack.c.l.b16 %v885
    %v1042 = vunpack.c.h.b16 %v885
    %v1043 = vunpack.c.l.b16 %v886
    %v1044 = vunpack.c.h.b16 %v886
    %v1045 = vunpack.c.l.b16 %v887
    %v1046 = vunpack.c.h.b16 %v887
    %v1047 = vunpack.c.l.b16 %v888
    %v1048 = vunpack.c.h.b16 %v888
    %v1049 = vunpack.c.l.b16 %v889
    %v1050 = vunpack.c.h.b16 %v889
    %v1051 = vunpack.c.l.b16 %v890
    %v1052 = vunpack.c.h.b16 %v890
    %v1053 = vunpack.c.l.b16 %v891
    %v1054 = vunpack.c.h.b16 %v891
    %v1055 = vunpack.c.l.b16 %v892
    %v1056 = vunpack.c.h.b16 %v892
    %v1057 = vunpack.c.l.b16 %v893
    %v1058 = vunpack.c.h.b16 %v893
    %v1059 = vunpack.c.l.b16 %v894
    %v1060 = vunpack.c.h.b16 %v894
    %v1061 = vunpack.c.l.b16 %v895
    %v1062 = vunpack.c.h.b16 %v895
    %v1063 = vunpack.c.l.b16 %v896
    %v1064 = vunpack.c.h.b16 %v896
    %v1065 = vunpack.c.l.b16 %v897
    %v1066 = vunpack.c.h.b16 %v897
    %v1067 = vunpack.c.l.b16 %v898
    %v1068 = vunpack.c.h.b16 %v898
    %v1069 = vunpack.c.l.b16 %v899
    %v1070 = vunpack.c.h.b16 %v899
    %v1071 = vunpack.c.l.b16 %v900
    %v1072 = vunpack.c.h.b16 %v900
    %v1073 = vunpack.c.l.b16 %v901
    %v1074 = vunpack.c.h.b16 %v901
    %v1075 = vunpack.c.l.b16 %v902
    %v1076 = vunpack.c.h.b16 %v902
    %v1077 = vunpack.c.l.b16 %v903
    %v1078 = vunpack.c.h.b16 %v903
    %v1079 = vunpack.c.l.b16 %v904
    %v1080 = vunpack.c.h.b16 %v904
    %v1081 = vunpack.c.l.b16 %v905
    %v1082 = vunpack.c.h.b16 %v905
    %v1083 = vunpack.c.l.b16 %v906
    %v1084 = vunpack.c.h.b16 %v906
    %v1085 = vunpack.c.l.b16 %v907
    %v1086 = vunpack.c.h.b16 %v907
    %v1087 = vunpack.c.l.b16 %v908
    %v1088 = vunpack.c.h.b16 %v908
    %v1089 = vunpack.c.l.b16 %v909
    %v1090 = vunpack.c.h.b16 %v909
    %v1091 = vunpack.c.l.b16 %v910
    %v1092 = vunpack.c.h.b16 %v910
    %v1093 = vunpack.c.l.b16 %v911
    %v1094 = vunpack.c.h.b16 %v911
    %v1095 = vunpack.c.l.b16 %v912
    %v1096 = vunpack.c.h.b16 %v912
    %v1097 = vunpack.c.l.b16 %v913
    %v1098 = vunpack.c.h.b16 %v913
    %v1099 = vunpack.c.l.b16 %v914
    %v1100 = vunpack.c.h.b16 %v914
    %v1101 = vunpack.c.l.b16 %v915
    %v1102 = vunpack.c.h.b16 %v915
    %v1103 = vunpack.c.l.b16 %v916
    %v1104 = vunpack.c.h.b16 %v916
    %v1105 = vunpack.c.l.b16 %v917
    %v1106 = vunpack.c.h.b16 %v917
    %v1107 = vunpack.c.l.b16 %v918
    %v1108 = vunpack.c.h.b16 %v918
    %v1109 = vunpack.c.l.b16 %v919
    %v1110 = vunpack.c.h.b16 %v919
    %v1111 = vunpack.c.l.b16 %v920
    %v1112 = vunpack.c.h.b16 %v920
    %v1113 = vpack.c.b16 %v993, %v985
    %v1114 = vpack.c.b16 %v994, %v986
    %v1115 = vpack.c.b16 %v995, %v987
    %v1116 = vpack.c.b16 %v996, %v988
    %v1117 = vpack.c.b16 %v997, %v989
    %v1118 = vpack.c.b16 %v998, %v990
    %v1119 = vpack.c.b16 %v999, %v991
    %v1120 = vpack.c.b16 %v1000, %v992
    %v1121 = vpack.c.b16 %v1009, %v1001
    %v1122 = vpack.c.b16 %v1010, %v1002
    %v1123 = vpack.c.b16 %v1011, %v1003
    %v1124 = vpack.c.b16 %v1012, %v1004
    %v1125 = vpack.c.b16 %v1013, %v1005
    %v1126 = vpack.c.b16 %v1014, %v1006
    %v1127 = vpack.c.b16 %v1015, %v1007
    %v1128 = vpack.c.b16 %v1016, %v1008
    %v1129 = vpack.c.b16 %v1025, %v1017
    %v1130 = vpack.c.b16 %v1026, %v1018
    %v1131 = vpack.c.b16 %v1027, %v1019
    %v1132 = vpack.c.b16 %v1028, %v1020
    %v1133 = vpack.c.b16 %v1029, %v1021
    %v1134 = vpack.c.b16 %v1030, %v1022
    %v1135 = vpack.c.b16 %v1031, %v1023
    %v1136 = vpack.c.b16 %v1032, %v1024
    %v1137 = vpack.c.b16 %v1041, %v1033
    %v1138 = vpack.c.b16 %v1042, %v1034
    %v1139 = vpack.c.b16 %v1043, %v1035
    %v1140 = vpack.c.b16 %v1044, %v1036
    %v1141 = vpack.c.b16 %v1045, %v1037
    %v1142 = vpack.c.b16 %v1046, %v1038
    %v1143 = vpack.c.b16 %v1047, %v1039
    %v1144 = vpack.c.b16 %v1048, %v1040
    %v1145 = vpack.c.b16 %v1057, %v1049
    %v1146 = vpack.c.b16 %v1058, %v1050
    %v1147 = vpack.c.b16 %v1059, %v1051
    %v1148 = vpack.c.b16 %v1060, %v1052
    %v1149 = vpack.c.b16 %v1061, %v1053
    %v1150 = vpack.c.b16 %v1062, %v1054
    %v1151 = vpack.c.b16 %v1063, %v1055
    %v1152 = vpack.c.b16 %v1064, %v1056
    %v1153 = vpack.c.b16 %v1073, %v1065
    %v1154 = vpack.c.b16 %v1074, %v1066
    %v1155 = vpack.c.b16 %v1075, %v1067
    %v1156 = vpack.c.b16 %v1076, %v1068
    %v1157 = vpack.c.b16 %v1077, %v1069
    %v1158 = vpack.c.b16 %v1078, %v1070
    %v1159 = vpack.c.b16 %v1079, %v1071
    %v1160 = vpack.c.b16 %v1080, %v1072
    %v1161 = vpack.c.b16 %v1089, %v1081
    %v1162 = vpack.c.b16 %v1090, %v1082
    %v1163 = vpack.c.b16 %v1091, %v1083
    %v1164 = vpack.c.b16 %v1092, %v1084
    %v1165 = vpack.c.b16 %v1093, %v1085
    %v1166 = vpack.c.b16 %v1094, %v1086
    %v1167 = vpack.c.b16 %v1095, %v1087
    %v1168 = vpack.c.b16 %v1096, %v1088
    %v1169 = vpack.c.b16 %v1105, %v1097
    %v1170 = vpack.c.b16 %v1106, %v1098
    %v1171 = vpack.c.b16 %v1107, %v1099
    %v1172 = vpack.c.b16 %v1108, %v1100
    %v1173 = vpack.c.b16 %v1109, %v1101
    %v1174 = vpack.c.b16 %v1110, %v1102
    %v1175 = vpack.c.b16 %v1111, %v1103
    %v1176 = vpack.c.b16 %v1112, %v1104
    %1241 = vmatpush.bf16.msra.mxu0 %v1169
    %1242 = vmatpush.bf16.msra.mxu0 %v1161
    %1243 = vmatpush.bf16.msra.mxu0 %v1153
    %1244 = vmatpush.bf16.msra.mxu0 %v1145
    %1245 = vmatpush.bf16.msra.mxu0 %v1137
    %1246 = vmatpush.bf16.msra.mxu0 %v1129
    %1247 = vmatpush.bf16.msra.mxu0 %v1121
    %1248 = vmatpush.bf16.msra.mxu0 %v1113
    %1249 = vmatmul.bf16.gmra.mxu0 %v787
    %v1250 = vpop.f32.mrf.mxu0
    %v1251 = vadd.f32 0.0, %v1250
    %v1252 = vpop.f32.mrf.mxu0
    %v1253 = vadd.f32 0.0, %v1252
    %1254 = vmatmul.bf16.gmra.mxu0 %v795
    %v1255 = vpop.f32.mrf.mxu0
    %v1256 = vadd.f32 0.0, %v1255
    %v1257 = vpop.f32.mrf.mxu0
    %v1258 = vadd.f32 0.0, %v1257
    %1259 = vmatmul.bf16.gmra.mxu0 %v803
    %v1260 = vpop.f32.mrf.mxu0
    %v1261 = vadd.f32 0.0, %v1260
    %v1262 = vpop.f32.mrf.mxu0
    %v1263 = vadd.f32 0.0, %v1262
    %1264 = vmatmul.bf16.gmra.mxu0 %v811
    %v1265 = vpop.f32.mrf.mxu0
    %v1266 = vadd.f32 0.0, %v1265
    %v1267 = vpop.f32.mrf.mxu0
    %v1268 = vadd.f32 0.0, %v1267
    %1269 = vmatmul.bf16.gmra.mxu0 %v819
    %v1270 = vpop.f32.mrf.mxu0
    %v1271 = vadd.f32 0.0, %v1270
    %v1272 = vpop.f32.mrf.mxu0
    %v1273 = vadd.f32 0.0, %v1272
    %1274 = vmatmul.bf16.gmra.mxu0 %v827
    %v1275 = vpop.f32.mrf.mxu0
    %v1276 = vadd.f32 0.0, %v1275
    %v1277 = vpop.f32.mrf.mxu0
    %v1278 = vadd.f32 0.0, %v1277
    %1279 = vmatmul.bf16.gmra.mxu0 %v835
    %v1280 = vpop.f32.mrf.mxu0
    %v1281 = vadd.f32 0.0, %v1280
    %v1282 = vpop.f32.mrf.mxu0
    %v1283 = vadd.f32 0.0, %v1282
    %1284 = vmatmul.bf16.gmra.mxu0 %v855
    %v1285 = vpop.f32.mrf.mxu0
    %v1286 = vadd.f32 0.0, %v1285
    %v1287 = vpop.f32.mrf.mxu0
    %v1288 = vadd.f32 0.0, %v1287
    %1289 = vdwg.mxu0
    %1290 = vmatpush.bf16.msra.mxu0 %v1170
    %1291 = vmatpush.bf16.msra.mxu0 %v1162
    %1292 = vmatpush.bf16.msra.mxu0 %v1154
    %1293 = vmatpush.bf16.msra.mxu0 %v1146
    %1294 = vmatpush.bf16.msra.mxu0 %v1138
    %1295 = vmatpush.bf16.msra.mxu0 %v1130
    %1296 = vmatpush.bf16.msra.mxu0 %v1122
    %1297 = vmatpush.bf16.msra.mxu0 %v1114
    %1298 = vmatmul.bf16.gmra.mxu0 %v787
    %v1299 = vpop.f32.mrf.mxu0
    %v1300 = vadd.f32 0.0, %v1299
    %v1301 = vpop.f32.mrf.mxu0
    %v1302 = vadd.f32 0.0, %v1301
    %1303 = vmatmul.bf16.gmra.mxu0 %v795
    %v1304 = vpop.f32.mrf.mxu0
    %v1305 = vadd.f32 0.0, %v1304
    %v1306 = vpop.f32.mrf.mxu0
    %v1307 = vadd.f32 0.0, %v1306
    %1308 = vmatmul.bf16.gmra.mxu0 %v803
    %v1309 = vpop.f32.mrf.mxu0
    %v1310 = vadd.f32 0.0, %v1309
    %v1311 = vpop.f32.mrf.mxu0
    %v1312 = vadd.f32 0.0, %v1311
    %1313 = vmatmul.bf16.gmra.mxu0 %v811
    %v1314 = vpop.f32.mrf.mxu0
    %v1315 = vadd.f32 0.0, %v1314
    %v1316 = vpop.f32.mrf.mxu0
    %v1317 = vadd.f32 0.0, %v1316
    %1318 = vmatmul.bf16.gmra.mxu0 %v819
    %v1319 = vpop.f32.mrf.mxu0
    %v1320 = vadd.f32 0.0, %v1319
    %v1321 = vpop.f32.mrf.mxu0
    %v1322 = vadd.f32 0.0, %v1321
    %1323 = vmatmul.bf16.gmra.mxu0 %v827
    %v1324 = vpop.f32.mrf.mxu0
    %v1325 = vadd.f32 0.0, %v1324
    %v1326 = vpop.f32.mrf.mxu0
    %v1327 = vadd.f32 0.0, %v1326
    %1328 = vmatmul.bf16.gmra.mxu0 %v835
    %v1329 = vpop.f32.mrf.mxu0
    %v1330 = vadd.f32 0.0, %v1329
    %v1331 = vpop.f32.mrf.mxu0
    %v1332 = vadd.f32 0.0, %v1331
    %1333 = vmatmul.bf16.gmra.mxu0 %v855
    %v1334 = vpop.f32.mrf.mxu0
    %v1335 = vadd.f32 0.0, %v1334
    %v1336 = vpop.f32.mrf.mxu0
    %v1337 = vadd.f32 0.0, %v1336
    %1338 = vdwg.mxu0
    %1339 = vmatpush.bf16.msra.mxu0 %v1171
    %1340 = vmatpush.bf16.msra.mxu0 %v1163
    %1341 = vmatpush.bf16.msra.mxu0 %v1155
    %1342 = vmatpush.bf16.msra.mxu0 %v1147
    %1343 = vmatpush.bf16.msra.mxu0 %v1139
    %1344 = vmatpush.bf16.msra.mxu0 %v1131
    %1345 = vmatpush.bf16.msra.mxu0 %v1123
    %1346 = vmatpush.bf16.msra.mxu0 %v1115
    %1347 = vmatmul.bf16.gmra.mxu0 %v787
    %v1348 = vpop.f32.mrf.mxu0
    %v1349 = vadd.f32 0.0, %v1348
    %v1350 = vpop.f32.mrf.mxu0
    %v1351 = vadd.f32 0.0, %v1350
    %1352 = vmatmul.bf16.gmra.mxu0 %v795
    %v1353 = vpop.f32.mrf.mxu0
    %v1354 = vadd.f32 0.0, %v1353
    %v1355 = vpop.f32.mrf.mxu0
    %v1356 = vadd.f32 0.0, %v1355
    %1357 = vmatmul.bf16.gmra.mxu0 %v803
    %v1358 = vpop.f32.mrf.mxu0
    %v1359 = vadd.f32 0.0, %v1358
    %v1360 = vpop.f32.mrf.mxu0
    %v1361 = vadd.f32 0.0, %v1360
    %1362 = vmatmul.bf16.gmra.mxu0 %v811
    %v1363 = vpop.f32.mrf.mxu0
    %v1364 = vadd.f32 0.0, %v1363
    %v1365 = vpop.f32.mrf.mxu0
    %v1366 = vadd.f32 0.0, %v1365
    %1367 = vmatmul.bf16.gmra.mxu0 %v819
    %v1368 = vpop.f32.mrf.mxu0
    %v1369 = vadd.f32 0.0, %v1368
    %v1370 = vpop.f32.mrf.mxu0
    %v1371 = vadd.f32 0.0, %v1370
    %1372 = vmatmul.bf16.gmra.mxu0 %v827
    %v1373 = vpop.f32.mrf.mxu0
    %v1374 = vadd.f32 0.0, %v1373
    %v1375 = vpop.f32.mrf.mxu0
    %v1376 = vadd.f32 0.0, %v1375
    %1377 = vmatmul.bf16.gmra.mxu0 %v835
    %v1378 = vpop.f32.mrf.mxu0
    %v1379 = vadd.f32 0.0, %v1378
    %v1380 = vpop.f32.mrf.mxu0
    %v1381 = vadd.f32 0.0, %v1380
    %1382 = vmatmul.bf16.gmra.mxu0 %v855
    %v1383 = vpop.f32.mrf.mxu0
    %v1384 = vadd.f32 0.0, %v1383
    %v1385 = vpop.f32.mrf.mxu0
    %v1386 = vadd.f32 0.0, %v1385
    %1387 = vdwg.mxu0
    %1388 = vmatpush.bf16.msra.mxu0 %v1172
    %1389 = vmatpush.bf16.msra.mxu0 %v1164
    %1390 = vmatpush.bf16.msra.mxu0 %v1156
    %1391 = vmatpush.bf16.msra.mxu0 %v1148
    %1392 = vmatpush.bf16.msra.mxu0 %v1140
    %1393 = vmatpush.bf16.msra.mxu0 %v1132
    %1394 = vmatpush.bf16.msra.mxu0 %v1124
    %1395 = vmatpush.bf16.msra.mxu0 %v1116
    %1396 = vmatmul.bf16.gmra.mxu0 %v787
    %v1397 = vpop.f32.mrf.mxu0
    %v1398 = vadd.f32 0.0, %v1397
    %v1399 = vpop.f32.mrf.mxu0
    %v1400 = vadd.f32 0.0, %v1399
    %1401 = vmatmul.bf16.gmra.mxu0 %v795
    %v1402 = vpop.f32.mrf.mxu0
    %v1403 = vadd.f32 0.0, %v1402
    %v1404 = vpop.f32.mrf.mxu0
    %v1405 = vadd.f32 0.0, %v1404
    %1406 = vmatmul.bf16.gmra.mxu0 %v803
    %v1407 = vpop.f32.mrf.mxu0
    %v1408 = vadd.f32 0.0, %v1407
    %v1409 = vpop.f32.mrf.mxu0
    %v1410 = vadd.f32 0.0, %v1409
    %1411 = vmatmul.bf16.gmra.mxu0 %v811
    %v1412 = vpop.f32.mrf.mxu0
    %v1413 = vadd.f32 0.0, %v1412
    %v1414 = vpop.f32.mrf.mxu0
    %v1415 = vadd.f32 0.0, %v1414
    %1416 = vmatmul.bf16.gmra.mxu0 %v819
    %v1417 = vpop.f32.mrf.mxu0
    %v1418 = vadd.f32 0.0, %v1417
    %v1419 = vpop.f32.mrf.mxu0
    %v1420 = vadd.f32 0.0, %v1419
    %1421 = vmatmul.bf16.gmra.mxu0 %v827
    %v1422 = vpop.f32.mrf.mxu0
    %v1423 = vadd.f32 0.0, %v1422
    %v1424 = vpop.f32.mrf.mxu0
    %v1425 = vadd.f32 0.0, %v1424
    %1426 = vmatmul.bf16.gmra.mxu0 %v835
    %v1427 = vpop.f32.mrf.mxu0
    %v1428 = vadd.f32 0.0, %v1427
    %v1429 = vpop.f32.mrf.mxu0
    %v1430 = vadd.f32 0.0, %v1429
    %1431 = vmatmul.bf16.gmra.mxu0 %v855
    %v1432 = vpop.f32.mrf.mxu0
    %v1433 = vadd.f32 0.0, %v1432
    %v1434 = vpop.f32.mrf.mxu0
    %v1435 = vadd.f32 0.0, %v1434
    %1436 = vdwg.mxu0
    %1437 = vmatpush.bf16.msra.mxu0 %v1173
    %1438 = vmatpush.bf16.msra.mxu0 %v1165
    %1439 = vmatpush.bf16.msra.mxu0 %v1157
    %1440 = vmatpush.bf16.msra.mxu0 %v1149
    %1441 = vmatpush.bf16.msra.mxu0 %v1141
    %1442 = vmatpush.bf16.msra.mxu0 %v1133
    %1443 = vmatpush.bf16.msra.mxu0 %v1125
    %1444 = vmatpush.bf16.msra.mxu0 %v1117
    %1445 = vmatmul.bf16.gmra.mxu0 %v787
    %v1446 = vpop.f32.mrf.mxu0
    %v1447 = vadd.f32 0.0, %v1446
    %v1448 = vpop.f32.mrf.mxu0
    %v1449 = vadd.f32 0.0, %v1448
    %1450 = vmatmul.bf16.gmra.mxu0 %v795
    %v1451 = vpop.f32.mrf.mxu0
    %v1452 = vadd.f32 0.0, %v1451
    %v1453 = vpop.f32.mrf.mxu0
    %v1454 = vadd.f32 0.0, %v1453
    %1455 = vmatmul.bf16.gmra.mxu0 %v803
    %v1456 = vpop.f32.mrf.mxu0
    %v1457 = vadd.f32 0.0, %v1456
    %v1458 = vpop.f32.mrf.mxu0
    %v1459 = vadd.f32 0.0, %v1458
    %1460 = vmatmul.bf16.gmra.mxu0 %v811
    %v1461 = vpop.f32.mrf.mxu0
    %v1462 = vadd.f32 0.0, %v1461
    %v1463 = vpop.f32.mrf.mxu0
    %v1464 = vadd.f32 0.0, %v1463
    %1465 = vmatmul.bf16.gmra.mxu0 %v819
    %v1466 = vpop.f32.mrf.mxu0
    %v1467 = vadd.f32 0.0, %v1466
    %v1468 = vpop.f32.mrf.mxu0
    %v1469 = vadd.f32 0.0, %v1468
    %1470 = vmatmul.bf16.gmra.mxu0 %v827
    %v1471 = vpop.f32.mrf.mxu0
    %v1472 = vadd.f32 0.0, %v1471
    %v1473 = vpop.f32.mrf.mxu0
    %v1474 = vadd.f32 0.0, %v1473
    %1475 = vmatmul.bf16.gmra.mxu0 %v835
    %v1476 = vpop.f32.mrf.mxu0
    %v1477 = vadd.f32 0.0, %v1476
    %v1478 = vpop.f32.mrf.mxu0
    %v1479 = vadd.f32 0.0, %v1478
    %1480 = vmatmul.bf16.gmra.mxu0 %v855
    %v1481 = vpop.f32.mrf.mxu0
    %v1482 = vadd.f32 0.0, %v1481
    %v1483 = vpop.f32.mrf.mxu0
    %v1484 = vadd.f32 0.0, %v1483
    %1485 = vdwg.mxu0
    %1486 = vmatpush.bf16.msra.mxu0 %v1174
    %1487 = vmatpush.bf16.msra.mxu0 %v1166
    %1488 = vmatpush.bf16.msra.mxu0 %v1158
    %1489 = vmatpush.bf16.msra.mxu0 %v1150
    %1490 = vmatpush.bf16.msra.mxu0 %v1142
    %1491 = vmatpush.bf16.msra.mxu0 %v1134
    %1492 = vmatpush.bf16.msra.mxu0 %v1126
    %1493 = vmatpush.bf16.msra.mxu0 %v1118
    %1494 = vmatmul.bf16.gmra.mxu0 %v787
    %v1495 = vpop.f32.mrf.mxu0
    %v1496 = vadd.f32 0.0, %v1495
    %v1497 = vpop.f32.mrf.mxu0
    %v1498 = vadd.f32 0.0, %v1497
    %1499 = vmatmul.bf16.gmra.mxu0 %v795
    %v1500 = vpop.f32.mrf.mxu0
    %v1501 = vadd.f32 0.0, %v1500
    %v1502 = vpop.f32.mrf.mxu0
    %v1503 = vadd.f32 0.0, %v1502
    %1504 = vmatmul.bf16.gmra.mxu0 %v803
    %v1505 = vpop.f32.mrf.mxu0
    %v1506 = vadd.f32 0.0, %v1505
    %v1507 = vpop.f32.mrf.mxu0
    %v1508 = vadd.f32 0.0, %v1507
    %1509 = vmatmul.bf16.gmra.mxu0 %v811
    %v1510 = vpop.f32.mrf.mxu0
    %v1511 = vadd.f32 0.0, %v1510
    %v1512 = vpop.f32.mrf.mxu0
    %v1513 = vadd.f32 0.0, %v1512
    %1514 = vmatmul.bf16.gmra.mxu0 %v819
    %v1515 = vpop.f32.mrf.mxu0
    %v1516 = vadd.f32 0.0, %v1515
    %v1517 = vpop.f32.mrf.mxu0
    %v1518 = vadd.f32 0.0, %v1517
    %1519 = vmatmul.bf16.gmra.mxu0 %v827
    %v1520 = vpop.f32.mrf.mxu0
    %v1521 = vadd.f32 0.0, %v1520
    %v1522 = vpop.f32.mrf.mxu0
    %v1523 = vadd.f32 0.0, %v1522
    %1524 = vmatmul.bf16.gmra.mxu0 %v835
    %v1525 = vpop.f32.mrf.mxu0
    %v1526 = vadd.f32 0.0, %v1525
    %v1527 = vpop.f32.mrf.mxu0
    %v1528 = vadd.f32 0.0, %v1527
    %1529 = vmatmul.bf16.gmra.mxu0 %v855
    %v1530 = vpop.f32.mrf.mxu0
    %v1531 = vadd.f32 0.0, %v1530
    %v1532 = vpop.f32.mrf.mxu0
    %v1533 = vadd.f32 0.0, %v1532
    %1534 = vdwg.mxu0
    %1535 = vmatpush.bf16.msra.mxu0 %v1175
    %1536 = vmatpush.bf16.msra.mxu0 %v1167
    %1537 = vmatpush.bf16.msra.mxu0 %v1159
    %1538 = vmatpush.bf16.msra.mxu0 %v1151
    %1539 = vmatpush.bf16.msra.mxu0 %v1143
    %1540 = vmatpush.bf16.msra.mxu0 %v1135
    %1541 = vmatpush.bf16.msra.mxu0 %v1127
    %1542 = vmatpush.bf16.msra.mxu0 %v1119
    %1543 = vmatmul.bf16.gmra.mxu0 %v787
    %v1544 = vpop.f32.mrf.mxu0
    %v1545 = vadd.f32 0.0, %v1544
    %v1546 = vpop.f32.mrf.mxu0
    %v1547 = vadd.f32 0.0, %v1546
    %1548 = vmatmul.bf16.gmra.mxu0 %v795
    %v1549 = vpop.f32.mrf.mxu0
    %v1550 = vadd.f32 0.0, %v1549
    %v1551 = vpop.f32.mrf.mxu0
    %v1552 = vadd.f32 0.0, %v1551
    %1553 = vmatmul.bf16.gmra.mxu0 %v803
    %v1554 = vpop.f32.mrf.mxu0
    %v1555 = vadd.f32 0.0, %v1554
    %v1556 = vpop.f32.mrf.mxu0
    %v1557 = vadd.f32 0.0, %v1556
    %1558 = vmatmul.bf16.gmra.mxu0 %v811
    %v1559 = vpop.f32.mrf.mxu0
    %v1560 = vadd.f32 0.0, %v1559
    %v1561 = vpop.f32.mrf.mxu0
    %v1562 = vadd.f32 0.0, %v1561
    %1563 = vmatmul.bf16.gmra.mxu0 %v819
    %v1564 = vpop.f32.mrf.mxu0
    %v1565 = vadd.f32 0.0, %v1564
    %v1566 = vpop.f32.mrf.mxu0
    %v1567 = vadd.f32 0.0, %v1566
    %1568 = vmatmul.bf16.gmra.mxu0 %v827
    %v1569 = vpop.f32.mrf.mxu0
    %v1570 = vadd.f32 0.0, %v1569
    %v1571 = vpop.f32.mrf.mxu0
    %v1572 = vadd.f32 0.0, %v1571
    %1573 = vmatmul.bf16.gmra.mxu0 %v835
    %v1574 = vpop.f32.mrf.mxu0
    %v1575 = vadd.f32 0.0, %v1574
    %v1576 = vpop.f32.mrf.mxu0
    %v1577 = vadd.f32 0.0, %v1576
    %1578 = vmatmul.bf16.gmra.mxu0 %v855
    %v1579 = vpop.f32.mrf.mxu0
    %v1580 = vadd.f32 0.0, %v1579
    %v1581 = vpop.f32.mrf.mxu0
    %v1582 = vadd.f32 0.0, %v1581
    %1583 = vdwg.mxu0
    %1584 = vmatpush.bf16.msra.mxu0 %v1176
    %1585 = vmatpush.bf16.msra.mxu0 %v1168
    %1586 = vmatpush.bf16.msra.mxu0 %v1160
    %1587 = vmatpush.bf16.msra.mxu0 %v1152
    %1588 = vmatpush.bf16.msra.mxu0 %v1144
    %1589 = vmatpush.bf16.msra.mxu0 %v1136
    %1590 = vmatpush.bf16.msra.mxu0 %v1128
    %1591 = vmatpush.bf16.msra.mxu0 %v1120
    %1592 = vmatmul.bf16.gmra.mxu0 %v787
    %v1593 = vpop.f32.mrf.mxu0
    %v1594 = vadd.f32 0.0, %v1593
    %v1595 = vpop.f32.mrf.mxu0
    %v1596 = vadd.f32 0.0, %v1595
    %1597 = vmatmul.bf16.gmra.mxu0 %v795
    %v1598 = vpop.f32.mrf.mxu0
    %v1599 = vadd.f32 0.0, %v1598
    %v1600 = vpop.f32.mrf.mxu0
    %v1601 = vadd.f32 0.0, %v1600
    %1602 = vmatmul.bf16.gmra.mxu0 %v803
    %v1603 = vpop.f32.mrf.mxu0
    %v1604 = vadd.f32 0.0, %v1603
    %v1605 = vpop.f32.mrf.mxu0
    %v1606 = vadd.f32 0.0, %v1605
    %1607 = vmatmul.bf16.gmra.mxu0 %v811
    %v1608 = vpop.f32.mrf.mxu0
    %v1609 = vadd.f32 0.0, %v1608
    %v1610 = vpop.f32.mrf.mxu0
    %v1611 = vadd.f32 0.0, %v1610
    %1612 = vmatmul.bf16.gmra.mxu0 %v819
    %v1613 = vpop.f32.mrf.mxu0
    %v1614 = vadd.f32 0.0, %v1613
    %v1615 = vpop.f32.mrf.mxu0
    %v1616 = vadd.f32 0.0, %v1615
    %1617 = vmatmul.bf16.gmra.mxu0 %v827
    %v1618 = vpop.f32.mrf.mxu0
    %v1619 = vadd.f32 0.0, %v1618
    %v1620 = vpop.f32.mrf.mxu0
    %v1621 = vadd.f32 0.0, %v1620
    %1622 = vmatmul.bf16.gmra.mxu0 %v835
    %v1623 = vpop.f32.mrf.mxu0
    %v1624 = vadd.f32 0.0, %v1623
    %v1625 = vpop.f32.mrf.mxu0
    %v1626 = vadd.f32 0.0, %v1625
    %1627 = vmatmul.bf16.gmra.mxu0 %v855
    %v1628 = vpop.f32.mrf.mxu0
    %v1629 = vadd.f32 0.0, %v1628
    %v1630 = vpop.f32.mrf.mxu0
    %v1631 = vadd.f32 0.0, %v1630
    %1632 = vdwg.mxu0
    %v1705 = vunpack.c.l.b16 %v671
    %v1706 = vunpack.c.h.b16 %v671
    %v1707 = vunpack.c.l.b16 %v672
    %v1708 = vunpack.c.h.b16 %v672
    %v1709 = vunpack.c.l.b16 %v673
    %v1710 = vunpack.c.h.b16 %v673
    %v1711 = vunpack.c.l.b16 %v674
    %v1712 = vunpack.c.h.b16 %v674
    %v1713 = vunpack.c.l.b16 %v675
    %v1714 = vunpack.c.h.b16 %v675
    %v1715 = vunpack.c.l.b16 %v676
    %v1716 = vunpack.c.h.b16 %v676
    %v1717 = vunpack.c.l.b16 %v677
    %v1718 = vunpack.c.h.b16 %v677
    %v1719 = vunpack.c.l.b16 %v678
    %v1720 = vunpack.c.h.b16 %v678
    %v1721 = vunpack.c.l.b16 %v679
    %v1722 = vunpack.c.h.b16 %v679
    %v1723 = vunpack.c.l.b16 %v680
    %v1724 = vunpack.c.h.b16 %v680
    %v1725 = vunpack.c.l.b16 %v681
    %v1726 = vunpack.c.h.b16 %v681
    %v1727 = vunpack.c.l.b16 %v682
    %v1728 = vunpack.c.h.b16 %v682
    %v1729 = vunpack.c.l.b16 %v683
    %v1730 = vunpack.c.h.b16 %v683
    %v1731 = vunpack.c.l.b16 %v684
    %v1732 = vunpack.c.h.b16 %v684
    %v1733 = vunpack.c.l.b16 %v685
    %v1734 = vunpack.c.h.b16 %v685
    %v1735 = vunpack.c.l.b16 %v686
    %v1736 = vunpack.c.h.b16 %v686
    %v1737 = vunpack.c.l.b16 %v687
    %v1738 = vunpack.c.h.b16 %v687
    %v1739 = vunpack.c.l.b16 %v688
    %v1740 = vunpack.c.h.b16 %v688
    %v1741 = vunpack.c.l.b16 %v689
    %v1742 = vunpack.c.h.b16 %v689
    %v1743 = vunpack.c.l.b16 %v690
    %v1744 = vunpack.c.h.b16 %v690
    %v1745 = vunpack.c.l.b16 %v691
    %v1746 = vunpack.c.h.b16 %v691
    %v1747 = vunpack.c.l.b16 %v692
    %v1748 = vunpack.c.h.b16 %v692
    %v1749 = vunpack.c.l.b16 %v693
    %v1750 = vunpack.c.h.b16 %v693
    %v1751 = vunpack.c.l.b16 %v694
    %v1752 = vunpack.c.h.b16 %v694
    %v1753 = vunpack.c.l.b16 %v695
    %v1754 = vunpack.c.h.b16 %v695
    %v1755 = vunpack.c.l.b16 %v696
    %v1756 = vunpack.c.h.b16 %v696
    %v1757 = vunpack.c.l.b16 %v697
    %v1758 = vunpack.c.h.b16 %v697
    %v1759 = vunpack.c.l.b16 %v698
    %v1760 = vunpack.c.h.b16 %v698
    %v1761 = vunpack.c.l.b16 %v699
    %v1762 = vunpack.c.h.b16 %v699
    %v1763 = vunpack.c.l.b16 %v700
    %v1764 = vunpack.c.h.b16 %v700
    %v1765 = vunpack.c.l.b16 %v701
    %v1766 = vunpack.c.h.b16 %v701
    %v1767 = vunpack.c.l.b16 %v702
    %v1768 = vunpack.c.h.b16 %v702
    %v1769 = vunpack.c.l.b16 %v703
    %v1770 = vunpack.c.h.b16 %v703
    %v1771 = vunpack.c.l.b16 %v704
    %v1772 = vunpack.c.h.b16 %v704
    %v1773 = vunpack.c.l.b16 %v705
    %v1774 = vunpack.c.h.b16 %v705
    %v1775 = vunpack.c.l.b16 %v706
    %v1776 = vunpack.c.h.b16 %v706
    %v1777 = vunpack.c.l.b16 %v707
    %v1778 = vunpack.c.h.b16 %v707
    %v1779 = vunpack.c.l.b16 %v708
    %v1780 = vunpack.c.h.b16 %v708
    %v1781 = vunpack.c.l.b16 %v709
    %v1782 = vunpack.c.h.b16 %v709
    %v1783 = vunpack.c.l.b16 %v710
    %v1784 = vunpack.c.h.b16 %v710
    %v1785 = vunpack.c.l.b16 %v711
    %v1786 = vunpack.c.h.b16 %v711
    %v1787 = vunpack.c.l.b16 %v712
    %v1788 = vunpack.c.h.b16 %v712
    %v1789 = vunpack.c.l.b16 %v713
    %v1790 = vunpack.c.h.b16 %v713
    %v1791 = vunpack.c.l.b16 %v714
    %v1792 = vunpack.c.h.b16 %v714
    %v1793 = vunpack.c.l.b16 %v715
    %v1794 = vunpack.c.h.b16 %v715
    %v1795 = vunpack.c.l.b16 %v716
    %v1796 = vunpack.c.h.b16 %v716
    %v1797 = vunpack.c.l.b16 %v717
    %v1798 = vunpack.c.h.b16 %v717
    %v1799 = vunpack.c.l.b16 %v718
    %v1800 = vunpack.c.h.b16 %v718
    %v1801 = vunpack.c.l.b16 %v719
    %v1802 = vunpack.c.h.b16 %v719
    %v1803 = vunpack.c.l.b16 %v720
    %v1804 = vunpack.c.h.b16 %v720
    %v1805 = vunpack.c.l.b16 %v721
    %v1806 = vunpack.c.h.b16 %v721
    %v1807 = vunpack.c.l.b16 %v722
    %v1808 = vunpack.c.h.b16 %v722
    %v1809 = vunpack.c.l.b16 %v723
    %v1810 = vunpack.c.h.b16 %v723
    %v1811 = vunpack.c.l.b16 %v724
    %v1812 = vunpack.c.h.b16 %v724
    %v1813 = vunpack.c.l.b16 %v725
    %v1814 = vunpack.c.h.b16 %v725
    %v1815 = vunpack.c.l.b16 %v726
    %v1816 = vunpack.c.h.b16 %v726
    %v1817 = vunpack.c.l.b16 %v727
    %v1818 = vunpack.c.h.b16 %v727
    %v1819 = vunpack.c.l.b16 %v728
    %v1820 = vunpack.c.h.b16 %v728
    %v1821 = vunpack.c.l.b16 %v729
    %v1822 = vunpack.c.h.b16 %v729
    %v1823 = vunpack.c.l.b16 %v730
    %v1824 = vunpack.c.h.b16 %v730
    %v1825 = vunpack.c.l.b16 %v731
    %v1826 = vunpack.c.h.b16 %v731
    %v1827 = vunpack.c.l.b16 %v732
    %v1828 = vunpack.c.h.b16 %v732
    %v1829 = vunpack.c.l.b16 %v733
    %v1830 = vunpack.c.h.b16 %v733
    %v1831 = vunpack.c.l.b16 %v734
    %v1832 = vunpack.c.h.b16 %v734
    %v1833 = vpack.c.b16 %v1713, %v1705
    %v1834 = vpack.c.b16 %v1714, %v1706
    %v1835 = vpack.c.b16 %v1715, %v1707
    %v1836 = vpack.c.b16 %v1716, %v1708
    %v1837 = vpack.c.b16 %v1717, %v1709
    %v1838 = vpack.c.b16 %v1718, %v1710
    %v1839 = vpack.c.b16 %v1719, %v1711
    %v1840 = vpack.c.b16 %v1720, %v1712
    %v1841 = vpack.c.b16 %v1729, %v1721
    %v1842 = vpack.c.b16 %v1730, %v1722
    %v1843 = vpack.c.b16 %v1731, %v1723
    %v1844 = vpack.c.b16 %v1732, %v1724
    %v1845 = vpack.c.b16 %v1733, %v1725
    %v1846 = vpack.c.b16 %v1734, %v1726
    %v1847 = vpack.c.b16 %v1735, %v1727
    %v1848 = vpack.c.b16 %v1736, %v1728
    %v1849 = vpack.c.b16 %v1745, %v1737
    %v1850 = vpack.c.b16 %v1746, %v1738
    %v1851 = vpack.c.b16 %v1747, %v1739
    %v1852 = vpack.c.b16 %v1748, %v1740
    %v1853 = vpack.c.b16 %v1749, %v1741
    %v1854 = vpack.c.b16 %v1750, %v1742
    %v1855 = vpack.c.b16 %v1751, %v1743
    %v1856 = vpack.c.b16 %v1752, %v1744
    %v1857 = vpack.c.b16 %v1761, %v1753
    %v1858 = vpack.c.b16 %v1762, %v1754
    %v1859 = vpack.c.b16 %v1763, %v1755
    %v1860 = vpack.c.b16 %v1764, %v1756
    %v1861 = vpack.c.b16 %v1765, %v1757
    %v1862 = vpack.c.b16 %v1766, %v1758
    %v1863 = vpack.c.b16 %v1767, %v1759
    %v1864 = vpack.c.b16 %v1768, %v1760
    %v1865 = vpack.c.b16 %v1777, %v1769
    %v1866 = vpack.c.b16 %v1778, %v1770
    %v1867 = vpack.c.b16 %v1779, %v1771
    %v1868 = vpack.c.b16 %v1780, %v1772
    %v1869 = vpack.c.b16 %v1781, %v1773
    %v1870 = vpack.c.b16 %v1782, %v1774
    %v1871 = vpack.c.b16 %v1783, %v1775
    %v1872 = vpack.c.b16 %v1784, %v1776
    %v1873 = vpack.c.b16 %v1793, %v1785
    %v1874 = vpack.c.b16 %v1794, %v1786
    %v1875 = vpack.c.b16 %v1795, %v1787
    %v1876 = vpack.c.b16 %v1796, %v1788
    %v1877 = vpack.c.b16 %v1797, %v1789
    %v1878 = vpack.c.b16 %v1798, %v1790
    %v1879 = vpack.c.b16 %v1799, %v1791
    %v1880 = vpack.c.b16 %v1800, %v1792
    %v1881 = vpack.c.b16 %v1809, %v1801
    %v1882 = vpack.c.b16 %v1810, %v1802
    %v1883 = vpack.c.b16 %v1811, %v1803
    %v1884 = vpack.c.b16 %v1812, %v1804
    %v1885 = vpack.c.b16 %v1813, %v1805
    %v1886 = vpack.c.b16 %v1814, %v1806
    %v1887 = vpack.c.b16 %v1815, %v1807
    %v1888 = vpack.c.b16 %v1816, %v1808
    %v1889 = vpack.c.b16 %v1825, %v1817
    %v1890 = vpack.c.b16 %v1826, %v1818
    %v1891 = vpack.c.b16 %v1827, %v1819
    %v1892 = vpack.c.b16 %v1828, %v1820
    %v1893 = vpack.c.b16 %v1829, %v1821
    %v1894 = vpack.c.b16 %v1830, %v1822
    %v1895 = vpack.c.b16 %v1831, %v1823
    %v1896 = vpack.c.b16 %v1832, %v1824
    %1961 = vmatpush.bf16.msra.mxu0 %v1889
    %1962 = vmatpush.bf16.msra.mxu0 %v1881
    %1963 = vmatpush.bf16.msra.mxu0 %v1873
    %1964 = vmatpush.bf16.msra.mxu0 %v1865
    %1965 = vmatpush.bf16.msra.mxu0 %v1857
    %1966 = vmatpush.bf16.msra.mxu0 %v1849
    %1967 = vmatpush.bf16.msra.mxu0 %v1841
    %1968 = vmatpush.bf16.msra.mxu0 %v1833
    %1969 = vmatmul.bf16.gmra.mxu0 %v767
    %v1970 = vpop.f32.mrf.mxu0
    %v1971 = vadd.f32 %v1251, %v1970
    %v1972 = vpop.f32.mrf.mxu0
    %v1973 = vadd.f32 %v1253, %v1972
    %1974 = vmatmul.bf16.gmra.mxu0 %v768
    %v1975 = vpop.f32.mrf.mxu0
    %v1976 = vadd.f32 %v1256, %v1975
    %v1977 = vpop.f32.mrf.mxu0
    %v1978 = vadd.f32 %v1258, %v1977
    %1979 = vmatmul.bf16.gmra.mxu0 %v769
    %v1980 = vpop.f32.mrf.mxu0
    %v1981 = vadd.f32 %v1261, %v1980
    %v1982 = vpop.f32.mrf.mxu0
    %v1983 = vadd.f32 %v1263, %v1982
    %1984 = vmatmul.bf16.gmra.mxu0 %v770
    %v1985 = vpop.f32.mrf.mxu0
    %v1986 = vadd.f32 %v1266, %v1985
    %v1987 = vpop.f32.mrf.mxu0
    %v1988 = vadd.f32 %v1268, %v1987
    %1989 = vmatmul.bf16.gmra.mxu0 %v771
    %v1990 = vpop.f32.mrf.mxu0
    %v1991 = vadd.f32 %v1271, %v1990
    %v1992 = vpop.f32.mrf.mxu0
    %v1993 = vadd.f32 %v1273, %v1992
    %1994 = vmatmul.bf16.gmra.mxu0 %v772
    %v1995 = vpop.f32.mrf.mxu0
    %v1996 = vadd.f32 %v1276, %v1995
    %v1997 = vpop.f32.mrf.mxu0
    %v1998 = vadd.f32 %v1278, %v1997
    %1999 = vmatmul.bf16.gmra.mxu0 %v773
    %v2000 = vpop.f32.mrf.mxu0
    %v2001 = vadd.f32 %v1281, %v2000
    %v2002 = vpop.f32.mrf.mxu0
    %v2003 = vadd.f32 %v1283, %v2002
    %2004 = vmatmul.bf16.gmra.mxu0 %v774
    %v2005 = vpop.f32.mrf.mxu0
    %v2006 = vadd.f32 %v1286, %v2005
    %v2007 = vpop.f32.mrf.mxu0
    %v2008 = vadd.f32 %v1288, %v2007
    %2009 = vdwg.mxu0
    %2010 = vmatpush.bf16.msra.mxu0 %v1890
    %2011 = vmatpush.bf16.msra.mxu0 %v1882
    %2012 = vmatpush.bf16.msra.mxu0 %v1874
    %2013 = vmatpush.bf16.msra.mxu0 %v1866
    %2014 = vmatpush.bf16.msra.mxu0 %v1858
    %2015 = vmatpush.bf16.msra.mxu0 %v1850
    %2016 = vmatpush.bf16.msra.mxu0 %v1842
    %2017 = vmatpush.bf16.msra.mxu0 %v1834
    %2018 = vmatmul.bf16.gmra.mxu0 %v767
    %v2019 = vpop.f32.mrf.mxu0
    %v2020 = vadd.f32 %v1300, %v2019
    %v2021 = vpop.f32.mrf.mxu0
    %v2022 = vadd.f32 %v1302, %v2021
    %2023 = vmatmul.bf16.gmra.mxu0 %v768
    %v2024 = vpop.f32.mrf.mxu0
    %v2025 = vadd.f32 %v1305, %v2024
    %v2026 = vpop.f32.mrf.mxu0
    %v2027 = vadd.f32 %v1307, %v2026
    %2028 = vmatmul.bf16.gmra.mxu0 %v769
    %v2029 = vpop.f32.mrf.mxu0
    %v2030 = vadd.f32 %v1310, %v2029
    %v2031 = vpop.f32.mrf.mxu0
    %v2032 = vadd.f32 %v1312, %v2031
    %2033 = vmatmul.bf16.gmra.mxu0 %v770
    %v2034 = vpop.f32.mrf.mxu0
    %v2035 = vadd.f32 %v1315, %v2034
    %v2036 = vpop.f32.mrf.mxu0
    %v2037 = vadd.f32 %v1317, %v2036
    %2038 = vmatmul.bf16.gmra.mxu0 %v771
    %v2039 = vpop.f32.mrf.mxu0
    %v2040 = vadd.f32 %v1320, %v2039
    %v2041 = vpop.f32.mrf.mxu0
    %v2042 = vadd.f32 %v1322, %v2041
    %2043 = vmatmul.bf16.gmra.mxu0 %v772
    %v2044 = vpop.f32.mrf.mxu0
    %v2045 = vadd.f32 %v1325, %v2044
    %v2046 = vpop.f32.mrf.mxu0
    %v2047 = vadd.f32 %v1327, %v2046
    %2048 = vmatmul.bf16.gmra.mxu0 %v773
    %v2049 = vpop.f32.mrf.mxu0
    %v2050 = vadd.f32 %v1330, %v2049
    %v2051 = vpop.f32.mrf.mxu0
    %v2052 = vadd.f32 %v1332, %v2051
    %2053 = vmatmul.bf16.gmra.mxu0 %v774
    %v2054 = vpop.f32.mrf.mxu0
    %v2055 = vadd.f32 %v1335, %v2054
    %v2056 = vpop.f32.mrf.mxu0
    %v2057 = vadd.f32 %v1337, %v2056
    %2058 = vdwg.mxu0
    %2059 = vmatpush.bf16.msra.mxu0 %v1891
    %2060 = vmatpush.bf16.msra.mxu0 %v1883
    %2061 = vmatpush.bf16.msra.mxu0 %v1875
    %2062 = vmatpush.bf16.msra.mxu0 %v1867
    %2063 = vmatpush.bf16.msra.mxu0 %v1859
    %2064 = vmatpush.bf16.msra.mxu0 %v1851
    %2065 = vmatpush.bf16.msra.mxu0 %v1843
    %2066 = vmatpush.bf16.msra.mxu0 %v1835
    %2067 = vmatmul.bf16.gmra.mxu0 %v767
    %v2068 = vpop.f32.mrf.mxu0
    %v2069 = vadd.f32 %v1349, %v2068
    %v2070 = vpop.f32.mrf.mxu0
    %v2071 = vadd.f32 %v1351, %v2070
    %2072 = vmatmul.bf16.gmra.mxu0 %v768
    %v2073 = vpop.f32.mrf.mxu0
    %v2074 = vadd.f32 %v1354, %v2073
    %v2075 = vpop.f32.mrf.mxu0
    %v2076 = vadd.f32 %v1356, %v2075
    %2077 = vmatmul.bf16.gmra.mxu0 %v769
    %v2078 = vpop.f32.mrf.mxu0
    %v2079 = vadd.f32 %v1359, %v2078
    %v2080 = vpop.f32.mrf.mxu0
    %v2081 = vadd.f32 %v1361, %v2080
    %2082 = vmatmul.bf16.gmra.mxu0 %v770
    %v2083 = vpop.f32.mrf.mxu0
    %v2084 = vadd.f32 %v1364, %v2083
    %v2085 = vpop.f32.mrf.mxu0
    %v2086 = vadd.f32 %v1366, %v2085
    %2087 = vmatmul.bf16.gmra.mxu0 %v771
    %v2088 = vpop.f32.mrf.mxu0
    %v2089 = vadd.f32 %v1369, %v2088
    %v2090 = vpop.f32.mrf.mxu0
    %v2091 = vadd.f32 %v1371, %v2090
    %2092 = vmatmul.bf16.gmra.mxu0 %v772
    %v2093 = vpop.f32.mrf.mxu0
    %v2094 = vadd.f32 %v1374, %v2093
    %v2095 = vpop.f32.mrf.mxu0
    %v2096 = vadd.f32 %v1376, %v2095
    %2097 = vmatmul.bf16.gmra.mxu0 %v773
    %v2098 = vpop.f32.mrf.mxu0
    %v2099 = vadd.f32 %v1379, %v2098
    %v2100 = vpop.f32.mrf.mxu0
    %v2101 = vadd.f32 %v1381, %v2100
    %2102 = vmatmul.bf16.gmra.mxu0 %v774
    %v2103 = vpop.f32.mrf.mxu0
    %v2104 = vadd.f32 %v1384, %v2103
    %v2105 = vpop.f32.mrf.mxu0
    %v2106 = vadd.f32 %v1386, %v2105
    %2107 = vdwg.mxu0
    %2108 = vmatpush.bf16.msra.mxu0 %v1892
    %2109 = vmatpush.bf16.msra.mxu0 %v1884
    %2110 = vmatpush.bf16.msra.mxu0 %v1876
    %2111 = vmatpush.bf16.msra.mxu0 %v1868
    %2112 = vmatpush.bf16.msra.mxu0 %v1860
    %2113 = vmatpush.bf16.msra.mxu0 %v1852
    %2114 = vmatpush.bf16.msra.mxu0 %v1844
    %2115 = vmatpush.bf16.msra.mxu0 %v1836
    %2116 = vmatmul.bf16.gmra.mxu0 %v767
    %v2117 = vpop.f32.mrf.mxu0
    %v2118 = vadd.f32 %v1398, %v2117
    %v2119 = vpop.f32.mrf.mxu0
    %v2120 = vadd.f32 %v1400, %v2119
    %2121 = vmatmul.bf16.gmra.mxu0 %v768
    %v2122 = vpop.f32.mrf.mxu0
    %v2123 = vadd.f32 %v1403, %v2122
    %v2124 = vpop.f32.mrf.mxu0
    %v2125 = vadd.f32 %v1405, %v2124
    %2126 = vmatmul.bf16.gmra.mxu0 %v769
    %v2127 = vpop.f32.mrf.mxu0
    %v2128 = vadd.f32 %v1408, %v2127
    %v2129 = vpop.f32.mrf.mxu0
    %v2130 = vadd.f32 %v1410, %v2129
    %2131 = vmatmul.bf16.gmra.mxu0 %v770
    %v2132 = vpop.f32.mrf.mxu0
    %v2133 = vadd.f32 %v1413, %v2132
    %v2134 = vpop.f32.mrf.mxu0
    %v2135 = vadd.f32 %v1415, %v2134
    %2136 = vmatmul.bf16.gmra.mxu0 %v771
    %v2137 = vpop.f32.mrf.mxu0
    %v2138 = vadd.f32 %v1418, %v2137
    %v2139 = vpop.f32.mrf.mxu0
    %v2140 = vadd.f32 %v1420, %v2139
    %2141 = vmatmul.bf16.gmra.mxu0 %v772
    %v2142 = vpop.f32.mrf.mxu0
    %v2143 = vadd.f32 %v1423, %v2142
    %v2144 = vpop.f32.mrf.mxu0
    %v2145 = vadd.f32 %v1425, %v2144
    %2146 = vmatmul.bf16.gmra.mxu0 %v773
    %v2147 = vpop.f32.mrf.mxu0
    %v2148 = vadd.f32 %v1428, %v2147
    %v2149 = vpop.f32.mrf.mxu0
    %v2150 = vadd.f32 %v1430, %v2149
    %2151 = vmatmul.bf16.gmra.mxu0 %v774
    %v2152 = vpop.f32.mrf.mxu0
    %v2153 = vadd.f32 %v1433, %v2152
    %v2154 = vpop.f32.mrf.mxu0
    %v2155 = vadd.f32 %v1435, %v2154
    %2156 = vdwg.mxu0
    %2157 = vmatpush.bf16.msra.mxu0 %v1893
    %2158 = vmatpush.bf16.msra.mxu0 %v1885
    %2159 = vmatpush.bf16.msra.mxu0 %v1877
    %2160 = vmatpush.bf16.msra.mxu0 %v1869
    %2161 = vmatpush.bf16.msra.mxu0 %v1861
    %2162 = vmatpush.bf16.msra.mxu0 %v1853
    %2163 = vmatpush.bf16.msra.mxu0 %v1845
    %2164 = vmatpush.bf16.msra.mxu0 %v1837
    %2165 = vmatmul.bf16.gmra.mxu0 %v767
    %v2166 = vpop.f32.mrf.mxu0
    %v2167 = vadd.f32 %v1447, %v2166
    %v2168 = vpop.f32.mrf.mxu0
    %v2169 = vadd.f32 %v1449, %v2168
    %2170 = vmatmul.bf16.gmra.mxu0 %v768
    %v2171 = vpop.f32.mrf.mxu0
    %v2172 = vadd.f32 %v1452, %v2171
    %v2173 = vpop.f32.mrf.mxu0
    %v2174 = vadd.f32 %v1454, %v2173
    %2175 = vmatmul.bf16.gmra.mxu0 %v769
    %v2176 = vpop.f32.mrf.mxu0
    %v2177 = vadd.f32 %v1457, %v2176
    %v2178 = vpop.f32.mrf.mxu0
    %v2179 = vadd.f32 %v1459, %v2178
    %2180 = vmatmul.bf16.gmra.mxu0 %v770
    %v2181 = vpop.f32.mrf.mxu0
    %v2182 = vadd.f32 %v1462, %v2181
    %v2183 = vpop.f32.mrf.mxu0
    %v2184 = vadd.f32 %v1464, %v2183
    %2185 = vmatmul.bf16.gmra.mxu0 %v771
    %v2186 = vpop.f32.mrf.mxu0
    %v2187 = vadd.f32 %v1467, %v2186
    %v2188 = vpop.f32.mrf.mxu0
    %v2189 = vadd.f32 %v1469, %v2188
    %2190 = vmatmul.bf16.gmra.mxu0 %v772
    %v2191 = vpop.f32.mrf.mxu0
    %v2192 = vadd.f32 %v1472, %v2191
    %v2193 = vpop.f32.mrf.mxu0
    %v2194 = vadd.f32 %v1474, %v2193
    %2195 = vmatmul.bf16.gmra.mxu0 %v773
    %v2196 = vpop.f32.mrf.mxu0
    %v2197 = vadd.f32 %v1477, %v2196
    %v2198 = vpop.f32.mrf.mxu0
    %v2199 = vadd.f32 %v1479, %v2198
    %2200 = vmatmul.bf16.gmra.mxu0 %v774
    %v2201 = vpop.f32.mrf.mxu0
    %v2202 = vadd.f32 %v1482, %v2201
    %v2203 = vpop.f32.mrf.mxu0
    %v2204 = vadd.f32 %v1484, %v2203
    %2205 = vdwg.mxu0
    %2206 = vmatpush.bf16.msra.mxu0 %v1894
    %2207 = vmatpush.bf16.msra.mxu0 %v1886
    %2208 = vmatpush.bf16.msra.mxu0 %v1878
    %2209 = vmatpush.bf16.msra.mxu0 %v1870
    %2210 = vmatpush.bf16.msra.mxu0 %v1862
    %2211 = vmatpush.bf16.msra.mxu0 %v1854
    %2212 = vmatpush.bf16.msra.mxu0 %v1846
    %2213 = vmatpush.bf16.msra.mxu0 %v1838
    %2214 = vmatmul.bf16.gmra.mxu0 %v767
    %v2215 = vpop.f32.mrf.mxu0
    %v2216 = vadd.f32 %v1496, %v2215
    %v2217 = vpop.f32.mrf.mxu0
    %v2218 = vadd.f32 %v1498, %v2217
    %2219 = vmatmul.bf16.gmra.mxu0 %v768
    %v2220 = vpop.f32.mrf.mxu0
    %v2221 = vadd.f32 %v1501, %v2220
    %v2222 = vpop.f32.mrf.mxu0
    %v2223 = vadd.f32 %v1503, %v2222
    %2224 = vmatmul.bf16.gmra.mxu0 %v769
    %v2225 = vpop.f32.mrf.mxu0
    %v2226 = vadd.f32 %v1506, %v2225
    %v2227 = vpop.f32.mrf.mxu0
    %v2228 = vadd.f32 %v1508, %v2227
    %2229 = vmatmul.bf16.gmra.mxu0 %v770
    %v2230 = vpop.f32.mrf.mxu0
    %v2231 = vadd.f32 %v1511, %v2230
    %v2232 = vpop.f32.mrf.mxu0
    %v2233 = vadd.f32 %v1513, %v2232
    %2234 = vmatmul.bf16.gmra.mxu0 %v771
    %v2235 = vpop.f32.mrf.mxu0
    %v2236 = vadd.f32 %v1516, %v2235
    %v2237 = vpop.f32.mrf.mxu0
    %v2238 = vadd.f32 %v1518, %v2237
    %2239 = vmatmul.bf16.gmra.mxu0 %v772
    %v2240 = vpop.f32.mrf.mxu0
    %v2241 = vadd.f32 %v1521, %v2240
    %v2242 = vpop.f32.mrf.mxu0
    %v2243 = vadd.f32 %v1523, %v2242
    %2244 = vmatmul.bf16.gmra.mxu0 %v773
    %v2245 = vpop.f32.mrf.mxu0
    %v2246 = vadd.f32 %v1526, %v2245
    %v2247 = vpop.f32.mrf.mxu0
    %v2248 = vadd.f32 %v1528, %v2247
    %2249 = vmatmul.bf16.gmra.mxu0 %v774
    %v2250 = vpop.f32.mrf.mxu0
    %v2251 = vadd.f32 %v1531, %v2250
    %v2252 = vpop.f32.mrf.mxu0
    %v2253 = vadd.f32 %v1533, %v2252
    %2254 = vdwg.mxu0
    %2255 = vmatpush.bf16.msra.mxu0 %v1895
    %2256 = vmatpush.bf16.msra.mxu0 %v1887
    %2257 = vmatpush.bf16.msra.mxu0 %v1879
    %2258 = vmatpush.bf16.msra.mxu0 %v1871
    %2259 = vmatpush.bf16.msra.mxu0 %v1863
    %2260 = vmatpush.bf16.msra.mxu0 %v1855
    %2261 = vmatpush.bf16.msra.mxu0 %v1847
    %2262 = vmatpush.bf16.msra.mxu0 %v1839
    %2263 = vmatmul.bf16.gmra.mxu0 %v767
    %v2264 = vpop.f32.mrf.mxu0
    %v2265 = vadd.f32 %v1545, %v2264
    %v2266 = vpop.f32.mrf.mxu0
    %v2267 = vadd.f32 %v1547, %v2266
    %2268 = vmatmul.bf16.gmra.mxu0 %v768
    %v2269 = vpop.f32.mrf.mxu0
    %v2270 = vadd.f32 %v1550, %v2269
    %v2271 = vpop.f32.mrf.mxu0
    %v2272 = vadd.f32 %v1552, %v2271
    %2273 = vmatmul.bf16.gmra.mxu0 %v769
    %v2274 = vpop.f32.mrf.mxu0
    %v2275 = vadd.f32 %v1555, %v2274
    %v2276 = vpop.f32.mrf.mxu0
    %v2277 = vadd.f32 %v1557, %v2276
    %2278 = vmatmul.bf16.gmra.mxu0 %v770
    %v2279 = vpop.f32.mrf.mxu0
    %v2280 = vadd.f32 %v1560, %v2279
    %v2281 = vpop.f32.mrf.mxu0
    %v2282 = vadd.f32 %v1562, %v2281
    %2283 = vmatmul.bf16.gmra.mxu0 %v771
    %v2284 = vpop.f32.mrf.mxu0
    %v2285 = vadd.f32 %v1565, %v2284
    %v2286 = vpop.f32.mrf.mxu0
    %v2287 = vadd.f32 %v1567, %v2286
    %2288 = vmatmul.bf16.gmra.mxu0 %v772
    %v2289 = vpop.f32.mrf.mxu0
    %v2290 = vadd.f32 %v1570, %v2289
    %v2291 = vpop.f32.mrf.mxu0
    %v2292 = vadd.f32 %v1572, %v2291
    %2293 = vmatmul.bf16.gmra.mxu0 %v773
    %v2294 = vpop.f32.mrf.mxu0
    %v2295 = vadd.f32 %v1575, %v2294
    %v2296 = vpop.f32.mrf.mxu0
    %v2297 = vadd.f32 %v1577, %v2296
    %2298 = vmatmul.bf16.gmra.mxu0 %v774
    %v2299 = vpop.f32.mrf.mxu0
    %v2300 = vadd.f32 %v1580, %v2299
    %v2301 = vpop.f32.mrf.mxu0
    %v2302 = vadd.f32 %v1582, %v2301
    %2303 = vdwg.mxu0
    %2304 = vmatpush.bf16.msra.mxu0 %v1896
    %2305 = vmatpush.bf16.msra.mxu0 %v1888
    %2306 = vmatpush.bf16.msra.mxu0 %v1880
    %2307 = vmatpush.bf16.msra.mxu0 %v1872
    %2308 = vmatpush.bf16.msra.mxu0 %v1864
    %2309 = vmatpush.bf16.msra.mxu0 %v1856
    %2310 = vmatpush.bf16.msra.mxu0 %v1848
    %2311 = vmatpush.bf16.msra.mxu0 %v1840
    %2312 = vmatmul.bf16.gmra.mxu0 %v767
    %v2313 = vpop.f32.mrf.mxu0
    %v2314 = vadd.f32 %v1594, %v2313
    %v2315 = vpop.f32.mrf.mxu0
    %v2316 = vadd.f32 %v1596, %v2315
    %2317 = vmatmul.bf16.gmra.mxu0 %v768
    %v2318 = vpop.f32.mrf.mxu0
    %v2319 = vadd.f32 %v1599, %v2318
    %v2320 = vpop.f32.mrf.mxu0
    %v2321 = vadd.f32 %v1601, %v2320
    %2322 = vmatmul.bf16.gmra.mxu0 %v769
    %v2323 = vpop.f32.mrf.mxu0
    %v2324 = vadd.f32 %v1604, %v2323
    %v2325 = vpop.f32.mrf.mxu0
    %v2326 = vadd.f32 %v1606, %v2325
    %2327 = vmatmul.bf16.gmra.mxu0 %v770
    %v2328 = vpop.f32.mrf.mxu0
    %v2329 = vadd.f32 %v1609, %v2328
    %v2330 = vpop.f32.mrf.mxu0
    %v2331 = vadd.f32 %v1611, %v2330
    %2332 = vmatmul.bf16.gmra.mxu0 %v771
    %v2333 = vpop.f32.mrf.mxu0
    %v2334 = vadd.f32 %v1614, %v2333
    %v2335 = vpop.f32.mrf.mxu0
    %v2336 = vadd.f32 %v1616, %v2335
    %2337 = vmatmul.bf16.gmra.mxu0 %v772
    %v2338 = vpop.f32.mrf.mxu0
    %v2339 = vadd.f32 %v1619, %v2338
    %v2340 = vpop.f32.mrf.mxu0
    %v2341 = vadd.f32 %v1621, %v2340
    %2342 = vmatmul.bf16.gmra.mxu0 %v773
    %v2343 = vpop.f32.mrf.mxu0
    %v2344 = vadd.f32 %v1624, %v2343
    %v2345 = vpop.f32.mrf.mxu0
    %v2346 = vadd.f32 %v1626, %v2345
    %2347 = vmatmul.bf16.gmra.mxu0 %v774
    %v2348 = vpop.f32.mrf.mxu0
    %v2349 = vadd.f32 %v1629, %v2348
    %v2350 = vpop.f32.mrf.mxu0
    %v2351 = vadd.f32 %v1631, %v2350
    %2352 = vdwg.mxu0
    %vm2353 = vcmask 1046528
    %v2354 = vrot.slane %v767, 1
    %v2355 = vrot.slane %v768, 1
    %v2356 = vsel %vm2353, %v2354, %v2355
    %v2357 = vrot.slane %v769, 1
    %v2358 = vsel %vm2353, %v2355, %v2357
    %v2359 = vrot.slane %v770, 1
    %v2360 = vsel %vm2353, %v2357, %v2359
    %v2361 = vrot.slane %v771, 1
    %v2362 = vsel %vm2353, %v2359, %v2361
    %v2363 = vrot.slane %v772, 1
    %v2364 = vsel %vm2353, %v2361, %v2363
    %v2365 = vrot.slane %v773, 1
    %v2366 = vsel %vm2353, %v2363, %v2365
    %v2367 = vrot.slane %v774, 1
    %v2368 = vsel %vm2353, %v2365, %v2367
    %v2376 = vrot.slane %v847, 1
    %vm2377 = vcmask 1046528
    %v2380 = vsel %vm2377, %v2367, %v2376
    %s2382 = scalar_lea.vmem %s3, 1024
    %v2383 = vld [vmem:[%s2382] sm:$0xff]
    %v2384 = vld [vmem:[%s2382 + $0x8] sm:$0xff]
    %v2385 = vld [vmem:[%s2382 + $0x10] sm:$0xff]
    %v2386 = vld [vmem:[%s2382 + $0x18] sm:$0xff]
    %v2387 = vld [vmem:[%s2382 + $0x20] sm:$0xff]
    %v2388 = vld [vmem:[%s2382 + $0x28] sm:$0xff]
    %v2389 = vld [vmem:[%s2382 + $0x30] sm:$0xff]
    %v2390 = vld [vmem:[%s2382 + $0x38] sm:$0xff]
    %v2391 = vld [vmem:[%s2382 + $0x40] sm:$0xff]
    %v2392 = vld [vmem:[%s2382 + $0x48] sm:$0xff]
    %v2393 = vld [vmem:[%s2382 + $0x50] sm:$0xff]
    %v2394 = vld [vmem:[%s2382 + $0x58] sm:$0xff]
    %v2395 = vld [vmem:[%s2382 + $0x60] sm:$0xff]
    %v2396 = vld [vmem:[%s2382 + $0x68] sm:$0xff]
    %v2397 = vld [vmem:[%s2382 + $0x70] sm:$0xff]
    %v2398 = vld [vmem:[%s2382 + $0x78] sm:$0xff]
    %v2399 = vld [vmem:[%s2382 + $0x80] sm:$0xff]
    %v2400 = vld [vmem:[%s2382 + $0x88] sm:$0xff]
    %v2401 = vld [vmem:[%s2382 + $0x90] sm:$0xff]
    %v2402 = vld [vmem:[%s2382 + $0x98] sm:$0xff]
    %v2403 = vld [vmem:[%s2382 + $0xa0] sm:$0xff]
    %v2404 = vld [vmem:[%s2382 + $0xa8] sm:$0xff]
    %v2405 = vld [vmem:[%s2382 + $0xb0] sm:$0xff]
    %v2406 = vld [vmem:[%s2382 + $0xb8] sm:$0xff]
    %v2407 = vld [vmem:[%s2382 + $0xc0] sm:$0xff]
    %v2408 = vld [vmem:[%s2382 + $0xc8] sm:$0xff]
    %v2409 = vld [vmem:[%s2382 + $0xd0] sm:$0xff]
    %v2410 = vld [vmem:[%s2382 + $0xd8] sm:$0xff]
    %v2411 = vld [vmem:[%s2382 + $0xe0] sm:$0xff]
    %v2412 = vld [vmem:[%s2382 + $0xe8] sm:$0xff]
    %v2413 = vld [vmem:[%s2382 + $0xf0] sm:$0xff]
    %v2414 = vld [vmem:[%s2382 + $0xf8] sm:$0xff]
    %v2415 = vld [vmem:[%s2382 + $0x100] sm:$0xff]
    %v2416 = vld [vmem:[%s2382 + $0x108] sm:$0xff]
    %v2417 = vld [vmem:[%s2382 + $0x110] sm:$0xff]
    %v2418 = vld [vmem:[%s2382 + $0x118] sm:$0xff]
    %v2419 = vld [vmem:[%s2382 + $0x120] sm:$0xff]
    %v2420 = vld [vmem:[%s2382 + $0x128] sm:$0xff]
    %v2421 = vld [vmem:[%s2382 + $0x130] sm:$0xff]
    %v2422 = vld [vmem:[%s2382 + $0x138] sm:$0xff]
    %v2423 = vld [vmem:[%s2382 + $0x140] sm:$0xff]
    %v2424 = vld [vmem:[%s2382 + $0x148] sm:$0xff]
    %v2425 = vld [vmem:[%s2382 + $0x150] sm:$0xff]
    %v2426 = vld [vmem:[%s2382 + $0x158] sm:$0xff]
    %v2427 = vld [vmem:[%s2382 + $0x160] sm:$0xff]
    %v2428 = vld [vmem:[%s2382 + $0x168] sm:$0xff]
    %v2429 = vld [vmem:[%s2382 + $0x170] sm:$0xff]
    %v2430 = vld [vmem:[%s2382 + $0x178] sm:$0xff]
    %v2431 = vld [vmem:[%s2382 + $0x180] sm:$0xff]
    %v2432 = vld [vmem:[%s2382 + $0x188] sm:$0xff]
    %v2433 = vld [vmem:[%s2382 + $0x190] sm:$0xff]
    %v2434 = vld [vmem:[%s2382 + $0x198] sm:$0xff]
    %v2435 = vld [vmem:[%s2382 + $0x1a0] sm:$0xff]
    %v2436 = vld [vmem:[%s2382 + $0x1a8] sm:$0xff]
    %v2437 = vld [vmem:[%s2382 + $0x1b0] sm:$0xff]
    %v2438 = vld [vmem:[%s2382 + $0x1b8] sm:$0xff]
    %v2439 = vld [vmem:[%s2382 + $0x1c0] sm:$0xff]
    %v2440 = vld [vmem:[%s2382 + $0x1c8] sm:$0xff]
    %v2441 = vld [vmem:[%s2382 + $0x1d0] sm:$0xff]
    %v2442 = vld [vmem:[%s2382 + $0x1d8] sm:$0xff]
    %v2443 = vld [vmem:[%s2382 + $0x1e0] sm:$0xff]
    %v2444 = vld [vmem:[%s2382 + $0x1e8] sm:$0xff]
    %v2445 = vld [vmem:[%s2382 + $0x1f0] sm:$0xff]
    %v2446 = vld [vmem:[%s2382 + $0x1f8] sm:$0xff]
    %v2511 = vunpack.c.l.b16 %v2383
    %v2512 = vunpack.c.h.b16 %v2383
    %v2513 = vunpack.c.l.b16 %v2384
    %v2514 = vunpack.c.h.b16 %v2384
    %v2515 = vunpack.c.l.b16 %v2385
    %v2516 = vunpack.c.h.b16 %v2385
    %v2517 = vunpack.c.l.b16 %v2386
    %v2518 = vunpack.c.h.b16 %v2386
    %v2519 = vunpack.c.l.b16 %v2387
    %v2520 = vunpack.c.h.b16 %v2387
    %v2521 = vunpack.c.l.b16 %v2388
    %v2522 = vunpack.c.h.b16 %v2388
    %v2523 = vunpack.c.l.b16 %v2389
    %v2524 = vunpack.c.h.b16 %v2389
    %v2525 = vunpack.c.l.b16 %v2390
    %v2526 = vunpack.c.h.b16 %v2390
    %v2527 = vunpack.c.l.b16 %v2391
    %v2528 = vunpack.c.h.b16 %v2391
    %v2529 = vunpack.c.l.b16 %v2392
    %v2530 = vunpack.c.h.b16 %v2392
    %v2531 = vunpack.c.l.b16 %v2393
    %v2532 = vunpack.c.h.b16 %v2393
    %v2533 = vunpack.c.l.b16 %v2394
    %v2534 = vunpack.c.h.b16 %v2394
    %v2535 = vunpack.c.l.b16 %v2395
    %v2536 = vunpack.c.h.b16 %v2395
    %v2537 = vunpack.c.l.b16 %v2396
    %v2538 = vunpack.c.h.b16 %v2396
    %v2539 = vunpack.c.l.b16 %v2397
    %v2540 = vunpack.c.h.b16 %v2397
    %v2541 = vunpack.c.l.b16 %v2398
    %v2542 = vunpack.c.h.b16 %v2398
    %v2543 = vunpack.c.l.b16 %v2399
    %v2544 = vunpack.c.h.b16 %v2399
    %v2545 = vunpack.c.l.b16 %v2400
    %v2546 = vunpack.c.h.b16 %v2400
    %v2547 = vunpack.c.l.b16 %v2401
    %v2548 = vunpack.c.h.b16 %v2401
    %v2549 = vunpack.c.l.b16 %v2402
    %v2550 = vunpack.c.h.b16 %v2402
    %v2551 = vunpack.c.l.b16 %v2403
    %v2552 = vunpack.c.h.b16 %v2403
    %v2553 = vunpack.c.l.b16 %v2404
    %v2554 = vunpack.c.h.b16 %v2404
    %v2555 = vunpack.c.l.b16 %v2405
    %v2556 = vunpack.c.h.b16 %v2405
    %v2557 = vunpack.c.l.b16 %v2406
    %v2558 = vunpack.c.h.b16 %v2406
    %v2559 = vunpack.c.l.b16 %v2407
    %v2560 = vunpack.c.h.b16 %v2407
    %v2561 = vunpack.c.l.b16 %v2408
    %v2562 = vunpack.c.h.b16 %v2408
    %v2563 = vunpack.c.l.b16 %v2409
    %v2564 = vunpack.c.h.b16 %v2409
    %v2565 = vunpack.c.l.b16 %v2410
    %v2566 = vunpack.c.h.b16 %v2410
    %v2567 = vunpack.c.l.b16 %v2411
    %v2568 = vunpack.c.h.b16 %v2411
    %v2569 = vunpack.c.l.b16 %v2412
    %v2570 = vunpack.c.h.b16 %v2412
    %v2571 = vunpack.c.l.b16 %v2413
    %v2572 = vunpack.c.h.b16 %v2413
    %v2573 = vunpack.c.l.b16 %v2414
    %v2574 = vunpack.c.h.b16 %v2414
    %v2575 = vunpack.c.l.b16 %v2415
    %v2576 = vunpack.c.h.b16 %v2415
    %v2577 = vunpack.c.l.b16 %v2416
    %v2578 = vunpack.c.h.b16 %v2416
    %v2579 = vunpack.c.l.b16 %v2417
    %v2580 = vunpack.c.h.b16 %v2417
    %v2581 = vunpack.c.l.b16 %v2418
    %v2582 = vunpack.c.h.b16 %v2418
    %v2583 = vunpack.c.l.b16 %v2419
    %v2584 = vunpack.c.h.b16 %v2419
    %v2585 = vunpack.c.l.b16 %v2420
    %v2586 = vunpack.c.h.b16 %v2420
    %v2587 = vunpack.c.l.b16 %v2421
    %v2588 = vunpack.c.h.b16 %v2421
    %v2589 = vunpack.c.l.b16 %v2422
    %v2590 = vunpack.c.h.b16 %v2422
    %v2591 = vunpack.c.l.b16 %v2423
    %v2592 = vunpack.c.h.b16 %v2423
    %v2593 = vunpack.c.l.b16 %v2424
    %v2594 = vunpack.c.h.b16 %v2424
    %v2595 = vunpack.c.l.b16 %v2425
    %v2596 = vunpack.c.h.b16 %v2425
    %v2597 = vunpack.c.l.b16 %v2426
    %v2598 = vunpack.c.h.b16 %v2426
    %v2599 = vunpack.c.l.b16 %v2427
    %v2600 = vunpack.c.h.b16 %v2427
    %v2601 = vunpack.c.l.b16 %v2428
    %v2602 = vunpack.c.h.b16 %v2428
    %v2603 = vunpack.c.l.b16 %v2429
    %v2604 = vunpack.c.h.b16 %v2429
    %v2605 = vunpack.c.l.b16 %v2430
    %v2606 = vunpack.c.h.b16 %v2430
    %v2607 = vunpack.c.l.b16 %v2431
    %v2608 = vunpack.c.h.b16 %v2431
    %v2609 = vunpack.c.l.b16 %v2432
    %v2610 = vunpack.c.h.b16 %v2432
    %v2611 = vunpack.c.l.b16 %v2433
    %v2612 = vunpack.c.h.b16 %v2433
    %v2613 = vunpack.c.l.b16 %v2434
    %v2614 = vunpack.c.h.b16 %v2434
    %v2615 = vunpack.c.l.b16 %v2435
    %v2616 = vunpack.c.h.b16 %v2435
    %v2617 = vunpack.c.l.b16 %v2436
    %v2618 = vunpack.c.h.b16 %v2436
    %v2619 = vunpack.c.l.b16 %v2437
    %v2620 = vunpack.c.h.b16 %v2437
    %v2621 = vunpack.c.l.b16 %v2438
    %v2622 = vunpack.c.h.b16 %v2438
    %v2623 = vunpack.c.l.b16 %v2439
    %v2624 = vunpack.c.h.b16 %v2439
    %v2625 = vunpack.c.l.b16 %v2440
    %v2626 = vunpack.c.h.b16 %v2440
    %v2627 = vunpack.c.l.b16 %v2441
    %v2628 = vunpack.c.h.b16 %v2441
    %v2629 = vunpack.c.l.b16 %v2442
    %v2630 = vunpack.c.h.b16 %v2442
    %v2631 = vunpack.c.l.b16 %v2443
    %v2632 = vunpack.c.h.b16 %v2443
    %v2633 = vunpack.c.l.b16 %v2444
    %v2634 = vunpack.c.h.b16 %v2444
    %v2635 = vunpack.c.l.b16 %v2445
    %v2636 = vunpack.c.h.b16 %v2445
    %v2637 = vunpack.c.l.b16 %v2446
    %v2638 = vunpack.c.h.b16 %v2446
    %v2639 = vpack.c.b16 %v2519, %v2511
    %v2640 = vpack.c.b16 %v2520, %v2512
    %v2641 = vpack.c.b16 %v2521, %v2513
    %v2642 = vpack.c.b16 %v2522, %v2514
    %v2643 = vpack.c.b16 %v2523, %v2515
    %v2644 = vpack.c.b16 %v2524, %v2516
    %v2645 = vpack.c.b16 %v2525, %v2517
    %v2646 = vpack.c.b16 %v2526, %v2518
    %v2647 = vpack.c.b16 %v2535, %v2527
    %v2648 = vpack.c.b16 %v2536, %v2528
    %v2649 = vpack.c.b16 %v2537, %v2529
    %v2650 = vpack.c.b16 %v2538, %v2530
    %v2651 = vpack.c.b16 %v2539, %v2531
    %v2652 = vpack.c.b16 %v2540, %v2532
    %v2653 = vpack.c.b16 %v2541, %v2533
    %v2654 = vpack.c.b16 %v2542, %v2534
    %v2655 = vpack.c.b16 %v2551, %v2543
    %v2656 = vpack.c.b16 %v2552, %v2544
    %v2657 = vpack.c.b16 %v2553, %v2545
    %v2658 = vpack.c.b16 %v2554, %v2546
    %v2659 = vpack.c.b16 %v2555, %v2547
    %v2660 = vpack.c.b16 %v2556, %v2548
    %v2661 = vpack.c.b16 %v2557, %v2549
    %v2662 = vpack.c.b16 %v2558, %v2550
    %v2663 = vpack.c.b16 %v2567, %v2559
    %v2664 = vpack.c.b16 %v2568, %v2560
    %v2665 = vpack.c.b16 %v2569, %v2561
    %v2666 = vpack.c.b16 %v2570, %v2562
    %v2667 = vpack.c.b16 %v2571, %v2563
    %v2668 = vpack.c.b16 %v2572, %v2564
    %v2669 = vpack.c.b16 %v2573, %v2565
    %v2670 = vpack.c.b16 %v2574, %v2566
    %v2671 = vpack.c.b16 %v2583, %v2575
    %v2672 = vpack.c.b16 %v2584, %v2576
    %v2673 = vpack.c.b16 %v2585, %v2577
    %v2674 = vpack.c.b16 %v2586, %v2578
    %v2675 = vpack.c.b16 %v2587, %v2579
    %v2676 = vpack.c.b16 %v2588, %v2580
    %v2677 = vpack.c.b16 %v2589, %v2581
    %v2678 = vpack.c.b16 %v2590, %v2582
    %v2679 = vpack.c.b16 %v2599, %v2591
    %v2680 = vpack.c.b16 %v2600, %v2592
    %v2681 = vpack.c.b16 %v2601, %v2593
    %v2682 = vpack.c.b16 %v2602, %v2594
    %v2683 = vpack.c.b16 %v2603, %v2595
    %v2684 = vpack.c.b16 %v2604, %v2596
    %v2685 = vpack.c.b16 %v2605, %v2597
    %v2686 = vpack.c.b16 %v2606, %v2598
    %v2687 = vpack.c.b16 %v2615, %v2607
    %v2688 = vpack.c.b16 %v2616, %v2608
    %v2689 = vpack.c.b16 %v2617, %v2609
    %v2690 = vpack.c.b16 %v2618, %v2610
    %v2691 = vpack.c.b16 %v2619, %v2611
    %v2692 = vpack.c.b16 %v2620, %v2612
    %v2693 = vpack.c.b16 %v2621, %v2613
    %v2694 = vpack.c.b16 %v2622, %v2614
    %v2695 = vpack.c.b16 %v2631, %v2623
    %v2696 = vpack.c.b16 %v2632, %v2624
    %v2697 = vpack.c.b16 %v2633, %v2625
    %v2698 = vpack.c.b16 %v2634, %v2626
    %v2699 = vpack.c.b16 %v2635, %v2627
    %v2700 = vpack.c.b16 %v2636, %v2628
    %v2701 = vpack.c.b16 %v2637, %v2629
    %v2702 = vpack.c.b16 %v2638, %v2630
    %2767 = vmatpush.bf16.msra.mxu0 %v2695
    %2768 = vmatpush.bf16.msra.mxu0 %v2687
    %2769 = vmatpush.bf16.msra.mxu0 %v2679
    %2770 = vmatpush.bf16.msra.mxu0 %v2671
    %2771 = vmatpush.bf16.msra.mxu0 %v2663
    %2772 = vmatpush.bf16.msra.mxu0 %v2655
    %2773 = vmatpush.bf16.msra.mxu0 %v2647
    %2774 = vmatpush.bf16.msra.mxu0 %v2639
    %2775 = vmatmul.bf16.gmra.mxu0 %v2356
    %v2776 = vpop.f32.mrf.mxu0
    %v2777 = vadd.f32 0.0, %v2776
    %v2778 = vpop.f32.mrf.mxu0
    %v2779 = vadd.f32 0.0, %v2778
    %2780 = vmatmul.bf16.gmra.mxu0 %v2358
    %v2781 = vpop.f32.mrf.mxu0
    %v2782 = vadd.f32 0.0, %v2781
    %v2783 = vpop.f32.mrf.mxu0
    %v2784 = vadd.f32 0.0, %v2783
    %2785 = vmatmul.bf16.gmra.mxu0 %v2360
    %v2786 = vpop.f32.mrf.mxu0
    %v2787 = vadd.f32 0.0, %v2786
    %v2788 = vpop.f32.mrf.mxu0
    %v2789 = vadd.f32 0.0, %v2788
    %2790 = vmatmul.bf16.gmra.mxu0 %v2362
    %v2791 = vpop.f32.mrf.mxu0
    %v2792 = vadd.f32 0.0, %v2791
    %v2793 = vpop.f32.mrf.mxu0
    %v2794 = vadd.f32 0.0, %v2793
    %2795 = vmatmul.bf16.gmra.mxu0 %v2364
    %v2796 = vpop.f32.mrf.mxu0
    %v2797 = vadd.f32 0.0, %v2796
    %v2798 = vpop.f32.mrf.mxu0
    %v2799 = vadd.f32 0.0, %v2798
    %2800 = vmatmul.bf16.gmra.mxu0 %v2366
    %v2801 = vpop.f32.mrf.mxu0
    %v2802 = vadd.f32 0.0, %v2801
    %v2803 = vpop.f32.mrf.mxu0
    %v2804 = vadd.f32 0.0, %v2803
    %2805 = vmatmul.bf16.gmra.mxu0 %v2368
    %v2806 = vpop.f32.mrf.mxu0
    %v2807 = vadd.f32 0.0, %v2806
    %v2808 = vpop.f32.mrf.mxu0
    %v2809 = vadd.f32 0.0, %v2808
    %2810 = vmatmul.bf16.gmra.mxu0 %v2380
    %v2811 = vpop.f32.mrf.mxu0
    %v2812 = vadd.f32 0.0, %v2811
    %v2813 = vpop.f32.mrf.mxu0
    %v2814 = vadd.f32 0.0, %v2813
    %2815 = vdwg.mxu0
    %2816 = vmatpush.bf16.msra.mxu0 %v2696
    %2817 = vmatpush.bf16.msra.mxu0 %v2688
    %2818 = vmatpush.bf16.msra.mxu0 %v2680
    %2819 = vmatpush.bf16.msra.mxu0 %v2672
    %2820 = vmatpush.bf16.msra.mxu0 %v2664
    %2821 = vmatpush.bf16.msra.mxu0 %v2656
    %2822 = vmatpush.bf16.msra.mxu0 %v2648
    %2823 = vmatpush.bf16.msra.mxu0 %v2640
    %2824 = vmatmul.bf16.gmra.mxu0 %v2356
    %v2825 = vpop.f32.mrf.mxu0
    %v2826 = vadd.f32 0.0, %v2825
    %v2827 = vpop.f32.mrf.mxu0
    %v2828 = vadd.f32 0.0, %v2827
    %2829 = vmatmul.bf16.gmra.mxu0 %v2358
    %v2830 = vpop.f32.mrf.mxu0
    %v2831 = vadd.f32 0.0, %v2830
    %v2832 = vpop.f32.mrf.mxu0
    %v2833 = vadd.f32 0.0, %v2832
    %2834 = vmatmul.bf16.gmra.mxu0 %v2360
    %v2835 = vpop.f32.mrf.mxu0
    %v2836 = vadd.f32 0.0, %v2835
    %v2837 = vpop.f32.mrf.mxu0
    %v2838 = vadd.f32 0.0, %v2837
    %2839 = vmatmul.bf16.gmra.mxu0 %v2362
    %v2840 = vpop.f32.mrf.mxu0
    %v2841 = vadd.f32 0.0, %v2840
    %v2842 = vpop.f32.mrf.mxu0
    %v2843 = vadd.f32 0.0, %v2842
    %2844 = vmatmul.bf16.gmra.mxu0 %v2364
    %v2845 = vpop.f32.mrf.mxu0
    %v2846 = vadd.f32 0.0, %v2845
    %v2847 = vpop.f32.mrf.mxu0
    %v2848 = vadd.f32 0.0, %v2847
    %2849 = vmatmul.bf16.gmra.mxu0 %v2366
    %v2850 = vpop.f32.mrf.mxu0
    %v2851 = vadd.f32 0.0, %v2850
    %v2852 = vpop.f32.mrf.mxu0
    %v2853 = vadd.f32 0.0, %v2852
    %2854 = vmatmul.bf16.gmra.mxu0 %v2368
    %v2855 = vpop.f32.mrf.mxu0
    %v2856 = vadd.f32 0.0, %v2855
    %v2857 = vpop.f32.mrf.mxu0
    %v2858 = vadd.f32 0.0, %v2857
    %2859 = vmatmul.bf16.gmra.mxu0 %v2380
    %v2860 = vpop.f32.mrf.mxu0
    %v2861 = vadd.f32 0.0, %v2860
    %v2862 = vpop.f32.mrf.mxu0
    %v2863 = vadd.f32 0.0, %v2862
    %2864 = vdwg.mxu0
    %2865 = vmatpush.bf16.msra.mxu0 %v2697
    %2866 = vmatpush.bf16.msra.mxu0 %v2689
    %2867 = vmatpush.bf16.msra.mxu0 %v2681
    %2868 = vmatpush.bf16.msra.mxu0 %v2673
    %2869 = vmatpush.bf16.msra.mxu0 %v2665
    %2870 = vmatpush.bf16.msra.mxu0 %v2657
    %2871 = vmatpush.bf16.msra.mxu0 %v2649
    %2872 = vmatpush.bf16.msra.mxu0 %v2641
    %2873 = vmatmul.bf16.gmra.mxu0 %v2356
    %v2874 = vpop.f32.mrf.mxu0
    %v2875 = vadd.f32 0.0, %v2874
    %v2876 = vpop.f32.mrf.mxu0
    %v2877 = vadd.f32 0.0, %v2876
    %2878 = vmatmul.bf16.gmra.mxu0 %v2358
    %v2879 = vpop.f32.mrf.mxu0
    %v2880 = vadd.f32 0.0, %v2879
    %v2881 = vpop.f32.mrf.mxu0
    %v2882 = vadd.f32 0.0, %v2881
    %2883 = vmatmul.bf16.gmra.mxu0 %v2360
    %v2884 = vpop.f32.mrf.mxu0
    %v2885 = vadd.f32 0.0, %v2884
    %v2886 = vpop.f32.mrf.mxu0
    %v2887 = vadd.f32 0.0, %v2886
    %2888 = vmatmul.bf16.gmra.mxu0 %v2362
    %v2889 = vpop.f32.mrf.mxu0
    %v2890 = vadd.f32 0.0, %v2889
    %v2891 = vpop.f32.mrf.mxu0
    %v2892 = vadd.f32 0.0, %v2891
    %2893 = vmatmul.bf16.gmra.mxu0 %v2364
    %v2894 = vpop.f32.mrf.mxu0
    %v2895 = vadd.f32 0.0, %v2894
    %v2896 = vpop.f32.mrf.mxu0
    %v2897 = vadd.f32 0.0, %v2896
    %2898 = vmatmul.bf16.gmra.mxu0 %v2366
    %v2899 = vpop.f32.mrf.mxu0
    %v2900 = vadd.f32 0.0, %v2899
    %v2901 = vpop.f32.mrf.mxu0
    %v2902 = vadd.f32 0.0, %v2901
    %2903 = vmatmul.bf16.gmra.mxu0 %v2368
    %v2904 = vpop.f32.mrf.mxu0
    %v2905 = vadd.f32 0.0, %v2904
    %v2906 = vpop.f32.mrf.mxu0
    %v2907 = vadd.f32 0.0, %v2906
    %2908 = vmatmul.bf16.gmra.mxu0 %v2380
    %v2909 = vpop.f32.mrf.mxu0
    %v2910 = vadd.f32 0.0, %v2909
    %v2911 = vpop.f32.mrf.mxu0
    %v2912 = vadd.f32 0.0, %v2911
    %2913 = vdwg.mxu0
    %2914 = vmatpush.bf16.msra.mxu0 %v2698
    %2915 = vmatpush.bf16.msra.mxu0 %v2690
    %2916 = vmatpush.bf16.msra.mxu0 %v2682
    %2917 = vmatpush.bf16.msra.mxu0 %v2674
    %2918 = vmatpush.bf16.msra.mxu0 %v2666
    %2919 = vmatpush.bf16.msra.mxu0 %v2658
    %2920 = vmatpush.bf16.msra.mxu0 %v2650
    %2921 = vmatpush.bf16.msra.mxu0 %v2642
    %2922 = vmatmul.bf16.gmra.mxu0 %v2356
    %v2923 = vpop.f32.mrf.mxu0
    %v2924 = vadd.f32 0.0, %v2923
    %v2925 = vpop.f32.mrf.mxu0
    %v2926 = vadd.f32 0.0, %v2925
    %2927 = vmatmul.bf16.gmra.mxu0 %v2358
    %v2928 = vpop.f32.mrf.mxu0
    %v2929 = vadd.f32 0.0, %v2928
    %v2930 = vpop.f32.mrf.mxu0
    %v2931 = vadd.f32 0.0, %v2930
    %2932 = vmatmul.bf16.gmra.mxu0 %v2360
    %v2933 = vpop.f32.mrf.mxu0
    %v2934 = vadd.f32 0.0, %v2933
    %v2935 = vpop.f32.mrf.mxu0
    %v2936 = vadd.f32 0.0, %v2935
    %2937 = vmatmul.bf16.gmra.mxu0 %v2362
    %v2938 = vpop.f32.mrf.mxu0
    %v2939 = vadd.f32 0.0, %v2938
    %v2940 = vpop.f32.mrf.mxu0
    %v2941 = vadd.f32 0.0, %v2940
    %2942 = vmatmul.bf16.gmra.mxu0 %v2364
    %v2943 = vpop.f32.mrf.mxu0
    %v2944 = vadd.f32 0.0, %v2943
    %v2945 = vpop.f32.mrf.mxu0
    %v2946 = vadd.f32 0.0, %v2945
    %2947 = vmatmul.bf16.gmra.mxu0 %v2366
    %v2948 = vpop.f32.mrf.mxu0
    %v2949 = vadd.f32 0.0, %v2948
    %v2950 = vpop.f32.mrf.mxu0
    %v2951 = vadd.f32 0.0, %v2950
    %2952 = vmatmul.bf16.gmra.mxu0 %v2368
    %v2953 = vpop.f32.mrf.mxu0
    %v2954 = vadd.f32 0.0, %v2953
    %v2955 = vpop.f32.mrf.mxu0
    %v2956 = vadd.f32 0.0, %v2955
    %2957 = vmatmul.bf16.gmra.mxu0 %v2380
    %v2958 = vpop.f32.mrf.mxu0
    %v2959 = vadd.f32 0.0, %v2958
    %v2960 = vpop.f32.mrf.mxu0
    %v2961 = vadd.f32 0.0, %v2960
    %2962 = vdwg.mxu0
    %2963 = vmatpush.bf16.msra.mxu0 %v2699
    %2964 = vmatpush.bf16.msra.mxu0 %v2691
    %2965 = vmatpush.bf16.msra.mxu0 %v2683
    %2966 = vmatpush.bf16.msra.mxu0 %v2675
    %2967 = vmatpush.bf16.msra.mxu0 %v2667
    %2968 = vmatpush.bf16.msra.mxu0 %v2659
    %2969 = vmatpush.bf16.msra.mxu0 %v2651
    %2970 = vmatpush.bf16.msra.mxu0 %v2643
    %2971 = vmatmul.bf16.gmra.mxu0 %v2356
    %v2972 = vpop.f32.mrf.mxu0
    %v2973 = vadd.f32 0.0, %v2972
    %v2974 = vpop.f32.mrf.mxu0
    %v2975 = vadd.f32 0.0, %v2974
    %2976 = vmatmul.bf16.gmra.mxu0 %v2358
    %v2977 = vpop.f32.mrf.mxu0
    %v2978 = vadd.f32 0.0, %v2977
    %v2979 = vpop.f32.mrf.mxu0
    %v2980 = vadd.f32 0.0, %v2979
    %2981 = vmatmul.bf16.gmra.mxu0 %v2360
    %v2982 = vpop.f32.mrf.mxu0
    %v2983 = vadd.f32 0.0, %v2982
    %v2984 = vpop.f32.mrf.mxu0
    %v2985 = vadd.f32 0.0, %v2984
    %2986 = vmatmul.bf16.gmra.mxu0 %v2362
    %v2987 = vpop.f32.mrf.mxu0
    %v2988 = vadd.f32 0.0, %v2987
    %v2989 = vpop.f32.mrf.mxu0
    %v2990 = vadd.f32 0.0, %v2989
    %2991 = vmatmul.bf16.gmra.mxu0 %v2364
    %v2992 = vpop.f32.mrf.mxu0
    %v2993 = vadd.f32 0.0, %v2992
    %v2994 = vpop.f32.mrf.mxu0
    %v2995 = vadd.f32 0.0, %v2994
    %2996 = vmatmul.bf16.gmra.mxu0 %v2366
    %v2997 = vpop.f32.mrf.mxu0
    %v2998 = vadd.f32 0.0, %v2997
    %v2999 = vpop.f32.mrf.mxu0
    %v3000 = vadd.f32 0.0, %v2999
    %3001 = vmatmul.bf16.gmra.mxu0 %v2368
    %v3002 = vpop.f32.mrf.mxu0
    %v3003 = vadd.f32 0.0, %v3002
    %v3004 = vpop.f32.mrf.mxu0
    %v3005 = vadd.f32 0.0, %v3004
    %3006 = vmatmul.bf16.gmra.mxu0 %v2380
    %v3007 = vpop.f32.mrf.mxu0
    %v3008 = vadd.f32 0.0, %v3007
    %v3009 = vpop.f32.mrf.mxu0
    %v3010 = vadd.f32 0.0, %v3009
    %3011 = vdwg.mxu0
    %3012 = vmatpush.bf16.msra.mxu0 %v2700
    %3013 = vmatpush.bf16.msra.mxu0 %v2692
    %3014 = vmatpush.bf16.msra.mxu0 %v2684
    %3015 = vmatpush.bf16.msra.mxu0 %v2676
    %3016 = vmatpush.bf16.msra.mxu0 %v2668
    %3017 = vmatpush.bf16.msra.mxu0 %v2660
    %3018 = vmatpush.bf16.msra.mxu0 %v2652
    %3019 = vmatpush.bf16.msra.mxu0 %v2644
    %3020 = vmatmul.bf16.gmra.mxu0 %v2356
    %v3021 = vpop.f32.mrf.mxu0
    %v3022 = vadd.f32 0.0, %v3021
    %v3023 = vpop.f32.mrf.mxu0
    %v3024 = vadd.f32 0.0, %v3023
    %3025 = vmatmul.bf16.gmra.mxu0 %v2358
    %v3026 = vpop.f32.mrf.mxu0
    %v3027 = vadd.f32 0.0, %v3026
    %v3028 = vpop.f32.mrf.mxu0
    %v3029 = vadd.f32 0.0, %v3028
    %3030 = vmatmul.bf16.gmra.mxu0 %v2360
    %v3031 = vpop.f32.mrf.mxu0
    %v3032 = vadd.f32 0.0, %v3031
    %v3033 = vpop.f32.mrf.mxu0
    %v3034 = vadd.f32 0.0, %v3033
    %3035 = vmatmul.bf16.gmra.mxu0 %v2362
    %v3036 = vpop.f32.mrf.mxu0
    %v3037 = vadd.f32 0.0, %v3036
    %v3038 = vpop.f32.mrf.mxu0
    %v3039 = vadd.f32 0.0, %v3038
    %3040 = vmatmul.bf16.gmra.mxu0 %v2364
    %v3041 = vpop.f32.mrf.mxu0
    %v3042 = vadd.f32 0.0, %v3041
    %v3043 = vpop.f32.mrf.mxu0
    %v3044 = vadd.f32 0.0, %v3043
    %3045 = vmatmul.bf16.gmra.mxu0 %v2366
    %v3046 = vpop.f32.mrf.mxu0
    %v3047 = vadd.f32 0.0, %v3046
    %v3048 = vpop.f32.mrf.mxu0
    %v3049 = vadd.f32 0.0, %v3048
    %3050 = vmatmul.bf16.gmra.mxu0 %v2368
    %v3051 = vpop.f32.mrf.mxu0
    %v3052 = vadd.f32 0.0, %v3051
    %v3053 = vpop.f32.mrf.mxu0
    %v3054 = vadd.f32 0.0, %v3053
    %3055 = vmatmul.bf16.gmra.mxu0 %v2380
    %v3056 = vpop.f32.mrf.mxu0
    %v3057 = vadd.f32 0.0, %v3056
    %v3058 = vpop.f32.mrf.mxu0
    %v3059 = vadd.f32 0.0, %v3058
    %3060 = vdwg.mxu0
    %3061 = vmatpush.bf16.msra.mxu0 %v2701
    %3062 = vmatpush.bf16.msra.mxu0 %v2693
    %3063 = vmatpush.bf16.msra.mxu0 %v2685
    %3064 = vmatpush.bf16.msra.mxu0 %v2677
    %3065 = vmatpush.bf16.msra.mxu0 %v2669
    %3066 = vmatpush.bf16.msra.mxu0 %v2661
    %3067 = vmatpush.bf16.msra.mxu0 %v2653
    %3068 = vmatpush.bf16.msra.mxu0 %v2645
    %3069 = vmatmul.bf16.gmra.mxu0 %v2356
    %v3070 = vpop.f32.mrf.mxu0
    %v3071 = vadd.f32 0.0, %v3070
    %v3072 = vpop.f32.mrf.mxu0
    %v3073 = vadd.f32 0.0, %v3072
    %3074 = vmatmul.bf16.gmra.mxu0 %v2358
    %v3075 = vpop.f32.mrf.mxu0
    %v3076 = vadd.f32 0.0, %v3075
    %v3077 = vpop.f32.mrf.mxu0
    %v3078 = vadd.f32 0.0, %v3077
    %3079 = vmatmul.bf16.gmra.mxu0 %v2360
    %v3080 = vpop.f32.mrf.mxu0
    %v3081 = vadd.f32 0.0, %v3080
    %v3082 = vpop.f32.mrf.mxu0
    %v3083 = vadd.f32 0.0, %v3082
    %3084 = vmatmul.bf16.gmra.mxu0 %v2362
    %v3085 = vpop.f32.mrf.mxu0
    %v3086 = vadd.f32 0.0, %v3085
    %v3087 = vpop.f32.mrf.mxu0
    %v3088 = vadd.f32 0.0, %v3087
    %3089 = vmatmul.bf16.gmra.mxu0 %v2364
    %v3090 = vpop.f32.mrf.mxu0
    %v3091 = vadd.f32 0.0, %v3090
    %v3092 = vpop.f32.mrf.mxu0
    %v3093 = vadd.f32 0.0, %v3092
    %3094 = vmatmul.bf16.gmra.mxu0 %v2366
    %v3095 = vpop.f32.mrf.mxu0
    %v3096 = vadd.f32 0.0, %v3095
    %v3097 = vpop.f32.mrf.mxu0
    %v3098 = vadd.f32 0.0, %v3097
    %3099 = vmatmul.bf16.gmra.mxu0 %v2368
    %v3100 = vpop.f32.mrf.mxu0
    %v3101 = vadd.f32 0.0, %v3100
    %v3102 = vpop.f32.mrf.mxu0
    %v3103 = vadd.f32 0.0, %v3102
    %3104 = vmatmul.bf16.gmra.mxu0 %v2380
    %v3105 = vpop.f32.mrf.mxu0
    %v3106 = vadd.f32 0.0, %v3105
    %v3107 = vpop.f32.mrf.mxu0
    %v3108 = vadd.f32 0.0, %v3107
    %3109 = vdwg.mxu0
    %3110 = vmatpush.bf16.msra.mxu0 %v2702
    %3111 = vmatpush.bf16.msra.mxu0 %v2694
    %3112 = vmatpush.bf16.msra.mxu0 %v2686
    %3113 = vmatpush.bf16.msra.mxu0 %v2678
    %3114 = vmatpush.bf16.msra.mxu0 %v2670
    %3115 = vmatpush.bf16.msra.mxu0 %v2662
    %3116 = vmatpush.bf16.msra.mxu0 %v2654
    %3117 = vmatpush.bf16.msra.mxu0 %v2646
    %3118 = vmatmul.bf16.gmra.mxu0 %v2356
    %v3119 = vpop.f32.mrf.mxu0
    %v3120 = vadd.f32 0.0, %v3119
    %v3121 = vpop.f32.mrf.mxu0
    %v3122 = vadd.f32 0.0, %v3121
    %3123 = vmatmul.bf16.gmra.mxu0 %v2358
    %v3124 = vpop.f32.mrf.mxu0
    %v3125 = vadd.f32 0.0, %v3124
    %v3126 = vpop.f32.mrf.mxu0
    %v3127 = vadd.f32 0.0, %v3126
    %3128 = vmatmul.bf16.gmra.mxu0 %v2360
    %v3129 = vpop.f32.mrf.mxu0
    %v3130 = vadd.f32 0.0, %v3129
    %v3131 = vpop.f32.mrf.mxu0
    %v3132 = vadd.f32 0.0, %v3131
    %3133 = vmatmul.bf16.gmra.mxu0 %v2362
    %v3134 = vpop.f32.mrf.mxu0
    %v3135 = vadd.f32 0.0, %v3134
    %v3136 = vpop.f32.mrf.mxu0
    %v3137 = vadd.f32 0.0, %v3136
    %3138 = vmatmul.bf16.gmra.mxu0 %v2364
    %v3139 = vpop.f32.mrf.mxu0
    %v3140 = vadd.f32 0.0, %v3139
    %v3141 = vpop.f32.mrf.mxu0
    %v3142 = vadd.f32 0.0, %v3141
    %3143 = vmatmul.bf16.gmra.mxu0 %v2366
    %v3144 = vpop.f32.mrf.mxu0
    %v3145 = vadd.f32 0.0, %v3144
    %v3146 = vpop.f32.mrf.mxu0
    %v3147 = vadd.f32 0.0, %v3146
    %3148 = vmatmul.bf16.gmra.mxu0 %v2368
    %v3149 = vpop.f32.mrf.mxu0
    %v3150 = vadd.f32 0.0, %v3149
    %v3151 = vpop.f32.mrf.mxu0
    %v3152 = vadd.f32 0.0, %v3151
    %3153 = vmatmul.bf16.gmra.mxu0 %v2380
    %v3154 = vpop.f32.mrf.mxu0
    %v3155 = vadd.f32 0.0, %v3154
    %v3156 = vpop.f32.mrf.mxu0
    %v3157 = vadd.f32 0.0, %v3156
    %3158 = vdwg.mxu0
    %v3159 = vadd.f32 %v1971, %v2777
    %v3160 = vadd.f32 %v2020, %v2826
    %v3161 = vadd.f32 %v2069, %v2875
    %v3162 = vadd.f32 %v2118, %v2924
    %v3163 = vadd.f32 %v2167, %v2973
    %v3164 = vadd.f32 %v2216, %v3022
    %v3165 = vadd.f32 %v2265, %v3071
    %v3166 = vadd.f32 %v2314, %v3120
    %v3167 = vadd.f32 %v1973, %v2779
    %v3168 = vadd.f32 %v2022, %v2828
    %v3169 = vadd.f32 %v2071, %v2877
    %v3170 = vadd.f32 %v2120, %v2926
    %v3171 = vadd.f32 %v2169, %v2975
    %v3172 = vadd.f32 %v2218, %v3024
    %v3173 = vadd.f32 %v2267, %v3073
    %v3174 = vadd.f32 %v2316, %v3122
    %v3175 = vadd.f32 %v1976, %v2782
    %v3176 = vadd.f32 %v2025, %v2831
    %v3177 = vadd.f32 %v2074, %v2880
    %v3178 = vadd.f32 %v2123, %v2929
    %v3179 = vadd.f32 %v2172, %v2978
    %v3180 = vadd.f32 %v2221, %v3027
    %v3181 = vadd.f32 %v2270, %v3076
    %v3182 = vadd.f32 %v2319, %v3125
    %v3183 = vadd.f32 %v1978, %v2784
    %v3184 = vadd.f32 %v2027, %v2833
    %v3185 = vadd.f32 %v2076, %v2882
    %v3186 = vadd.f32 %v2125, %v2931
    %v3187 = vadd.f32 %v2174, %v2980
    %v3188 = vadd.f32 %v2223, %v3029
    %v3189 = vadd.f32 %v2272, %v3078
    %v3190 = vadd.f32 %v2321, %v3127
    %v3191 = vadd.f32 %v1981, %v2787
    %v3192 = vadd.f32 %v2030, %v2836
    %v3193 = vadd.f32 %v2079, %v2885
    %v3194 = vadd.f32 %v2128, %v2934
    %v3195 = vadd.f32 %v2177, %v2983
    %v3196 = vadd.f32 %v2226, %v3032
    %v3197 = vadd.f32 %v2275, %v3081
    %v3198 = vadd.f32 %v2324, %v3130
    %v3199 = vadd.f32 %v1983, %v2789
    %v3200 = vadd.f32 %v2032, %v2838
    %v3201 = vadd.f32 %v2081, %v2887
    %v3202 = vadd.f32 %v2130, %v2936
    %v3203 = vadd.f32 %v2179, %v2985
    %v3204 = vadd.f32 %v2228, %v3034
    %v3205 = vadd.f32 %v2277, %v3083
    %v3206 = vadd.f32 %v2326, %v3132
    %v3207 = vadd.f32 %v1986, %v2792
    %v3208 = vadd.f32 %v2035, %v2841
    %v3209 = vadd.f32 %v2084, %v2890
    %v3210 = vadd.f32 %v2133, %v2939
    %v3211 = vadd.f32 %v2182, %v2988
    %v3212 = vadd.f32 %v2231, %v3037
    %v3213 = vadd.f32 %v2280, %v3086
    %v3214 = vadd.f32 %v2329, %v3135
    %v3215 = vadd.f32 %v1988, %v2794
    %v3216 = vadd.f32 %v2037, %v2843
    %v3217 = vadd.f32 %v2086, %v2892
    %v3218 = vadd.f32 %v2135, %v2941
    %v3219 = vadd.f32 %v2184, %v2990
    %v3220 = vadd.f32 %v2233, %v3039
    %v3221 = vadd.f32 %v2282, %v3088
    %v3222 = vadd.f32 %v2331, %v3137
    %v3223 = vadd.f32 %v1991, %v2797
    %v3224 = vadd.f32 %v2040, %v2846
    %v3225 = vadd.f32 %v2089, %v2895
    %v3226 = vadd.f32 %v2138, %v2944
    %v3227 = vadd.f32 %v2187, %v2993
    %v3228 = vadd.f32 %v2236, %v3042
    %v3229 = vadd.f32 %v2285, %v3091
    %v3230 = vadd.f32 %v2334, %v3140
    %v3231 = vadd.f32 %v1993, %v2799
    %v3232 = vadd.f32 %v2042, %v2848
    %v3233 = vadd.f32 %v2091, %v2897
    %v3234 = vadd.f32 %v2140, %v2946
    %v3235 = vadd.f32 %v2189, %v2995
    %v3236 = vadd.f32 %v2238, %v3044
    %v3237 = vadd.f32 %v2287, %v3093
    %v3238 = vadd.f32 %v2336, %v3142
    %v3239 = vadd.f32 %v1996, %v2802
    %v3240 = vadd.f32 %v2045, %v2851
    %v3241 = vadd.f32 %v2094, %v2900
    %v3242 = vadd.f32 %v2143, %v2949
    %v3243 = vadd.f32 %v2192, %v2998
    %v3244 = vadd.f32 %v2241, %v3047
    %v3245 = vadd.f32 %v2290, %v3096
    %v3246 = vadd.f32 %v2339, %v3145
    %v3247 = vadd.f32 %v1998, %v2804
    %v3248 = vadd.f32 %v2047, %v2853
    %v3249 = vadd.f32 %v2096, %v2902
    %v3250 = vadd.f32 %v2145, %v2951
    %v3251 = vadd.f32 %v2194, %v3000
    %v3252 = vadd.f32 %v2243, %v3049
    %v3253 = vadd.f32 %v2292, %v3098
    %v3254 = vadd.f32 %v2341, %v3147
    %v3255 = vadd.f32 %v2001, %v2807
    %v3256 = vadd.f32 %v2050, %v2856
    %v3257 = vadd.f32 %v2099, %v2905
    %v3258 = vadd.f32 %v2148, %v2954
    %v3259 = vadd.f32 %v2197, %v3003
    %v3260 = vadd.f32 %v2246, %v3052
    %v3261 = vadd.f32 %v2295, %v3101
    %v3262 = vadd.f32 %v2344, %v3150
    %v3263 = vadd.f32 %v2003, %v2809
    %v3264 = vadd.f32 %v2052, %v2858
    %v3265 = vadd.f32 %v2101, %v2907
    %v3266 = vadd.f32 %v2150, %v2956
    %v3267 = vadd.f32 %v2199, %v3005
    %v3268 = vadd.f32 %v2248, %v3054
    %v3269 = vadd.f32 %v2297, %v3103
    %v3270 = vadd.f32 %v2346, %v3152
    %v3271 = vadd.f32 %v2006, %v2812
    %v3272 = vadd.f32 %v2055, %v2861
    %v3273 = vadd.f32 %v2104, %v2910
    %v3274 = vadd.f32 %v2153, %v2959
    %v3275 = vadd.f32 %v2202, %v3008
    %v3276 = vadd.f32 %v2251, %v3057
    %v3277 = vadd.f32 %v2300, %v3106
    %v3278 = vadd.f32 %v2349, %v3155
    %v3279 = vadd.f32 %v2008, %v2814
    %v3280 = vadd.f32 %v2057, %v2863
    %v3281 = vadd.f32 %v2106, %v2912
    %v3282 = vadd.f32 %v2155, %v2961
    %v3283 = vadd.f32 %v2204, %v3010
    %v3284 = vadd.f32 %v2253, %v3059
    %v3285 = vadd.f32 %v2302, %v3108
    %v3286 = vadd.f32 %v2351, %v3157
    %vm3287 = vsmask.f32 6400
    %v3288 = vrot.slane %v777, 1
    %v3289 = vrot.slane %v779, 2
    %v3290 = vor.u32 %v3288, %v3289
    %v3291 = vrot.slane %v788, 1
    %v3292 = vrot.slane %v784, 2
    %v3293 = vor.u32 %v3291, %v3292
    %v3294 = vsel %vm3287, %v3290, %v3293
    %v3295 = vrot.slane %v796, 1
    %v3296 = vrot.slane %v792, 2
    %v3297 = vor.u32 %v3295, %v3296
    %v3298 = vsel %vm3287, %v3293, %v3297
    %v3299 = vrot.slane %v804, 1
    %v3300 = vrot.slane %v800, 2
    %v3301 = vor.u32 %v3299, %v3300
    %v3302 = vsel %vm3287, %v3297, %v3301
    %v3303 = vrot.slane %v812, 1
    %v3304 = vrot.slane %v808, 2
    %v3305 = vor.u32 %v3303, %v3304
    %v3306 = vsel %vm3287, %v3301, %v3305
    %v3307 = vrot.slane %v820, 1
    %v3308 = vrot.slane %v816, 2
    %v3309 = vor.u32 %v3307, %v3308
    %v3310 = vsel %vm3287, %v3305, %v3309
    %v3311 = vrot.slane %v828, 1
    %v3312 = vrot.slane %v824, 2
    %v3313 = vor.u32 %v3311, %v3312
    %v3314 = vsel %vm3287, %v3309, %v3313
    %v3315 = vrot.slane %v836, 1
    %v3316 = vrot.slane %v832, 2
    %v3317 = vor.u32 %v3315, %v3316
    %v3318 = vsel %vm3287, %v3313, %v3317
    %v3327 = vshrl.u32 %v847, 16
    %v3329 = vrot.slane %v3327, 1
    %v3330 = vrot.slane %v849, 2
    %v3331 = vor.u32 %v3329, %v3330
    %vm3333 = vmand %vm2353, %vm3287
    %v3334 = vsel %vm3333, %v3317, %v3331
    %s3335 = scalar_lea.vmem %s3, 1536
    %v3336 = vld [vmem:[%s3335] sm:$0xff]
    %v3337 = vld [vmem:[%s3335 + $0x8] sm:$0xff]
    %v3338 = vld [vmem:[%s3335 + $0x10] sm:$0xff]
    %v3339 = vld [vmem:[%s3335 + $0x18] sm:$0xff]
    %v3340 = vld [vmem:[%s3335 + $0x20] sm:$0xff]
    %v3341 = vld [vmem:[%s3335 + $0x28] sm:$0xff]
    %v3342 = vld [vmem:[%s3335 + $0x30] sm:$0xff]
    %v3343 = vld [vmem:[%s3335 + $0x38] sm:$0xff]
    %v3344 = vld [vmem:[%s3335 + $0x40] sm:$0xff]
    %v3345 = vld [vmem:[%s3335 + $0x48] sm:$0xff]
    %v3346 = vld [vmem:[%s3335 + $0x50] sm:$0xff]
    %v3347 = vld [vmem:[%s3335 + $0x58] sm:$0xff]
    %v3348 = vld [vmem:[%s3335 + $0x60] sm:$0xff]
    %v3349 = vld [vmem:[%s3335 + $0x68] sm:$0xff]
    %v3350 = vld [vmem:[%s3335 + $0x70] sm:$0xff]
    %v3351 = vld [vmem:[%s3335 + $0x78] sm:$0xff]
    %v3352 = vld [vmem:[%s3335 + $0x80] sm:$0xff]
    %v3353 = vld [vmem:[%s3335 + $0x88] sm:$0xff]
    %v3354 = vld [vmem:[%s3335 + $0x90] sm:$0xff]
    %v3355 = vld [vmem:[%s3335 + $0x98] sm:$0xff]
    %v3356 = vld [vmem:[%s3335 + $0xa0] sm:$0xff]
    %v3357 = vld [vmem:[%s3335 + $0xa8] sm:$0xff]
    %v3358 = vld [vmem:[%s3335 + $0xb0] sm:$0xff]
    %v3359 = vld [vmem:[%s3335 + $0xb8] sm:$0xff]
    %v3360 = vld [vmem:[%s3335 + $0xc0] sm:$0xff]
    %v3361 = vld [vmem:[%s3335 + $0xc8] sm:$0xff]
    %v3362 = vld [vmem:[%s3335 + $0xd0] sm:$0xff]
    %v3363 = vld [vmem:[%s3335 + $0xd8] sm:$0xff]
    %v3364 = vld [vmem:[%s3335 + $0xe0] sm:$0xff]
    %v3365 = vld [vmem:[%s3335 + $0xe8] sm:$0xff]
    %v3366 = vld [vmem:[%s3335 + $0xf0] sm:$0xff]
    %v3367 = vld [vmem:[%s3335 + $0xf8] sm:$0xff]
    %v3368 = vld [vmem:[%s3335 + $0x100] sm:$0xff]
    %v3369 = vld [vmem:[%s3335 + $0x108] sm:$0xff]
    %v3370 = vld [vmem:[%s3335 + $0x110] sm:$0xff]
    %v3371 = vld [vmem:[%s3335 + $0x118] sm:$0xff]
    %v3372 = vld [vmem:[%s3335 + $0x120] sm:$0xff]
    %v3373 = vld [vmem:[%s3335 + $0x128] sm:$0xff]
    %v3374 = vld [vmem:[%s3335 + $0x130] sm:$0xff]
    %v3375 = vld [vmem:[%s3335 + $0x138] sm:$0xff]
    %v3376 = vld [vmem:[%s3335 + $0x140] sm:$0xff]
    %v3377 = vld [vmem:[%s3335 + $0x148] sm:$0xff]
    %v3378 = vld [vmem:[%s3335 + $0x150] sm:$0xff]
    %v3379 = vld [vmem:[%s3335 + $0x158] sm:$0xff]
    %v3380 = vld [vmem:[%s3335 + $0x160] sm:$0xff]
    %v3381 = vld [vmem:[%s3335 + $0x168] sm:$0xff]
    %v3382 = vld [vmem:[%s3335 + $0x170] sm:$0xff]
    %v3383 = vld [vmem:[%s3335 + $0x178] sm:$0xff]
    %v3384 = vld [vmem:[%s3335 + $0x180] sm:$0xff]
    %v3385 = vld [vmem:[%s3335 + $0x188] sm:$0xff]
    %v3386 = vld [vmem:[%s3335 + $0x190] sm:$0xff]
    %v3387 = vld [vmem:[%s3335 + $0x198] sm:$0xff]
    %v3388 = vld [vmem:[%s3335 + $0x1a0] sm:$0xff]
    %v3389 = vld [vmem:[%s3335 + $0x1a8] sm:$0xff]
    %v3390 = vld [vmem:[%s3335 + $0x1b0] sm:$0xff]
    %v3391 = vld [vmem:[%s3335 + $0x1b8] sm:$0xff]
    %v3392 = vld [vmem:[%s3335 + $0x1c0] sm:$0xff]
    %v3393 = vld [vmem:[%s3335 + $0x1c8] sm:$0xff]
    %v3394 = vld [vmem:[%s3335 + $0x1d0] sm:$0xff]
    %v3395 = vld [vmem:[%s3335 + $0x1d8] sm:$0xff]
    %v3396 = vld [vmem:[%s3335 + $0x1e0] sm:$0xff]
    %v3397 = vld [vmem:[%s3335 + $0x1e8] sm:$0xff]
    %v3398 = vld [vmem:[%s3335 + $0x1f0] sm:$0xff]
    %v3399 = vld [vmem:[%s3335 + $0x1f8] sm:$0xff]
    %v3464 = vunpack.c.l.b16 %v3336
    %v3465 = vunpack.c.h.b16 %v3336
    %v3466 = vunpack.c.l.b16 %v3337
    %v3467 = vunpack.c.h.b16 %v3337
    %v3468 = vunpack.c.l.b16 %v3338
    %v3469 = vunpack.c.h.b16 %v3338
    %v3470 = vunpack.c.l.b16 %v3339
    %v3471 = vunpack.c.h.b16 %v3339
    %v3472 = vunpack.c.l.b16 %v3340
    %v3473 = vunpack.c.h.b16 %v3340
    %v3474 = vunpack.c.l.b16 %v3341
    %v3475 = vunpack.c.h.b16 %v3341
    %v3476 = vunpack.c.l.b16 %v3342
    %v3477 = vunpack.c.h.b16 %v3342
    %v3478 = vunpack.c.l.b16 %v3343
    %v3479 = vunpack.c.h.b16 %v3343
    %v3480 = vunpack.c.l.b16 %v3344
    %v3481 = vunpack.c.h.b16 %v3344
    %v3482 = vunpack.c.l.b16 %v3345
    %v3483 = vunpack.c.h.b16 %v3345
    %v3484 = vunpack.c.l.b16 %v3346
    %v3485 = vunpack.c.h.b16 %v3346
    %v3486 = vunpack.c.l.b16 %v3347
    %v3487 = vunpack.c.h.b16 %v3347
    %v3488 = vunpack.c.l.b16 %v3348
    %v3489 = vunpack.c.h.b16 %v3348
    %v3490 = vunpack.c.l.b16 %v3349
    %v3491 = vunpack.c.h.b16 %v3349
    %v3492 = vunpack.c.l.b16 %v3350
    %v3493 = vunpack.c.h.b16 %v3350
    %v3494 = vunpack.c.l.b16 %v3351
    %v3495 = vunpack.c.h.b16 %v3351
    %v3496 = vunpack.c.l.b16 %v3352
    %v3497 = vunpack.c.h.b16 %v3352
    %v3498 = vunpack.c.l.b16 %v3353
    %v3499 = vunpack.c.h.b16 %v3353
    %v3500 = vunpack.c.l.b16 %v3354
    %v3501 = vunpack.c.h.b16 %v3354
    %v3502 = vunpack.c.l.b16 %v3355
    %v3503 = vunpack.c.h.b16 %v3355
    %v3504 = vunpack.c.l.b16 %v3356
    %v3505 = vunpack.c.h.b16 %v3356
    %v3506 = vunpack.c.l.b16 %v3357
    %v3507 = vunpack.c.h.b16 %v3357
    %v3508 = vunpack.c.l.b16 %v3358
    %v3509 = vunpack.c.h.b16 %v3358
    %v3510 = vunpack.c.l.b16 %v3359
    %v3511 = vunpack.c.h.b16 %v3359
    %v3512 = vunpack.c.l.b16 %v3360
    %v3513 = vunpack.c.h.b16 %v3360
    %v3514 = vunpack.c.l.b16 %v3361
    %v3515 = vunpack.c.h.b16 %v3361
    %v3516 = vunpack.c.l.b16 %v3362
    %v3517 = vunpack.c.h.b16 %v3362
    %v3518 = vunpack.c.l.b16 %v3363
    %v3519 = vunpack.c.h.b16 %v3363
    %v3520 = vunpack.c.l.b16 %v3364
    %v3521 = vunpack.c.h.b16 %v3364
    %v3522 = vunpack.c.l.b16 %v3365
    %v3523 = vunpack.c.h.b16 %v3365
    %v3524 = vunpack.c.l.b16 %v3366
    %v3525 = vunpack.c.h.b16 %v3366
    %v3526 = vunpack.c.l.b16 %v3367
    %v3527 = vunpack.c.h.b16 %v3367
    %v3528 = vunpack.c.l.b16 %v3368
    %v3529 = vunpack.c.h.b16 %v3368
    %v3530 = vunpack.c.l.b16 %v3369
    %v3531 = vunpack.c.h.b16 %v3369
    %v3532 = vunpack.c.l.b16 %v3370
    %v3533 = vunpack.c.h.b16 %v3370
    %v3534 = vunpack.c.l.b16 %v3371
    %v3535 = vunpack.c.h.b16 %v3371
    %v3536 = vunpack.c.l.b16 %v3372
    %v3537 = vunpack.c.h.b16 %v3372
    %v3538 = vunpack.c.l.b16 %v3373
    %v3539 = vunpack.c.h.b16 %v3373
    %v3540 = vunpack.c.l.b16 %v3374
    %v3541 = vunpack.c.h.b16 %v3374
    %v3542 = vunpack.c.l.b16 %v3375
    %v3543 = vunpack.c.h.b16 %v3375
    %v3544 = vunpack.c.l.b16 %v3376
    %v3545 = vunpack.c.h.b16 %v3376
    %v3546 = vunpack.c.l.b16 %v3377
    %v3547 = vunpack.c.h.b16 %v3377
    %v3548 = vunpack.c.l.b16 %v3378
    %v3549 = vunpack.c.h.b16 %v3378
    %v3550 = vunpack.c.l.b16 %v3379
    %v3551 = vunpack.c.h.b16 %v3379
    %v3552 = vunpack.c.l.b16 %v3380
    %v3553 = vunpack.c.h.b16 %v3380
    %v3554 = vunpack.c.l.b16 %v3381
    %v3555 = vunpack.c.h.b16 %v3381
    %v3556 = vunpack.c.l.b16 %v3382
    %v3557 = vunpack.c.h.b16 %v3382
    %v3558 = vunpack.c.l.b16 %v3383
    %v3559 = vunpack.c.h.b16 %v3383
    %v3560 = vunpack.c.l.b16 %v3384
    %v3561 = vunpack.c.h.b16 %v3384
    %v3562 = vunpack.c.l.b16 %v3385
    %v3563 = vunpack.c.h.b16 %v3385
    %v3564 = vunpack.c.l.b16 %v3386
    %v3565 = vunpack.c.h.b16 %v3386
    %v3566 = vunpack.c.l.b16 %v3387
    %v3567 = vunpack.c.h.b16 %v3387
    %v3568 = vunpack.c.l.b16 %v3388
    %v3569 = vunpack.c.h.b16 %v3388
    %v3570 = vunpack.c.l.b16 %v3389
    %v3571 = vunpack.c.h.b16 %v3389
    %v3572 = vunpack.c.l.b16 %v3390
    %v3573 = vunpack.c.h.b16 %v3390
    %v3574 = vunpack.c.l.b16 %v3391
    %v3575 = vunpack.c.h.b16 %v3391
    %v3576 = vunpack.c.l.b16 %v3392
    %v3577 = vunpack.c.h.b16 %v3392
    %v3578 = vunpack.c.l.b16 %v3393
    %v3579 = vunpack.c.h.b16 %v3393
    %v3580 = vunpack.c.l.b16 %v3394
    %v3581 = vunpack.c.h.b16 %v3394
    %v3582 = vunpack.c.l.b16 %v3395
    %v3583 = vunpack.c.h.b16 %v3395
    %v3584 = vunpack.c.l.b16 %v3396
    %v3585 = vunpack.c.h.b16 %v3396
    %v3586 = vunpack.c.l.b16 %v3397
    %v3587 = vunpack.c.h.b16 %v3397
    %v3588 = vunpack.c.l.b16 %v3398
    %v3589 = vunpack.c.h.b16 %v3398
    %v3590 = vunpack.c.l.b16 %v3399
    %v3591 = vunpack.c.h.b16 %v3399
    %v3592 = vpack.c.b16 %v3472, %v3464
    %v3593 = vpack.c.b16 %v3473, %v3465
    %v3594 = vpack.c.b16 %v3474, %v3466
    %v3595 = vpack.c.b16 %v3475, %v3467
    %v3596 = vpack.c.b16 %v3476, %v3468
    %v3597 = vpack.c.b16 %v3477, %v3469
    %v3598 = vpack.c.b16 %v3478, %v3470
    %v3599 = vpack.c.b16 %v3479, %v3471
    %v3600 = vpack.c.b16 %v3488, %v3480
    %v3601 = vpack.c.b16 %v3489, %v3481
    %v3602 = vpack.c.b16 %v3490, %v3482
    %v3603 = vpack.c.b16 %v3491, %v3483
    %v3604 = vpack.c.b16 %v3492, %v3484
    %v3605 = vpack.c.b16 %v3493, %v3485
    %v3606 = vpack.c.b16 %v3494, %v3486
    %v3607 = vpack.c.b16 %v3495, %v3487
    %v3608 = vpack.c.b16 %v3504, %v3496
    %v3609 = vpack.c.b16 %v3505, %v3497
    %v3610 = vpack.c.b16 %v3506, %v3498
    %v3611 = vpack.c.b16 %v3507, %v3499
    %v3612 = vpack.c.b16 %v3508, %v3500
    %v3613 = vpack.c.b16 %v3509, %v3501
    %v3614 = vpack.c.b16 %v3510, %v3502
    %v3615 = vpack.c.b16 %v3511, %v3503
    %v3616 = vpack.c.b16 %v3520, %v3512
    %v3617 = vpack.c.b16 %v3521, %v3513
    %v3618 = vpack.c.b16 %v3522, %v3514
    %v3619 = vpack.c.b16 %v3523, %v3515
    %v3620 = vpack.c.b16 %v3524, %v3516
    %v3621 = vpack.c.b16 %v3525, %v3517
    %v3622 = vpack.c.b16 %v3526, %v3518
    %v3623 = vpack.c.b16 %v3527, %v3519
    %v3624 = vpack.c.b16 %v3536, %v3528
    %v3625 = vpack.c.b16 %v3537, %v3529
    %v3626 = vpack.c.b16 %v3538, %v3530
    %v3627 = vpack.c.b16 %v3539, %v3531
    %v3628 = vpack.c.b16 %v3540, %v3532
    %v3629 = vpack.c.b16 %v3541, %v3533
    %v3630 = vpack.c.b16 %v3542, %v3534
    %v3631 = vpack.c.b16 %v3543, %v3535
    %v3632 = vpack.c.b16 %v3552, %v3544
    %v3633 = vpack.c.b16 %v3553, %v3545
    %v3634 = vpack.c.b16 %v3554, %v3546
    %v3635 = vpack.c.b16 %v3555, %v3547
    %v3636 = vpack.c.b16 %v3556, %v3548
    %v3637 = vpack.c.b16 %v3557, %v3549
    %v3638 = vpack.c.b16 %v3558, %v3550
    %v3639 = vpack.c.b16 %v3559, %v3551
    %v3640 = vpack.c.b16 %v3568, %v3560
    %v3641 = vpack.c.b16 %v3569, %v3561
    %v3642 = vpack.c.b16 %v3570, %v3562
    %v3643 = vpack.c.b16 %v3571, %v3563
    %v3644 = vpack.c.b16 %v3572, %v3564
    %v3645 = vpack.c.b16 %v3573, %v3565
    %v3646 = vpack.c.b16 %v3574, %v3566
    %v3647 = vpack.c.b16 %v3575, %v3567
    %v3648 = vpack.c.b16 %v3584, %v3576
    %v3649 = vpack.c.b16 %v3585, %v3577
    %v3650 = vpack.c.b16 %v3586, %v3578
    %v3651 = vpack.c.b16 %v3587, %v3579
    %v3652 = vpack.c.b16 %v3588, %v3580
    %v3653 = vpack.c.b16 %v3589, %v3581
    %v3654 = vpack.c.b16 %v3590, %v3582
    %v3655 = vpack.c.b16 %v3591, %v3583
    %3720 = vmatpush.bf16.msra.mxu0 %v3648
    %3721 = vmatpush.bf16.msra.mxu0 %v3640
    %3722 = vmatpush.bf16.msra.mxu0 %v3632
    %3723 = vmatpush.bf16.msra.mxu0 %v3624
    %3724 = vmatpush.bf16.msra.mxu0 %v3616
    %3725 = vmatpush.bf16.msra.mxu0 %v3608
    %3726 = vmatpush.bf16.msra.mxu0 %v3600
    %3727 = vmatpush.bf16.msra.mxu0 %v3592
    %3728 = vmatmul.bf16.gmra.mxu0 %v3294
    %v3729 = vpop.f32.mrf.mxu0
    %v3730 = vadd.f32 0.0, %v3729
    %v3731 = vpop.f32.mrf.mxu0
    %v3732 = vadd.f32 0.0, %v3731
    %3733 = vmatmul.bf16.gmra.mxu0 %v3298
    %v3734 = vpop.f32.mrf.mxu0
    %v3735 = vadd.f32 0.0, %v3734
    %v3736 = vpop.f32.mrf.mxu0
    %v3737 = vadd.f32 0.0, %v3736
    %3738 = vmatmul.bf16.gmra.mxu0 %v3302
    %v3739 = vpop.f32.mrf.mxu0
    %v3740 = vadd.f32 0.0, %v3739
    %v3741 = vpop.f32.mrf.mxu0
    %v3742 = vadd.f32 0.0, %v3741
    %3743 = vmatmul.bf16.gmra.mxu0 %v3306
    %v3744 = vpop.f32.mrf.mxu0
    %v3745 = vadd.f32 0.0, %v3744
    %v3746 = vpop.f32.mrf.mxu0
    %v3747 = vadd.f32 0.0, %v3746
    %3748 = vmatmul.bf16.gmra.mxu0 %v3310
    %v3749 = vpop.f32.mrf.mxu0
    %v3750 = vadd.f32 0.0, %v3749
    %v3751 = vpop.f32.mrf.mxu0
    %v3752 = vadd.f32 0.0, %v3751
    %3753 = vmatmul.bf16.gmra.mxu0 %v3314
    %v3754 = vpop.f32.mrf.mxu0
    %v3755 = vadd.f32 0.0, %v3754
    %v3756 = vpop.f32.mrf.mxu0
    %v3757 = vadd.f32 0.0, %v3756
    %3758 = vmatmul.bf16.gmra.mxu0 %v3318
    %v3759 = vpop.f32.mrf.mxu0
    %v3760 = vadd.f32 0.0, %v3759
    %v3761 = vpop.f32.mrf.mxu0
    %v3762 = vadd.f32 0.0, %v3761
    %3763 = vmatmul.bf16.gmra.mxu0 %v3334
    %v3764 = vpop.f32.mrf.mxu0
    %v3765 = vadd.f32 0.0, %v3764
    %v3766 = vpop.f32.mrf.mxu0
    %v3767 = vadd.f32 0.0, %v3766
    %3768 = vdwg.mxu0
    %3769 = vmatpush.bf16.msra.mxu0 %v3649
    %3770 = vmatpush.bf16.msra.mxu0 %v3641
    %3771 = vmatpush.bf16.msra.mxu0 %v3633
    %3772 = vmatpush.bf16.msra.mxu0 %v3625
    %3773 = vmatpush.bf16.msra.mxu0 %v3617
    %3774 = vmatpush.bf16.msra.mxu0 %v3609
    %3775 = vmatpush.bf16.msra.mxu0 %v3601
    %3776 = vmatpush.bf16.msra.mxu0 %v3593
    %3777 = vmatmul.bf16.gmra.mxu0 %v3294
    %v3778 = vpop.f32.mrf.mxu0
    %v3779 = vadd.f32 0.0, %v3778
    %v3780 = vpop.f32.mrf.mxu0
    %v3781 = vadd.f32 0.0, %v3780
    %3782 = vmatmul.bf16.gmra.mxu0 %v3298
    %v3783 = vpop.f32.mrf.mxu0
    %v3784 = vadd.f32 0.0, %v3783
    %v3785 = vpop.f32.mrf.mxu0
    %v3786 = vadd.f32 0.0, %v3785
    %3787 = vmatmul.bf16.gmra.mxu0 %v3302
    %v3788 = vpop.f32.mrf.mxu0
    %v3789 = vadd.f32 0.0, %v3788
    %v3790 = vpop.f32.mrf.mxu0
    %v3791 = vadd.f32 0.0, %v3790
    %3792 = vmatmul.bf16.gmra.mxu0 %v3306
    %v3793 = vpop.f32.mrf.mxu0
    %v3794 = vadd.f32 0.0, %v3793
    %v3795 = vpop.f32.mrf.mxu0
    %v3796 = vadd.f32 0.0, %v3795
    %3797 = vmatmul.bf16.gmra.mxu0 %v3310
    %v3798 = vpop.f32.mrf.mxu0
    %v3799 = vadd.f32 0.0, %v3798
    %v3800 = vpop.f32.mrf.mxu0
    %v3801 = vadd.f32 0.0, %v3800
    %3802 = vmatmul.bf16.gmra.mxu0 %v3314
    %v3803 = vpop.f32.mrf.mxu0
    %v3804 = vadd.f32 0.0, %v3803
    %v3805 = vpop.f32.mrf.mxu0
    %v3806 = vadd.f32 0.0, %v3805
    %3807 = vmatmul.bf16.gmra.mxu0 %v3318
    %v3808 = vpop.f32.mrf.mxu0
    %v3809 = vadd.f32 0.0, %v3808
    %v3810 = vpop.f32.mrf.mxu0
    %v3811 = vadd.f32 0.0, %v3810
    %3812 = vmatmul.bf16.gmra.mxu0 %v3334
    %v3813 = vpop.f32.mrf.mxu0
    %v3814 = vadd.f32 0.0, %v3813
    %v3815 = vpop.f32.mrf.mxu0
    %v3816 = vadd.f32 0.0, %v3815
    %3817 = vdwg.mxu0
    %3818 = vmatpush.bf16.msra.mxu0 %v3650
    %3819 = vmatpush.bf16.msra.mxu0 %v3642
    %3820 = vmatpush.bf16.msra.mxu0 %v3634
    %3821 = vmatpush.bf16.msra.mxu0 %v3626
    %3822 = vmatpush.bf16.msra.mxu0 %v3618
    %3823 = vmatpush.bf16.msra.mxu0 %v3610
    %3824 = vmatpush.bf16.msra.mxu0 %v3602
    %3825 = vmatpush.bf16.msra.mxu0 %v3594
    %3826 = vmatmul.bf16.gmra.mxu0 %v3294
    %v3827 = vpop.f32.mrf.mxu0
    %v3828 = vadd.f32 0.0, %v3827
    %v3829 = vpop.f32.mrf.mxu0
    %v3830 = vadd.f32 0.0, %v3829
    %3831 = vmatmul.bf16.gmra.mxu0 %v3298
    %v3832 = vpop.f32.mrf.mxu0
    %v3833 = vadd.f32 0.0, %v3832
    %v3834 = vpop.f32.mrf.mxu0
    %v3835 = vadd.f32 0.0, %v3834
    %3836 = vmatmul.bf16.gmra.mxu0 %v3302
    %v3837 = vpop.f32.mrf.mxu0
    %v3838 = vadd.f32 0.0, %v3837
    %v3839 = vpop.f32.mrf.mxu0
    %v3840 = vadd.f32 0.0, %v3839
    %3841 = vmatmul.bf16.gmra.mxu0 %v3306
    %v3842 = vpop.f32.mrf.mxu0
    %v3843 = vadd.f32 0.0, %v3842
    %v3844 = vpop.f32.mrf.mxu0
    %v3845 = vadd.f32 0.0, %v3844
    %3846 = vmatmul.bf16.gmra.mxu0 %v3310
    %v3847 = vpop.f32.mrf.mxu0
    %v3848 = vadd.f32 0.0, %v3847
    %v3849 = vpop.f32.mrf.mxu0
    %v3850 = vadd.f32 0.0, %v3849
    %3851 = vmatmul.bf16.gmra.mxu0 %v3314
    %v3852 = vpop.f32.mrf.mxu0
    %v3853 = vadd.f32 0.0, %v3852
    %v3854 = vpop.f32.mrf.mxu0
    %v3855 = vadd.f32 0.0, %v3854
    %3856 = vmatmul.bf16.gmra.mxu0 %v3318
    %v3857 = vpop.f32.mrf.mxu0
    %v3858 = vadd.f32 0.0, %v3857
    %v3859 = vpop.f32.mrf.mxu0
    %v3860 = vadd.f32 0.0, %v3859
    %3861 = vmatmul.bf16.gmra.mxu0 %v3334
    %v3862 = vpop.f32.mrf.mxu0
    %v3863 = vadd.f32 0.0, %v3862
    %v3864 = vpop.f32.mrf.mxu0
    %v3865 = vadd.f32 0.0, %v3864
    %3866 = vdwg.mxu0
    %3867 = vmatpush.bf16.msra.mxu0 %v3651
    %3868 = vmatpush.bf16.msra.mxu0 %v3643
    %3869 = vmatpush.bf16.msra.mxu0 %v3635
    %3870 = vmatpush.bf16.msra.mxu0 %v3627
    %3871 = vmatpush.bf16.msra.mxu0 %v3619
    %3872 = vmatpush.bf16.msra.mxu0 %v3611
    %3873 = vmatpush.bf16.msra.mxu0 %v3603
    %3874 = vmatpush.bf16.msra.mxu0 %v3595
    %3875 = vmatmul.bf16.gmra.mxu0 %v3294
    %v3876 = vpop.f32.mrf.mxu0
    %v3877 = vadd.f32 0.0, %v3876
    %v3878 = vpop.f32.mrf.mxu0
    %v3879 = vadd.f32 0.0, %v3878
    %3880 = vmatmul.bf16.gmra.mxu0 %v3298
    %v3881 = vpop.f32.mrf.mxu0
    %v3882 = vadd.f32 0.0, %v3881
    %v3883 = vpop.f32.mrf.mxu0
    %v3884 = vadd.f32 0.0, %v3883
    %3885 = vmatmul.bf16.gmra.mxu0 %v3302
    %v3886 = vpop.f32.mrf.mxu0
    %v3887 = vadd.f32 0.0, %v3886
    %v3888 = vpop.f32.mrf.mxu0
    %v3889 = vadd.f32 0.0, %v3888
    %3890 = vmatmul.bf16.gmra.mxu0 %v3306
    %v3891 = vpop.f32.mrf.mxu0
    %v3892 = vadd.f32 0.0, %v3891
    %v3893 = vpop.f32.mrf.mxu0
    %v3894 = vadd.f32 0.0, %v3893
    %3895 = vmatmul.bf16.gmra.mxu0 %v3310
    %v3896 = vpop.f32.mrf.mxu0
    %v3897 = vadd.f32 0.0, %v3896
    %v3898 = vpop.f32.mrf.mxu0
    %v3899 = vadd.f32 0.0, %v3898
    %3900 = vmatmul.bf16.gmra.mxu0 %v3314
    %v3901 = vpop.f32.mrf.mxu0
    %v3902 = vadd.f32 0.0, %v3901
    %v3903 = vpop.f32.mrf.mxu0
    %v3904 = vadd.f32 0.0, %v3903
    %3905 = vmatmul.bf16.gmra.mxu0 %v3318
    %v3906 = vpop.f32.mrf.mxu0
    %v3907 = vadd.f32 0.0, %v3906
    %v3908 = vpop.f32.mrf.mxu0
    %v3909 = vadd.f32 0.0, %v3908
    %3910 = vmatmul.bf16.gmra.mxu0 %v3334
    %v3911 = vpop.f32.mrf.mxu0
    %v3912 = vadd.f32 0.0, %v3911
    %v3913 = vpop.f32.mrf.mxu0
    %v3914 = vadd.f32 0.0, %v3913
    %3915 = vdwg.mxu0
    %3916 = vmatpush.bf16.msra.mxu0 %v3652
    %3917 = vmatpush.bf16.msra.mxu0 %v3644
    %3918 = vmatpush.bf16.msra.mxu0 %v3636
    %3919 = vmatpush.bf16.msra.mxu0 %v3628
    %3920 = vmatpush.bf16.msra.mxu0 %v3620
    %3921 = vmatpush.bf16.msra.mxu0 %v3612
    %3922 = vmatpush.bf16.msra.mxu0 %v3604
    %3923 = vmatpush.bf16.msra.mxu0 %v3596
    %3924 = vmatmul.bf16.gmra.mxu0 %v3294
    %v3925 = vpop.f32.mrf.mxu0
    %v3926 = vadd.f32 0.0, %v3925
    %v3927 = vpop.f32.mrf.mxu0
    %v3928 = vadd.f32 0.0, %v3927
    %3929 = vmatmul.bf16.gmra.mxu0 %v3298
    %v3930 = vpop.f32.mrf.mxu0
    %v3931 = vadd.f32 0.0, %v3930
    %v3932 = vpop.f32.mrf.mxu0
    %v3933 = vadd.f32 0.0, %v3932
    %3934 = vmatmul.bf16.gmra.mxu0 %v3302
    %v3935 = vpop.f32.mrf.mxu0
    %v3936 = vadd.f32 0.0, %v3935
    %v3937 = vpop.f32.mrf.mxu0
    %v3938 = vadd.f32 0.0, %v3937
    %3939 = vmatmul.bf16.gmra.mxu0 %v3306
    %v3940 = vpop.f32.mrf.mxu0
    %v3941 = vadd.f32 0.0, %v3940
    %v3942 = vpop.f32.mrf.mxu0
    %v3943 = vadd.f32 0.0, %v3942
    %3944 = vmatmul.bf16.gmra.mxu0 %v3310
    %v3945 = vpop.f32.mrf.mxu0
    %v3946 = vadd.f32 0.0, %v3945
    %v3947 = vpop.f32.mrf.mxu0
    %v3948 = vadd.f32 0.0, %v3947
    %3949 = vmatmul.bf16.gmra.mxu0 %v3314
    %v3950 = vpop.f32.mrf.mxu0
    %v3951 = vadd.f32 0.0, %v3950
    %v3952 = vpop.f32.mrf.mxu0
    %v3953 = vadd.f32 0.0, %v3952
    %3954 = vmatmul.bf16.gmra.mxu0 %v3318
    %v3955 = vpop.f32.mrf.mxu0
    %v3956 = vadd.f32 0.0, %v3955
    %v3957 = vpop.f32.mrf.mxu0
    %v3958 = vadd.f32 0.0, %v3957
    %3959 = vmatmul.bf16.gmra.mxu0 %v3334
    %v3960 = vpop.f32.mrf.mxu0
    %v3961 = vadd.f32 0.0, %v3960
    %v3962 = vpop.f32.mrf.mxu0
    %v3963 = vadd.f32 0.0, %v3962
    %3964 = vdwg.mxu0
    %3965 = vmatpush.bf16.msra.mxu0 %v3653
    %3966 = vmatpush.bf16.msra.mxu0 %v3645
    %3967 = vmatpush.bf16.msra.mxu0 %v3637
    %3968 = vmatpush.bf16.msra.mxu0 %v3629
    %3969 = vmatpush.bf16.msra.mxu0 %v3621
    %3970 = vmatpush.bf16.msra.mxu0 %v3613
    %3971 = vmatpush.bf16.msra.mxu0 %v3605
    %3972 = vmatpush.bf16.msra.mxu0 %v3597
    %3973 = vmatmul.bf16.gmra.mxu0 %v3294
    %v3974 = vpop.f32.mrf.mxu0
    %v3975 = vadd.f32 0.0, %v3974
    %v3976 = vpop.f32.mrf.mxu0
    %v3977 = vadd.f32 0.0, %v3976
    %3978 = vmatmul.bf16.gmra.mxu0 %v3298
    %v3979 = vpop.f32.mrf.mxu0
    %v3980 = vadd.f32 0.0, %v3979
    %v3981 = vpop.f32.mrf.mxu0
    %v3982 = vadd.f32 0.0, %v3981
    %3983 = vmatmul.bf16.gmra.mxu0 %v3302
    %v3984 = vpop.f32.mrf.mxu0
    %v3985 = vadd.f32 0.0, %v3984
    %v3986 = vpop.f32.mrf.mxu0
    %v3987 = vadd.f32 0.0, %v3986
    %3988 = vmatmul.bf16.gmra.mxu0 %v3306
    %v3989 = vpop.f32.mrf.mxu0
    %v3990 = vadd.f32 0.0, %v3989
    %v3991 = vpop.f32.mrf.mxu0
    %v3992 = vadd.f32 0.0, %v3991
    %3993 = vmatmul.bf16.gmra.mxu0 %v3310
    %v3994 = vpop.f32.mrf.mxu0
    %v3995 = vadd.f32 0.0, %v3994
    %v3996 = vpop.f32.mrf.mxu0
    %v3997 = vadd.f32 0.0, %v3996
    %3998 = vmatmul.bf16.gmra.mxu0 %v3314
    %v3999 = vpop.f32.mrf.mxu0
    %v4000 = vadd.f32 0.0, %v3999
    %v4001 = vpop.f32.mrf.mxu0
    %v4002 = vadd.f32 0.0, %v4001
    %4003 = vmatmul.bf16.gmra.mxu0 %v3318
    %v4004 = vpop.f32.mrf.mxu0
    %v4005 = vadd.f32 0.0, %v4004
    %v4006 = vpop.f32.mrf.mxu0
    %v4007 = vadd.f32 0.0, %v4006
    %4008 = vmatmul.bf16.gmra.mxu0 %v3334
    %v4009 = vpop.f32.mrf.mxu0
    %v4010 = vadd.f32 0.0, %v4009
    %v4011 = vpop.f32.mrf.mxu0
    %v4012 = vadd.f32 0.0, %v4011
    %4013 = vdwg.mxu0
    %4014 = vmatpush.bf16.msra.mxu0 %v3654
    %4015 = vmatpush.bf16.msra.mxu0 %v3646
    %4016 = vmatpush.bf16.msra.mxu0 %v3638
    %4017 = vmatpush.bf16.msra.mxu0 %v3630
    %4018 = vmatpush.bf16.msra.mxu0 %v3622
    %4019 = vmatpush.bf16.msra.mxu0 %v3614
    %4020 = vmatpush.bf16.msra.mxu0 %v3606
    %4021 = vmatpush.bf16.msra.mxu0 %v3598
    %4022 = vmatmul.bf16.gmra.mxu0 %v3294
    %v4023 = vpop.f32.mrf.mxu0
    %v4024 = vadd.f32 0.0, %v4023
    %v4025 = vpop.f32.mrf.mxu0
    %v4026 = vadd.f32 0.0, %v4025
    %4027 = vmatmul.bf16.gmra.mxu0 %v3298
    %v4028 = vpop.f32.mrf.mxu0
    %v4029 = vadd.f32 0.0, %v4028
    %v4030 = vpop.f32.mrf.mxu0
    %v4031 = vadd.f32 0.0, %v4030
    %4032 = vmatmul.bf16.gmra.mxu0 %v3302
    %v4033 = vpop.f32.mrf.mxu0
    %v4034 = vadd.f32 0.0, %v4033
    %v4035 = vpop.f32.mrf.mxu0
    %v4036 = vadd.f32 0.0, %v4035
    %4037 = vmatmul.bf16.gmra.mxu0 %v3306
    %v4038 = vpop.f32.mrf.mxu0
    %v4039 = vadd.f32 0.0, %v4038
    %v4040 = vpop.f32.mrf.mxu0
    %v4041 = vadd.f32 0.0, %v4040
    %4042 = vmatmul.bf16.gmra.mxu0 %v3310
    %v4043 = vpop.f32.mrf.mxu0
    %v4044 = vadd.f32 0.0, %v4043
    %v4045 = vpop.f32.mrf.mxu0
    %v4046 = vadd.f32 0.0, %v4045
    %4047 = vmatmul.bf16.gmra.mxu0 %v3314
    %v4048 = vpop.f32.mrf.mxu0
    %v4049 = vadd.f32 0.0, %v4048
    %v4050 = vpop.f32.mrf.mxu0
    %v4051 = vadd.f32 0.0, %v4050
    %4052 = vmatmul.bf16.gmra.mxu0 %v3318
    %v4053 = vpop.f32.mrf.mxu0
    %v4054 = vadd.f32 0.0, %v4053
    %v4055 = vpop.f32.mrf.mxu0
    %v4056 = vadd.f32 0.0, %v4055
    %4057 = vmatmul.bf16.gmra.mxu0 %v3334
    %v4058 = vpop.f32.mrf.mxu0
    %v4059 = vadd.f32 0.0, %v4058
    %v4060 = vpop.f32.mrf.mxu0
    %v4061 = vadd.f32 0.0, %v4060
    %4062 = vdwg.mxu0
    %4063 = vmatpush.bf16.msra.mxu0 %v3655
    %4064 = vmatpush.bf16.msra.mxu0 %v3647
    %4065 = vmatpush.bf16.msra.mxu0 %v3639
    %4066 = vmatpush.bf16.msra.mxu0 %v3631
    %4067 = vmatpush.bf16.msra.mxu0 %v3623
    %4068 = vmatpush.bf16.msra.mxu0 %v3615
    %4069 = vmatpush.bf16.msra.mxu0 %v3607
    %4070 = vmatpush.bf16.msra.mxu0 %v3599
    %4071 = vmatmul.bf16.gmra.mxu0 %v3294
    %v4072 = vpop.f32.mrf.mxu0
    %v4073 = vadd.f32 0.0, %v4072
    %v4074 = vpop.f32.mrf.mxu0
    %v4075 = vadd.f32 0.0, %v4074
    %4076 = vmatmul.bf16.gmra.mxu0 %v3298
    %v4077 = vpop.f32.mrf.mxu0
    %v4078 = vadd.f32 0.0, %v4077
    %v4079 = vpop.f32.mrf.mxu0
    %v4080 = vadd.f32 0.0, %v4079
    %4081 = vmatmul.bf16.gmra.mxu0 %v3302
    %v4082 = vpop.f32.mrf.mxu0
    %v4083 = vadd.f32 0.0, %v4082
    %v4084 = vpop.f32.mrf.mxu0
    %v4085 = vadd.f32 0.0, %v4084
    %4086 = vmatmul.bf16.gmra.mxu0 %v3306
    %v4087 = vpop.f32.mrf.mxu0
    %v4088 = vadd.f32 0.0, %v4087
    %v4089 = vpop.f32.mrf.mxu0
    %v4090 = vadd.f32 0.0, %v4089
    %4091 = vmatmul.bf16.gmra.mxu0 %v3310
    %v4092 = vpop.f32.mrf.mxu0
    %v4093 = vadd.f32 0.0, %v4092
    %v4094 = vpop.f32.mrf.mxu0
    %v4095 = vadd.f32 0.0, %v4094
    %4096 = vmatmul.bf16.gmra.mxu0 %v3314
    %v4097 = vpop.f32.mrf.mxu0
    %v4098 = vadd.f32 0.0, %v4097
    %v4099 = vpop.f32.mrf.mxu0
    %v4100 = vadd.f32 0.0, %v4099
    %4101 = vmatmul.bf16.gmra.mxu0 %v3318
    %v4102 = vpop.f32.mrf.mxu0
    %v4103 = vadd.f32 0.0, %v4102
    %v4104 = vpop.f32.mrf.mxu0
    %v4105 = vadd.f32 0.0, %v4104
    %4106 = vmatmul.bf16.gmra.mxu0 %v3334
    %v4107 = vpop.f32.mrf.mxu0
    %v4108 = vadd.f32 0.0, %v4107
    %v4109 = vpop.f32.mrf.mxu0
    %v4110 = vadd.f32 0.0, %v4109
    %4111 = vdwg.mxu0
    %v4112 = vadd.f32 %v3159, %v3730
    %v4113 = vadd.f32 %v3160, %v3779
    %v4114 = vadd.f32 %v3161, %v3828
    %v4115 = vadd.f32 %v3162, %v3877
    %v4116 = vadd.f32 %v3163, %v3926
    %v4117 = vadd.f32 %v3164, %v3975
    %v4118 = vadd.f32 %v3165, %v4024
    %v4119 = vadd.f32 %v3166, %v4073
    %v4120 = vadd.f32 %v3167, %v3732
    %v4121 = vadd.f32 %v3168, %v3781
    %v4122 = vadd.f32 %v3169, %v3830
    %v4123 = vadd.f32 %v3170, %v3879
    %v4124 = vadd.f32 %v3171, %v3928
    %v4125 = vadd.f32 %v3172, %v3977
    %v4126 = vadd.f32 %v3173, %v4026
    %v4127 = vadd.f32 %v3174, %v4075
    %v4128 = vadd.f32 %v3175, %v3735
    %v4129 = vadd.f32 %v3176, %v3784
    %v4130 = vadd.f32 %v3177, %v3833
    %v4131 = vadd.f32 %v3178, %v3882
    %v4132 = vadd.f32 %v3179, %v3931
    %v4133 = vadd.f32 %v3180, %v3980
    %v4134 = vadd.f32 %v3181, %v4029
    %v4135 = vadd.f32 %v3182, %v4078
    %v4136 = vadd.f32 %v3183, %v3737
    %v4137 = vadd.f32 %v3184, %v3786
    %v4138 = vadd.f32 %v3185, %v3835
    %v4139 = vadd.f32 %v3186, %v3884
    %v4140 = vadd.f32 %v3187, %v3933
    %v4141 = vadd.f32 %v3188, %v3982
    %v4142 = vadd.f32 %v3189, %v4031
    %v4143 = vadd.f32 %v3190, %v4080
    %v4144 = vadd.f32 %v3191, %v3740
    %v4145 = vadd.f32 %v3192, %v3789
    %v4146 = vadd.f32 %v3193, %v3838
    %v4147 = vadd.f32 %v3194, %v3887
    %v4148 = vadd.f32 %v3195, %v3936
    %v4149 = vadd.f32 %v3196, %v3985
    %v4150 = vadd.f32 %v3197, %v4034
    %v4151 = vadd.f32 %v3198, %v4083
    %v4152 = vadd.f32 %v3199, %v3742
    %v4153 = vadd.f32 %v3200, %v3791
    %v4154 = vadd.f32 %v3201, %v3840
    %v4155 = vadd.f32 %v3202, %v3889
    %v4156 = vadd.f32 %v3203, %v3938
    %v4157 = vadd.f32 %v3204, %v3987
    %v4158 = vadd.f32 %v3205, %v4036
    %v4159 = vadd.f32 %v3206, %v4085
    %v4160 = vadd.f32 %v3207, %v3745
    %v4161 = vadd.f32 %v3208, %v3794
    %v4162 = vadd.f32 %v3209, %v3843
    %v4163 = vadd.f32 %v3210, %v3892
    %v4164 = vadd.f32 %v3211, %v3941
    %v4165 = vadd.f32 %v3212, %v3990
    %v4166 = vadd.f32 %v3213, %v4039
    %v4167 = vadd.f32 %v3214, %v4088
    %v4168 = vadd.f32 %v3215, %v3747
    %v4169 = vadd.f32 %v3216, %v3796
    %v4170 = vadd.f32 %v3217, %v3845
    %v4171 = vadd.f32 %v3218, %v3894
    %v4172 = vadd.f32 %v3219, %v3943
    %v4173 = vadd.f32 %v3220, %v3992
    %v4174 = vadd.f32 %v3221, %v4041
    %v4175 = vadd.f32 %v3222, %v4090
    %v4176 = vadd.f32 %v3223, %v3750
    %v4177 = vadd.f32 %v3224, %v3799
    %v4178 = vadd.f32 %v3225, %v3848
    %v4179 = vadd.f32 %v3226, %v3897
    %v4180 = vadd.f32 %v3227, %v3946
    %v4181 = vadd.f32 %v3228, %v3995
    %v4182 = vadd.f32 %v3229, %v4044
    %v4183 = vadd.f32 %v3230, %v4093
    %v4184 = vadd.f32 %v3231, %v3752
    %v4185 = vadd.f32 %v3232, %v3801
    %v4186 = vadd.f32 %v3233, %v3850
    %v4187 = vadd.f32 %v3234, %v3899
    %v4188 = vadd.f32 %v3235, %v3948
    %v4189 = vadd.f32 %v3236, %v3997
    %v4190 = vadd.f32 %v3237, %v4046
    %v4191 = vadd.f32 %v3238, %v4095
    %v4192 = vadd.f32 %v3239, %v3755
    %v4193 = vadd.f32 %v3240, %v3804
    %v4194 = vadd.f32 %v3241, %v3853
    %v4195 = vadd.f32 %v3242, %v3902
    %v4196 = vadd.f32 %v3243, %v3951
    %v4197 = vadd.f32 %v3244, %v4000
    %v4198 = vadd.f32 %v3245, %v4049
    %v4199 = vadd.f32 %v3246, %v4098
    %v4200 = vadd.f32 %v3247, %v3757
    %v4201 = vadd.f32 %v3248, %v3806
    %v4202 = vadd.f32 %v3249, %v3855
    %v4203 = vadd.f32 %v3250, %v3904
    %v4204 = vadd.f32 %v3251, %v3953
    %v4205 = vadd.f32 %v3252, %v4002
    %v4206 = vadd.f32 %v3253, %v4051
    %v4207 = vadd.f32 %v3254, %v4100
    %v4208 = vadd.f32 %v3255, %v3760
    %v4209 = vadd.f32 %v3256, %v3809
    %v4210 = vadd.f32 %v3257, %v3858
    %v4211 = vadd.f32 %v3258, %v3907
    %v4212 = vadd.f32 %v3259, %v3956
    %v4213 = vadd.f32 %v3260, %v4005
    %v4214 = vadd.f32 %v3261, %v4054
    %v4215 = vadd.f32 %v3262, %v4103
    %v4216 = vadd.f32 %v3263, %v3762
    %v4217 = vadd.f32 %v3264, %v3811
    %v4218 = vadd.f32 %v3265, %v3860
    %v4219 = vadd.f32 %v3266, %v3909
    %v4220 = vadd.f32 %v3267, %v3958
    %v4221 = vadd.f32 %v3268, %v4007
    %v4222 = vadd.f32 %v3269, %v4056
    %v4223 = vadd.f32 %v3270, %v4105
    %v4224 = vadd.f32 %v3271, %v3765
    %v4225 = vadd.f32 %v3272, %v3814
    %v4226 = vadd.f32 %v3273, %v3863
    %v4227 = vadd.f32 %v3274, %v3912
    %v4228 = vadd.f32 %v3275, %v3961
    %v4229 = vadd.f32 %v3276, %v4010
    %v4230 = vadd.f32 %v3277, %v4059
    %v4231 = vadd.f32 %v3278, %v4108
    %v4232 = vadd.f32 %v3279, %v3767
    %v4233 = vadd.f32 %v3280, %v3816
    %v4234 = vadd.f32 %v3281, %v3865
    %v4235 = vadd.f32 %v3282, %v3914
    %v4236 = vadd.f32 %v3283, %v3963
    %v4237 = vadd.f32 %v3284, %v4012
    %v4238 = vadd.f32 %v3285, %v4061
    %v4239 = vadd.f32 %v3286, %v4110
    %vm4240 = vcmask 1045504
    %v4241 = vrot.slane %v767, 2
    %v4242 = vrot.slane %v768, 2
    %v4243 = vsel %vm4240, %v4241, %v4242
    %v4244 = vrot.slane %v769, 2
    %v4245 = vsel %vm4240, %v4242, %v4244
    %v4246 = vrot.slane %v770, 2
    %v4247 = vsel %vm4240, %v4244, %v4246
    %v4248 = vrot.slane %v771, 2
    %v4249 = vsel %vm4240, %v4246, %v4248
    %v4250 = vrot.slane %v772, 2
    %v4251 = vsel %vm4240, %v4248, %v4250
    %v4252 = vrot.slane %v773, 2
    %v4253 = vsel %vm4240, %v4250, %v4252
    %v4254 = vrot.slane %v774, 2
    %v4255 = vsel %vm4240, %v4252, %v4254
    %v4263 = vrot.slane %v847, 2
    %vm4264 = vcmask 1045504
    %v4267 = vsel %vm4264, %v4254, %v4263
    %s4269 = scalar_lea.vmem %s3, 2048
    %v4270 = vld [vmem:[%s4269] sm:$0xff]
    %v4271 = vld [vmem:[%s4269 + $0x8] sm:$0xff]
    %v4272 = vld [vmem:[%s4269 + $0x10] sm:$0xff]
    %v4273 = vld [vmem:[%s4269 + $0x18] sm:$0xff]
    %v4274 = vld [vmem:[%s4269 + $0x20] sm:$0xff]
    %v4275 = vld [vmem:[%s4269 + $0x28] sm:$0xff]
    %v4276 = vld [vmem:[%s4269 + $0x30] sm:$0xff]
    %v4277 = vld [vmem:[%s4269 + $0x38] sm:$0xff]
    %v4278 = vld [vmem:[%s4269 + $0x40] sm:$0xff]
    %v4279 = vld [vmem:[%s4269 + $0x48] sm:$0xff]
    %v4280 = vld [vmem:[%s4269 + $0x50] sm:$0xff]
    %v4281 = vld [vmem:[%s4269 + $0x58] sm:$0xff]
    %v4282 = vld [vmem:[%s4269 + $0x60] sm:$0xff]
    %v4283 = vld [vmem:[%s4269 + $0x68] sm:$0xff]
    %v4284 = vld [vmem:[%s4269 + $0x70] sm:$0xff]
    %v4285 = vld [vmem:[%s4269 + $0x78] sm:$0xff]
    %v4286 = vld [vmem:[%s4269 + $0x80] sm:$0xff]
    %v4287 = vld [vmem:[%s4269 + $0x88] sm:$0xff]
    %v4288 = vld [vmem:[%s4269 + $0x90] sm:$0xff]
    %v4289 = vld [vmem:[%s4269 + $0x98] sm:$0xff]
    %v4290 = vld [vmem:[%s4269 + $0xa0] sm:$0xff]
    %v4291 = vld [vmem:[%s4269 + $0xa8] sm:$0xff]
    %v4292 = vld [vmem:[%s4269 + $0xb0] sm:$0xff]
    %v4293 = vld [vmem:[%s4269 + $0xb8] sm:$0xff]
    %v4294 = vld [vmem:[%s4269 + $0xc0] sm:$0xff]
    %v4295 = vld [vmem:[%s4269 + $0xc8] sm:$0xff]
    %v4296 = vld [vmem:[%s4269 + $0xd0] sm:$0xff]
    %v4297 = vld [vmem:[%s4269 + $0xd8] sm:$0xff]
    %v4298 = vld [vmem:[%s4269 + $0xe0] sm:$0xff]
    %v4299 = vld [vmem:[%s4269 + $0xe8] sm:$0xff]
    %v4300 = vld [vmem:[%s4269 + $0xf0] sm:$0xff]
    %v4301 = vld [vmem:[%s4269 + $0xf8] sm:$0xff]
    %v4302 = vld [vmem:[%s4269 + $0x100] sm:$0xff]
    %v4303 = vld [vmem:[%s4269 + $0x108] sm:$0xff]
    %v4304 = vld [vmem:[%s4269 + $0x110] sm:$0xff]
    %v4305 = vld [vmem:[%s4269 + $0x118] sm:$0xff]
    %v4306 = vld [vmem:[%s4269 + $0x120] sm:$0xff]
    %v4307 = vld [vmem:[%s4269 + $0x128] sm:$0xff]
    %v4308 = vld [vmem:[%s4269 + $0x130] sm:$0xff]
    %v4309 = vld [vmem:[%s4269 + $0x138] sm:$0xff]
    %v4310 = vld [vmem:[%s4269 + $0x140] sm:$0xff]
    %v4311 = vld [vmem:[%s4269 + $0x148] sm:$0xff]
    %v4312 = vld [vmem:[%s4269 + $0x150] sm:$0xff]
    %v4313 = vld [vmem:[%s4269 + $0x158] sm:$0xff]
    %v4314 = vld [vmem:[%s4269 + $0x160] sm:$0xff]
    %v4315 = vld [vmem:[%s4269 + $0x168] sm:$0xff]
    %v4316 = vld [vmem:[%s4269 + $0x170] sm:$0xff]
    %v4317 = vld [vmem:[%s4269 + $0x178] sm:$0xff]
    %v4318 = vld [vmem:[%s4269 + $0x180] sm:$0xff]
    %v4319 = vld [vmem:[%s4269 + $0x188] sm:$0xff]
    %v4320 = vld [vmem:[%s4269 + $0x190] sm:$0xff]
    %v4321 = vld [vmem:[%s4269 + $0x198] sm:$0xff]
    %v4322 = vld [vmem:[%s4269 + $0x1a0] sm:$0xff]
    %v4323 = vld [vmem:[%s4269 + $0x1a8] sm:$0xff]
    %v4324 = vld [vmem:[%s4269 + $0x1b0] sm:$0xff]
    %v4325 = vld [vmem:[%s4269 + $0x1b8] sm:$0xff]
    %v4326 = vld [vmem:[%s4269 + $0x1c0] sm:$0xff]
    %v4327 = vld [vmem:[%s4269 + $0x1c8] sm:$0xff]
    %v4328 = vld [vmem:[%s4269 + $0x1d0] sm:$0xff]
    %v4329 = vld [vmem:[%s4269 + $0x1d8] sm:$0xff]
    %v4330 = vld [vmem:[%s4269 + $0x1e0] sm:$0xff]
    %v4331 = vld [vmem:[%s4269 + $0x1e8] sm:$0xff]
    %v4332 = vld [vmem:[%s4269 + $0x1f0] sm:$0xff]
    %v4333 = vld [vmem:[%s4269 + $0x1f8] sm:$0xff]
    %v4398 = vunpack.c.l.b16 %v4270
    %v4399 = vunpack.c.h.b16 %v4270
    %v4400 = vunpack.c.l.b16 %v4271
    %v4401 = vunpack.c.h.b16 %v4271
    %v4402 = vunpack.c.l.b16 %v4272
    %v4403 = vunpack.c.h.b16 %v4272
    %v4404 = vunpack.c.l.b16 %v4273
    %v4405 = vunpack.c.h.b16 %v4273
    %v4406 = vunpack.c.l.b16 %v4274
    %v4407 = vunpack.c.h.b16 %v4274
    %v4408 = vunpack.c.l.b16 %v4275
    %v4409 = vunpack.c.h.b16 %v4275
    %v4410 = vunpack.c.l.b16 %v4276
    %v4411 = vunpack.c.h.b16 %v4276
    %v4412 = vunpack.c.l.b16 %v4277
    %v4413 = vunpack.c.h.b16 %v4277
    %v4414 = vunpack.c.l.b16 %v4278
    %v4415 = vunpack.c.h.b16 %v4278
    %v4416 = vunpack.c.l.b16 %v4279
    %v4417 = vunpack.c.h.b16 %v4279
    %v4418 = vunpack.c.l.b16 %v4280
    %v4419 = vunpack.c.h.b16 %v4280
    %v4420 = vunpack.c.l.b16 %v4281
    %v4421 = vunpack.c.h.b16 %v4281
    %v4422 = vunpack.c.l.b16 %v4282
    %v4423 = vunpack.c.h.b16 %v4282
    %v4424 = vunpack.c.l.b16 %v4283
    %v4425 = vunpack.c.h.b16 %v4283
    %v4426 = vunpack.c.l.b16 %v4284
    %v4427 = vunpack.c.h.b16 %v4284
    %v4428 = vunpack.c.l.b16 %v4285
    %v4429 = vunpack.c.h.b16 %v4285
    %v4430 = vunpack.c.l.b16 %v4286
    %v4431 = vunpack.c.h.b16 %v4286
    %v4432 = vunpack.c.l.b16 %v4287
    %v4433 = vunpack.c.h.b16 %v4287
    %v4434 = vunpack.c.l.b16 %v4288
    %v4435 = vunpack.c.h.b16 %v4288
    %v4436 = vunpack.c.l.b16 %v4289
    %v4437 = vunpack.c.h.b16 %v4289
    %v4438 = vunpack.c.l.b16 %v4290
    %v4439 = vunpack.c.h.b16 %v4290
    %v4440 = vunpack.c.l.b16 %v4291
    %v4441 = vunpack.c.h.b16 %v4291
    %v4442 = vunpack.c.l.b16 %v4292
    %v4443 = vunpack.c.h.b16 %v4292
    %v4444 = vunpack.c.l.b16 %v4293
    %v4445 = vunpack.c.h.b16 %v4293
    %v4446 = vunpack.c.l.b16 %v4294
    %v4447 = vunpack.c.h.b16 %v4294
    %v4448 = vunpack.c.l.b16 %v4295
    %v4449 = vunpack.c.h.b16 %v4295
    %v4450 = vunpack.c.l.b16 %v4296
    %v4451 = vunpack.c.h.b16 %v4296
    %v4452 = vunpack.c.l.b16 %v4297
    %v4453 = vunpack.c.h.b16 %v4297
    %v4454 = vunpack.c.l.b16 %v4298
    %v4455 = vunpack.c.h.b16 %v4298
    %v4456 = vunpack.c.l.b16 %v4299
    %v4457 = vunpack.c.h.b16 %v4299
    %v4458 = vunpack.c.l.b16 %v4300
    %v4459 = vunpack.c.h.b16 %v4300
    %v4460 = vunpack.c.l.b16 %v4301
    %v4461 = vunpack.c.h.b16 %v4301
    %v4462 = vunpack.c.l.b16 %v4302
    %v4463 = vunpack.c.h.b16 %v4302
    %v4464 = vunpack.c.l.b16 %v4303
    %v4465 = vunpack.c.h.b16 %v4303
    %v4466 = vunpack.c.l.b16 %v4304
    %v4467 = vunpack.c.h.b16 %v4304
    %v4468 = vunpack.c.l.b16 %v4305
    %v4469 = vunpack.c.h.b16 %v4305
    %v4470 = vunpack.c.l.b16 %v4306
    %v4471 = vunpack.c.h.b16 %v4306
    %v4472 = vunpack.c.l.b16 %v4307
    %v4473 = vunpack.c.h.b16 %v4307
    %v4474 = vunpack.c.l.b16 %v4308
    %v4475 = vunpack.c.h.b16 %v4308
    %v4476 = vunpack.c.l.b16 %v4309
    %v4477 = vunpack.c.h.b16 %v4309
    %v4478 = vunpack.c.l.b16 %v4310
    %v4479 = vunpack.c.h.b16 %v4310
    %v4480 = vunpack.c.l.b16 %v4311
    %v4481 = vunpack.c.h.b16 %v4311
    %v4482 = vunpack.c.l.b16 %v4312
    %v4483 = vunpack.c.h.b16 %v4312
    %v4484 = vunpack.c.l.b16 %v4313
    %v4485 = vunpack.c.h.b16 %v4313
    %v4486 = vunpack.c.l.b16 %v4314
    %v4487 = vunpack.c.h.b16 %v4314
    %v4488 = vunpack.c.l.b16 %v4315
    %v4489 = vunpack.c.h.b16 %v4315
    %v4490 = vunpack.c.l.b16 %v4316
    %v4491 = vunpack.c.h.b16 %v4316
    %v4492 = vunpack.c.l.b16 %v4317
    %v4493 = vunpack.c.h.b16 %v4317
    %v4494 = vunpack.c.l.b16 %v4318
    %v4495 = vunpack.c.h.b16 %v4318
    %v4496 = vunpack.c.l.b16 %v4319
    %v4497 = vunpack.c.h.b16 %v4319
    %v4498 = vunpack.c.l.b16 %v4320
    %v4499 = vunpack.c.h.b16 %v4320
    %v4500 = vunpack.c.l.b16 %v4321
    %v4501 = vunpack.c.h.b16 %v4321
    %v4502 = vunpack.c.l.b16 %v4322
    %v4503 = vunpack.c.h.b16 %v4322
    %v4504 = vunpack.c.l.b16 %v4323
    %v4505 = vunpack.c.h.b16 %v4323
    %v4506 = vunpack.c.l.b16 %v4324
    %v4507 = vunpack.c.h.b16 %v4324
    %v4508 = vunpack.c.l.b16 %v4325
    %v4509 = vunpack.c.h.b16 %v4325
    %v4510 = vunpack.c.l.b16 %v4326
    %v4511 = vunpack.c.h.b16 %v4326
    %v4512 = vunpack.c.l.b16 %v4327
    %v4513 = vunpack.c.h.b16 %v4327
    %v4514 = vunpack.c.l.b16 %v4328
    %v4515 = vunpack.c.h.b16 %v4328
    %v4516 = vunpack.c.l.b16 %v4329
    %v4517 = vunpack.c.h.b16 %v4329
    %v4518 = vunpack.c.l.b16 %v4330
    %v4519 = vunpack.c.h.b16 %v4330
    %v4520 = vunpack.c.l.b16 %v4331
    %v4521 = vunpack.c.h.b16 %v4331
    %v4522 = vunpack.c.l.b16 %v4332
    %v4523 = vunpack.c.h.b16 %v4332
    %v4524 = vunpack.c.l.b16 %v4333
    %v4525 = vunpack.c.h.b16 %v4333
    %v4526 = vpack.c.b16 %v4406, %v4398
    %v4527 = vpack.c.b16 %v4407, %v4399
    %v4528 = vpack.c.b16 %v4408, %v4400
    %v4529 = vpack.c.b16 %v4409, %v4401
    %v4530 = vpack.c.b16 %v4410, %v4402
    %v4531 = vpack.c.b16 %v4411, %v4403
    %v4532 = vpack.c.b16 %v4412, %v4404
    %v4533 = vpack.c.b16 %v4413, %v4405
    %v4534 = vpack.c.b16 %v4422, %v4414
    %v4535 = vpack.c.b16 %v4423, %v4415
    %v4536 = vpack.c.b16 %v4424, %v4416
    %v4537 = vpack.c.b16 %v4425, %v4417
    %v4538 = vpack.c.b16 %v4426, %v4418
    %v4539 = vpack.c.b16 %v4427, %v4419
    %v4540 = vpack.c.b16 %v4428, %v4420
    %v4541 = vpack.c.b16 %v4429, %v4421
    %v4542 = vpack.c.b16 %v4438, %v4430
    %v4543 = vpack.c.b16 %v4439, %v4431
    %v4544 = vpack.c.b16 %v4440, %v4432
    %v4545 = vpack.c.b16 %v4441, %v4433
    %v4546 = vpack.c.b16 %v4442, %v4434
    %v4547 = vpack.c.b16 %v4443, %v4435
    %v4548 = vpack.c.b16 %v4444, %v4436
    %v4549 = vpack.c.b16 %v4445, %v4437
    %v4550 = vpack.c.b16 %v4454, %v4446
    %v4551 = vpack.c.b16 %v4455, %v4447
    %v4552 = vpack.c.b16 %v4456, %v4448
    %v4553 = vpack.c.b16 %v4457, %v4449
    %v4554 = vpack.c.b16 %v4458, %v4450
    %v4555 = vpack.c.b16 %v4459, %v4451
    %v4556 = vpack.c.b16 %v4460, %v4452
    %v4557 = vpack.c.b16 %v4461, %v4453
    %v4558 = vpack.c.b16 %v4470, %v4462
    %v4559 = vpack.c.b16 %v4471, %v4463
    %v4560 = vpack.c.b16 %v4472, %v4464
    %v4561 = vpack.c.b16 %v4473, %v4465
    %v4562 = vpack.c.b16 %v4474, %v4466
    %v4563 = vpack.c.b16 %v4475, %v4467
    %v4564 = vpack.c.b16 %v4476, %v4468
    %v4565 = vpack.c.b16 %v4477, %v4469
    %v4566 = vpack.c.b16 %v4486, %v4478
    %v4567 = vpack.c.b16 %v4487, %v4479
    %v4568 = vpack.c.b16 %v4488, %v4480
    %v4569 = vpack.c.b16 %v4489, %v4481
    %v4570 = vpack.c.b16 %v4490, %v4482
    %v4571 = vpack.c.b16 %v4491, %v4483
    %v4572 = vpack.c.b16 %v4492, %v4484
    %v4573 = vpack.c.b16 %v4493, %v4485
    %v4574 = vpack.c.b16 %v4502, %v4494
    %v4575 = vpack.c.b16 %v4503, %v4495
    %v4576 = vpack.c.b16 %v4504, %v4496
    %v4577 = vpack.c.b16 %v4505, %v4497
    %v4578 = vpack.c.b16 %v4506, %v4498
    %v4579 = vpack.c.b16 %v4507, %v4499
    %v4580 = vpack.c.b16 %v4508, %v4500
    %v4581 = vpack.c.b16 %v4509, %v4501
    %v4582 = vpack.c.b16 %v4518, %v4510
    %v4583 = vpack.c.b16 %v4519, %v4511
    %v4584 = vpack.c.b16 %v4520, %v4512
    %v4585 = vpack.c.b16 %v4521, %v4513
    %v4586 = vpack.c.b16 %v4522, %v4514
    %v4587 = vpack.c.b16 %v4523, %v4515
    %v4588 = vpack.c.b16 %v4524, %v4516
    %v4589 = vpack.c.b16 %v4525, %v4517
    %4654 = vmatpush.bf16.msra.mxu0 %v4582
    %4655 = vmatpush.bf16.msra.mxu0 %v4574
    %4656 = vmatpush.bf16.msra.mxu0 %v4566
    %4657 = vmatpush.bf16.msra.mxu0 %v4558
    %4658 = vmatpush.bf16.msra.mxu0 %v4550
    %4659 = vmatpush.bf16.msra.mxu0 %v4542
    %4660 = vmatpush.bf16.msra.mxu0 %v4534
    %4661 = vmatpush.bf16.msra.mxu0 %v4526
    %4662 = vmatmul.bf16.gmra.mxu0 %v4243
    %v4663 = vpop.f32.mrf.mxu0
    %v4664 = vadd.f32 0.0, %v4663
    %v4665 = vpop.f32.mrf.mxu0
    %v4666 = vadd.f32 0.0, %v4665
    %4667 = vmatmul.bf16.gmra.mxu0 %v4245
    %v4668 = vpop.f32.mrf.mxu0
    %v4669 = vadd.f32 0.0, %v4668
    %v4670 = vpop.f32.mrf.mxu0
    %v4671 = vadd.f32 0.0, %v4670
    %4672 = vmatmul.bf16.gmra.mxu0 %v4247
    %v4673 = vpop.f32.mrf.mxu0
    %v4674 = vadd.f32 0.0, %v4673
    %v4675 = vpop.f32.mrf.mxu0
    %v4676 = vadd.f32 0.0, %v4675
    %4677 = vmatmul.bf16.gmra.mxu0 %v4249
    %v4678 = vpop.f32.mrf.mxu0
    %v4679 = vadd.f32 0.0, %v4678
    %v4680 = vpop.f32.mrf.mxu0
    %v4681 = vadd.f32 0.0, %v4680
    %4682 = vmatmul.bf16.gmra.mxu0 %v4251
    %v4683 = vpop.f32.mrf.mxu0
    %v4684 = vadd.f32 0.0, %v4683
    %v4685 = vpop.f32.mrf.mxu0
    %v4686 = vadd.f32 0.0, %v4685
    %4687 = vmatmul.bf16.gmra.mxu0 %v4253
    %v4688 = vpop.f32.mrf.mxu0
    %v4689 = vadd.f32 0.0, %v4688
    %v4690 = vpop.f32.mrf.mxu0
    %v4691 = vadd.f32 0.0, %v4690
    %4692 = vmatmul.bf16.gmra.mxu0 %v4255
    %v4693 = vpop.f32.mrf.mxu0
    %v4694 = vadd.f32 0.0, %v4693
    %v4695 = vpop.f32.mrf.mxu0
    %v4696 = vadd.f32 0.0, %v4695
    %4697 = vmatmul.bf16.gmra.mxu0 %v4267
    %v4698 = vpop.f32.mrf.mxu0
    %v4699 = vadd.f32 0.0, %v4698
    %v4700 = vpop.f32.mrf.mxu0
    %v4701 = vadd.f32 0.0, %v4700
    %4702 = vdwg.mxu0
    %4703 = vmatpush.bf16.msra.mxu0 %v4583
    %4704 = vmatpush.bf16.msra.mxu0 %v4575
    %4705 = vmatpush.bf16.msra.mxu0 %v4567
    %4706 = vmatpush.bf16.msra.mxu0 %v4559
    %4707 = vmatpush.bf16.msra.mxu0 %v4551
    %4708 = vmatpush.bf16.msra.mxu0 %v4543
    %4709 = vmatpush.bf16.msra.mxu0 %v4535
    %4710 = vmatpush.bf16.msra.mxu0 %v4527
    %4711 = vmatmul.bf16.gmra.mxu0 %v4243
    %v4712 = vpop.f32.mrf.mxu0
    %v4713 = vadd.f32 0.0, %v4712
    %v4714 = vpop.f32.mrf.mxu0
    %v4715 = vadd.f32 0.0, %v4714
    %4716 = vmatmul.bf16.gmra.mxu0 %v4245
    %v4717 = vpop.f32.mrf.mxu0
    %v4718 = vadd.f32 0.0, %v4717
    %v4719 = vpop.f32.mrf.mxu0
    %v4720 = vadd.f32 0.0, %v4719
    %4721 = vmatmul.bf16.gmra.mxu0 %v4247
    %v4722 = vpop.f32.mrf.mxu0
    %v4723 = vadd.f32 0.0, %v4722
    %v4724 = vpop.f32.mrf.mxu0
    %v4725 = vadd.f32 0.0, %v4724
    %4726 = vmatmul.bf16.gmra.mxu0 %v4249
    %v4727 = vpop.f32.mrf.mxu0
    %v4728 = vadd.f32 0.0, %v4727
    %v4729 = vpop.f32.mrf.mxu0
    %v4730 = vadd.f32 0.0, %v4729
    %4731 = vmatmul.bf16.gmra.mxu0 %v4251
    %v4732 = vpop.f32.mrf.mxu0
    %v4733 = vadd.f32 0.0, %v4732
    %v4734 = vpop.f32.mrf.mxu0
    %v4735 = vadd.f32 0.0, %v4734
    %4736 = vmatmul.bf16.gmra.mxu0 %v4253
    %v4737 = vpop.f32.mrf.mxu0
    %v4738 = vadd.f32 0.0, %v4737
    %v4739 = vpop.f32.mrf.mxu0
    %v4740 = vadd.f32 0.0, %v4739
    %4741 = vmatmul.bf16.gmra.mxu0 %v4255
    %v4742 = vpop.f32.mrf.mxu0
    %v4743 = vadd.f32 0.0, %v4742
    %v4744 = vpop.f32.mrf.mxu0
    %v4745 = vadd.f32 0.0, %v4744
    %4746 = vmatmul.bf16.gmra.mxu0 %v4267
    %v4747 = vpop.f32.mrf.mxu0
    %v4748 = vadd.f32 0.0, %v4747
    %v4749 = vpop.f32.mrf.mxu0
    %v4750 = vadd.f32 0.0, %v4749
    %4751 = vdwg.mxu0
    %4752 = vmatpush.bf16.msra.mxu0 %v4584
    %4753 = vmatpush.bf16.msra.mxu0 %v4576
    %4754 = vmatpush.bf16.msra.mxu0 %v4568
    %4755 = vmatpush.bf16.msra.mxu0 %v4560
    %4756 = vmatpush.bf16.msra.mxu0 %v4552
    %4757 = vmatpush.bf16.msra.mxu0 %v4544
    %4758 = vmatpush.bf16.msra.mxu0 %v4536
    %4759 = vmatpush.bf16.msra.mxu0 %v4528
    %4760 = vmatmul.bf16.gmra.mxu0 %v4243
    %v4761 = vpop.f32.mrf.mxu0
    %v4762 = vadd.f32 0.0, %v4761
    %v4763 = vpop.f32.mrf.mxu0
    %v4764 = vadd.f32 0.0, %v4763
    %4765 = vmatmul.bf16.gmra.mxu0 %v4245
    %v4766 = vpop.f32.mrf.mxu0
    %v4767 = vadd.f32 0.0, %v4766
    %v4768 = vpop.f32.mrf.mxu0
    %v4769 = vadd.f32 0.0, %v4768
    %4770 = vmatmul.bf16.gmra.mxu0 %v4247
    %v4771 = vpop.f32.mrf.mxu0
    %v4772 = vadd.f32 0.0, %v4771
    %v4773 = vpop.f32.mrf.mxu0
    %v4774 = vadd.f32 0.0, %v4773
    %4775 = vmatmul.bf16.gmra.mxu0 %v4249
    %v4776 = vpop.f32.mrf.mxu0
    %v4777 = vadd.f32 0.0, %v4776
    %v4778 = vpop.f32.mrf.mxu0
    %v4779 = vadd.f32 0.0, %v4778
    %4780 = vmatmul.bf16.gmra.mxu0 %v4251
    %v4781 = vpop.f32.mrf.mxu0
    %v4782 = vadd.f32 0.0, %v4781
    %v4783 = vpop.f32.mrf.mxu0
    %v4784 = vadd.f32 0.0, %v4783
    %4785 = vmatmul.bf16.gmra.mxu0 %v4253
    %v4786 = vpop.f32.mrf.mxu0
    %v4787 = vadd.f32 0.0, %v4786
    %v4788 = vpop.f32.mrf.mxu0
    %v4789 = vadd.f32 0.0, %v4788
    %4790 = vmatmul.bf16.gmra.mxu0 %v4255
    %v4791 = vpop.f32.mrf.mxu0
    %v4792 = vadd.f32 0.0, %v4791
    %v4793 = vpop.f32.mrf.mxu0
    %v4794 = vadd.f32 0.0, %v4793
    %4795 = vmatmul.bf16.gmra.mxu0 %v4267
    %v4796 = vpop.f32.mrf.mxu0
    %v4797 = vadd.f32 0.0, %v4796
    %v4798 = vpop.f32.mrf.mxu0
    %v4799 = vadd.f32 0.0, %v4798
    %4800 = vdwg.mxu0
    %4801 = vmatpush.bf16.msra.mxu0 %v4585
    %4802 = vmatpush.bf16.msra.mxu0 %v4577
    %4803 = vmatpush.bf16.msra.mxu0 %v4569
    %4804 = vmatpush.bf16.msra.mxu0 %v4561
    %4805 = vmatpush.bf16.msra.mxu0 %v4553
    %4806 = vmatpush.bf16.msra.mxu0 %v4545
    %4807 = vmatpush.bf16.msra.mxu0 %v4537
    %4808 = vmatpush.bf16.msra.mxu0 %v4529
    %4809 = vmatmul.bf16.gmra.mxu0 %v4243
    %v4810 = vpop.f32.mrf.mxu0
    %v4811 = vadd.f32 0.0, %v4810
    %v4812 = vpop.f32.mrf.mxu0
    %v4813 = vadd.f32 0.0, %v4812
    %4814 = vmatmul.bf16.gmra.mxu0 %v4245
    %v4815 = vpop.f32.mrf.mxu0
    %v4816 = vadd.f32 0.0, %v4815
    %v4817 = vpop.f32.mrf.mxu0
    %v4818 = vadd.f32 0.0, %v4817
    %4819 = vmatmul.bf16.gmra.mxu0 %v4247
    %v4820 = vpop.f32.mrf.mxu0
    %v4821 = vadd.f32 0.0, %v4820
    %v4822 = vpop.f32.mrf.mxu0
    %v4823 = vadd.f32 0.0, %v4822
    %4824 = vmatmul.bf16.gmra.mxu0 %v4249
    %v4825 = vpop.f32.mrf.mxu0
    %v4826 = vadd.f32 0.0, %v4825
    %v4827 = vpop.f32.mrf.mxu0
    %v4828 = vadd.f32 0.0, %v4827
    %4829 = vmatmul.bf16.gmra.mxu0 %v4251
    %v4830 = vpop.f32.mrf.mxu0
    %v4831 = vadd.f32 0.0, %v4830
    %v4832 = vpop.f32.mrf.mxu0
    %v4833 = vadd.f32 0.0, %v4832
    %4834 = vmatmul.bf16.gmra.mxu0 %v4253
    %v4835 = vpop.f32.mrf.mxu0
    %v4836 = vadd.f32 0.0, %v4835
    %v4837 = vpop.f32.mrf.mxu0
    %v4838 = vadd.f32 0.0, %v4837
    %4839 = vmatmul.bf16.gmra.mxu0 %v4255
    %v4840 = vpop.f32.mrf.mxu0
    %v4841 = vadd.f32 0.0, %v4840
    %v4842 = vpop.f32.mrf.mxu0
    %v4843 = vadd.f32 0.0, %v4842
    %4844 = vmatmul.bf16.gmra.mxu0 %v4267
    %v4845 = vpop.f32.mrf.mxu0
    %v4846 = vadd.f32 0.0, %v4845
    %v4847 = vpop.f32.mrf.mxu0
    %v4848 = vadd.f32 0.0, %v4847
    %4849 = vdwg.mxu0
    %4850 = vmatpush.bf16.msra.mxu0 %v4586
    %4851 = vmatpush.bf16.msra.mxu0 %v4578
    %4852 = vmatpush.bf16.msra.mxu0 %v4570
    %4853 = vmatpush.bf16.msra.mxu0 %v4562
    %4854 = vmatpush.bf16.msra.mxu0 %v4554
    %4855 = vmatpush.bf16.msra.mxu0 %v4546
    %4856 = vmatpush.bf16.msra.mxu0 %v4538
    %4857 = vmatpush.bf16.msra.mxu0 %v4530
    %4858 = vmatmul.bf16.gmra.mxu0 %v4243
    %v4859 = vpop.f32.mrf.mxu0
    %v4860 = vadd.f32 0.0, %v4859
    %v4861 = vpop.f32.mrf.mxu0
    %v4862 = vadd.f32 0.0, %v4861
    %4863 = vmatmul.bf16.gmra.mxu0 %v4245
    %v4864 = vpop.f32.mrf.mxu0
    %v4865 = vadd.f32 0.0, %v4864
    %v4866 = vpop.f32.mrf.mxu0
    %v4867 = vadd.f32 0.0, %v4866
    %4868 = vmatmul.bf16.gmra.mxu0 %v4247
    %v4869 = vpop.f32.mrf.mxu0
    %v4870 = vadd.f32 0.0, %v4869
    %v4871 = vpop.f32.mrf.mxu0
    %v4872 = vadd.f32 0.0, %v4871
    %4873 = vmatmul.bf16.gmra.mxu0 %v4249
    %v4874 = vpop.f32.mrf.mxu0
    %v4875 = vadd.f32 0.0, %v4874
    %v4876 = vpop.f32.mrf.mxu0
    %v4877 = vadd.f32 0.0, %v4876
    %4878 = vmatmul.bf16.gmra.mxu0 %v4251
    %v4879 = vpop.f32.mrf.mxu0
    %v4880 = vadd.f32 0.0, %v4879
    %v4881 = vpop.f32.mrf.mxu0
    %v4882 = vadd.f32 0.0, %v4881
    %4883 = vmatmul.bf16.gmra.mxu0 %v4253
    %v4884 = vpop.f32.mrf.mxu0
    %v4885 = vadd.f32 0.0, %v4884
    %v4886 = vpop.f32.mrf.mxu0
    %v4887 = vadd.f32 0.0, %v4886
    %4888 = vmatmul.bf16.gmra.mxu0 %v4255
    %v4889 = vpop.f32.mrf.mxu0
    %v4890 = vadd.f32 0.0, %v4889
    %v4891 = vpop.f32.mrf.mxu0
    %v4892 = vadd.f32 0.0, %v4891
    %4893 = vmatmul.bf16.gmra.mxu0 %v4267
    %v4894 = vpop.f32.mrf.mxu0
    %v4895 = vadd.f32 0.0, %v4894
    %v4896 = vpop.f32.mrf.mxu0
    %v4897 = vadd.f32 0.0, %v4896
    %4898 = vdwg.mxu0
    %4899 = vmatpush.bf16.msra.mxu0 %v4587
    %4900 = vmatpush.bf16.msra.mxu0 %v4579
    %4901 = vmatpush.bf16.msra.mxu0 %v4571
    %4902 = vmatpush.bf16.msra.mxu0 %v4563
    %4903 = vmatpush.bf16.msra.mxu0 %v4555
    %4904 = vmatpush.bf16.msra.mxu0 %v4547
    %4905 = vmatpush.bf16.msra.mxu0 %v4539
    %4906 = vmatpush.bf16.msra.mxu0 %v4531
    %4907 = vmatmul.bf16.gmra.mxu0 %v4243
    %v4908 = vpop.f32.mrf.mxu0
    %v4909 = vadd.f32 0.0, %v4908
    %v4910 = vpop.f32.mrf.mxu0
    %v4911 = vadd.f32 0.0, %v4910
    %4912 = vmatmul.bf16.gmra.mxu0 %v4245
    %v4913 = vpop.f32.mrf.mxu0
    %v4914 = vadd.f32 0.0, %v4913
    %v4915 = vpop.f32.mrf.mxu0
    %v4916 = vadd.f32 0.0, %v4915
    %4917 = vmatmul.bf16.gmra.mxu0 %v4247
    %v4918 = vpop.f32.mrf.mxu0
    %v4919 = vadd.f32 0.0, %v4918
    %v4920 = vpop.f32.mrf.mxu0
    %v4921 = vadd.f32 0.0, %v4920
    %4922 = vmatmul.bf16.gmra.mxu0 %v4249
    %v4923 = vpop.f32.mrf.mxu0
    %v4924 = vadd.f32 0.0, %v4923
    %v4925 = vpop.f32.mrf.mxu0
    %v4926 = vadd.f32 0.0, %v4925
    %4927 = vmatmul.bf16.gmra.mxu0 %v4251
    %v4928 = vpop.f32.mrf.mxu0
    %v4929 = vadd.f32 0.0, %v4928
    %v4930 = vpop.f32.mrf.mxu0
    %v4931 = vadd.f32 0.0, %v4930
    %4932 = vmatmul.bf16.gmra.mxu0 %v4253
    %v4933 = vpop.f32.mrf.mxu0
    %v4934 = vadd.f32 0.0, %v4933
    %v4935 = vpop.f32.mrf.mxu0
    %v4936 = vadd.f32 0.0, %v4935
    %4937 = vmatmul.bf16.gmra.mxu0 %v4255
    %v4938 = vpop.f32.mrf.mxu0
    %v4939 = vadd.f32 0.0, %v4938
    %v4940 = vpop.f32.mrf.mxu0
    %v4941 = vadd.f32 0.0, %v4940
    %4942 = vmatmul.bf16.gmra.mxu0 %v4267
    %v4943 = vpop.f32.mrf.mxu0
    %v4944 = vadd.f32 0.0, %v4943
    %v4945 = vpop.f32.mrf.mxu0
    %v4946 = vadd.f32 0.0, %v4945
    %4947 = vdwg.mxu0
    %4948 = vmatpush.bf16.msra.mxu0 %v4588
    %4949 = vmatpush.bf16.msra.mxu0 %v4580
    %4950 = vmatpush.bf16.msra.mxu0 %v4572
    %4951 = vmatpush.bf16.msra.mxu0 %v4564
    %4952 = vmatpush.bf16.msra.mxu0 %v4556
    %4953 = vmatpush.bf16.msra.mxu0 %v4548
    %4954 = vmatpush.bf16.msra.mxu0 %v4540
    %4955 = vmatpush.bf16.msra.mxu0 %v4532
    %4956 = vmatmul.bf16.gmra.mxu0 %v4243
    %v4957 = vpop.f32.mrf.mxu0
    %v4958 = vadd.f32 0.0, %v4957
    %v4959 = vpop.f32.mrf.mxu0
    %v4960 = vadd.f32 0.0, %v4959
    %4961 = vmatmul.bf16.gmra.mxu0 %v4245
    %v4962 = vpop.f32.mrf.mxu0
    %v4963 = vadd.f32 0.0, %v4962
    %v4964 = vpop.f32.mrf.mxu0
    %v4965 = vadd.f32 0.0, %v4964
    %4966 = vmatmul.bf16.gmra.mxu0 %v4247
    %v4967 = vpop.f32.mrf.mxu0
    %v4968 = vadd.f32 0.0, %v4967
    %v4969 = vpop.f32.mrf.mxu0
    %v4970 = vadd.f32 0.0, %v4969
    %4971 = vmatmul.bf16.gmra.mxu0 %v4249
    %v4972 = vpop.f32.mrf.mxu0
    %v4973 = vadd.f32 0.0, %v4972
    %v4974 = vpop.f32.mrf.mxu0
    %v4975 = vadd.f32 0.0, %v4974
    %4976 = vmatmul.bf16.gmra.mxu0 %v4251
    %v4977 = vpop.f32.mrf.mxu0
    %v4978 = vadd.f32 0.0, %v4977
    %v4979 = vpop.f32.mrf.mxu0
    %v4980 = vadd.f32 0.0, %v4979
    %4981 = vmatmul.bf16.gmra.mxu0 %v4253
    %v4982 = vpop.f32.mrf.mxu0
    %v4983 = vadd.f32 0.0, %v4982
    %v4984 = vpop.f32.mrf.mxu0
    %v4985 = vadd.f32 0.0, %v4984
    %4986 = vmatmul.bf16.gmra.mxu0 %v4255
    %v4987 = vpop.f32.mrf.mxu0
    %v4988 = vadd.f32 0.0, %v4987
    %v4989 = vpop.f32.mrf.mxu0
    %v4990 = vadd.f32 0.0, %v4989
    %4991 = vmatmul.bf16.gmra.mxu0 %v4267
    %v4992 = vpop.f32.mrf.mxu0
    %v4993 = vadd.f32 0.0, %v4992
    %v4994 = vpop.f32.mrf.mxu0
    %v4995 = vadd.f32 0.0, %v4994
    %4996 = vdwg.mxu0
    %4997 = vmatpush.bf16.msra.mxu0 %v4589
    %4998 = vmatpush.bf16.msra.mxu0 %v4581
    %4999 = vmatpush.bf16.msra.mxu0 %v4573
    %5000 = vmatpush.bf16.msra.mxu0 %v4565
    %5001 = vmatpush.bf16.msra.mxu0 %v4557
    %5002 = vmatpush.bf16.msra.mxu0 %v4549
    %5003 = vmatpush.bf16.msra.mxu0 %v4541
    %5004 = vmatpush.bf16.msra.mxu0 %v4533
    %5005 = vmatmul.bf16.gmra.mxu0 %v4243
    %v5006 = vpop.f32.mrf.mxu0
    %v5007 = vadd.f32 0.0, %v5006
    %v5008 = vpop.f32.mrf.mxu0
    %v5009 = vadd.f32 0.0, %v5008
    %5010 = vmatmul.bf16.gmra.mxu0 %v4245
    %v5011 = vpop.f32.mrf.mxu0
    %v5012 = vadd.f32 0.0, %v5011
    %v5013 = vpop.f32.mrf.mxu0
    %v5014 = vadd.f32 0.0, %v5013
    %5015 = vmatmul.bf16.gmra.mxu0 %v4247
    %v5016 = vpop.f32.mrf.mxu0
    %v5017 = vadd.f32 0.0, %v5016
    %v5018 = vpop.f32.mrf.mxu0
    %v5019 = vadd.f32 0.0, %v5018
    %5020 = vmatmul.bf16.gmra.mxu0 %v4249
    %v5021 = vpop.f32.mrf.mxu0
    %v5022 = vadd.f32 0.0, %v5021
    %v5023 = vpop.f32.mrf.mxu0
    %v5024 = vadd.f32 0.0, %v5023
    %5025 = vmatmul.bf16.gmra.mxu0 %v4251
    %v5026 = vpop.f32.mrf.mxu0
    %v5027 = vadd.f32 0.0, %v5026
    %v5028 = vpop.f32.mrf.mxu0
    %v5029 = vadd.f32 0.0, %v5028
    %5030 = vmatmul.bf16.gmra.mxu0 %v4253
    %v5031 = vpop.f32.mrf.mxu0
    %v5032 = vadd.f32 0.0, %v5031
    %v5033 = vpop.f32.mrf.mxu0
    %v5034 = vadd.f32 0.0, %v5033
    %5035 = vmatmul.bf16.gmra.mxu0 %v4255
    %v5036 = vpop.f32.mrf.mxu0
    %v5037 = vadd.f32 0.0, %v5036
    %v5038 = vpop.f32.mrf.mxu0
    %v5039 = vadd.f32 0.0, %v5038
    %5040 = vmatmul.bf16.gmra.mxu0 %v4267
    %v5041 = vpop.f32.mrf.mxu0
    %v5042 = vadd.f32 0.0, %v5041
    %v5043 = vpop.f32.mrf.mxu0
    %v5044 = vadd.f32 0.0, %v5043
    %5045 = vdwg.mxu0
    %v5046 = vadd.f32 %v4112, %v4664
    %v5047 = vadd.f32 %v4113, %v4713
    %v5048 = vadd.f32 %v4114, %v4762
    %v5049 = vadd.f32 %v4115, %v4811
    %v5050 = vadd.f32 %v4116, %v4860
    %v5051 = vadd.f32 %v4117, %v4909
    %v5052 = vadd.f32 %v4118, %v4958
    %v5053 = vadd.f32 %v4119, %v5007
    %v5054 = vadd.f32 %v4120, %v4666
    %v5055 = vadd.f32 %v4121, %v4715
    %v5056 = vadd.f32 %v4122, %v4764
    %v5057 = vadd.f32 %v4123, %v4813
    %v5058 = vadd.f32 %v4124, %v4862
    %v5059 = vadd.f32 %v4125, %v4911
    %v5060 = vadd.f32 %v4126, %v4960
    %v5061 = vadd.f32 %v4127, %v5009
    %v5062 = vadd.f32 %v4128, %v4669
    %v5063 = vadd.f32 %v4129, %v4718
    %v5064 = vadd.f32 %v4130, %v4767
    %v5065 = vadd.f32 %v4131, %v4816
    %v5066 = vadd.f32 %v4132, %v4865
    %v5067 = vadd.f32 %v4133, %v4914
    %v5068 = vadd.f32 %v4134, %v4963
    %v5069 = vadd.f32 %v4135, %v5012
    %v5070 = vadd.f32 %v4136, %v4671
    %v5071 = vadd.f32 %v4137, %v4720
    %v5072 = vadd.f32 %v4138, %v4769
    %v5073 = vadd.f32 %v4139, %v4818
    %v5074 = vadd.f32 %v4140, %v4867
    %v5075 = vadd.f32 %v4141, %v4916
    %v5076 = vadd.f32 %v4142, %v4965
    %v5077 = vadd.f32 %v4143, %v5014
    %v5078 = vadd.f32 %v4144, %v4674
    %v5079 = vadd.f32 %v4145, %v4723
    %v5080 = vadd.f32 %v4146, %v4772
    %v5081 = vadd.f32 %v4147, %v4821
    %v5082 = vadd.f32 %v4148, %v4870
    %v5083 = vadd.f32 %v4149, %v4919
    %v5084 = vadd.f32 %v4150, %v4968
    %v5085 = vadd.f32 %v4151, %v5017
    %v5086 = vadd.f32 %v4152, %v4676
    %v5087 = vadd.f32 %v4153, %v4725
    %v5088 = vadd.f32 %v4154, %v4774
    %v5089 = vadd.f32 %v4155, %v4823
    %v5090 = vadd.f32 %v4156, %v4872
    %v5091 = vadd.f32 %v4157, %v4921
    %v5092 = vadd.f32 %v4158, %v4970
    %v5093 = vadd.f32 %v4159, %v5019
    %v5094 = vadd.f32 %v4160, %v4679
    %v5095 = vadd.f32 %v4161, %v4728
    %v5096 = vadd.f32 %v4162, %v4777
    %v5097 = vadd.f32 %v4163, %v4826
    %v5098 = vadd.f32 %v4164, %v4875
    %v5099 = vadd.f32 %v4165, %v4924
    %v5100 = vadd.f32 %v4166, %v4973
    %v5101 = vadd.f32 %v4167, %v5022
    %v5102 = vadd.f32 %v4168, %v4681
    %v5103 = vadd.f32 %v4169, %v4730
    %v5104 = vadd.f32 %v4170, %v4779
    %v5105 = vadd.f32 %v4171, %v4828
    %v5106 = vadd.f32 %v4172, %v4877
    %v5107 = vadd.f32 %v4173, %v4926
    %v5108 = vadd.f32 %v4174, %v4975
    %v5109 = vadd.f32 %v4175, %v5024
    %v5110 = vadd.f32 %v4176, %v4684
    %v5111 = vadd.f32 %v4177, %v4733
    %v5112 = vadd.f32 %v4178, %v4782
    %v5113 = vadd.f32 %v4179, %v4831
    %v5114 = vadd.f32 %v4180, %v4880
    %v5115 = vadd.f32 %v4181, %v4929
    %v5116 = vadd.f32 %v4182, %v4978
    %v5117 = vadd.f32 %v4183, %v5027
    %v5118 = vadd.f32 %v4184, %v4686
    %v5119 = vadd.f32 %v4185, %v4735
    %v5120 = vadd.f32 %v4186, %v4784
    %v5121 = vadd.f32 %v4187, %v4833
    %v5122 = vadd.f32 %v4188, %v4882
    %v5123 = vadd.f32 %v4189, %v4931
    %v5124 = vadd.f32 %v4190, %v4980
    %v5125 = vadd.f32 %v4191, %v5029
    %v5126 = vadd.f32 %v4192, %v4689
    %v5127 = vadd.f32 %v4193, %v4738
    %v5128 = vadd.f32 %v4194, %v4787
    %v5129 = vadd.f32 %v4195, %v4836
    %v5130 = vadd.f32 %v4196, %v4885
    %v5131 = vadd.f32 %v4197, %v4934
    %v5132 = vadd.f32 %v4198, %v4983
    %v5133 = vadd.f32 %v4199, %v5032
    %v5134 = vadd.f32 %v4200, %v4691
    %v5135 = vadd.f32 %v4201, %v4740
    %v5136 = vadd.f32 %v4202, %v4789
    %v5137 = vadd.f32 %v4203, %v4838
    %v5138 = vadd.f32 %v4204, %v4887
    %v5139 = vadd.f32 %v4205, %v4936
    %v5140 = vadd.f32 %v4206, %v4985
    %v5141 = vadd.f32 %v4207, %v5034
    %v5142 = vadd.f32 %v4208, %v4694
    %v5143 = vadd.f32 %v4209, %v4743
    %v5144 = vadd.f32 %v4210, %v4792
    %v5145 = vadd.f32 %v4211, %v4841
    %v5146 = vadd.f32 %v4212, %v4890
    %v5147 = vadd.f32 %v4213, %v4939
    %v5148 = vadd.f32 %v4214, %v4988
    %v5149 = vadd.f32 %v4215, %v5037
    %v5150 = vadd.f32 %v4216, %v4696
    %v5151 = vadd.f32 %v4217, %v4745
    %v5152 = vadd.f32 %v4218, %v4794
    %v5153 = vadd.f32 %v4219, %v4843
    %v5154 = vadd.f32 %v4220, %v4892
    %v5155 = vadd.f32 %v4221, %v4941
    %v5156 = vadd.f32 %v4222, %v4990
    %v5157 = vadd.f32 %v4223, %v5039
    %v5158 = vadd.f32 %v4224, %v4699
    %v5159 = vadd.f32 %v4225, %v4748
    %v5160 = vadd.f32 %v4226, %v4797
    %v5161 = vadd.f32 %v4227, %v4846
    %v5162 = vadd.f32 %v4228, %v4895
    %v5163 = vadd.f32 %v4229, %v4944
    %v5164 = vadd.f32 %v4230, %v4993
    %v5165 = vadd.f32 %v4231, %v5042
    %v5166 = vadd.f32 %v4232, %v4701
    %v5167 = vadd.f32 %v4233, %v4750
    %v5168 = vadd.f32 %v4234, %v4799
    %v5169 = vadd.f32 %v4235, %v4848
    %v5170 = vadd.f32 %v4236, %v4897
    %v5171 = vadd.f32 %v4237, %v4946
    %v5172 = vadd.f32 %v4238, %v4995
    %v5173 = vadd.f32 %v4239, %v5044
    %v5174 = vld [vmem:[%s4] sm:$0xff]
    %v5176 = vperm.slane %v5174, 0
    %v5177 = vperm.slane %v5174, 1
    %v5178 = vperm.slane %v5174, 2
    %v5179 = vperm.slane %v5174, 3
    %v5180 = vperm.slane %v5174, 4
    %v5181 = vperm.slane %v5174, 5
    %v5182 = vperm.slane %v5174, 6
    %v5183 = vperm.slane %v5174, 7
    %v5192 = vadd.f32 %v5046, %v5176
    %v5193 = vadd.f32 %v5047, %v5177
    %v5194 = vadd.f32 %v5048, %v5178
    %v5195 = vadd.f32 %v5049, %v5179
    %v5196 = vadd.f32 %v5050, %v5180
    %v5197 = vadd.f32 %v5051, %v5181
    %v5198 = vadd.f32 %v5052, %v5182
    %v5199 = vadd.f32 %v5053, %v5183
    %v5200 = vadd.f32 %v5054, %v5176
    %v5201 = vadd.f32 %v5055, %v5177
    %v5202 = vadd.f32 %v5056, %v5178
    %v5203 = vadd.f32 %v5057, %v5179
    %v5204 = vadd.f32 %v5058, %v5180
    %v5205 = vadd.f32 %v5059, %v5181
    %v5206 = vadd.f32 %v5060, %v5182
    %v5207 = vadd.f32 %v5061, %v5183
    %v5208 = vadd.f32 %v5062, %v5176
    %v5209 = vadd.f32 %v5063, %v5177
    %v5210 = vadd.f32 %v5064, %v5178
    %v5211 = vadd.f32 %v5065, %v5179
    %v5212 = vadd.f32 %v5066, %v5180
    %v5213 = vadd.f32 %v5067, %v5181
    %v5214 = vadd.f32 %v5068, %v5182
    %v5215 = vadd.f32 %v5069, %v5183
    %v5216 = vadd.f32 %v5070, %v5176
    %v5217 = vadd.f32 %v5071, %v5177
    %v5218 = vadd.f32 %v5072, %v5178
    %v5219 = vadd.f32 %v5073, %v5179
    %v5220 = vadd.f32 %v5074, %v5180
    %v5221 = vadd.f32 %v5075, %v5181
    %v5222 = vadd.f32 %v5076, %v5182
    %v5223 = vadd.f32 %v5077, %v5183
    %v5224 = vadd.f32 %v5078, %v5176
    %v5225 = vadd.f32 %v5079, %v5177
    %v5226 = vadd.f32 %v5080, %v5178
    %v5227 = vadd.f32 %v5081, %v5179
    %v5228 = vadd.f32 %v5082, %v5180
    %v5229 = vadd.f32 %v5083, %v5181
    %v5230 = vadd.f32 %v5084, %v5182
    %v5231 = vadd.f32 %v5085, %v5183
    %v5232 = vadd.f32 %v5086, %v5176
    %v5233 = vadd.f32 %v5087, %v5177
    %v5234 = vadd.f32 %v5088, %v5178
    %v5235 = vadd.f32 %v5089, %v5179
    %v5236 = vadd.f32 %v5090, %v5180
    %v5237 = vadd.f32 %v5091, %v5181
    %v5238 = vadd.f32 %v5092, %v5182
    %v5239 = vadd.f32 %v5093, %v5183
    %v5240 = vadd.f32 %v5094, %v5176
    %v5241 = vadd.f32 %v5095, %v5177
    %v5242 = vadd.f32 %v5096, %v5178
    %v5243 = vadd.f32 %v5097, %v5179
    %v5244 = vadd.f32 %v5098, %v5180
    %v5245 = vadd.f32 %v5099, %v5181
    %v5246 = vadd.f32 %v5100, %v5182
    %v5247 = vadd.f32 %v5101, %v5183
    %v5248 = vadd.f32 %v5102, %v5176
    %v5249 = vadd.f32 %v5103, %v5177
    %v5250 = vadd.f32 %v5104, %v5178
    %v5251 = vadd.f32 %v5105, %v5179
    %v5252 = vadd.f32 %v5106, %v5180
    %v5253 = vadd.f32 %v5107, %v5181
    %v5254 = vadd.f32 %v5108, %v5182
    %v5255 = vadd.f32 %v5109, %v5183
    %v5256 = vadd.f32 %v5110, %v5176
    %v5257 = vadd.f32 %v5111, %v5177
    %v5258 = vadd.f32 %v5112, %v5178
    %v5259 = vadd.f32 %v5113, %v5179
    %v5260 = vadd.f32 %v5114, %v5180
    %v5261 = vadd.f32 %v5115, %v5181
    %v5262 = vadd.f32 %v5116, %v5182
    %v5263 = vadd.f32 %v5117, %v5183
    %v5264 = vadd.f32 %v5118, %v5176
    %v5265 = vadd.f32 %v5119, %v5177
    %v5266 = vadd.f32 %v5120, %v5178
    %v5267 = vadd.f32 %v5121, %v5179
    %v5268 = vadd.f32 %v5122, %v5180
    %v5269 = vadd.f32 %v5123, %v5181
    %v5270 = vadd.f32 %v5124, %v5182
    %v5271 = vadd.f32 %v5125, %v5183
    %v5272 = vadd.f32 %v5126, %v5176
    %v5273 = vadd.f32 %v5127, %v5177
    %v5274 = vadd.f32 %v5128, %v5178
    %v5275 = vadd.f32 %v5129, %v5179
    %v5276 = vadd.f32 %v5130, %v5180
    %v5277 = vadd.f32 %v5131, %v5181
    %v5278 = vadd.f32 %v5132, %v5182
    %v5279 = vadd.f32 %v5133, %v5183
    %v5280 = vadd.f32 %v5134, %v5176
    %v5281 = vadd.f32 %v5135, %v5177
    %v5282 = vadd.f32 %v5136, %v5178
    %v5283 = vadd.f32 %v5137, %v5179
    %v5284 = vadd.f32 %v5138, %v5180
    %v5285 = vadd.f32 %v5139, %v5181
    %v5286 = vadd.f32 %v5140, %v5182
    %v5287 = vadd.f32 %v5141, %v5183
    %v5288 = vadd.f32 %v5142, %v5176
    %v5289 = vadd.f32 %v5143, %v5177
    %v5290 = vadd.f32 %v5144, %v5178
    %v5291 = vadd.f32 %v5145, %v5179
    %v5292 = vadd.f32 %v5146, %v5180
    %v5293 = vadd.f32 %v5147, %v5181
    %v5294 = vadd.f32 %v5148, %v5182
    %v5295 = vadd.f32 %v5149, %v5183
    %v5296 = vadd.f32 %v5150, %v5176
    %v5297 = vadd.f32 %v5151, %v5177
    %v5298 = vadd.f32 %v5152, %v5178
    %v5299 = vadd.f32 %v5153, %v5179
    %v5300 = vadd.f32 %v5154, %v5180
    %v5301 = vadd.f32 %v5155, %v5181
    %v5302 = vadd.f32 %v5156, %v5182
    %v5303 = vadd.f32 %v5157, %v5183
    %v5304 = vadd.f32 %v5158, %v5176
    %v5305 = vadd.f32 %v5159, %v5177
    %v5306 = vadd.f32 %v5160, %v5178
    %v5307 = vadd.f32 %v5161, %v5179
    %v5308 = vadd.f32 %v5162, %v5180
    %v5309 = vadd.f32 %v5163, %v5181
    %v5310 = vadd.f32 %v5164, %v5182
    %v5311 = vadd.f32 %v5165, %v5183
    %v5312 = vadd.f32 %v5166, %v5176
    %v5313 = vadd.f32 %v5167, %v5177
    %v5314 = vadd.f32 %v5168, %v5178
    %v5315 = vadd.f32 %v5169, %v5179
    %v5316 = vadd.f32 %v5170, %v5180
    %v5317 = vadd.f32 %v5171, %v5181
    %v5318 = vadd.f32 %v5172, %v5182
    %v5319 = vadd.f32 %v5173, %v5183
    %v5320 = vmax.f32 %v5192, 0.0
    %v5321 = vmax.f32 %v5193, 0.0
    %v5322 = vmax.f32 %v5194, 0.0
    %v5323 = vmax.f32 %v5195, 0.0
    %v5324 = vmax.f32 %v5196, 0.0
    %v5325 = vmax.f32 %v5197, 0.0
    %v5326 = vmax.f32 %v5198, 0.0
    %v5327 = vmax.f32 %v5199, 0.0
    %v5328 = vmax.f32 %v5200, 0.0
    %v5329 = vmax.f32 %v5201, 0.0
    %v5330 = vmax.f32 %v5202, 0.0
    %v5331 = vmax.f32 %v5203, 0.0
    %v5332 = vmax.f32 %v5204, 0.0
    %v5333 = vmax.f32 %v5205, 0.0
    %v5334 = vmax.f32 %v5206, 0.0
    %v5335 = vmax.f32 %v5207, 0.0
    %v5336 = vmax.f32 %v5208, 0.0
    %v5337 = vmax.f32 %v5209, 0.0
    %v5338 = vmax.f32 %v5210, 0.0
    %v5339 = vmax.f32 %v5211, 0.0
    %v5340 = vmax.f32 %v5212, 0.0
    %v5341 = vmax.f32 %v5213, 0.0
    %v5342 = vmax.f32 %v5214, 0.0
    %v5343 = vmax.f32 %v5215, 0.0
    %v5344 = vmax.f32 %v5216, 0.0
    %v5345 = vmax.f32 %v5217, 0.0
    %v5346 = vmax.f32 %v5218, 0.0
    %v5347 = vmax.f32 %v5219, 0.0
    %v5348 = vmax.f32 %v5220, 0.0
    %v5349 = vmax.f32 %v5221, 0.0
    %v5350 = vmax.f32 %v5222, 0.0
    %v5351 = vmax.f32 %v5223, 0.0
    %v5352 = vmax.f32 %v5224, 0.0
    %v5353 = vmax.f32 %v5225, 0.0
    %v5354 = vmax.f32 %v5226, 0.0
    %v5355 = vmax.f32 %v5227, 0.0
    %v5356 = vmax.f32 %v5228, 0.0
    %v5357 = vmax.f32 %v5229, 0.0
    %v5358 = vmax.f32 %v5230, 0.0
    %v5359 = vmax.f32 %v5231, 0.0
    %v5360 = vmax.f32 %v5232, 0.0
    %v5361 = vmax.f32 %v5233, 0.0
    %v5362 = vmax.f32 %v5234, 0.0
    %v5363 = vmax.f32 %v5235, 0.0
    %v5364 = vmax.f32 %v5236, 0.0
    %v5365 = vmax.f32 %v5237, 0.0
    %v5366 = vmax.f32 %v5238, 0.0
    %v5367 = vmax.f32 %v5239, 0.0
    %v5368 = vmax.f32 %v5240, 0.0
    %v5369 = vmax.f32 %v5241, 0.0
    %v5370 = vmax.f32 %v5242, 0.0
    %v5371 = vmax.f32 %v5243, 0.0
    %v5372 = vmax.f32 %v5244, 0.0
    %v5373 = vmax.f32 %v5245, 0.0
    %v5374 = vmax.f32 %v5246, 0.0
    %v5375 = vmax.f32 %v5247, 0.0
    %v5376 = vmax.f32 %v5248, 0.0
    %v5377 = vmax.f32 %v5249, 0.0
    %v5378 = vmax.f32 %v5250, 0.0
    %v5379 = vmax.f32 %v5251, 0.0
    %v5380 = vmax.f32 %v5252, 0.0
    %v5381 = vmax.f32 %v5253, 0.0
    %v5382 = vmax.f32 %v5254, 0.0
    %v5383 = vmax.f32 %v5255, 0.0
    %v5384 = vmax.f32 %v5256, 0.0
    %v5385 = vmax.f32 %v5257, 0.0
    %v5386 = vmax.f32 %v5258, 0.0
    %v5387 = vmax.f32 %v5259, 0.0
    %v5388 = vmax.f32 %v5260, 0.0
    %v5389 = vmax.f32 %v5261, 0.0
    %v5390 = vmax.f32 %v5262, 0.0
    %v5391 = vmax.f32 %v5263, 0.0
    %v5392 = vmax.f32 %v5264, 0.0
    %v5393 = vmax.f32 %v5265, 0.0
    %v5394 = vmax.f32 %v5266, 0.0
    %v5395 = vmax.f32 %v5267, 0.0
    %v5396 = vmax.f32 %v5268, 0.0
    %v5397 = vmax.f32 %v5269, 0.0
    %v5398 = vmax.f32 %v5270, 0.0
    %v5399 = vmax.f32 %v5271, 0.0
    %v5400 = vmax.f32 %v5272, 0.0
    %v5401 = vmax.f32 %v5273, 0.0
    %v5402 = vmax.f32 %v5274, 0.0
    %v5403 = vmax.f32 %v5275, 0.0
    %v5404 = vmax.f32 %v5276, 0.0
    %v5405 = vmax.f32 %v5277, 0.0
    %v5406 = vmax.f32 %v5278, 0.0
    %v5407 = vmax.f32 %v5279, 0.0
    %v5408 = vmax.f32 %v5280, 0.0
    %v5409 = vmax.f32 %v5281, 0.0
    %v5410 = vmax.f32 %v5282, 0.0
    %v5411 = vmax.f32 %v5283, 0.0
    %v5412 = vmax.f32 %v5284, 0.0
    %v5413 = vmax.f32 %v5285, 0.0
    %v5414 = vmax.f32 %v5286, 0.0
    %v5415 = vmax.f32 %v5287, 0.0
    %v5416 = vmax.f32 %v5288, 0.0
    %v5417 = vmax.f32 %v5289, 0.0
    %v5418 = vmax.f32 %v5290, 0.0
    %v5419 = vmax.f32 %v5291, 0.0
    %v5420 = vmax.f32 %v5292, 0.0
    %v5421 = vmax.f32 %v5293, 0.0
    %v5422 = vmax.f32 %v5294, 0.0
    %v5423 = vmax.f32 %v5295, 0.0
    %v5424 = vmax.f32 %v5296, 0.0
    %v5425 = vmax.f32 %v5297, 0.0
    %v5426 = vmax.f32 %v5298, 0.0
    %v5427 = vmax.f32 %v5299, 0.0
    %v5428 = vmax.f32 %v5300, 0.0
    %v5429 = vmax.f32 %v5301, 0.0
    %v5430 = vmax.f32 %v5302, 0.0
    %v5431 = vmax.f32 %v5303, 0.0
    %v5432 = vmax.f32 %v5304, 0.0
    %v5433 = vmax.f32 %v5305, 0.0
    %v5434 = vmax.f32 %v5306, 0.0
    %v5435 = vmax.f32 %v5307, 0.0
    %v5436 = vmax.f32 %v5308, 0.0
    %v5437 = vmax.f32 %v5309, 0.0
    %v5438 = vmax.f32 %v5310, 0.0
    %v5439 = vmax.f32 %v5311, 0.0
    %v5440 = vmax.f32 %v5312, 0.0
    %v5441 = vmax.f32 %v5313, 0.0
    %v5442 = vmax.f32 %v5314, 0.0
    %v5443 = vmax.f32 %v5315, 0.0
    %v5444 = vmax.f32 %v5316, 0.0
    %v5445 = vmax.f32 %v5317, 0.0
    %v5446 = vmax.f32 %v5318, 0.0
    %v5447 = vmax.f32 %v5319, 0.0
    %v5448 = vlaneseq
    %v5449 = vshrl.u32 %v5448, 7
    %v5450 = vadd.s32 %v5449, 8
    %v5451 = vadd.s32 %v5449, 16
    %v5452 = vadd.s32 %v5449, 24
    %v5453 = vadd.s32 %v5449, 32
    %v5454 = vadd.s32 %v5449, 40
    %v5455 = vadd.s32 %v5449, 48
    %v5456 = vadd.s32 %v5449, 56
    %v5457 = vadd.s32 %v5449, 64
    %v5458 = vadd.s32 %v5449, 72
    %v5459 = vadd.s32 %v5449, 80
    %v5460 = vadd.s32 %v5449, 88
    %v5461 = vadd.s32 %v5449, 96
    %v5462 = vadd.s32 %v5449, 104
    %v5463 = vadd.s32 %v5449, 112
    %v5464 = vadd.s32 %v5449, 120
    %vm5465 = vcmp.lt.s32.totalorder %v5449, 0
    %v5466 = vsub.s32 0, %v5449
    %v5467 = vsel %vm5465, %v5466, %v5449
    %v5468 = vshrl.u32 %v5467, 5
    %v5469 = vand.u32 %v5467, 31
    %v5470 = vsub.s32 0, %v5469
    %v5471 = vsel %vm5465, %v5470, %v5469
    %vm5472 = vcmp.lt.s32.totalorder %v5450, 0
    %v5473 = vsub.s32 0, %v5450
    %v5474 = vsel %vm5472, %v5473, %v5450
    %v5475 = vshrl.u32 %v5474, 5
    %v5476 = vand.u32 %v5474, 31
    %v5477 = vsub.s32 0, %v5476
    %v5478 = vsel %vm5472, %v5477, %v5476
    %vm5479 = vcmp.lt.s32.totalorder %v5451, 0
    %v5480 = vsub.s32 0, %v5451
    %v5481 = vsel %vm5479, %v5480, %v5451
    %v5482 = vshrl.u32 %v5481, 5
    %v5483 = vand.u32 %v5481, 31
    %v5484 = vsub.s32 0, %v5483
    %v5485 = vsel %vm5479, %v5484, %v5483
    %vm5486 = vcmp.lt.s32.totalorder %v5452, 0
    %v5487 = vsub.s32 0, %v5452
    %v5488 = vsel %vm5486, %v5487, %v5452
    %v5489 = vshrl.u32 %v5488, 5
    %v5490 = vand.u32 %v5488, 31
    %v5491 = vsub.s32 0, %v5490
    %v5492 = vsel %vm5486, %v5491, %v5490
    %vm5493 = vcmp.lt.s32.totalorder %v5453, 0
    %v5494 = vsub.s32 0, %v5453
    %v5495 = vsel %vm5493, %v5494, %v5453
    %v5496 = vshrl.u32 %v5495, 5
    %v5497 = vand.u32 %v5495, 31
    %v5498 = vsub.s32 0, %v5497
    %v5499 = vsel %vm5493, %v5498, %v5497
    %vm5500 = vcmp.lt.s32.totalorder %v5454, 0
    %v5501 = vsub.s32 0, %v5454
    %v5502 = vsel %vm5500, %v5501, %v5454
    %v5503 = vshrl.u32 %v5502, 5
    %v5504 = vand.u32 %v5502, 31
    %v5505 = vsub.s32 0, %v5504
    %v5506 = vsel %vm5500, %v5505, %v5504
    %vm5507 = vcmp.lt.s32.totalorder %v5455, 0
    %v5508 = vsub.s32 0, %v5455
    %v5509 = vsel %vm5507, %v5508, %v5455
    %v5510 = vshrl.u32 %v5509, 5
    %v5511 = vand.u32 %v5509, 31
    %v5512 = vsub.s32 0, %v5511
    %v5513 = vsel %vm5507, %v5512, %v5511
    %vm5514 = vcmp.lt.s32.totalorder %v5456, 0
    %v5515 = vsub.s32 0, %v5456
    %v5516 = vsel %vm5514, %v5515, %v5456
    %v5517 = vshrl.u32 %v5516, 5
    %v5518 = vand.u32 %v5516, 31
    %v5519 = vsub.s32 0, %v5518
    %v5520 = vsel %vm5514, %v5519, %v5518
    %vm5521 = vcmp.lt.s32.totalorder %v5457, 0
    %v5522 = vsub.s32 0, %v5457
    %v5523 = vsel %vm5521, %v5522, %v5457
    %v5524 = vshrl.u32 %v5523, 5
    %v5525 = vand.u32 %v5523, 31
    %v5526 = vsub.s32 0, %v5525
    %v5527 = vsel %vm5521, %v5526, %v5525
    %vm5528 = vcmp.lt.s32.totalorder %v5458, 0
    %v5529 = vsub.s32 0, %v5458
    %v5530 = vsel %vm5528, %v5529, %v5458
    %v5531 = vshrl.u32 %v5530, 5
    %v5532 = vand.u32 %v5530, 31
    %v5533 = vsub.s32 0, %v5532
    %v5534 = vsel %vm5528, %v5533, %v5532
    %vm5535 = vcmp.lt.s32.totalorder %v5459, 0
    %v5536 = vsub.s32 0, %v5459
    %v5537 = vsel %vm5535, %v5536, %v5459
    %v5538 = vshrl.u32 %v5537, 5
    %v5539 = vand.u32 %v5537, 31
    %v5540 = vsub.s32 0, %v5539
    %v5541 = vsel %vm5535, %v5540, %v5539
    %vm5542 = vcmp.lt.s32.totalorder %v5460, 0
    %v5543 = vsub.s32 0, %v5460
    %v5544 = vsel %vm5542, %v5543, %v5460
    %v5545 = vshrl.u32 %v5544, 5
    %v5546 = vand.u32 %v5544, 31
    %v5547 = vsub.s32 0, %v5546
    %v5548 = vsel %vm5542, %v5547, %v5546
    %vm5549 = vcmp.lt.s32.totalorder %v5461, 0
    %v5550 = vsub.s32 0, %v5461
    %v5551 = vsel %vm5549, %v5550, %v5461
    %v5552 = vshrl.u32 %v5551, 5
    %v5553 = vand.u32 %v5551, 31
    %v5554 = vsub.s32 0, %v5553
    %v5555 = vsel %vm5549, %v5554, %v5553
    %vm5556 = vcmp.lt.s32.totalorder %v5462, 0
    %v5557 = vsub.s32 0, %v5462
    %v5558 = vsel %vm5556, %v5557, %v5462
    %v5559 = vshrl.u32 %v5558, 5
    %v5560 = vand.u32 %v5558, 31
    %v5561 = vsub.s32 0, %v5560
    %v5562 = vsel %vm5556, %v5561, %v5560
    %vm5563 = vcmp.lt.s32.totalorder %v5463, 0
    %v5564 = vsub.s32 0, %v5463
    %v5565 = vsel %vm5563, %v5564, %v5463
    %v5566 = vshrl.u32 %v5565, 5
    %v5567 = vand.u32 %v5565, 31
    %v5568 = vsub.s32 0, %v5567
    %v5569 = vsel %vm5563, %v5568, %v5567
    %vm5570 = vcmp.lt.s32.totalorder %v5464, 0
    %v5571 = vsub.s32 0, %v5464
    %v5572 = vsel %vm5570, %v5571, %v5464
    %v5573 = vshrl.u32 %v5572, 5
    %v5574 = vand.u32 %v5572, 31
    %v5575 = vsub.s32 0, %v5574
    %v5576 = vsel %vm5570, %v5575, %v5574
    %vm5577 = vcmp.ne.s32.totalorder %v5471, 0
    %vm5578 = vcmp.ne.s32.totalorder %v5478, 0
    %vm5579 = vcmp.ne.s32.totalorder %v5485, 0
    %vm5580 = vcmp.ne.s32.totalorder %v5492, 0
    %vm5581 = vcmp.ne.s32.totalorder %v5499, 0
    %vm5582 = vcmp.ne.s32.totalorder %v5506, 0
    %vm5583 = vcmp.ne.s32.totalorder %v5513, 0
    %vm5584 = vcmp.ne.s32.totalorder %v5520, 0
    %vm5585 = vcmp.ne.s32.totalorder %v5527, 0
    %vm5586 = vcmp.ne.s32.totalorder %v5534, 0
    %vm5587 = vcmp.ne.s32.totalorder %v5541, 0
    %vm5588 = vcmp.ne.s32.totalorder %v5548, 0
    %vm5589 = vcmp.ne.s32.totalorder %v5555, 0
    %vm5590 = vcmp.ne.s32.totalorder %v5562, 0
    %vm5591 = vcmp.ne.s32.totalorder %v5569, 0
    %vm5592 = vcmp.ne.s32.totalorder %v5576, 0
    %vm5593 = vcmp.lt.s32.totalorder %v5471, 0
    %vm5594 = vcmp.lt.s32.totalorder %v5478, 0
    %vm5595 = vcmp.lt.s32.totalorder %v5485, 0
    %vm5596 = vcmp.lt.s32.totalorder %v5492, 0
    %vm5597 = vcmp.lt.s32.totalorder %v5499, 0
    %vm5598 = vcmp.lt.s32.totalorder %v5506, 0
    %vm5599 = vcmp.lt.s32.totalorder %v5513, 0
    %vm5600 = vcmp.lt.s32.totalorder %v5520, 0
    %vm5601 = vcmp.lt.s32.totalorder %v5527, 0
    %vm5602 = vcmp.lt.s32.totalorder %v5534, 0
    %vm5603 = vcmp.lt.s32.totalorder %v5541, 0
    %vm5604 = vcmp.lt.s32.totalorder %v5548, 0
    %vm5605 = vcmp.lt.s32.totalorder %v5555, 0
    %vm5606 = vcmp.lt.s32.totalorder %v5562, 0
    %vm5607 = vcmp.lt.s32.totalorder %v5569, 0
    %vm5608 = vcmp.lt.s32.totalorder %v5576, 0
    %vm5609 = vmand %vm5593, %vm5577
    %vm5610 = vmand %vm5594, %vm5578
    %vm5611 = vmand %vm5595, %vm5579
    %vm5612 = vmand %vm5596, %vm5580
    %vm5613 = vmand %vm5597, %vm5581
    %vm5614 = vmand %vm5598, %vm5582
    %vm5615 = vmand %vm5599, %vm5583
    %vm5616 = vmand %vm5600, %vm5584
    %vm5617 = vmand %vm5601, %vm5585
    %vm5618 = vmand %vm5602, %vm5586
    %vm5619 = vmand %vm5603, %vm5587
    %vm5620 = vmand %vm5604, %vm5588
    %vm5621 = vmand %vm5605, %vm5589
    %vm5622 = vmand %vm5606, %vm5590
    %vm5623 = vmand %vm5607, %vm5591
    %vm5624 = vmand %vm5608, %vm5592
    %v5625 = vadd.s32 %v5471, 32
    %v5626 = vadd.s32 %v5478, 32
    %v5627 = vadd.s32 %v5485, 32
    %v5628 = vadd.s32 %v5492, 32
    %v5629 = vadd.s32 %v5499, 32
    %v5630 = vadd.s32 %v5506, 32
    %v5631 = vadd.s32 %v5513, 32
    %v5632 = vadd.s32 %v5520, 32
    %v5633 = vadd.s32 %v5527, 32
    %v5634 = vadd.s32 %v5534, 32
    %v5635 = vadd.s32 %v5541, 32
    %v5636 = vadd.s32 %v5548, 32
    %v5637 = vadd.s32 %v5555, 32
    %v5638 = vadd.s32 %v5562, 32
    %v5639 = vadd.s32 %v5569, 32
    %v5640 = vadd.s32 %v5576, 32
    %v5641 = vsel %vm5609, %v5625, %v5471
    %v5642 = vsel %vm5610, %v5626, %v5478
    %v5643 = vsel %vm5611, %v5627, %v5485
    %v5644 = vsel %vm5612, %v5628, %v5492
    %v5645 = vsel %vm5613, %v5629, %v5499
    %v5646 = vsel %vm5614, %v5630, %v5506
    %v5647 = vsel %vm5615, %v5631, %v5513
    %v5648 = vsel %vm5616, %v5632, %v5520
    %v5649 = vsel %vm5617, %v5633, %v5527
    %v5650 = vsel %vm5618, %v5634, %v5534
    %v5651 = vsel %vm5619, %v5635, %v5541
    %v5652 = vsel %vm5620, %v5636, %v5548
    %v5653 = vsel %vm5621, %v5637, %v5555
    %v5654 = vsel %vm5622, %v5638, %v5562
    %v5655 = vsel %vm5623, %v5639, %v5569
    %v5656 = vsel %vm5624, %v5640, %v5576
    %vm5657 = vcmp.lt.s32.totalorder %v5641, 20
    %vm5658 = vcmp.lt.s32.totalorder %v5642, 20
    %vm5659 = vcmp.lt.s32.totalorder %v5643, 20
    %vm5660 = vcmp.lt.s32.totalorder %v5644, 20
    %vm5661 = vcmp.lt.s32.totalorder %v5645, 20
    %vm5662 = vcmp.lt.s32.totalorder %v5646, 20
    %vm5663 = vcmp.lt.s32.totalorder %v5647, 20
    %vm5664 = vcmp.lt.s32.totalorder %v5648, 20
    %vm5665 = vcmp.lt.s32.totalorder %v5649, 20
    %vm5666 = vcmp.lt.s32.totalorder %v5650, 20
    %vm5667 = vcmp.lt.s32.totalorder %v5651, 20
    %vm5668 = vcmp.lt.s32.totalorder %v5652, 20
    %vm5669 = vcmp.lt.s32.totalorder %v5653, 20
    %vm5670 = vcmp.lt.s32.totalorder %v5654, 20
    %vm5671 = vcmp.lt.s32.totalorder %v5655, 20
    %vm5672 = vcmp.lt.s32.totalorder %v5656, 20
    %vm5673 = vcmp.lt.s32.totalorder %v5641, 0
    %v5674 = vsub.s32 0, %v5641
    %v5675 = vsel %vm5673, %v5674, %v5641
    %v5676 = vshrl.u32 %v5675, 1
    %v5677 = vand.u32 %v5675, 1
    %v5678 = vsub.s32 0, %v5677
    %v5679 = vsel %vm5673, %v5678, %v5677
    %vm5680 = vcmp.lt.s32.totalorder %v5642, 0
    %v5681 = vsub.s32 0, %v5642
    %v5682 = vsel %vm5680, %v5681, %v5642
    %v5683 = vshrl.u32 %v5682, 1
    %v5684 = vand.u32 %v5682, 1
    %v5685 = vsub.s32 0, %v5684
    %v5686 = vsel %vm5680, %v5685, %v5684
    %vm5687 = vcmp.lt.s32.totalorder %v5643, 0
    %v5688 = vsub.s32 0, %v5643
    %v5689 = vsel %vm5687, %v5688, %v5643
    %v5690 = vshrl.u32 %v5689, 1
    %v5691 = vand.u32 %v5689, 1
    %v5692 = vsub.s32 0, %v5691
    %v5693 = vsel %vm5687, %v5692, %v5691
    %vm5694 = vcmp.lt.s32.totalorder %v5644, 0
    %v5695 = vsub.s32 0, %v5644
    %v5696 = vsel %vm5694, %v5695, %v5644
    %v5697 = vshrl.u32 %v5696, 1
    %v5698 = vand.u32 %v5696, 1
    %v5699 = vsub.s32 0, %v5698
    %v5700 = vsel %vm5694, %v5699, %v5698
    %vm5701 = vcmp.lt.s32.totalorder %v5645, 0
    %v5702 = vsub.s32 0, %v5645
    %v5703 = vsel %vm5701, %v5702, %v5645
    %v5704 = vshrl.u32 %v5703, 1
    %v5705 = vand.u32 %v5703, 1
    %v5706 = vsub.s32 0, %v5705
    %v5707 = vsel %vm5701, %v5706, %v5705
    %vm5708 = vcmp.lt.s32.totalorder %v5646, 0
    %v5709 = vsub.s32 0, %v5646
    %v5710 = vsel %vm5708, %v5709, %v5646
    %v5711 = vshrl.u32 %v5710, 1
    %v5712 = vand.u32 %v5710, 1
    %v5713 = vsub.s32 0, %v5712
    %v5714 = vsel %vm5708, %v5713, %v5712
    %vm5715 = vcmp.lt.s32.totalorder %v5647, 0
    %v5716 = vsub.s32 0, %v5647
    %v5717 = vsel %vm5715, %v5716, %v5647
    %v5718 = vshrl.u32 %v5717, 1
    %v5719 = vand.u32 %v5717, 1
    %v5720 = vsub.s32 0, %v5719
    %v5721 = vsel %vm5715, %v5720, %v5719
    %vm5722 = vcmp.lt.s32.totalorder %v5648, 0
    %v5723 = vsub.s32 0, %v5648
    %v5724 = vsel %vm5722, %v5723, %v5648
    %v5725 = vshrl.u32 %v5724, 1
    %v5726 = vand.u32 %v5724, 1
    %v5727 = vsub.s32 0, %v5726
    %v5728 = vsel %vm5722, %v5727, %v5726
    %vm5729 = vcmp.lt.s32.totalorder %v5649, 0
    %v5730 = vsub.s32 0, %v5649
    %v5731 = vsel %vm5729, %v5730, %v5649
    %v5732 = vshrl.u32 %v5731, 1
    %v5733 = vand.u32 %v5731, 1
    %v5734 = vsub.s32 0, %v5733
    %v5735 = vsel %vm5729, %v5734, %v5733
    %vm5736 = vcmp.lt.s32.totalorder %v5650, 0
    %v5737 = vsub.s32 0, %v5650
    %v5738 = vsel %vm5736, %v5737, %v5650
    %v5739 = vshrl.u32 %v5738, 1
    %v5740 = vand.u32 %v5738, 1
    %v5741 = vsub.s32 0, %v5740
    %v5742 = vsel %vm5736, %v5741, %v5740
    %vm5743 = vcmp.lt.s32.totalorder %v5651, 0
    %v5744 = vsub.s32 0, %v5651
    %v5745 = vsel %vm5743, %v5744, %v5651
    %v5746 = vshrl.u32 %v5745, 1
    %v5747 = vand.u32 %v5745, 1
    %v5748 = vsub.s32 0, %v5747
    %v5749 = vsel %vm5743, %v5748, %v5747
    %vm5750 = vcmp.lt.s32.totalorder %v5652, 0
    %v5751 = vsub.s32 0, %v5652
    %v5752 = vsel %vm5750, %v5751, %v5652
    %v5753 = vshrl.u32 %v5752, 1
    %v5754 = vand.u32 %v5752, 1
    %v5755 = vsub.s32 0, %v5754
    %v5756 = vsel %vm5750, %v5755, %v5754
    %vm5757 = vcmp.lt.s32.totalorder %v5653, 0
    %v5758 = vsub.s32 0, %v5653
    %v5759 = vsel %vm5757, %v5758, %v5653
    %v5760 = vshrl.u32 %v5759, 1
    %v5761 = vand.u32 %v5759, 1
    %v5762 = vsub.s32 0, %v5761
    %v5763 = vsel %vm5757, %v5762, %v5761
    %vm5764 = vcmp.lt.s32.totalorder %v5654, 0
    %v5765 = vsub.s32 0, %v5654
    %v5766 = vsel %vm5764, %v5765, %v5654
    %v5767 = vshrl.u32 %v5766, 1
    %v5768 = vand.u32 %v5766, 1
    %v5769 = vsub.s32 0, %v5768
    %v5770 = vsel %vm5764, %v5769, %v5768
    %vm5771 = vcmp.lt.s32.totalorder %v5655, 0
    %v5772 = vsub.s32 0, %v5655
    %v5773 = vsel %vm5771, %v5772, %v5655
    %v5774 = vshrl.u32 %v5773, 1
    %v5775 = vand.u32 %v5773, 1
    %v5776 = vsub.s32 0, %v5775
    %v5777 = vsel %vm5771, %v5776, %v5775
    %vm5778 = vcmp.lt.s32.totalorder %v5656, 0
    %v5779 = vsub.s32 0, %v5656
    %v5780 = vsel %vm5778, %v5779, %v5656
    %v5781 = vshrl.u32 %v5780, 1
    %v5782 = vand.u32 %v5780, 1
    %v5783 = vsub.s32 0, %v5782
    %v5784 = vsel %vm5778, %v5783, %v5782
    %vm5785 = vcmp.ne.s32.totalorder %v5679, 0
    %vm5786 = vcmp.ne.s32.totalorder %v5686, 0
    %vm5787 = vcmp.ne.s32.totalorder %v5693, 0
    %vm5788 = vcmp.ne.s32.totalorder %v5700, 0
    %vm5789 = vcmp.ne.s32.totalorder %v5707, 0
    %vm5790 = vcmp.ne.s32.totalorder %v5714, 0
    %vm5791 = vcmp.ne.s32.totalorder %v5721, 0
    %vm5792 = vcmp.ne.s32.totalorder %v5728, 0
    %vm5793 = vcmp.ne.s32.totalorder %v5735, 0
    %vm5794 = vcmp.ne.s32.totalorder %v5742, 0
    %vm5795 = vcmp.ne.s32.totalorder %v5749, 0
    %vm5796 = vcmp.ne.s32.totalorder %v5756, 0
    %vm5797 = vcmp.ne.s32.totalorder %v5763, 0
    %vm5798 = vcmp.ne.s32.totalorder %v5770, 0
    %vm5799 = vcmp.ne.s32.totalorder %v5777, 0
    %vm5800 = vcmp.ne.s32.totalorder %v5784, 0
    %vm5801 = vcmp.lt.s32.totalorder %v5679, 0
    %vm5802 = vcmp.lt.s32.totalorder %v5686, 0
    %vm5803 = vcmp.lt.s32.totalorder %v5693, 0
    %vm5804 = vcmp.lt.s32.totalorder %v5700, 0
    %vm5805 = vcmp.lt.s32.totalorder %v5707, 0
    %vm5806 = vcmp.lt.s32.totalorder %v5714, 0
    %vm5807 = vcmp.lt.s32.totalorder %v5721, 0
    %vm5808 = vcmp.lt.s32.totalorder %v5728, 0
    %vm5809 = vcmp.lt.s32.totalorder %v5735, 0
    %vm5810 = vcmp.lt.s32.totalorder %v5742, 0
    %vm5811 = vcmp.lt.s32.totalorder %v5749, 0
    %vm5812 = vcmp.lt.s32.totalorder %v5756, 0
    %vm5813 = vcmp.lt.s32.totalorder %v5763, 0
    %vm5814 = vcmp.lt.s32.totalorder %v5770, 0
    %vm5815 = vcmp.lt.s32.totalorder %v5777, 0
    %vm5816 = vcmp.lt.s32.totalorder %v5784, 0
    %vm5817 = vmand %vm5801, %vm5785
    %vm5818 = vmand %vm5802, %vm5786
    %vm5819 = vmand %vm5803, %vm5787
    %vm5820 = vmand %vm5804, %vm5788
    %vm5821 = vmand %vm5805, %vm5789
    %vm5822 = vmand %vm5806, %vm5790
    %vm5823 = vmand %vm5807, %vm5791
    %vm5824 = vmand %vm5808, %vm5792
    %vm5825 = vmand %vm5809, %vm5793
    %vm5826 = vmand %vm5810, %vm5794
    %vm5827 = vmand %vm5811, %vm5795
    %vm5828 = vmand %vm5812, %vm5796
    %vm5829 = vmand %vm5813, %vm5797
    %vm5830 = vmand %vm5814, %vm5798
    %vm5831 = vmand %vm5815, %vm5799
    %vm5832 = vmand %vm5816, %vm5800
    %v5833 = vadd.s32 %v5679, 2
    %v5834 = vadd.s32 %v5686, 2
    %v5835 = vadd.s32 %v5693, 2
    %v5836 = vadd.s32 %v5700, 2
    %v5837 = vadd.s32 %v5707, 2
    %v5838 = vadd.s32 %v5714, 2
    %v5839 = vadd.s32 %v5721, 2
    %v5840 = vadd.s32 %v5728, 2
    %v5841 = vadd.s32 %v5735, 2
    %v5842 = vadd.s32 %v5742, 2
    %v5843 = vadd.s32 %v5749, 2
    %v5844 = vadd.s32 %v5756, 2
    %v5845 = vadd.s32 %v5763, 2
    %v5846 = vadd.s32 %v5770, 2
    %v5847 = vadd.s32 %v5777, 2
    %v5848 = vadd.s32 %v5784, 2
    %v5849 = vsel %vm5817, %v5833, %v5679
    %v5850 = vsel %vm5818, %v5834, %v5686
    %v5851 = vsel %vm5819, %v5835, %v5693
    %v5852 = vsel %vm5820, %v5836, %v5700
    %v5853 = vsel %vm5821, %v5837, %v5707
    %v5854 = vsel %vm5822, %v5838, %v5714
    %v5855 = vsel %vm5823, %v5839, %v5721
    %v5856 = vsel %vm5824, %v5840, %v5728
    %v5857 = vsel %vm5825, %v5841, %v5735
    %v5858 = vsel %vm5826, %v5842, %v5742
    %v5859 = vsel %vm5827, %v5843, %v5749
    %v5860 = vsel %vm5828, %v5844, %v5756
    %v5861 = vsel %vm5829, %v5845, %v5763
    %v5862 = vsel %vm5830, %v5846, %v5770
    %v5863 = vsel %vm5831, %v5847, %v5777
    %v5864 = vsel %vm5832, %v5848, %v5784
    %vm5865 = vcmp.eq.s32.totalorder %v5849, 0
    %vm5866 = vcmp.eq.s32.totalorder %v5850, 0
    %vm5867 = vcmp.eq.s32.totalorder %v5851, 0
    %vm5868 = vcmp.eq.s32.totalorder %v5852, 0
    %vm5869 = vcmp.eq.s32.totalorder %v5853, 0
    %vm5870 = vcmp.eq.s32.totalorder %v5854, 0
    %vm5871 = vcmp.eq.s32.totalorder %v5855, 0
    %vm5872 = vcmp.eq.s32.totalorder %v5856, 0
    %vm5873 = vcmp.eq.s32.totalorder %v5857, 0
    %vm5874 = vcmp.eq.s32.totalorder %v5858, 0
    %vm5875 = vcmp.eq.s32.totalorder %v5859, 0
    %vm5876 = vcmp.eq.s32.totalorder %v5860, 0
    %vm5877 = vcmp.eq.s32.totalorder %v5861, 0
    %vm5878 = vcmp.eq.s32.totalorder %v5862, 0
    %vm5879 = vcmp.eq.s32.totalorder %v5863, 0
    %vm5880 = vcmp.eq.s32.totalorder %v5864, 0
    %vm5881 = vmand %vm5657, %vm5865
    %vm5882 = vmand %vm5658, %vm5866
    %vm5883 = vmand %vm5659, %vm5867
    %vm5884 = vmand %vm5660, %vm5868
    %vm5885 = vmand %vm5661, %vm5869
    %vm5886 = vmand %vm5662, %vm5870
    %vm5887 = vmand %vm5663, %vm5871
    %vm5888 = vmand %vm5664, %vm5872
    %vm5889 = vmand %vm5665, %vm5873
    %vm5890 = vmand %vm5666, %vm5874
    %vm5891 = vmand %vm5667, %vm5875
    %vm5892 = vmand %vm5668, %vm5876
    %vm5893 = vmand %vm5669, %vm5877
    %vm5894 = vmand %vm5670, %vm5878
    %vm5895 = vmand %vm5671, %vm5879
    %vm5896 = vmand %vm5672, %vm5880
    %v5897 = vsel %vm5881, 1, 0
    %v5898 = vsel %vm5882, 1, 0
    %v5899 = vsel %vm5883, 1, 0
    %v5900 = vsel %vm5884, 1, 0
    %v5901 = vsel %vm5885, 1, 0
    %v5902 = vsel %vm5886, 1, 0
    %v5903 = vsel %vm5887, 1, 0
    %v5904 = vsel %vm5888, 1, 0
    %v5905 = vsel %vm5889, 1, 0
    %v5906 = vsel %vm5890, 1, 0
    %v5907 = vsel %vm5891, 1, 0
    %v5908 = vsel %vm5892, 1, 0
    %v5909 = vsel %vm5893, 1, 0
    %v5910 = vsel %vm5894, 1, 0
    %v5911 = vsel %vm5895, 1, 0
    %v5912 = vsel %vm5896, 1, 0
    %vm5913 = vcmp.eq.s32.totalorder %v5897, 1
    %vm5914 = vcmp.eq.s32.totalorder %v5898, 1
    %vm5915 = vcmp.eq.s32.totalorder %v5899, 1
    %vm5916 = vcmp.eq.s32.totalorder %v5900, 1
    %vm5917 = vcmp.eq.s32.totalorder %v5901, 1
    %vm5918 = vcmp.eq.s32.totalorder %v5902, 1
    %vm5919 = vcmp.eq.s32.totalorder %v5903, 1
    %vm5920 = vcmp.eq.s32.totalorder %v5904, 1
    %vm5921 = vcmp.eq.s32.totalorder %v5905, 1
    %vm5922 = vcmp.eq.s32.totalorder %v5906, 1
    %vm5923 = vcmp.eq.s32.totalorder %v5907, 1
    %vm5924 = vcmp.eq.s32.totalorder %v5908, 1
    %vm5925 = vcmp.eq.s32.totalorder %v5909, 1
    %vm5926 = vcmp.eq.s32.totalorder %v5910, 1
    %vm5927 = vcmp.eq.s32.totalorder %v5911, 1
    %vm5928 = vcmp.eq.s32.totalorder %v5912, 1
    %v5929 = vsel %vm5913, %v5320, 0.0
    %v5930 = vsel %vm5913, %v5321, 0.0
    %v5931 = vsel %vm5913, %v5322, 0.0
    %v5932 = vsel %vm5913, %v5323, 0.0
    %v5933 = vsel %vm5913, %v5324, 0.0
    %v5934 = vsel %vm5913, %v5325, 0.0
    %v5935 = vsel %vm5913, %v5326, 0.0
    %v5936 = vsel %vm5913, %v5327, 0.0
    %v5937 = vsel %vm5914, %v5328, 0.0
    %v5938 = vsel %vm5914, %v5329, 0.0
    %v5939 = vsel %vm5914, %v5330, 0.0
    %v5940 = vsel %vm5914, %v5331, 0.0
    %v5941 = vsel %vm5914, %v5332, 0.0
    %v5942 = vsel %vm5914, %v5333, 0.0
    %v5943 = vsel %vm5914, %v5334, 0.0
    %v5944 = vsel %vm5914, %v5335, 0.0
    %v5945 = vsel %vm5915, %v5336, 0.0
    %v5946 = vsel %vm5915, %v5337, 0.0
    %v5947 = vsel %vm5915, %v5338, 0.0
    %v5948 = vsel %vm5915, %v5339, 0.0
    %v5949 = vsel %vm5915, %v5340, 0.0
    %v5950 = vsel %vm5915, %v5341, 0.0
    %v5951 = vsel %vm5915, %v5342, 0.0
    %v5952 = vsel %vm5915, %v5343, 0.0
    %v5953 = vsel %vm5916, %v5344, 0.0
    %v5954 = vsel %vm5916, %v5345, 0.0
    %v5955 = vsel %vm5916, %v5346, 0.0
    %v5956 = vsel %vm5916, %v5347, 0.0
    %v5957 = vsel %vm5916, %v5348, 0.0
    %v5958 = vsel %vm5916, %v5349, 0.0
    %v5959 = vsel %vm5916, %v5350, 0.0
    %v5960 = vsel %vm5916, %v5351, 0.0
    %v5961 = vsel %vm5917, %v5352, 0.0
    %v5962 = vsel %vm5917, %v5353, 0.0
    %v5963 = vsel %vm5917, %v5354, 0.0
    %v5964 = vsel %vm5917, %v5355, 0.0
    %v5965 = vsel %vm5917, %v5356, 0.0
    %v5966 = vsel %vm5917, %v5357, 0.0
    %v5967 = vsel %vm5917, %v5358, 0.0
    %v5968 = vsel %vm5917, %v5359, 0.0
    %v5969 = vsel %vm5918, %v5360, 0.0
    %v5970 = vsel %vm5918, %v5361, 0.0
    %v5971 = vsel %vm5918, %v5362, 0.0
    %v5972 = vsel %vm5918, %v5363, 0.0
    %v5973 = vsel %vm5918, %v5364, 0.0
    %v5974 = vsel %vm5918, %v5365, 0.0
    %v5975 = vsel %vm5918, %v5366, 0.0
    %v5976 = vsel %vm5918, %v5367, 0.0
    %v5977 = vsel %vm5919, %v5368, 0.0
    %v5978 = vsel %vm5919, %v5369, 0.0
    %v5979 = vsel %vm5919, %v5370, 0.0
    %v5980 = vsel %vm5919, %v5371, 0.0
    %v5981 = vsel %vm5919, %v5372, 0.0
    %v5982 = vsel %vm5919, %v5373, 0.0
    %v5983 = vsel %vm5919, %v5374, 0.0
    %v5984 = vsel %vm5919, %v5375, 0.0
    %v5985 = vsel %vm5920, %v5376, 0.0
    %v5986 = vsel %vm5920, %v5377, 0.0
    %v5987 = vsel %vm5920, %v5378, 0.0
    %v5988 = vsel %vm5920, %v5379, 0.0
    %v5989 = vsel %vm5920, %v5380, 0.0
    %v5990 = vsel %vm5920, %v5381, 0.0
    %v5991 = vsel %vm5920, %v5382, 0.0
    %v5992 = vsel %vm5920, %v5383, 0.0
    %v5993 = vsel %vm5921, %v5384, 0.0
    %v5994 = vsel %vm5921, %v5385, 0.0
    %v5995 = vsel %vm5921, %v5386, 0.0
    %v5996 = vsel %vm5921, %v5387, 0.0
    %v5997 = vsel %vm5921, %v5388, 0.0
    %v5998 = vsel %vm5921, %v5389, 0.0
    %v5999 = vsel %vm5921, %v5390, 0.0
    %v6000 = vsel %vm5921, %v5391, 0.0
    %v6001 = vsel %vm5922, %v5392, 0.0
    %v6002 = vsel %vm5922, %v5393, 0.0
    %v6003 = vsel %vm5922, %v5394, 0.0
    %v6004 = vsel %vm5922, %v5395, 0.0
    %v6005 = vsel %vm5922, %v5396, 0.0
    %v6006 = vsel %vm5922, %v5397, 0.0
    %v6007 = vsel %vm5922, %v5398, 0.0
    %v6008 = vsel %vm5922, %v5399, 0.0
    %v6009 = vsel %vm5923, %v5400, 0.0
    %v6010 = vsel %vm5923, %v5401, 0.0
    %v6011 = vsel %vm5923, %v5402, 0.0
    %v6012 = vsel %vm5923, %v5403, 0.0
    %v6013 = vsel %vm5923, %v5404, 0.0
    %v6014 = vsel %vm5923, %v5405, 0.0
    %v6015 = vsel %vm5923, %v5406, 0.0
    %v6016 = vsel %vm5923, %v5407, 0.0
    %v6017 = vsel %vm5924, %v5408, 0.0
    %v6018 = vsel %vm5924, %v5409, 0.0
    %v6019 = vsel %vm5924, %v5410, 0.0
    %v6020 = vsel %vm5924, %v5411, 0.0
    %v6021 = vsel %vm5924, %v5412, 0.0
    %v6022 = vsel %vm5924, %v5413, 0.0
    %v6023 = vsel %vm5924, %v5414, 0.0
    %v6024 = vsel %vm5924, %v5415, 0.0
    %v6025 = vsel %vm5925, %v5416, 0.0
    %v6026 = vsel %vm5925, %v5417, 0.0
    %v6027 = vsel %vm5925, %v5418, 0.0
    %v6028 = vsel %vm5925, %v5419, 0.0
    %v6029 = vsel %vm5925, %v5420, 0.0
    %v6030 = vsel %vm5925, %v5421, 0.0
    %v6031 = vsel %vm5925, %v5422, 0.0
    %v6032 = vsel %vm5925, %v5423, 0.0
    %v6033 = vsel %vm5926, %v5424, 0.0
    %v6034 = vsel %vm5926, %v5425, 0.0
    %v6035 = vsel %vm5926, %v5426, 0.0
    %v6036 = vsel %vm5926, %v5427, 0.0
    %v6037 = vsel %vm5926, %v5428, 0.0
    %v6038 = vsel %vm5926, %v5429, 0.0
    %v6039 = vsel %vm5926, %v5430, 0.0
    %v6040 = vsel %vm5926, %v5431, 0.0
    %v6041 = vsel %vm5927, %v5432, 0.0
    %v6042 = vsel %vm5927, %v5433, 0.0
    %v6043 = vsel %vm5927, %v5434, 0.0
    %v6044 = vsel %vm5927, %v5435, 0.0
    %v6045 = vsel %vm5927, %v5436, 0.0
    %v6046 = vsel %vm5927, %v5437, 0.0
    %v6047 = vsel %vm5927, %v5438, 0.0
    %v6048 = vsel %vm5927, %v5439, 0.0
    %v6049 = vsel %vm5928, %v5440, 0.0
    %v6050 = vsel %vm5928, %v5441, 0.0
    %v6051 = vsel %vm5928, %v5442, 0.0
    %v6052 = vsel %vm5928, %v5443, 0.0
    %v6053 = vsel %vm5928, %v5444, 0.0
    %v6054 = vsel %vm5928, %v5445, 0.0
    %v6055 = vsel %vm5928, %v5446, 0.0
    %v6056 = vsel %vm5928, %v5447, 0.0
    %v6057 = vmax.f32 %v5929, %v5937
    %v6058 = vmax.f32 %v6057, %v5945
    %v6059 = vmax.f32 %v6058, %v5953
    %v6060 = vrot.slane %v6059, 4
    %v6061 = vmax.f32 %v6059, %v6060
    %v6062 = vrot.slane %v6061, 2
    %v6063 = vmax.f32 %v6061, %v6062
    %v6064 = vrot.slane %v6063, 1
    %v6065 = vmax.f32 %v6063, %v6064
    %v6066 = vmax.f32 %v5930, %v5938
    %v6067 = vmax.f32 %v6066, %v5946
    %v6068 = vmax.f32 %v6067, %v5954
    %v6069 = vrot.slane %v6068, 4
    %v6070 = vmax.f32 %v6068, %v6069
    %v6071 = vrot.slane %v6070, 2
    %v6072 = vmax.f32 %v6070, %v6071
    %v6073 = vrot.slane %v6072, 1
    %v6074 = vmax.f32 %v6072, %v6073
    %v6075 = vmax.f32 %v5931, %v5939
    %v6076 = vmax.f32 %v6075, %v5947
    %v6077 = vmax.f32 %v6076, %v5955
    %v6078 = vrot.slane %v6077, 4
    %v6079 = vmax.f32 %v6077, %v6078
    %v6080 = vrot.slane %v6079, 2
    %v6081 = vmax.f32 %v6079, %v6080
    %v6082 = vrot.slane %v6081, 1
    %v6083 = vmax.f32 %v6081, %v6082
    %v6084 = vmax.f32 %v5932, %v5940
    %v6085 = vmax.f32 %v6084, %v5948
    %v6086 = vmax.f32 %v6085, %v5956
    %v6087 = vrot.slane %v6086, 4
    %v6088 = vmax.f32 %v6086, %v6087
    %v6089 = vrot.slane %v6088, 2
    %v6090 = vmax.f32 %v6088, %v6089
    %v6091 = vrot.slane %v6090, 1
    %v6092 = vmax.f32 %v6090, %v6091
    %v6093 = vmax.f32 %v5933, %v5941
    %v6094 = vmax.f32 %v6093, %v5949
    %v6095 = vmax.f32 %v6094, %v5957
    %v6096 = vrot.slane %v6095, 4
    %v6097 = vmax.f32 %v6095, %v6096
    %v6098 = vrot.slane %v6097, 2
    %v6099 = vmax.f32 %v6097, %v6098
    %v6100 = vrot.slane %v6099, 1
    %v6101 = vmax.f32 %v6099, %v6100
    %v6102 = vmax.f32 %v5934, %v5942
    %v6103 = vmax.f32 %v6102, %v5950
    %v6104 = vmax.f32 %v6103, %v5958
    %v6105 = vrot.slane %v6104, 4
    %v6106 = vmax.f32 %v6104, %v6105
    %v6107 = vrot.slane %v6106, 2
    %v6108 = vmax.f32 %v6106, %v6107
    %v6109 = vrot.slane %v6108, 1
    %v6110 = vmax.f32 %v6108, %v6109
    %v6111 = vmax.f32 %v5935, %v5943
    %v6112 = vmax.f32 %v6111, %v5951
    %v6113 = vmax.f32 %v6112, %v5959
    %v6114 = vrot.slane %v6113, 4
    %v6115 = vmax.f32 %v6113, %v6114
    %v6116 = vrot.slane %v6115, 2
    %v6117 = vmax.f32 %v6115, %v6116
    %v6118 = vrot.slane %v6117, 1
    %v6119 = vmax.f32 %v6117, %v6118
    %v6120 = vmax.f32 %v5936, %v5944
    %v6121 = vmax.f32 %v6120, %v5952
    %v6122 = vmax.f32 %v6121, %v5960
    %v6123 = vrot.slane %v6122, 4
    %v6124 = vmax.f32 %v6122, %v6123
    %v6125 = vrot.slane %v6124, 2
    %v6126 = vmax.f32 %v6124, %v6125
    %v6127 = vrot.slane %v6126, 1
    %v6128 = vmax.f32 %v6126, %v6127
    %v6129 = vmax.f32 %v5961, %v5969
    %v6130 = vmax.f32 %v6129, %v5977
    %v6131 = vmax.f32 %v6130, %v5985
    %v6132 = vrot.slane %v6131, 4
    %v6133 = vmax.f32 %v6131, %v6132
    %v6134 = vrot.slane %v6133, 2
    %v6135 = vmax.f32 %v6133, %v6134
    %v6136 = vrot.slane %v6135, 1
    %v6137 = vmax.f32 %v6135, %v6136
    %v6138 = vmax.f32 %v5962, %v5970
    %v6139 = vmax.f32 %v6138, %v5978
    %v6140 = vmax.f32 %v6139, %v5986
    %v6141 = vrot.slane %v6140, 4
    %v6142 = vmax.f32 %v6140, %v6141
    %v6143 = vrot.slane %v6142, 2
    %v6144 = vmax.f32 %v6142, %v6143
    %v6145 = vrot.slane %v6144, 1
    %v6146 = vmax.f32 %v6144, %v6145
    %v6147 = vmax.f32 %v5963, %v5971
    %v6148 = vmax.f32 %v6147, %v5979
    %v6149 = vmax.f32 %v6148, %v5987
    %v6150 = vrot.slane %v6149, 4
    %v6151 = vmax.f32 %v6149, %v6150
    %v6152 = vrot.slane %v6151, 2
    %v6153 = vmax.f32 %v6151, %v6152
    %v6154 = vrot.slane %v6153, 1
    %v6155 = vmax.f32 %v6153, %v6154
    %v6156 = vmax.f32 %v5964, %v5972
    %v6157 = vmax.f32 %v6156, %v5980
    %v6158 = vmax.f32 %v6157, %v5988
    %v6159 = vrot.slane %v6158, 4
    %v6160 = vmax.f32 %v6158, %v6159
    %v6161 = vrot.slane %v6160, 2
    %v6162 = vmax.f32 %v6160, %v6161
    %v6163 = vrot.slane %v6162, 1
    %v6164 = vmax.f32 %v6162, %v6163
    %v6165 = vmax.f32 %v5965, %v5973
    %v6166 = vmax.f32 %v6165, %v5981
    %v6167 = vmax.f32 %v6166, %v5989
    %v6168 = vrot.slane %v6167, 4
    %v6169 = vmax.f32 %v6167, %v6168
    %v6170 = vrot.slane %v6169, 2
    %v6171 = vmax.f32 %v6169, %v6170
    %v6172 = vrot.slane %v6171, 1
    %v6173 = vmax.f32 %v6171, %v6172
    %v6174 = vmax.f32 %v5966, %v5974
    %v6175 = vmax.f32 %v6174, %v5982
    %v6176 = vmax.f32 %v6175, %v5990
    %v6177 = vrot.slane %v6176, 4
    %v6178 = vmax.f32 %v6176, %v6177
    %v6179 = vrot.slane %v6178, 2
    %v6180 = vmax.f32 %v6178, %v6179
    %v6181 = vrot.slane %v6180, 1
    %v6182 = vmax.f32 %v6180, %v6181
    %v6183 = vmax.f32 %v5967, %v5975
    %v6184 = vmax.f32 %v6183, %v5983
    %v6185 = vmax.f32 %v6184, %v5991
    %v6186 = vrot.slane %v6185, 4
    %v6187 = vmax.f32 %v6185, %v6186
    %v6188 = vrot.slane %v6187, 2
    %v6189 = vmax.f32 %v6187, %v6188
    %v6190 = vrot.slane %v6189, 1
    %v6191 = vmax.f32 %v6189, %v6190
    %v6192 = vmax.f32 %v5968, %v5976
    %v6193 = vmax.f32 %v6192, %v5984
    %v6194 = vmax.f32 %v6193, %v5992
    %v6195 = vrot.slane %v6194, 4
    %v6196 = vmax.f32 %v6194, %v6195
    %v6197 = vrot.slane %v6196, 2
    %v6198 = vmax.f32 %v6196, %v6197
    %v6199 = vrot.slane %v6198, 1
    %v6200 = vmax.f32 %v6198, %v6199
    %v6201 = vmax.f32 %v5993, %v6001
    %v6202 = vmax.f32 %v6201, %v6009
    %v6203 = vmax.f32 %v6202, %v6017
    %v6204 = vrot.slane %v6203, 4
    %v6205 = vmax.f32 %v6203, %v6204
    %v6206 = vrot.slane %v6205, 2
    %v6207 = vmax.f32 %v6205, %v6206
    %v6208 = vrot.slane %v6207, 1
    %v6209 = vmax.f32 %v6207, %v6208
    %v6210 = vmax.f32 %v5994, %v6002
    %v6211 = vmax.f32 %v6210, %v6010
    %v6212 = vmax.f32 %v6211, %v6018
    %v6213 = vrot.slane %v6212, 4
    %v6214 = vmax.f32 %v6212, %v6213
    %v6215 = vrot.slane %v6214, 2
    %v6216 = vmax.f32 %v6214, %v6215
    %v6217 = vrot.slane %v6216, 1
    %v6218 = vmax.f32 %v6216, %v6217
    %v6219 = vmax.f32 %v5995, %v6003
    %v6220 = vmax.f32 %v6219, %v6011
    %v6221 = vmax.f32 %v6220, %v6019
    %v6222 = vrot.slane %v6221, 4
    %v6223 = vmax.f32 %v6221, %v6222
    %v6224 = vrot.slane %v6223, 2
    %v6225 = vmax.f32 %v6223, %v6224
    %v6226 = vrot.slane %v6225, 1
    %v6227 = vmax.f32 %v6225, %v6226
    %v6228 = vmax.f32 %v5996, %v6004
    %v6229 = vmax.f32 %v6228, %v6012
    %v6230 = vmax.f32 %v6229, %v6020
    %v6231 = vrot.slane %v6230, 4
    %v6232 = vmax.f32 %v6230, %v6231
    %v6233 = vrot.slane %v6232, 2
    %v6234 = vmax.f32 %v6232, %v6233
    %v6235 = vrot.slane %v6234, 1
    %v6236 = vmax.f32 %v6234, %v6235
    %v6237 = vmax.f32 %v5997, %v6005
    %v6238 = vmax.f32 %v6237, %v6013
    %v6239 = vmax.f32 %v6238, %v6021
    %v6240 = vrot.slane %v6239, 4
    %v6241 = vmax.f32 %v6239, %v6240
    %v6242 = vrot.slane %v6241, 2
    %v6243 = vmax.f32 %v6241, %v6242
    %v6244 = vrot.slane %v6243, 1
    %v6245 = vmax.f32 %v6243, %v6244
    %v6246 = vmax.f32 %v5998, %v6006
    %v6247 = vmax.f32 %v6246, %v6014
    %v6248 = vmax.f32 %v6247, %v6022
    %v6249 = vrot.slane %v6248, 4
    %v6250 = vmax.f32 %v6248, %v6249
    %v6251 = vrot.slane %v6250, 2
    %v6252 = vmax.f32 %v6250, %v6251
    %v6253 = vrot.slane %v6252, 1
    %v6254 = vmax.f32 %v6252, %v6253
    %v6255 = vmax.f32 %v5999, %v6007
    %v6256 = vmax.f32 %v6255, %v6015
    %v6257 = vmax.f32 %v6256, %v6023
    %v6258 = vrot.slane %v6257, 4
    %v6259 = vmax.f32 %v6257, %v6258
    %v6260 = vrot.slane %v6259, 2
    %v6261 = vmax.f32 %v6259, %v6260
    %v6262 = vrot.slane %v6261, 1
    %v6263 = vmax.f32 %v6261, %v6262
    %v6264 = vmax.f32 %v6000, %v6008
    %v6265 = vmax.f32 %v6264, %v6016
    %v6266 = vmax.f32 %v6265, %v6024
    %v6267 = vrot.slane %v6266, 4
    %v6268 = vmax.f32 %v6266, %v6267
    %v6269 = vrot.slane %v6268, 2
    %v6270 = vmax.f32 %v6268, %v6269
    %v6271 = vrot.slane %v6270, 1
    %v6272 = vmax.f32 %v6270, %v6271
    %v6273 = vmax.f32 %v6025, %v6033
    %v6274 = vmax.f32 %v6273, %v6041
    %v6275 = vmax.f32 %v6274, %v6049
    %v6276 = vrot.slane %v6275, 4
    %v6277 = vmax.f32 %v6275, %v6276
    %v6278 = vrot.slane %v6277, 2
    %v6279 = vmax.f32 %v6277, %v6278
    %v6280 = vrot.slane %v6279, 1
    %v6281 = vmax.f32 %v6279, %v6280
    %v6282 = vmax.f32 %v6026, %v6034
    %v6283 = vmax.f32 %v6282, %v6042
    %v6284 = vmax.f32 %v6283, %v6050
    %v6285 = vrot.slane %v6284, 4
    %v6286 = vmax.f32 %v6284, %v6285
    %v6287 = vrot.slane %v6286, 2
    %v6288 = vmax.f32 %v6286, %v6287
    %v6289 = vrot.slane %v6288, 1
    %v6290 = vmax.f32 %v6288, %v6289
    %v6291 = vmax.f32 %v6027, %v6035
    %v6292 = vmax.f32 %v6291, %v6043
    %v6293 = vmax.f32 %v6292, %v6051
    %v6294 = vrot.slane %v6293, 4
    %v6295 = vmax.f32 %v6293, %v6294
    %v6296 = vrot.slane %v6295, 2
    %v6297 = vmax.f32 %v6295, %v6296
    %v6298 = vrot.slane %v6297, 1
    %v6299 = vmax.f32 %v6297, %v6298
    %v6300 = vmax.f32 %v6028, %v6036
    %v6301 = vmax.f32 %v6300, %v6044
    %v6302 = vmax.f32 %v6301, %v6052
    %v6303 = vrot.slane %v6302, 4
    %v6304 = vmax.f32 %v6302, %v6303
    %v6305 = vrot.slane %v6304, 2
    %v6306 = vmax.f32 %v6304, %v6305
    %v6307 = vrot.slane %v6306, 1
    %v6308 = vmax.f32 %v6306, %v6307
    %v6309 = vmax.f32 %v6029, %v6037
    %v6310 = vmax.f32 %v6309, %v6045
    %v6311 = vmax.f32 %v6310, %v6053
    %v6312 = vrot.slane %v6311, 4
    %v6313 = vmax.f32 %v6311, %v6312
    %v6314 = vrot.slane %v6313, 2
    %v6315 = vmax.f32 %v6313, %v6314
    %v6316 = vrot.slane %v6315, 1
    %v6317 = vmax.f32 %v6315, %v6316
    %v6318 = vmax.f32 %v6030, %v6038
    %v6319 = vmax.f32 %v6318, %v6046
    %v6320 = vmax.f32 %v6319, %v6054
    %v6321 = vrot.slane %v6320, 4
    %v6322 = vmax.f32 %v6320, %v6321
    %v6323 = vrot.slane %v6322, 2
    %v6324 = vmax.f32 %v6322, %v6323
    %v6325 = vrot.slane %v6324, 1
    %v6326 = vmax.f32 %v6324, %v6325
    %v6327 = vmax.f32 %v6031, %v6039
    %v6328 = vmax.f32 %v6327, %v6047
    %v6329 = vmax.f32 %v6328, %v6055
    %v6330 = vrot.slane %v6329, 4
    %v6331 = vmax.f32 %v6329, %v6330
    %v6332 = vrot.slane %v6331, 2
    %v6333 = vmax.f32 %v6331, %v6332
    %v6334 = vrot.slane %v6333, 1
    %v6335 = vmax.f32 %v6333, %v6334
    %v6336 = vmax.f32 %v6032, %v6040
    %v6337 = vmax.f32 %v6336, %v6048
    %v6338 = vmax.f32 %v6337, %v6056
    %v6339 = vrot.slane %v6338, 4
    %v6340 = vmax.f32 %v6338, %v6339
    %v6341 = vrot.slane %v6340, 2
    %v6342 = vmax.f32 %v6340, %v6341
    %v6343 = vrot.slane %v6342, 1
    %v6344 = vmax.f32 %v6342, %v6343
    %v6345 = vld [vmem:[%s5] sm:$0xf]
    %v6346 = vld [vmem:[%s5 + $0x4] sm:$0xf]
    %v6347 = vld [vmem:[%s5 + $0x8] sm:$0xf]
    %v6348 = vld [vmem:[%s5 + $0xc] sm:$0xf]
    %v6349 = vld [vmem:[%s5 + $0x10] sm:$0xf]
    %v6350 = vld [vmem:[%s5 + $0x14] sm:$0xf]
    %v6351 = vld [vmem:[%s5 + $0x18] sm:$0xf]
    %v6352 = vld [vmem:[%s5 + $0x1c] sm:$0xf]
    %v6353 = vld [vmem:[%s5 + $0x20] sm:$0xf]
    %v6354 = vld [vmem:[%s5 + $0x24] sm:$0xf]
    %v6355 = vld [vmem:[%s5 + $0x28] sm:$0xf]
    %v6356 = vld [vmem:[%s5 + $0x2c] sm:$0xf]
    %v6357 = vld [vmem:[%s5 + $0x30] sm:$0xf]
    %v6358 = vld [vmem:[%s5 + $0x34] sm:$0xf]
    %v6359 = vld [vmem:[%s5 + $0x38] sm:$0xf]
    %v6360 = vld [vmem:[%s5 + $0x3c] sm:$0xf]
    %v6361 = vld [vmem:[%s5 + $0x40] sm:$0xf]
    %v6362 = vld [vmem:[%s5 + $0x44] sm:$0xf]
    %v6363 = vld [vmem:[%s5 + $0x48] sm:$0xf]
    %v6364 = vld [vmem:[%s5 + $0x4c] sm:$0xf]
    %v6365 = vld [vmem:[%s5 + $0x50] sm:$0xf]
    %v6366 = vld [vmem:[%s5 + $0x54] sm:$0xf]
    %v6367 = vld [vmem:[%s5 + $0x58] sm:$0xf]
    %v6368 = vld [vmem:[%s5 + $0x5c] sm:$0xf]
    %v6369 = vld [vmem:[%s5 + $0x60] sm:$0xf]
    %v6370 = vld [vmem:[%s5 + $0x64] sm:$0xf]
    %v6371 = vld [vmem:[%s5 + $0x68] sm:$0xf]
    %v6372 = vld [vmem:[%s5 + $0x6c] sm:$0xf]
    %v6373 = vld [vmem:[%s5 + $0x70] sm:$0xf]
    %v6374 = vld [vmem:[%s5 + $0x74] sm:$0xf]
    %v6375 = vld [vmem:[%s5 + $0x78] sm:$0xf]
    %v6376 = vld [vmem:[%s5 + $0x7c] sm:$0xf]
    %v6377 = vld [vmem:[%s5 + $0x80] sm:$0xf]
    %v6378 = vld [vmem:[%s5 + $0x84] sm:$0xf]
    %v6379 = vld [vmem:[%s5 + $0x88] sm:$0xf]
    %v6380 = vld [vmem:[%s5 + $0x8c] sm:$0xf]
    %v6381 = vld [vmem:[%s5 + $0x90] sm:$0xf]
    %v6382 = vld [vmem:[%s5 + $0x94] sm:$0xf]
    %v6383 = vld [vmem:[%s5 + $0x98] sm:$0xf]
    %v6384 = vld [vmem:[%s5 + $0x9c] sm:$0xf]
    %v6385 = vld [vmem:[%s5 + $0xa0] sm:$0xf]
    %v6386 = vld [vmem:[%s5 + $0xa4] sm:$0xf]
    %v6387 = vld [vmem:[%s5 + $0xa8] sm:$0xf]
    %v6388 = vld [vmem:[%s5 + $0xac] sm:$0xf]
    %v6389 = vld [vmem:[%s5 + $0xb0] sm:$0xf]
    %v6390 = vld [vmem:[%s5 + $0xb4] sm:$0xf]
    %v6391 = vld [vmem:[%s5 + $0xb8] sm:$0xf]
    %v6392 = vld [vmem:[%s5 + $0xbc] sm:$0xf]
    %v6393 = vld [vmem:[%s5 + $0xc0] sm:$0xf]
    %v6394 = vld [vmem:[%s5 + $0xc4] sm:$0xf]
    %v6395 = vld [vmem:[%s5 + $0xc8] sm:$0xf]
    %v6396 = vld [vmem:[%s5 + $0xcc] sm:$0xf]
    %v6397 = vld [vmem:[%s5 + $0xd0] sm:$0xf]
    %v6398 = vld [vmem:[%s5 + $0xd4] sm:$0xf]
    %v6399 = vld [vmem:[%s5 + $0xd8] sm:$0xf]
    %v6400 = vld [vmem:[%s5 + $0xdc] sm:$0xf]
    %v6401 = vld [vmem:[%s5 + $0xe0] sm:$0xf]
    %v6402 = vld [vmem:[%s5 + $0xe4] sm:$0xf]
    %v6403 = vld [vmem:[%s5 + $0xe8] sm:$0xf]
    %v6404 = vld [vmem:[%s5 + $0xec] sm:$0xf]
    %v6405 = vld [vmem:[%s5 + $0xf0] sm:$0xf]
    %v6406 = vld [vmem:[%s5 + $0xf4] sm:$0xf]
    %v6407 = vld [vmem:[%s5 + $0xf8] sm:$0xf]
    %v6408 = vld [vmem:[%s5 + $0xfc] sm:$0xf]
    %v6409 = vld [vmem:[%s5 + $0x100] sm:$0xf]
    %v6410 = vld [vmem:[%s5 + $0x104] sm:$0xf]
    %v6411 = vld [vmem:[%s5 + $0x108] sm:$0xf]
    %v6412 = vld [vmem:[%s5 + $0x10c] sm:$0xf]
    %v6413 = vld [vmem:[%s5 + $0x110] sm:$0xf]
    %v6414 = vld [vmem:[%s5 + $0x114] sm:$0xf]
    %v6415 = vld [vmem:[%s5 + $0x118] sm:$0xf]
    %v6416 = vld [vmem:[%s5 + $0x11c] sm:$0xf]
    %v6417 = vld [vmem:[%s5 + $0x120] sm:$0xf]
    %v6418 = vld [vmem:[%s5 + $0x124] sm:$0xf]
    %v6419 = vld [vmem:[%s5 + $0x128] sm:$0xf]
    %v6420 = vld [vmem:[%s5 + $0x12c] sm:$0xf]
    %v6421 = vld [vmem:[%s5 + $0x130] sm:$0xf]
    %v6422 = vld [vmem:[%s5 + $0x134] sm:$0xf]
    %v6423 = vld [vmem:[%s5 + $0x138] sm:$0xf]
    %v6424 = vld [vmem:[%s5 + $0x13c] sm:$0xf]
    %v6425 = vld [vmem:[%s5 + $0x140] sm:$0xf]
    %v6426 = vld [vmem:[%s5 + $0x144] sm:$0xf]
    %v6427 = vld [vmem:[%s5 + $0x148] sm:$0xf]
    %v6428 = vld [vmem:[%s5 + $0x14c] sm:$0xf]
    %v6429 = vld [vmem:[%s5 + $0x150] sm:$0xf]
    %v6430 = vld [vmem:[%s5 + $0x154] sm:$0xf]
    %v6431 = vld [vmem:[%s5 + $0x158] sm:$0xf]
    %v6432 = vld [vmem:[%s5 + $0x15c] sm:$0xf]
    %v6433 = vld [vmem:[%s5 + $0x160] sm:$0xf]
    %v6434 = vld [vmem:[%s5 + $0x164] sm:$0xf]
    %v6435 = vld [vmem:[%s5 + $0x168] sm:$0xf]
    %v6436 = vld [vmem:[%s5 + $0x16c] sm:$0xf]
    %v6437 = vld [vmem:[%s5 + $0x170] sm:$0xf]
    %v6438 = vld [vmem:[%s5 + $0x174] sm:$0xf]
    %v6439 = vld [vmem:[%s5 + $0x178] sm:$0xf]
    %v6440 = vld [vmem:[%s5 + $0x17c] sm:$0xf]
    %v6441 = vld [vmem:[%s5 + $0x180] sm:$0xf]
    %v6442 = vld [vmem:[%s5 + $0x184] sm:$0xf]
    %v6443 = vld [vmem:[%s5 + $0x188] sm:$0xf]
    %v6444 = vld [vmem:[%s5 + $0x18c] sm:$0xf]
    %v6445 = vld [vmem:[%s5 + $0x190] sm:$0xf]
    %v6446 = vld [vmem:[%s5 + $0x194] sm:$0xf]
    %v6447 = vld [vmem:[%s5 + $0x198] sm:$0xf]
    %v6448 = vld [vmem:[%s5 + $0x19c] sm:$0xf]
    %v6449 = vld [vmem:[%s5 + $0x1a0] sm:$0xf]
    %v6450 = vld [vmem:[%s5 + $0x1a4] sm:$0xf]
    %v6451 = vld [vmem:[%s5 + $0x1a8] sm:$0xf]
    %v6452 = vld [vmem:[%s5 + $0x1ac] sm:$0xf]
    %v6453 = vld [vmem:[%s5 + $0x1b0] sm:$0xf]
    %v6454 = vld [vmem:[%s5 + $0x1b4] sm:$0xf]
    %v6455 = vld [vmem:[%s5 + $0x1b8] sm:$0xf]
    %v6456 = vld [vmem:[%s5 + $0x1bc] sm:$0xf]
    %v6457 = vld [vmem:[%s5 + $0x1c0] sm:$0xf]
    %v6458 = vld [vmem:[%s5 + $0x1c4] sm:$0xf]
    %v6459 = vld [vmem:[%s5 + $0x1c8] sm:$0xf]
    %v6460 = vld [vmem:[%s5 + $0x1cc] sm:$0xf]
    %v6461 = vld [vmem:[%s5 + $0x1d0] sm:$0xf]
    %v6462 = vld [vmem:[%s5 + $0x1d4] sm:$0xf]
    %v6463 = vld [vmem:[%s5 + $0x1d8] sm:$0xf]
    %v6464 = vld [vmem:[%s5 + $0x1dc] sm:$0xf]
    %v6465 = vld [vmem:[%s5 + $0x1e0] sm:$0xf]
    %v6466 = vld [vmem:[%s5 + $0x1e4] sm:$0xf]
    %v6467 = vld [vmem:[%s5 + $0x1e8] sm:$0xf]
    %v6468 = vld [vmem:[%s5 + $0x1ec] sm:$0xf]
    %v6469 = vld [vmem:[%s5 + $0x1f0] sm:$0xf]
    %v6470 = vld [vmem:[%s5 + $0x1f4] sm:$0xf]
    %v6471 = vld [vmem:[%s5 + $0x1f8] sm:$0xf]
    %v6472 = vld [vmem:[%s5 + $0x1fc] sm:$0xf]
    %v6473 = vpack.c.bf16 %v6065, %v6065
    %v6474 = vpack.c.bf16 %v6074, %v6074
    %v6475 = vpack.c.bf16 %v6083, %v6083
    %v6476 = vpack.c.bf16 %v6092, %v6092
    %v6477 = vpack.c.bf16 %v6101, %v6101
    %v6478 = vpack.c.bf16 %v6110, %v6110
    %v6479 = vpack.c.bf16 %v6119, %v6119
    %v6480 = vpack.c.bf16 %v6128, %v6128
    %v6481 = vpack.c.bf16 %v6137, %v6137
    %v6482 = vpack.c.bf16 %v6146, %v6146
    %v6483 = vpack.c.bf16 %v6155, %v6155
    %v6484 = vpack.c.bf16 %v6164, %v6164
    %v6485 = vpack.c.bf16 %v6173, %v6173
    %v6486 = vpack.c.bf16 %v6182, %v6182
    %v6487 = vpack.c.bf16 %v6191, %v6191
    %v6488 = vpack.c.bf16 %v6200, %v6200
    %v6489 = vpack.c.bf16 %v6209, %v6209
    %v6490 = vpack.c.bf16 %v6218, %v6218
    %v6491 = vpack.c.bf16 %v6227, %v6227
    %v6492 = vpack.c.bf16 %v6236, %v6236
    %v6493 = vpack.c.bf16 %v6245, %v6245
    %v6494 = vpack.c.bf16 %v6254, %v6254
    %v6495 = vpack.c.bf16 %v6263, %v6263
    %v6496 = vpack.c.bf16 %v6272, %v6272
    %v6497 = vpack.c.bf16 %v6281, %v6281
    %v6498 = vpack.c.bf16 %v6290, %v6290
    %v6499 = vpack.c.bf16 %v6299, %v6299
    %v6500 = vpack.c.bf16 %v6308, %v6308
    %v6501 = vpack.c.bf16 %v6317, %v6317
    %v6502 = vpack.c.bf16 %v6326, %v6326
    %v6503 = vpack.c.bf16 %v6335, %v6335
    %v6504 = vpack.c.bf16 %v6344, %v6344
    %v6505 = vld [vmem:[%s6] sm:$0x1]
    %v6507 = vperm.slane %v6505, 0
    %v6541 = vunpack.c.l.b16 %v6473
    %v6542 = vunpack.c.l.b16 %v6474
    %v6543 = vunpack.c.l.b16 %v6475
    %v6544 = vunpack.c.l.b16 %v6476
    %v6545 = vunpack.c.l.b16 %v6477
    %v6546 = vunpack.c.l.b16 %v6478
    %v6547 = vunpack.c.l.b16 %v6479
    %v6548 = vunpack.c.l.b16 %v6480
    %v6549 = vunpack.c.l.b16 %v6481
    %v6550 = vunpack.c.l.b16 %v6482
    %v6551 = vunpack.c.l.b16 %v6483
    %v6552 = vunpack.c.l.b16 %v6484
    %v6553 = vunpack.c.l.b16 %v6485
    %v6554 = vunpack.c.l.b16 %v6486
    %v6555 = vunpack.c.l.b16 %v6487
    %v6556 = vunpack.c.l.b16 %v6488
    %v6557 = vunpack.c.l.b16 %v6489
    %v6558 = vunpack.c.l.b16 %v6490
    %v6559 = vunpack.c.l.b16 %v6491
    %v6560 = vunpack.c.l.b16 %v6492
    %v6561 = vunpack.c.l.b16 %v6493
    %v6562 = vunpack.c.l.b16 %v6494
    %v6563 = vunpack.c.l.b16 %v6495
    %v6564 = vunpack.c.l.b16 %v6496
    %v6565 = vunpack.c.l.b16 %v6497
    %v6566 = vunpack.c.l.b16 %v6498
    %v6567 = vunpack.c.l.b16 %v6499
    %v6568 = vunpack.c.l.b16 %v6500
    %v6569 = vunpack.c.l.b16 %v6501
    %v6570 = vunpack.c.l.b16 %v6502
    %v6571 = vunpack.c.l.b16 %v6503
    %v6572 = vunpack.c.l.b16 %v6504
    %vm6573 = vcmask 1041409
    %v6574 = vsel %vm6573, %v6549, %v6541
    %vm6575 = vcmask 1042434
    %v6576 = vsel %vm6575, %v6557, %v6574
    %vm6577 = vcmask 1043459
    %v6578 = vsel %vm6577, %v6565, %v6576
    %v6579 = vsel %vm6573, %v6550, %v6542
    %v6580 = vsel %vm6575, %v6558, %v6579
    %v6581 = vsel %vm6577, %v6566, %v6580
    %v6582 = vsel %vm6573, %v6551, %v6543
    %v6583 = vsel %vm6575, %v6559, %v6582
    %v6584 = vsel %vm6577, %v6567, %v6583
    %v6585 = vsel %vm6573, %v6552, %v6544
    %v6586 = vsel %vm6575, %v6560, %v6585
    %v6587 = vsel %vm6577, %v6568, %v6586
    %v6588 = vsel %vm6573, %v6553, %v6545
    %v6589 = vsel %vm6575, %v6561, %v6588
    %v6590 = vsel %vm6577, %v6569, %v6589
    %v6591 = vsel %vm6573, %v6554, %v6546
    %v6592 = vsel %vm6575, %v6562, %v6591
    %v6593 = vsel %vm6577, %v6570, %v6592
    %v6594 = vsel %vm6573, %v6555, %v6547
    %v6595 = vsel %vm6575, %v6563, %v6594
    %v6596 = vsel %vm6577, %v6571, %v6595
    %v6597 = vsel %vm6573, %v6556, %v6548
    %v6598 = vsel %vm6575, %v6564, %v6597
    %v6599 = vsel %vm6577, %v6572, %v6598
    %v6600 = vpack.c.b16 %v6578, %v6578
    %v6601 = vpack.c.b16 %v6581, %v6581
    %v6602 = vpack.c.b16 %v6584, %v6584
    %v6603 = vpack.c.b16 %v6587, %v6587
    %v6604 = vpack.c.b16 %v6590, %v6590
    %v6605 = vpack.c.b16 %v6593, %v6593
    %v6606 = vpack.c.b16 %v6596, %v6596
    %v6607 = vpack.c.b16 %v6599, %v6599
    %v6744 = vunpack.c.l.b16 %v6345
    %v6745 = vunpack.c.l.b16 %v6346
    %v6746 = vunpack.c.l.b16 %v6347
    %v6747 = vunpack.c.l.b16 %v6348
    %v6748 = vunpack.c.l.b16 %v6349
    %v6749 = vunpack.c.l.b16 %v6350
    %v6750 = vunpack.c.l.b16 %v6351
    %v6751 = vunpack.c.l.b16 %v6352
    %v6752 = vunpack.c.l.b16 %v6353
    %v6753 = vunpack.c.l.b16 %v6354
    %v6754 = vunpack.c.l.b16 %v6355
    %v6755 = vunpack.c.l.b16 %v6356
    %v6756 = vunpack.c.l.b16 %v6357
    %v6757 = vunpack.c.l.b16 %v6358
    %v6758 = vunpack.c.l.b16 %v6359
    %v6759 = vunpack.c.l.b16 %v6360
    %v6760 = vunpack.c.l.b16 %v6361
    %v6761 = vunpack.c.l.b16 %v6362
    %v6762 = vunpack.c.l.b16 %v6363
    %v6763 = vunpack.c.l.b16 %v6364
    %v6764 = vunpack.c.l.b16 %v6365
    %v6765 = vunpack.c.l.b16 %v6366
    %v6766 = vunpack.c.l.b16 %v6367
    %v6767 = vunpack.c.l.b16 %v6368
    %v6768 = vunpack.c.l.b16 %v6369
    %v6769 = vunpack.c.l.b16 %v6370
    %v6770 = vunpack.c.l.b16 %v6371
    %v6771 = vunpack.c.l.b16 %v6372
    %v6772 = vunpack.c.l.b16 %v6373
    %v6773 = vunpack.c.l.b16 %v6374
    %v6774 = vunpack.c.l.b16 %v6375
    %v6775 = vunpack.c.l.b16 %v6376
    %v6776 = vunpack.c.l.b16 %v6377
    %v6777 = vunpack.c.l.b16 %v6378
    %v6778 = vunpack.c.l.b16 %v6379
    %v6779 = vunpack.c.l.b16 %v6380
    %v6780 = vunpack.c.l.b16 %v6381
    %v6781 = vunpack.c.l.b16 %v6382
    %v6782 = vunpack.c.l.b16 %v6383
    %v6783 = vunpack.c.l.b16 %v6384
    %v6784 = vunpack.c.l.b16 %v6385
    %v6785 = vunpack.c.l.b16 %v6386
    %v6786 = vunpack.c.l.b16 %v6387
    %v6787 = vunpack.c.l.b16 %v6388
    %v6788 = vunpack.c.l.b16 %v6389
    %v6789 = vunpack.c.l.b16 %v6390
    %v6790 = vunpack.c.l.b16 %v6391
    %v6791 = vunpack.c.l.b16 %v6392
    %v6792 = vunpack.c.l.b16 %v6393
    %v6793 = vunpack.c.l.b16 %v6394
    %v6794 = vunpack.c.l.b16 %v6395
    %v6795 = vunpack.c.l.b16 %v6396
    %v6796 = vunpack.c.l.b16 %v6397
    %v6797 = vunpack.c.l.b16 %v6398
    %v6798 = vunpack.c.l.b16 %v6399
    %v6799 = vunpack.c.l.b16 %v6400
    %v6800 = vunpack.c.l.b16 %v6401
    %v6801 = vunpack.c.l.b16 %v6402
    %v6802 = vunpack.c.l.b16 %v6403
    %v6803 = vunpack.c.l.b16 %v6404
    %v6804 = vunpack.c.l.b16 %v6405
    %v6805 = vunpack.c.l.b16 %v6406
    %v6806 = vunpack.c.l.b16 %v6407
    %v6807 = vunpack.c.l.b16 %v6408
    %v6808 = vunpack.c.l.b16 %v6409
    %v6809 = vunpack.c.l.b16 %v6410
    %v6810 = vunpack.c.l.b16 %v6411
    %v6811 = vunpack.c.l.b16 %v6412
    %v6812 = vunpack.c.l.b16 %v6413
    %v6813 = vunpack.c.l.b16 %v6414
    %v6814 = vunpack.c.l.b16 %v6415
    %v6815 = vunpack.c.l.b16 %v6416
    %v6816 = vunpack.c.l.b16 %v6417
    %v6817 = vunpack.c.l.b16 %v6418
    %v6818 = vunpack.c.l.b16 %v6419
    %v6819 = vunpack.c.l.b16 %v6420
    %v6820 = vunpack.c.l.b16 %v6421
    %v6821 = vunpack.c.l.b16 %v6422
    %v6822 = vunpack.c.l.b16 %v6423
    %v6823 = vunpack.c.l.b16 %v6424
    %v6824 = vunpack.c.l.b16 %v6425
    %v6825 = vunpack.c.l.b16 %v6426
    %v6826 = vunpack.c.l.b16 %v6427
    %v6827 = vunpack.c.l.b16 %v6428
    %v6828 = vunpack.c.l.b16 %v6429
    %v6829 = vunpack.c.l.b16 %v6430
    %v6830 = vunpack.c.l.b16 %v6431
    %v6831 = vunpack.c.l.b16 %v6432
    %v6832 = vunpack.c.l.b16 %v6433
    %v6833 = vunpack.c.l.b16 %v6434
    %v6834 = vunpack.c.l.b16 %v6435
    %v6835 = vunpack.c.l.b16 %v6436
    %v6836 = vunpack.c.l.b16 %v6437
    %v6837 = vunpack.c.l.b16 %v6438
    %v6838 = vunpack.c.l.b16 %v6439
    %v6839 = vunpack.c.l.b16 %v6440
    %v6840 = vunpack.c.l.b16 %v6441
    %v6841 = vunpack.c.l.b16 %v6442
    %v6842 = vunpack.c.l.b16 %v6443
    %v6843 = vunpack.c.l.b16 %v6444
    %v6844 = vunpack.c.l.b16 %v6445
    %v6845 = vunpack.c.l.b16 %v6446
    %v6846 = vunpack.c.l.b16 %v6447
    %v6847 = vunpack.c.l.b16 %v6448
    %v6848 = vunpack.c.l.b16 %v6449
    %v6849 = vunpack.c.l.b16 %v6450
    %v6850 = vunpack.c.l.b16 %v6451
    %v6851 = vunpack.c.l.b16 %v6452
    %v6852 = vunpack.c.l.b16 %v6453
    %v6853 = vunpack.c.l.b16 %v6454
    %v6854 = vunpack.c.l.b16 %v6455
    %v6855 = vunpack.c.l.b16 %v6456
    %v6856 = vunpack.c.l.b16 %v6457
    %v6857 = vunpack.c.l.b16 %v6458
    %v6858 = vunpack.c.l.b16 %v6459
    %v6859 = vunpack.c.l.b16 %v6460
    %v6860 = vunpack.c.l.b16 %v6461
    %v6861 = vunpack.c.l.b16 %v6462
    %v6862 = vunpack.c.l.b16 %v6463
    %v6863 = vunpack.c.l.b16 %v6464
    %v6864 = vunpack.c.l.b16 %v6465
    %v6865 = vunpack.c.l.b16 %v6466
    %v6866 = vunpack.c.l.b16 %v6467
    %v6867 = vunpack.c.l.b16 %v6468
    %v6868 = vunpack.c.l.b16 %v6469
    %v6869 = vunpack.c.l.b16 %v6470
    %v6870 = vunpack.c.l.b16 %v6471
    %v6871 = vunpack.c.l.b16 %v6472
    %v6872 = vpack.c.b16 %v6745, %v6744
    %v6873 = vpack.c.b16 %v6747, %v6746
    %v6874 = vpack.c.b16 %v6749, %v6748
    %v6875 = vpack.c.b16 %v6751, %v6750
    %v6876 = vpack.c.b16 %v6753, %v6752
    %v6877 = vpack.c.b16 %v6755, %v6754
    %v6878 = vpack.c.b16 %v6757, %v6756
    %v6879 = vpack.c.b16 %v6759, %v6758
    %v6880 = vpack.c.b16 %v6761, %v6760
    %v6881 = vpack.c.b16 %v6763, %v6762
    %v6882 = vpack.c.b16 %v6765, %v6764
    %v6883 = vpack.c.b16 %v6767, %v6766
    %v6884 = vpack.c.b16 %v6769, %v6768
    %v6885 = vpack.c.b16 %v6771, %v6770
    %v6886 = vpack.c.b16 %v6773, %v6772
    %v6887 = vpack.c.b16 %v6775, %v6774
    %v6888 = vpack.c.b16 %v6777, %v6776
    %v6889 = vpack.c.b16 %v6779, %v6778
    %v6890 = vpack.c.b16 %v6781, %v6780
    %v6891 = vpack.c.b16 %v6783, %v6782
    %v6892 = vpack.c.b16 %v6785, %v6784
    %v6893 = vpack.c.b16 %v6787, %v6786
    %v6894 = vpack.c.b16 %v6789, %v6788
    %v6895 = vpack.c.b16 %v6791, %v6790
    %v6896 = vpack.c.b16 %v6793, %v6792
    %v6897 = vpack.c.b16 %v6795, %v6794
    %v6898 = vpack.c.b16 %v6797, %v6796
    %v6899 = vpack.c.b16 %v6799, %v6798
    %v6900 = vpack.c.b16 %v6801, %v6800
    %v6901 = vpack.c.b16 %v6803, %v6802
    %v6902 = vpack.c.b16 %v6805, %v6804
    %v6903 = vpack.c.b16 %v6807, %v6806
    %v6904 = vpack.c.b16 %v6809, %v6808
    %v6905 = vpack.c.b16 %v6811, %v6810
    %v6906 = vpack.c.b16 %v6813, %v6812
    %v6907 = vpack.c.b16 %v6815, %v6814
    %v6908 = vpack.c.b16 %v6817, %v6816
    %v6909 = vpack.c.b16 %v6819, %v6818
    %v6910 = vpack.c.b16 %v6821, %v6820
    %v6911 = vpack.c.b16 %v6823, %v6822
    %v6912 = vpack.c.b16 %v6825, %v6824
    %v6913 = vpack.c.b16 %v6827, %v6826
    %v6914 = vpack.c.b16 %v6829, %v6828
    %v6915 = vpack.c.b16 %v6831, %v6830
    %v6916 = vpack.c.b16 %v6833, %v6832
    %v6917 = vpack.c.b16 %v6835, %v6834
    %v6918 = vpack.c.b16 %v6837, %v6836
    %v6919 = vpack.c.b16 %v6839, %v6838
    %v6920 = vpack.c.b16 %v6841, %v6840
    %v6921 = vpack.c.b16 %v6843, %v6842
    %v6922 = vpack.c.b16 %v6845, %v6844
    %v6923 = vpack.c.b16 %v6847, %v6846
    %v6924 = vpack.c.b16 %v6849, %v6848
    %v6925 = vpack.c.b16 %v6851, %v6850
    %v6926 = vpack.c.b16 %v6853, %v6852
    %v6927 = vpack.c.b16 %v6855, %v6854
    %v6928 = vpack.c.b16 %v6857, %v6856
    %v6929 = vpack.c.b16 %v6859, %v6858
    %v6930 = vpack.c.b16 %v6861, %v6860
    %v6931 = vpack.c.b16 %v6863, %v6862
    %v6932 = vpack.c.b16 %v6865, %v6864
    %v6933 = vpack.c.b16 %v6867, %v6866
    %v6934 = vpack.c.b16 %v6869, %v6868
    %v6935 = vpack.c.b16 %v6871, %v6870
    %7000 = vmatpush.bf16.msra.mxu0 %v6879
    %7001 = vmatpush.bf16.msra.mxu0 %v6878
    %7002 = vmatpush.bf16.msra.mxu0 %v6877
    %7003 = vmatpush.bf16.msra.mxu0 %v6876
    %7004 = vmatpush.bf16.msra.mxu0 %v6875
    %7005 = vmatpush.bf16.msra.mxu0 %v6874
    %7006 = vmatpush.bf16.msra.mxu0 %v6873
    %7007 = vmatpush.bf16.msra.mxu0 %v6872
    %7008 = vmatmul.bf16.gmra.mxu0 %v6600
    %v7009 = vpop.f32.mrf.mxu0
    %v7010 = vadd.f32 %v6507, %v7009
    %v7011 = vpop.f32.mrf.mxu0
    %7012 = vdwg.mxu0
    %7013 = vmatpush.bf16.msra.mxu0 %v6887
    %7014 = vmatpush.bf16.msra.mxu0 %v6886
    %7015 = vmatpush.bf16.msra.mxu0 %v6885
    %7016 = vmatpush.bf16.msra.mxu0 %v6884
    %7017 = vmatpush.bf16.msra.mxu0 %v6883
    %7018 = vmatpush.bf16.msra.mxu0 %v6882
    %7019 = vmatpush.bf16.msra.mxu0 %v6881
    %7020 = vmatpush.bf16.msra.mxu0 %v6880
    %7021 = vmatmul.bf16.gmra.mxu0 %v6601
    %v7022 = vpop.f32.mrf.mxu0
    %v7023 = vadd.f32 %v7010, %v7022
    %v7024 = vpop.f32.mrf.mxu0
    %7025 = vdwg.mxu0
    %7026 = vmatpush.bf16.msra.mxu0 %v6895
    %7027 = vmatpush.bf16.msra.mxu0 %v6894
    %7028 = vmatpush.bf16.msra.mxu0 %v6893
    %7029 = vmatpush.bf16.msra.mxu0 %v6892
    %7030 = vmatpush.bf16.msra.mxu0 %v6891
    %7031 = vmatpush.bf16.msra.mxu0 %v6890
    %7032 = vmatpush.bf16.msra.mxu0 %v6889
    %7033 = vmatpush.bf16.msra.mxu0 %v6888
    %7034 = vmatmul.bf16.gmra.mxu0 %v6602
    %v7035 = vpop.f32.mrf.mxu0
    %v7036 = vadd.f32 %v7023, %v7035
    %v7037 = vpop.f32.mrf.mxu0
    %7038 = vdwg.mxu0
    %7039 = vmatpush.bf16.msra.mxu0 %v6903
    %7040 = vmatpush.bf16.msra.mxu0 %v6902
    %7041 = vmatpush.bf16.msra.mxu0 %v6901
    %7042 = vmatpush.bf16.msra.mxu0 %v6900
    %7043 = vmatpush.bf16.msra.mxu0 %v6899
    %7044 = vmatpush.bf16.msra.mxu0 %v6898
    %7045 = vmatpush.bf16.msra.mxu0 %v6897
    %7046 = vmatpush.bf16.msra.mxu0 %v6896
    %7047 = vmatmul.bf16.gmra.mxu0 %v6603
    %v7048 = vpop.f32.mrf.mxu0
    %v7049 = vadd.f32 %v7036, %v7048
    %v7050 = vpop.f32.mrf.mxu0
    %7051 = vdwg.mxu0
    %7052 = vmatpush.bf16.msra.mxu0 %v6911
    %7053 = vmatpush.bf16.msra.mxu0 %v6910
    %7054 = vmatpush.bf16.msra.mxu0 %v6909
    %7055 = vmatpush.bf16.msra.mxu0 %v6908
    %7056 = vmatpush.bf16.msra.mxu0 %v6907
    %7057 = vmatpush.bf16.msra.mxu0 %v6906
    %7058 = vmatpush.bf16.msra.mxu0 %v6905
    %7059 = vmatpush.bf16.msra.mxu0 %v6904
    %7060 = vmatmul.bf16.gmra.mxu0 %v6604
    %v7061 = vpop.f32.mrf.mxu0
    %v7062 = vadd.f32 %v7049, %v7061
    %v7063 = vpop.f32.mrf.mxu0
    %7064 = vdwg.mxu0
    %7065 = vmatpush.bf16.msra.mxu0 %v6919
    %7066 = vmatpush.bf16.msra.mxu0 %v6918
    %7067 = vmatpush.bf16.msra.mxu0 %v6917
    %7068 = vmatpush.bf16.msra.mxu0 %v6916
    %7069 = vmatpush.bf16.msra.mxu0 %v6915
    %7070 = vmatpush.bf16.msra.mxu0 %v6914
    %7071 = vmatpush.bf16.msra.mxu0 %v6913
    %7072 = vmatpush.bf16.msra.mxu0 %v6912
    %7073 = vmatmul.bf16.gmra.mxu0 %v6605
    %v7074 = vpop.f32.mrf.mxu0
    %v7075 = vadd.f32 %v7062, %v7074
    %v7076 = vpop.f32.mrf.mxu0
    %7077 = vdwg.mxu0
    %7078 = vmatpush.bf16.msra.mxu0 %v6927
    %7079 = vmatpush.bf16.msra.mxu0 %v6926
    %7080 = vmatpush.bf16.msra.mxu0 %v6925
    %7081 = vmatpush.bf16.msra.mxu0 %v6924
    %7082 = vmatpush.bf16.msra.mxu0 %v6923
    %7083 = vmatpush.bf16.msra.mxu0 %v6922
    %7084 = vmatpush.bf16.msra.mxu0 %v6921
    %7085 = vmatpush.bf16.msra.mxu0 %v6920
    %7086 = vmatmul.bf16.gmra.mxu0 %v6606
    %v7087 = vpop.f32.mrf.mxu0
    %v7088 = vadd.f32 %v7075, %v7087
    %v7089 = vpop.f32.mrf.mxu0
    %7090 = vdwg.mxu0
    %7091 = vmatpush.bf16.msra.mxu0 %v6935
    %7092 = vmatpush.bf16.msra.mxu0 %v6934
    %7093 = vmatpush.bf16.msra.mxu0 %v6933
    %7094 = vmatpush.bf16.msra.mxu0 %v6932
    %7095 = vmatpush.bf16.msra.mxu0 %v6931
    %7096 = vmatpush.bf16.msra.mxu0 %v6930
    %7097 = vmatpush.bf16.msra.mxu0 %v6929
    %7098 = vmatpush.bf16.msra.mxu0 %v6928
    %7099 = vmatmul.bf16.gmra.mxu0 %v6607
    %v7100 = vpop.f32.mrf.mxu0
    %v7101 = vadd.f32 %v7088, %v7100
    %v7102 = vpop.f32.mrf.mxu0
    %7103 = vdwg.mxu0
    %v7104 = vmax.f32 %v7101, 0.0
    %v7105 = vld [vmem:[%s7] sm:$0xf]
    %v7106 = vld [vmem:[%s8] sm:$0xff]
    %v7107 = vld [vmem:[%s8 + $0x8] sm:$0xff]
    %v7108 = vld [vmem:[%s8 + $0x10] sm:$0xff]
    %v7109 = vld [vmem:[%s8 + $0x18] sm:$0xff]
    %v7110 = vld [vmem:[%s8 + $0x20] sm:$0xff]
    %v7111 = vld [vmem:[%s8 + $0x28] sm:$0xff]
    %v7112 = vld [vmem:[%s8 + $0x30] sm:$0xff]
    %v7113 = vld [vmem:[%s8 + $0x38] sm:$0xff]
    %v7114 = vld [vmem:[%s8 + $0x40] sm:$0xff]
    %v7115 = vld [vmem:[%s8 + $0x48] sm:$0xff]
    %v7116 = vld [vmem:[%s8 + $0x50] sm:$0xff]
    %v7117 = vld [vmem:[%s8 + $0x58] sm:$0xff]
    %v7118 = vld [vmem:[%s8 + $0x60] sm:$0xff]
    %v7119 = vld [vmem:[%s8 + $0x68] sm:$0xff]
    %v7120 = vld [vmem:[%s8 + $0x70] sm:$0xff]
    %v7121 = vld [vmem:[%s8 + $0x78] sm:$0xff]
    %v7122 = vpack.c.bf16 %v7105, %v7105
    %v7123 = vld [vmem:[%s9] sm:$0x3]
    %v7125 = vperm.slane %v7123, 0
    %v7126 = vperm.slane %v7123, 1
    %v7145 = vunpack.c.l.b16 %v7106
    %v7146 = vunpack.c.h.b16 %v7106
    %v7147 = vunpack.c.l.b16 %v7107
    %v7148 = vunpack.c.h.b16 %v7107
    %v7149 = vunpack.c.l.b16 %v7108
    %v7150 = vunpack.c.h.b16 %v7108
    %v7151 = vunpack.c.l.b16 %v7109
    %v7152 = vunpack.c.h.b16 %v7109
    %v7153 = vunpack.c.l.b16 %v7110
    %v7154 = vunpack.c.h.b16 %v7110
    %v7155 = vunpack.c.l.b16 %v7111
    %v7156 = vunpack.c.h.b16 %v7111
    %v7157 = vunpack.c.l.b16 %v7112
    %v7158 = vunpack.c.h.b16 %v7112
    %v7159 = vunpack.c.l.b16 %v7113
    %v7160 = vunpack.c.h.b16 %v7113
    %v7161 = vunpack.c.l.b16 %v7114
    %v7162 = vunpack.c.h.b16 %v7114
    %v7163 = vunpack.c.l.b16 %v7115
    %v7164 = vunpack.c.h.b16 %v7115
    %v7165 = vunpack.c.l.b16 %v7116
    %v7166 = vunpack.c.h.b16 %v7116
    %v7167 = vunpack.c.l.b16 %v7117
    %v7168 = vunpack.c.h.b16 %v7117
    %v7169 = vunpack.c.l.b16 %v7118
    %v7170 = vunpack.c.h.b16 %v7118
    %v7171 = vunpack.c.l.b16 %v7119
    %v7172 = vunpack.c.h.b16 %v7119
    %v7173 = vunpack.c.l.b16 %v7120
    %v7174 = vunpack.c.h.b16 %v7120
    %v7175 = vunpack.c.l.b16 %v7121
    %v7176 = vunpack.c.h.b16 %v7121
    %v7177 = vpack.c.b16 %v7147, %v7145
    %v7178 = vpack.c.b16 %v7148, %v7146
    %v7179 = vpack.c.b16 %v7151, %v7149
    %v7180 = vpack.c.b16 %v7152, %v7150
    %v7181 = vpack.c.b16 %v7155, %v7153
    %v7182 = vpack.c.b16 %v7156, %v7154
    %v7183 = vpack.c.b16 %v7159, %v7157
    %v7184 = vpack.c.b16 %v7160, %v7158
    %v7185 = vpack.c.b16 %v7163, %v7161
    %v7186 = vpack.c.b16 %v7164, %v7162
    %v7187 = vpack.c.b16 %v7167, %v7165
    %v7188 = vpack.c.b16 %v7168, %v7166
    %v7189 = vpack.c.b16 %v7171, %v7169
    %v7190 = vpack.c.b16 %v7172, %v7170
    %v7191 = vpack.c.b16 %v7175, %v7173
    %v7192 = vpack.c.b16 %v7176, %v7174
    %7209 = vmatpush.bf16.msra.mxu0 %v7191
    %7210 = vmatpush.bf16.msra.mxu0 %v7189
    %7211 = vmatpush.bf16.msra.mxu0 %v7187
    %7212 = vmatpush.bf16.msra.mxu0 %v7185
    %7213 = vmatpush.bf16.msra.mxu0 %v7183
    %7214 = vmatpush.bf16.msra.mxu0 %v7181
    %7215 = vmatpush.bf16.msra.mxu0 %v7179
    %7216 = vmatpush.bf16.msra.mxu0 %v7177
    %7217 = vmatmul.bf16.gmra.mxu0 %v7122
    %v7218 = vpop.f32.mrf.mxu0
    %v7219 = vadd.f32 %v7125, %v7218
    %v7220 = vpop.f32.mrf.mxu0
    %7221 = vdwg.mxu0
    %7222 = vmatpush.bf16.msra.mxu0 %v7192
    %7223 = vmatpush.bf16.msra.mxu0 %v7190
    %7224 = vmatpush.bf16.msra.mxu0 %v7188
    %7225 = vmatpush.bf16.msra.mxu0 %v7186
    %7226 = vmatpush.bf16.msra.mxu0 %v7184
    %7227 = vmatpush.bf16.msra.mxu0 %v7182
    %7228 = vmatpush.bf16.msra.mxu0 %v7180
    %7229 = vmatpush.bf16.msra.mxu0 %v7178
    %7230 = vmatmul.bf16.gmra.mxu0 %v7122
    %v7231 = vpop.f32.mrf.mxu0
    %v7232 = vadd.f32 %v7126, %v7231
    %v7233 = vpop.f32.mrf.mxu0
    %7234 = vdwg.mxu0
    %v7235 = vxor.u32 %v7219, 2147483648
    %v7236 = vxor.u32 %v7232, 2147483648
    %v7237 = vmul.f32 %v7235, 1.442695
    %v7238 = vpow.pop %v7237
    %v7239 = vmul.f32 %v7236, 1.442695
    %v7240 = vpow.pop %v7239
    %v7241 = vadd.f32 %v7238, 1.0
    %v7242 = vadd.f32 %v7240, 1.0
    %v7243 = vrcp.pop %v7241
    %v7244 = vmul.f32 %v7241, %v7243
    %v7245 = vsub.f32 1.0, %v7244
    %v7246 = vmul.f32 %v7243, %v7245
    %v7247 = vadd.f32 %v7243, %v7246
    %vm7248 = vweird.f32 %v7241
    %vm7249 = vweird.f32 %v7243
    %vm7250 = vmor %vm7248, %vm7249
    %v7251 = vsel %vm7250, %v7243, %v7247
    %v7252 = vand.u32 2147483647, %v7241
    %vm7253 = vcmp.eq.f32.partialorder %v7252, 8.507059e+37
    %v7254 = vand.u32 %v7241, 2147483648
    %v7255 = vor.u32 1.1754944e-38, %v7254
    %v7256 = vsel %vm7253, %v7255, %v7251
    %v7257 = vmul.f32 1.0, %v7256
    %v7258 = vrcp.pop %v7242
    %v7259 = vmul.f32 %v7242, %v7258
    %v7260 = vsub.f32 1.0, %v7259
    %v7261 = vmul.f32 %v7258, %v7260
    %v7262 = vadd.f32 %v7258, %v7261
    %vm7263 = vweird.f32 %v7242
    %vm7264 = vweird.f32 %v7258
    %vm7265 = vmor %vm7263, %vm7264
    %v7266 = vsel %vm7265, %v7258, %v7262
    %v7267 = vand.u32 2147483647, %v7242
    %vm7268 = vcmp.eq.f32.partialorder %v7267, 8.507059e+37
    %v7269 = vand.u32 %v7242, 2147483648
    %v7270 = vor.u32 1.1754944e-38, %v7269
    %v7271 = vsel %vm7268, %v7270, %v7266
    %v7272 = vmul.f32 1.0, %v7271
    %vm7273 = vcmask 1043456
    %v7274 = vsel %vm7273, %v7257, 0.0
    %v7275 = vrot.slane %v7274, 4
    %v7276 = vadd.f32 %v7274, %v7275
    %v7277 = vrot.slane %v7276, 2
    %v7278 = vadd.f32 %v7276, %v7277
    %v7279 = vrot.slane %v7278, 1
    %v7280 = vadd.f32 %v7278, %v7279
    %v7281 = vsel %vm7273, %v7272, 0.0
    %v7282 = vrot.slane %v7281, 4
    %v7283 = vadd.f32 %v7281, %v7282
    %v7284 = vrot.slane %v7283, 2
    %v7285 = vadd.f32 %v7283, %v7284
    %v7286 = vrot.slane %v7285, 1
    %v7287 = vadd.f32 %v7285, %v7286
    %v7288 = vrcp.pop 4.0
    %v7289 = vmul.f32 4.0, %v7288
    %v7290 = vsub.f32 1.0, %v7289
    %v7291 = vmul.f32 %v7288, %v7290
    %v7292 = vadd.f32 %v7288, %v7291
    %vm7293 = vweird.f32 %v7288
    %v7294 = vsel %vm7293, %v7288, %v7292
    %v7295 = vmul.f32 %v7280, %v7294
    %v7296 = vmul.f32 %v7287, %v7294
    %v7297 = vsub.f32 %v7257, %v7295
    %v7298 = vsub.f32 %v7272, %v7296
    %v7299 = vmul.f32 %v7297, %v7297
    %v7300 = vmul.f32 %v7298, %v7298
    %v7301 = vsel %vm7273, %v7299, 0.0
    %v7302 = vrot.slane %v7301, 4
    %v7303 = vadd.f32 %v7301, %v7302
    %v7304 = vrot.slane %v7303, 2
    %v7305 = vadd.f32 %v7303, %v7304
    %v7306 = vrot.slane %v7305, 1
    %v7307 = vadd.f32 %v7305, %v7306
    %v7308 = vsel %vm7273, %v7300, 0.0
    %v7309 = vrot.slane %v7308, 4
    %v7310 = vadd.f32 %v7308, %v7309
    %v7311 = vrot.slane %v7310, 2
    %v7312 = vadd.f32 %v7310, %v7311
    %v7313 = vrot.slane %v7312, 1
    %v7314 = vadd.f32 %v7312, %v7313
    %v7315 = vmul.f32 %v7307, %v7294
    %v7316 = vmul.f32 %v7314, %v7294
    %v7317 = vadd.f32 %v7315, 1e-05
    %v7318 = vadd.f32 %v7316, 1e-05
    %v7319 = vrsqrt.pop %v7317
    %v7320 = vmul.f32 %v7319, %v7317
    %v7321 = vmul.f32 %v7320, %v7319
    %v7322 = vmul.f32 0.5, %v7321
    %v7323 = vsub.f32 1.5, %v7322
    %v7324 = vmul.f32 %v7319, %v7323
    %vm7325 = vweird.f32 %v7317
    %vm7326 = vweird.f32 %v7319
    %vm7327 = vmor %vm7325, %vm7326
    %v7328 = vsel %vm7327, %v7319, %v7324
    %v7329 = vrsqrt.pop %v7318
    %v7330 = vmul.f32 %v7329, %v7318
    %v7331 = vmul.f32 %v7330, %v7329
    %v7332 = vmul.f32 0.5, %v7331
    %v7333 = vsub.f32 1.5, %v7332
    %v7334 = vmul.f32 %v7329, %v7333
    %vm7335 = vweird.f32 %v7318
    %vm7336 = vweird.f32 %v7329
    %vm7337 = vmor %vm7335, %vm7336
    %v7338 = vsel %vm7337, %v7329, %v7334
    %v7339 = vmul.f32 %v7297, %v7328
    %v7340 = vmul.f32 %v7298, %v7338
    %v7341 = vld [vmem:[%s10] sm:$0xf]
    %v7342 = vld [vmem:[%s10 + $0x4] sm:$0xf]
    %v7343 = vld [vmem:[%s10 + $0x8] sm:$0xf]
    %v7344 = vld [vmem:[%s10 + $0xc] sm:$0xf]
    %v7345 = vld [vmem:[%s10 + $0x10] sm:$0xf]
    %v7346 = vld [vmem:[%s10 + $0x14] sm:$0xf]
    %v7347 = vld [vmem:[%s10 + $0x18] sm:$0xf]
    %v7348 = vld [vmem:[%s10 + $0x1c] sm:$0xf]
    %v7349 = vld [vmem:[%s10 + $0x20] sm:$0xf]
    %v7350 = vld [vmem:[%s10 + $0x24] sm:$0xf]
    %v7351 = vld [vmem:[%s10 + $0x28] sm:$0xf]
    %v7352 = vld [vmem:[%s10 + $0x2c] sm:$0xf]
    %v7353 = vld [vmem:[%s10 + $0x30] sm:$0xf]
    %v7354 = vld [vmem:[%s10 + $0x34] sm:$0xf]
    %v7355 = vld [vmem:[%s10 + $0x38] sm:$0xf]
    %v7356 = vld [vmem:[%s10 + $0x3c] sm:$0xf]
    %v7357 = vld [vmem:[%s10 + $0x40] sm:$0xf]
    %v7358 = vld [vmem:[%s10 + $0x44] sm:$0xf]
    %v7359 = vld [vmem:[%s10 + $0x48] sm:$0xf]
    %v7360 = vld [vmem:[%s10 + $0x4c] sm:$0xf]
    %v7361 = vld [vmem:[%s10 + $0x50] sm:$0xf]
    %v7362 = vld [vmem:[%s10 + $0x54] sm:$0xf]
    %v7363 = vld [vmem:[%s10 + $0x58] sm:$0xf]
    %v7364 = vld [vmem:[%s10 + $0x5c] sm:$0xf]
    %v7365 = vld [vmem:[%s10 + $0x60] sm:$0xf]
    %v7366 = vld [vmem:[%s10 + $0x64] sm:$0xf]
    %v7367 = vld [vmem:[%s10 + $0x68] sm:$0xf]
    %v7368 = vld [vmem:[%s10 + $0x6c] sm:$0xf]
    %v7369 = vld [vmem:[%s10 + $0x70] sm:$0xf]
    %v7370 = vld [vmem:[%s10 + $0x74] sm:$0xf]
    %v7371 = vld [vmem:[%s10 + $0x78] sm:$0xf]
    %v7372 = vld [vmem:[%s10 + $0x7c] sm:$0xf]
    %v7373 = vpack.c.bf16 %v7339, %v7339
    %v7374 = vpack.c.bf16 %v7340, %v7340
    %v7375 = vld [vmem:[%s11] sm:$0x1]
    %v7377 = vperm.slane %v7375, 0
    %v7411 = vunpack.c.l.b16 %v7341
    %v7412 = vunpack.c.l.b16 %v7342
    %v7413 = vunpack.c.l.b16 %v7343
    %v7414 = vunpack.c.l.b16 %v7344
    %v7415 = vunpack.c.l.b16 %v7345
    %v7416 = vunpack.c.l.b16 %v7346
    %v7417 = vunpack.c.l.b16 %v7347
    %v7418 = vunpack.c.l.b16 %v7348
    %v7419 = vunpack.c.l.b16 %v7349
    %v7420 = vunpack.c.l.b16 %v7350
    %v7421 = vunpack.c.l.b16 %v7351
    %v7422 = vunpack.c.l.b16 %v7352
    %v7423 = vunpack.c.l.b16 %v7353
    %v7424 = vunpack.c.l.b16 %v7354
    %v7425 = vunpack.c.l.b16 %v7355
    %v7426 = vunpack.c.l.b16 %v7356
    %v7427 = vunpack.c.l.b16 %v7357
    %v7428 = vunpack.c.l.b16 %v7358
    %v7429 = vunpack.c.l.b16 %v7359
    %v7430 = vunpack.c.l.b16 %v7360
    %v7431 = vunpack.c.l.b16 %v7361
    %v7432 = vunpack.c.l.b16 %v7362
    %v7433 = vunpack.c.l.b16 %v7363
    %v7434 = vunpack.c.l.b16 %v7364
    %v7435 = vunpack.c.l.b16 %v7365
    %v7436 = vunpack.c.l.b16 %v7366
    %v7437 = vunpack.c.l.b16 %v7367
    %v7438 = vunpack.c.l.b16 %v7368
    %v7439 = vunpack.c.l.b16 %v7369
    %v7440 = vunpack.c.l.b16 %v7370
    %v7441 = vunpack.c.l.b16 %v7371
    %v7442 = vunpack.c.l.b16 %v7372
    %v7443 = vpack.c.b16 %v7412, %v7411
    %v7444 = vpack.c.b16 %v7414, %v7413
    %v7445 = vpack.c.b16 %v7416, %v7415
    %v7446 = vpack.c.b16 %v7418, %v7417
    %v7447 = vpack.c.b16 %v7420, %v7419
    %v7448 = vpack.c.b16 %v7422, %v7421
    %v7449 = vpack.c.b16 %v7424, %v7423
    %v7450 = vpack.c.b16 %v7426, %v7425
    %v7451 = vpack.c.b16 %v7428, %v7427
    %v7452 = vpack.c.b16 %v7430, %v7429
    %v7453 = vpack.c.b16 %v7432, %v7431
    %v7454 = vpack.c.b16 %v7434, %v7433
    %v7455 = vpack.c.b16 %v7436, %v7435
    %v7456 = vpack.c.b16 %v7438, %v7437
    %v7457 = vpack.c.b16 %v7440, %v7439
    %v7458 = vpack.c.b16 %v7442, %v7441
    %7475 = vmatpush.bf16.msra.mxu0 %v7450
    %7476 = vmatpush.bf16.msra.mxu0 %v7449
    %7477 = vmatpush.bf16.msra.mxu0 %v7448
    %7478 = vmatpush.bf16.msra.mxu0 %v7447
    %7479 = vmatpush.bf16.msra.mxu0 %v7446
    %7480 = vmatpush.bf16.msra.mxu0 %v7445
    %7481 = vmatpush.bf16.msra.mxu0 %v7444
    %7482 = vmatpush.bf16.msra.mxu0 %v7443
    %7483 = vmatmul.bf16.gmra.mxu0 %v7373
    %v7484 = vpop.f32.mrf.mxu0
    %v7485 = vadd.f32 %v7377, %v7484
    %v7486 = vpop.f32.mrf.mxu0
    %7487 = vdwg.mxu0
    %7488 = vmatpush.bf16.msra.mxu0 %v7458
    %7489 = vmatpush.bf16.msra.mxu0 %v7457
    %7490 = vmatpush.bf16.msra.mxu0 %v7456
    %7491 = vmatpush.bf16.msra.mxu0 %v7455
    %7492 = vmatpush.bf16.msra.mxu0 %v7454
    %7493 = vmatpush.bf16.msra.mxu0 %v7453
    %7494 = vmatpush.bf16.msra.mxu0 %v7452
    %7495 = vmatpush.bf16.msra.mxu0 %v7451
    %7496 = vmatmul.bf16.gmra.mxu0 %v7374
    %v7497 = vpop.f32.mrf.mxu0
    %v7498 = vadd.f32 %v7485, %v7497
    %v7499 = vpop.f32.mrf.mxu0
    %7500 = vdwg.mxu0
    %v7501 = vmax.f32 %v7498, 0.0
    %v7502 = vld [vmem:[%s12] sm:$0xf]
    %v7503 = vld [vmem:[%s13] sm:$0xff]
    %v7504 = vld [vmem:[%s13 + $0x8] sm:$0xff]
    %v7505 = vld [vmem:[%s13 + $0x10] sm:$0xff]
    %v7506 = vld [vmem:[%s13 + $0x18] sm:$0xff]
    %v7507 = vld [vmem:[%s13 + $0x20] sm:$0xff]
    %v7508 = vld [vmem:[%s13 + $0x28] sm:$0xff]
    %v7509 = vld [vmem:[%s13 + $0x30] sm:$0xff]
    %v7510 = vld [vmem:[%s13 + $0x38] sm:$0xff]
    %v7511 = vld [vmem:[%s13 + $0x40] sm:$0xff]
    %v7512 = vld [vmem:[%s13 + $0x48] sm:$0xff]
    %v7513 = vld [vmem:[%s13 + $0x50] sm:$0xff]
    %v7514 = vld [vmem:[%s13 + $0x58] sm:$0xff]
    %v7515 = vld [vmem:[%s13 + $0x60] sm:$0xff]
    %v7516 = vld [vmem:[%s13 + $0x68] sm:$0xff]
    %v7517 = vld [vmem:[%s13 + $0x70] sm:$0xff]
    %v7518 = vld [vmem:[%s13 + $0x78] sm:$0xff]
    %v7519 = vpack.c.bf16 %v7502, %v7502
    %v7520 = vld [vmem:[%s14] sm:$0x3]
    %v7522 = vperm.slane %v7520, 0
    %v7523 = vperm.slane %v7520, 1
    %v7542 = vunpack.c.l.b16 %v7503
    %v7543 = vunpack.c.h.b16 %v7503
    %v7544 = vunpack.c.l.b16 %v7504
    %v7545 = vunpack.c.h.b16 %v7504
    %v7546 = vunpack.c.l.b16 %v7505
    %v7547 = vunpack.c.h.b16 %v7505
    %v7548 = vunpack.c.l.b16 %v7506
    %v7549 = vunpack.c.h.b16 %v7506
    %v7550 = vunpack.c.l.b16 %v7507
    %v7551 = vunpack.c.h.b16 %v7507
    %v7552 = vunpack.c.l.b16 %v7508
    %v7553 = vunpack.c.h.b16 %v7508
    %v7554 = vunpack.c.l.b16 %v7509
    %v7555 = vunpack.c.h.b16 %v7509
    %v7556 = vunpack.c.l.b16 %v7510
    %v7557 = vunpack.c.h.b16 %v7510
    %v7558 = vunpack.c.l.b16 %v7511
    %v7559 = vunpack.c.h.b16 %v7511
    %v7560 = vunpack.c.l.b16 %v7512
    %v7561 = vunpack.c.h.b16 %v7512
    %v7562 = vunpack.c.l.b16 %v7513
    %v7563 = vunpack.c.h.b16 %v7513
    %v7564 = vunpack.c.l.b16 %v7514
    %v7565 = vunpack.c.h.b16 %v7514
    %v7566 = vunpack.c.l.b16 %v7515
    %v7567 = vunpack.c.h.b16 %v7515
    %v7568 = vunpack.c.l.b16 %v7516
    %v7569 = vunpack.c.h.b16 %v7516
    %v7570 = vunpack.c.l.b16 %v7517
    %v7571 = vunpack.c.h.b16 %v7517
    %v7572 = vunpack.c.l.b16 %v7518
    %v7573 = vunpack.c.h.b16 %v7518
    %v7574 = vpack.c.b16 %v7544, %v7542
    %v7575 = vpack.c.b16 %v7545, %v7543
    %v7576 = vpack.c.b16 %v7548, %v7546
    %v7577 = vpack.c.b16 %v7549, %v7547
    %v7578 = vpack.c.b16 %v7552, %v7550
    %v7579 = vpack.c.b16 %v7553, %v7551
    %v7580 = vpack.c.b16 %v7556, %v7554
    %v7581 = vpack.c.b16 %v7557, %v7555
    %v7582 = vpack.c.b16 %v7560, %v7558
    %v7583 = vpack.c.b16 %v7561, %v7559
    %v7584 = vpack.c.b16 %v7564, %v7562
    %v7585 = vpack.c.b16 %v7565, %v7563
    %v7586 = vpack.c.b16 %v7568, %v7566
    %v7587 = vpack.c.b16 %v7569, %v7567
    %v7588 = vpack.c.b16 %v7572, %v7570
    %v7589 = vpack.c.b16 %v7573, %v7571
    %7606 = vmatpush.bf16.msra.mxu0 %v7588
    %7607 = vmatpush.bf16.msra.mxu0 %v7586
    %7608 = vmatpush.bf16.msra.mxu0 %v7584
    %7609 = vmatpush.bf16.msra.mxu0 %v7582
    %7610 = vmatpush.bf16.msra.mxu0 %v7580
    %7611 = vmatpush.bf16.msra.mxu0 %v7578
    %7612 = vmatpush.bf16.msra.mxu0 %v7576
    %7613 = vmatpush.bf16.msra.mxu0 %v7574
    %7614 = vmatmul.bf16.gmra.mxu0 %v7519
    %v7615 = vpop.f32.mrf.mxu0
    %v7616 = vadd.f32 %v7522, %v7615
    %v7617 = vpop.f32.mrf.mxu0
    %7618 = vdwg.mxu0
    %7619 = vmatpush.bf16.msra.mxu0 %v7589
    %7620 = vmatpush.bf16.msra.mxu0 %v7587
    %7621 = vmatpush.bf16.msra.mxu0 %v7585
    %7622 = vmatpush.bf16.msra.mxu0 %v7583
    %7623 = vmatpush.bf16.msra.mxu0 %v7581
    %7624 = vmatpush.bf16.msra.mxu0 %v7579
    %7625 = vmatpush.bf16.msra.mxu0 %v7577
    %7626 = vmatpush.bf16.msra.mxu0 %v7575
    %7627 = vmatmul.bf16.gmra.mxu0 %v7519
    %v7628 = vpop.f32.mrf.mxu0
    %v7629 = vadd.f32 %v7523, %v7628
    %v7630 = vpop.f32.mrf.mxu0
    %7631 = vdwg.mxu0
    %v7632 = vtanh.pop %v7616
    %v7633 = vtanh.pop %v7629
    %v7634 = vsel %vm7273, %v7632, 0.0
    %v7635 = vrot.slane %v7634, 4
    %v7636 = vadd.f32 %v7634, %v7635
    %v7637 = vrot.slane %v7636, 2
    %v7638 = vadd.f32 %v7636, %v7637
    %v7639 = vrot.slane %v7638, 1
    %v7640 = vadd.f32 %v7638, %v7639
    %v7641 = vsel %vm7273, %v7633, 0.0
    %v7642 = vrot.slane %v7641, 4
    %v7643 = vadd.f32 %v7641, %v7642
    %v7644 = vrot.slane %v7643, 2
    %v7645 = vadd.f32 %v7643, %v7644
    %v7646 = vrot.slane %v7645, 1
    %v7647 = vadd.f32 %v7645, %v7646
    %v7648 = vmul.f32 %v7640, %v7294
    %v7649 = vmul.f32 %v7647, %v7294
    %v7650 = vsub.f32 %v7632, %v7648
    %v7651 = vsub.f32 %v7633, %v7649
    %v7652 = vmul.f32 %v7650, %v7650
    %v7653 = vmul.f32 %v7651, %v7651
    %v7654 = vsel %vm7273, %v7652, 0.0
    %v7655 = vrot.slane %v7654, 4
    %v7656 = vadd.f32 %v7654, %v7655
    %v7657 = vrot.slane %v7656, 2
    %v7658 = vadd.f32 %v7656, %v7657
    %v7659 = vrot.slane %v7658, 1
    %v7660 = vadd.f32 %v7658, %v7659
    %v7661 = vsel %vm7273, %v7653, 0.0
    %v7662 = vrot.slane %v7661, 4
    %v7663 = vadd.f32 %v7661, %v7662
    %v7664 = vrot.slane %v7663, 2
    %v7665 = vadd.f32 %v7663, %v7664
    %v7666 = vrot.slane %v7665, 1
    %v7667 = vadd.f32 %v7665, %v7666
    %v7668 = vmul.f32 %v7660, %v7294
    %v7669 = vmul.f32 %v7667, %v7294
    %v7670 = vadd.f32 %v7668, 1e-05
    %v7671 = vadd.f32 %v7669, 1e-05
    %v7672 = vrsqrt.pop %v7670
    %v7673 = vmul.f32 %v7672, %v7670
    %v7674 = vmul.f32 %v7673, %v7672
    %v7675 = vmul.f32 0.5, %v7674
    %v7676 = vsub.f32 1.5, %v7675
    %v7677 = vmul.f32 %v7672, %v7676
    %vm7678 = vweird.f32 %v7670
    %vm7679 = vweird.f32 %v7672
    %vm7680 = vmor %vm7678, %vm7679
    %v7681 = vsel %vm7680, %v7672, %v7677
    %v7682 = vrsqrt.pop %v7671
    %v7683 = vmul.f32 %v7682, %v7671
    %v7684 = vmul.f32 %v7683, %v7682
    %v7685 = vmul.f32 0.5, %v7684
    %v7686 = vsub.f32 1.5, %v7685
    %v7687 = vmul.f32 %v7682, %v7686
    %vm7688 = vweird.f32 %v7671
    %vm7689 = vweird.f32 %v7682
    %vm7690 = vmor %vm7688, %vm7689
    %v7691 = vsel %vm7690, %v7682, %v7687
    %v7692 = vmul.f32 %v7650, %v7681
    %v7693 = vmul.f32 %v7651, %v7691
    %v7694 = vld [vmem:[%s15] sm:$0xf]
    %v7695 = vld [vmem:[%s15 + $0x4] sm:$0xf]
    %v7696 = vld [vmem:[%s15 + $0x8] sm:$0xf]
    %v7697 = vld [vmem:[%s15 + $0xc] sm:$0xf]
    %v7698 = vld [vmem:[%s15 + $0x10] sm:$0xf]
    %v7699 = vld [vmem:[%s15 + $0x14] sm:$0xf]
    %v7700 = vld [vmem:[%s15 + $0x18] sm:$0xf]
    %v7701 = vld [vmem:[%s15 + $0x1c] sm:$0xf]
    %v7702 = vld [vmem:[%s15 + $0x20] sm:$0xf]
    %v7703 = vld [vmem:[%s15 + $0x24] sm:$0xf]
    %v7704 = vld [vmem:[%s15 + $0x28] sm:$0xf]
    %v7705 = vld [vmem:[%s15 + $0x2c] sm:$0xf]
    %v7706 = vld [vmem:[%s15 + $0x30] sm:$0xf]
    %v7707 = vld [vmem:[%s15 + $0x34] sm:$0xf]
    %v7708 = vld [vmem:[%s15 + $0x38] sm:$0xf]
    %v7709 = vld [vmem:[%s15 + $0x3c] sm:$0xf]
    %v7710 = vld [vmem:[%s15 + $0x40] sm:$0xf]
    %v7711 = vld [vmem:[%s15 + $0x44] sm:$0xf]
    %v7712 = vld [vmem:[%s15 + $0x48] sm:$0xf]
    %v7713 = vld [vmem:[%s15 + $0x4c] sm:$0xf]
    %v7714 = vld [vmem:[%s15 + $0x50] sm:$0xf]
    %v7715 = vld [vmem:[%s15 + $0x54] sm:$0xf]
    %v7716 = vld [vmem:[%s15 + $0x58] sm:$0xf]
    %v7717 = vld [vmem:[%s15 + $0x5c] sm:$0xf]
    %v7718 = vld [vmem:[%s15 + $0x60] sm:$0xf]
    %v7719 = vld [vmem:[%s15 + $0x64] sm:$0xf]
    %v7720 = vld [vmem:[%s15 + $0x68] sm:$0xf]
    %v7721 = vld [vmem:[%s15 + $0x6c] sm:$0xf]
    %v7722 = vld [vmem:[%s15 + $0x70] sm:$0xf]
    %v7723 = vld [vmem:[%s15 + $0x74] sm:$0xf]
    %v7724 = vld [vmem:[%s15 + $0x78] sm:$0xf]
    %v7725 = vld [vmem:[%s15 + $0x7c] sm:$0xf]
    %v7726 = vpack.c.bf16 %v7692, %v7692
    %v7727 = vpack.c.bf16 %v7693, %v7693
    %v7728 = vld [vmem:[%s16] sm:$0x1]
    %v7730 = vperm.slane %v7728, 0
    %v7764 = vunpack.c.l.b16 %v7694
    %v7765 = vunpack.c.l.b16 %v7695
    %v7766 = vunpack.c.l.b16 %v7696
    %v7767 = vunpack.c.l.b16 %v7697
    %v7768 = vunpack.c.l.b16 %v7698
    %v7769 = vunpack.c.l.b16 %v7699
    %v7770 = vunpack.c.l.b16 %v7700
    %v7771 = vunpack.c.l.b16 %v7701
    %v7772 = vunpack.c.l.b16 %v7702
    %v7773 = vunpack.c.l.b16 %v7703
    %v7774 = vunpack.c.l.b16 %v7704
    %v7775 = vunpack.c.l.b16 %v7705
    %v7776 = vunpack.c.l.b16 %v7706
    %v7777 = vunpack.c.l.b16 %v7707
    %v7778 = vunpack.c.l.b16 %v7708
    %v7779 = vunpack.c.l.b16 %v7709
    %v7780 = vunpack.c.l.b16 %v7710
    %v7781 = vunpack.c.l.b16 %v7711
    %v7782 = vunpack.c.l.b16 %v7712
    %v7783 = vunpack.c.l.b16 %v7713
    %v7784 = vunpack.c.l.b16 %v7714
    %v7785 = vunpack.c.l.b16 %v7715
    %v7786 = vunpack.c.l.b16 %v7716
    %v7787 = vunpack.c.l.b16 %v7717
    %v7788 = vunpack.c.l.b16 %v7718
    %v7789 = vunpack.c.l.b16 %v7719
    %v7790 = vunpack.c.l.b16 %v7720
    %v7791 = vunpack.c.l.b16 %v7721
    %v7792 = vunpack.c.l.b16 %v7722
    %v7793 = vunpack.c.l.b16 %v7723
    %v7794 = vunpack.c.l.b16 %v7724
    %v7795 = vunpack.c.l.b16 %v7725
    %v7796 = vpack.c.b16 %v7765, %v7764
    %v7797 = vpack.c.b16 %v7767, %v7766
    %v7798 = vpack.c.b16 %v7769, %v7768
    %v7799 = vpack.c.b16 %v7771, %v7770
    %v7800 = vpack.c.b16 %v7773, %v7772
    %v7801 = vpack.c.b16 %v7775, %v7774
    %v7802 = vpack.c.b16 %v7777, %v7776
    %v7803 = vpack.c.b16 %v7779, %v7778
    %v7804 = vpack.c.b16 %v7781, %v7780
    %v7805 = vpack.c.b16 %v7783, %v7782
    %v7806 = vpack.c.b16 %v7785, %v7784
    %v7807 = vpack.c.b16 %v7787, %v7786
    %v7808 = vpack.c.b16 %v7789, %v7788
    %v7809 = vpack.c.b16 %v7791, %v7790
    %v7810 = vpack.c.b16 %v7793, %v7792
    %v7811 = vpack.c.b16 %v7795, %v7794
    %7828 = vmatpush.bf16.msra.mxu0 %v7803
    %7829 = vmatpush.bf16.msra.mxu0 %v7802
    %7830 = vmatpush.bf16.msra.mxu0 %v7801
    %7831 = vmatpush.bf16.msra.mxu0 %v7800
    %7832 = vmatpush.bf16.msra.mxu0 %v7799
    %7833 = vmatpush.bf16.msra.mxu0 %v7798
    %7834 = vmatpush.bf16.msra.mxu0 %v7797
    %7835 = vmatpush.bf16.msra.mxu0 %v7796
    %7836 = vmatmul.bf16.gmra.mxu0 %v7726
    %v7837 = vpop.f32.mrf.mxu0
    %v7838 = vadd.f32 %v7730, %v7837
    %v7839 = vpop.f32.mrf.mxu0
    %7840 = vdwg.mxu0
    %7841 = vmatpush.bf16.msra.mxu0 %v7811
    %7842 = vmatpush.bf16.msra.mxu0 %v7810
    %7843 = vmatpush.bf16.msra.mxu0 %v7809
    %7844 = vmatpush.bf16.msra.mxu0 %v7808
    %7845 = vmatpush.bf16.msra.mxu0 %v7807
    %7846 = vmatpush.bf16.msra.mxu0 %v7806
    %7847 = vmatpush.bf16.msra.mxu0 %v7805
    %7848 = vmatpush.bf16.msra.mxu0 %v7804
    %7849 = vmatmul.bf16.gmra.mxu0 %v7727
    %v7850 = vpop.f32.mrf.mxu0
    %v7851 = vadd.f32 %v7838, %v7850
    %v7852 = vpop.f32.mrf.mxu0
    %7853 = vdwg.mxu0
    %v7854 = vmax.f32 %v7851, 0.0
    %v7855 = vld [vmem:[%s18] sm:$0xf]
    %v7856 = vld [vmem:[%s18 + $0x4] sm:$0xf]
    %v7857 = vld [vmem:[%s18 + $0x8] sm:$0xf]
    %v7858 = vld [vmem:[%s18 + $0xc] sm:$0xf]
    %v7859 = vld [vmem:[%s18 + $0x10] sm:$0xf]
    %v7860 = vld [vmem:[%s18 + $0x14] sm:$0xf]
    %v7861 = vld [vmem:[%s18 + $0x18] sm:$0xf]
    %v7862 = vld [vmem:[%s18 + $0x1c] sm:$0xf]
    %v7863 = vld [vmem:[%s18 + $0x20] sm:$0xf]
    %v7864 = vld [vmem:[%s18 + $0x24] sm:$0xf]
    %v7865 = vld [vmem:[%s18 + $0x28] sm:$0xf]
    %v7866 = vld [vmem:[%s18 + $0x2c] sm:$0xf]
    %v7867 = vld [vmem:[%s18 + $0x30] sm:$0xf]
    %v7868 = vld [vmem:[%s18 + $0x34] sm:$0xf]
    %v7869 = vld [vmem:[%s18 + $0x38] sm:$0xf]
    %v7870 = vld [vmem:[%s18 + $0x3c] sm:$0xf]
    %v7871 = vpack.c.bf16 %v7104, %v7104
    %v7872 = vld [vmem:[%s19] sm:$0xf]
    %v7873 = vld [vmem:[%s19 + $0x4] sm:$0xf]
    %v7874 = vld [vmem:[%s19 + $0x8] sm:$0xf]
    %v7875 = vld [vmem:[%s19 + $0xc] sm:$0xf]
    %v7876 = vld [vmem:[%s19 + $0x10] sm:$0xf]
    %v7877 = vld [vmem:[%s19 + $0x14] sm:$0xf]
    %v7878 = vld [vmem:[%s19 + $0x18] sm:$0xf]
    %v7879 = vld [vmem:[%s19 + $0x1c] sm:$0xf]
    %v7880 = vld [vmem:[%s19 + $0x20] sm:$0xf]
    %v7881 = vld [vmem:[%s19 + $0x24] sm:$0xf]
    %v7882 = vld [vmem:[%s19 + $0x28] sm:$0xf]
    %v7883 = vld [vmem:[%s19 + $0x2c] sm:$0xf]
    %v7884 = vld [vmem:[%s19 + $0x30] sm:$0xf]
    %v7885 = vld [vmem:[%s19 + $0x34] sm:$0xf]
    %v7886 = vld [vmem:[%s19 + $0x38] sm:$0xf]
    %v7887 = vld [vmem:[%s19 + $0x3c] sm:$0xf]
    %v7888 = vpack.c.bf16 %v7501, %v7501
    %v7905 = vunpack.c.l.b16 %v7872
    %v7906 = vunpack.c.l.b16 %v7873
    %v7907 = vunpack.c.l.b16 %v7874
    %v7908 = vunpack.c.l.b16 %v7875
    %v7909 = vunpack.c.l.b16 %v7876
    %v7910 = vunpack.c.l.b16 %v7877
    %v7911 = vunpack.c.l.b16 %v7878
    %v7912 = vunpack.c.l.b16 %v7879
    %v7913 = vunpack.c.l.b16 %v7880
    %v7914 = vunpack.c.l.b16 %v7881
    %v7915 = vunpack.c.l.b16 %v7882
    %v7916 = vunpack.c.l.b16 %v7883
    %v7917 = vunpack.c.l.b16 %v7884
    %v7918 = vunpack.c.l.b16 %v7885
    %v7919 = vunpack.c.l.b16 %v7886
    %v7920 = vunpack.c.l.b16 %v7887
    %v7921 = vpack.c.b16 %v7906, %v7905
    %v7922 = vpack.c.b16 %v7908, %v7907
    %v7923 = vpack.c.b16 %v7910, %v7909
    %v7924 = vpack.c.b16 %v7912, %v7911
    %v7925 = vpack.c.b16 %v7914, %v7913
    %v7926 = vpack.c.b16 %v7916, %v7915
    %v7927 = vpack.c.b16 %v7918, %v7917
    %v7928 = vpack.c.b16 %v7920, %v7919
    %7937 = vmatpush.bf16.msra.mxu0 %v7928
    %7938 = vmatpush.bf16.msra.mxu0 %v7927
    %7939 = vmatpush.bf16.msra.mxu0 %v7926
    %7940 = vmatpush.bf16.msra.mxu0 %v7925
    %7941 = vmatpush.bf16.msra.mxu0 %v7924
    %7942 = vmatpush.bf16.msra.mxu0 %v7923
    %7943 = vmatpush.bf16.msra.mxu0 %v7922
    %7944 = vmatpush.bf16.msra.mxu0 %v7921
    %7945 = vmatmul.bf16.gmra.mxu0 %v7888
    %v7946 = vpop.f32.mrf.mxu0
    %v7947 = vadd.f32 0.0, %v7946
    %v7948 = vpop.f32.mrf.mxu0
    %7949 = vdwg.mxu0
    %v7966 = vunpack.c.l.b16 %v7855
    %v7967 = vunpack.c.l.b16 %v7856
    %v7968 = vunpack.c.l.b16 %v7857
    %v7969 = vunpack.c.l.b16 %v7858
    %v7970 = vunpack.c.l.b16 %v7859
    %v7971 = vunpack.c.l.b16 %v7860
    %v7972 = vunpack.c.l.b16 %v7861
    %v7973 = vunpack.c.l.b16 %v7862
    %v7974 = vunpack.c.l.b16 %v7863
    %v7975 = vunpack.c.l.b16 %v7864
    %v7976 = vunpack.c.l.b16 %v7865
    %v7977 = vunpack.c.l.b16 %v7866
    %v7978 = vunpack.c.l.b16 %v7867
    %v7979 = vunpack.c.l.b16 %v7868
    %v7980 = vunpack.c.l.b16 %v7869
    %v7981 = vunpack.c.l.b16 %v7870
    %v7982 = vpack.c.b16 %v7967, %v7966
    %v7983 = vpack.c.b16 %v7969, %v7968
    %v7984 = vpack.c.b16 %v7971, %v7970
    %v7985 = vpack.c.b16 %v7973, %v7972
    %v7986 = vpack.c.b16 %v7975, %v7974
    %v7987 = vpack.c.b16 %v7977, %v7976
    %v7988 = vpack.c.b16 %v7979, %v7978
    %v7989 = vpack.c.b16 %v7981, %v7980
    %7998 = vmatpush.bf16.msra.mxu0 %v7989
    %7999 = vmatpush.bf16.msra.mxu0 %v7988
    %8000 = vmatpush.bf16.msra.mxu0 %v7987
    %8001 = vmatpush.bf16.msra.mxu0 %v7986
    %8002 = vmatpush.bf16.msra.mxu0 %v7985
    %8003 = vmatpush.bf16.msra.mxu0 %v7984
    %8004 = vmatpush.bf16.msra.mxu0 %v7983
    %8005 = vmatpush.bf16.msra.mxu0 %v7982
    %8006 = vmatmul.bf16.gmra.mxu0 %v7871
    %v8007 = vpop.f32.mrf.mxu0
    %v8008 = vadd.f32 %v7947, %v8007
    %v8009 = vpop.f32.mrf.mxu0
    %8010 = vdwg.mxu0
    %v8011 = vld [vmem:[%s20] sm:$0xf]
    %v8012 = vld [vmem:[%s20 + $0x4] sm:$0xf]
    %v8013 = vld [vmem:[%s20 + $0x8] sm:$0xf]
    %v8014 = vld [vmem:[%s20 + $0xc] sm:$0xf]
    %v8015 = vld [vmem:[%s20 + $0x10] sm:$0xf]
    %v8016 = vld [vmem:[%s20 + $0x14] sm:$0xf]
    %v8017 = vld [vmem:[%s20 + $0x18] sm:$0xf]
    %v8018 = vld [vmem:[%s20 + $0x1c] sm:$0xf]
    %v8019 = vld [vmem:[%s20 + $0x20] sm:$0xf]
    %v8020 = vld [vmem:[%s20 + $0x24] sm:$0xf]
    %v8021 = vld [vmem:[%s20 + $0x28] sm:$0xf]
    %v8022 = vld [vmem:[%s20 + $0x2c] sm:$0xf]
    %v8023 = vld [vmem:[%s20 + $0x30] sm:$0xf]
    %v8024 = vld [vmem:[%s20 + $0x34] sm:$0xf]
    %v8025 = vld [vmem:[%s20 + $0x38] sm:$0xf]
    %v8026 = vld [vmem:[%s20 + $0x3c] sm:$0xf]
    %v8027 = vpack.c.bf16 %v7854, %v7854
    %v8044 = vunpack.c.l.b16 %v8011
    %v8045 = vunpack.c.l.b16 %v8012
    %v8046 = vunpack.c.l.b16 %v8013
    %v8047 = vunpack.c.l.b16 %v8014
    %v8048 = vunpack.c.l.b16 %v8015
    %v8049 = vunpack.c.l.b16 %v8016
    %v8050 = vunpack.c.l.b16 %v8017
    %v8051 = vunpack.c.l.b16 %v8018
    %v8052 = vunpack.c.l.b16 %v8019
    %v8053 = vunpack.c.l.b16 %v8020
    %v8054 = vunpack.c.l.b16 %v8021
    %v8055 = vunpack.c.l.b16 %v8022
    %v8056 = vunpack.c.l.b16 %v8023
    %v8057 = vunpack.c.l.b16 %v8024
    %v8058 = vunpack.c.l.b16 %v8025
    %v8059 = vunpack.c.l.b16 %v8026
    %v8060 = vpack.c.b16 %v8045, %v8044
    %v8061 = vpack.c.b16 %v8047, %v8046
    %v8062 = vpack.c.b16 %v8049, %v8048
    %v8063 = vpack.c.b16 %v8051, %v8050
    %v8064 = vpack.c.b16 %v8053, %v8052
    %v8065 = vpack.c.b16 %v8055, %v8054
    %v8066 = vpack.c.b16 %v8057, %v8056
    %v8067 = vpack.c.b16 %v8059, %v8058
    %8076 = vmatpush.bf16.msra.mxu0 %v8067
    %8077 = vmatpush.bf16.msra.mxu0 %v8066
    %8078 = vmatpush.bf16.msra.mxu0 %v8065
    %8079 = vmatpush.bf16.msra.mxu0 %v8064
    %8080 = vmatpush.bf16.msra.mxu0 %v8063
    %8081 = vmatpush.bf16.msra.mxu0 %v8062
    %8082 = vmatpush.bf16.msra.mxu0 %v8061
    %8083 = vmatpush.bf16.msra.mxu0 %v8060
    %8084 = vmatmul.bf16.gmra.mxu0 %v8027
    %v8085 = vpop.f32.mrf.mxu0
    %v8086 = vadd.f32 0.0, %v8085
    %v8087 = vpop.f32.mrf.mxu0
    %8088 = vdwg.mxu0
    %v8089 = vadd.f32 %v8008, %v8086
    %v8090 = vld [vmem:[%s21] sm:$0x1]
    %v8092 = vperm.slane %v8090, 0
    %v8094 = vadd.f32 %v8089, %v8092
    %vm8095 = vcmp.ge.f32.partialorder %v8094, 0.0
    %v8096 = vmul.f32 %v8094, 0.01
    %v8097 = vsel %vm8095, %v8094, %v8096
    %v8098 = vld [vmem:[%s17] sm:$0xf]
    %v8100 = vrot.slane %v8098, 4
    %v8102 = vsel %vm7273, %v8097, %v8100
    %v8103 = vrot.slane %v8102, 4
    %v8104 = vadd.f32 %v8102, %v8103
    %v8105 = vrot.slane %v8104, 2
    %v8106 = vadd.f32 %v8104, %v8105
    %v8107 = vrot.slane %v8106, 1
    %v8108 = vadd.f32 %v8106, %v8107
    %v8109 = vrcp.pop 8.0
    %v8110 = vmul.f32 8.0, %v8109
    %v8111 = vsub.f32 1.0, %v8110
    %v8112 = vmul.f32 %v8109, %v8111
    %v8113 = vadd.f32 %v8109, %v8112
    %vm8114 = vweird.f32 %v8109
    %v8115 = vsel %vm8114, %v8109, %v8113
    %v8116 = vmul.f32 %v8108, %v8115
    %v8117 = vsub.f32 %v8102, %v8116
    %v8118 = vmul.f32 %v8117, %v8117
    %v8119 = vrot.slane %v8118, 4
    %v8120 = vadd.f32 %v8118, %v8119
    %v8121 = vrot.slane %v8120, 2
    %v8122 = vadd.f32 %v8120, %v8121
    %v8123 = vrot.slane %v8122, 1
    %v8124 = vadd.f32 %v8122, %v8123
    %v8125 = vmul.f32 %v8124, %v8115
    %v8126 = vadd.f32 %v8125, 1e-05
    %v8127 = vrsqrt.pop %v8126
    %v8128 = vmul.f32 %v8127, %v8126
    %v8129 = vmul.f32 %v8128, %v8127
    %v8130 = vmul.f32 0.5, %v8129
    %v8131 = vsub.f32 1.5, %v8130
    %v8132 = vmul.f32 %v8127, %v8131
    %vm8133 = vweird.f32 %v8126
    %vm8134 = vweird.f32 %v8127
    %vm8135 = vmor %vm8133, %vm8134
    %v8136 = vsel %vm8135, %v8127, %v8132
    %v8137 = vmul.f32 %v8117, %v8136
    %8138 = vst [vmem:[#allocation2] sm:$0xff] %v8137
    // Predicated region
    $region90: #{node_representation_forward.3} parent=1 // pred_check
      _
    $region91: #{node_representation_forward.3} parent=1 // pred_check_branch
      %8140 = sbr.rel (0) target = $region93
    $region92: #{node_representation_forward.3} parent=1 // pred_region
      %8142 = vsyncadd [#allocation3], 0
      %s8144 = sshll.u32 [#allocation2], 4
      %s8145 = int_to_ptr.vmem [resolvable:$true] %s8144
      %s8146 = sshll.u32 %s22, 4
      %s8147 = int_to_ptr.hbm [resolvable:$true] %s8146
      %8149 = dma.vmem_to_hbm [thread:$0]  %s8145, 128, %s8147, [#allocation3]
    $region93: #{node_representation_forward.3} parent=1 // pred_fallthru
      _
    // Predicated region
    $region94: #{node_representation_forward.3} parent=1 // pred_check
      _
    $region95: #{node_representation_forward.3} parent=1 // pred_check_branch
      %8151 = sbr.rel (0) target = $region97
    $region96: #{node_representation_forward.3} parent=1 // pred_region
      %8153 = dma.done [#allocation3], 128
    $region97: #{node_representation_forward.3} parent=1 // pred_fallthru
      _
    %8154 = vsyncpa [#allocation3], 1

</llo_original>
